<compile_context>
chip_gen: v5e
topology: v5e:2x2
jax: 0.10.0
libtpu: 0.0.40
codegen_flags: <defaults>
</compile_context>

<pallas_src>
import functools

import jax
import jax.numpy as jnp
from jax.experimental import pallas as pl
from jax.experimental.pallas import tpu as pltpu

LANES = 128
SUBLANES = 8
SMALL_D = 1_048_576   # below ~1M elements, plain jnp.dot wins (launch overhead)


def _cdiv(a, b):
    return -(-a // b)


def _round_up(a, b):
    return _cdiv(a, b) * b


def _device_config():
    """Per-generation tile size + TensorCore split (best-effort, safe default)."""
    kind = ""
    try:
        kind = jax.devices()[0].device_kind.lower()
    except Exception:
        pass
    # v5-class: 16 MiB default scoped VMEM -> 4096-row tiles
    #   (2 inputs x 2 buffers x 2 MiB = 8 MiB).
    # v6e/v7x: 8192-row tiles (16 MiB of input buffers, inside the 32 MiB
    #   limit we set below; v7x physical VMEM is 64 MiB per TC).
    block_rows = 4096 if "v5" in kind else 8192
    # Only v7x has 2 TensorCores per chip worth splitting the reduction over.
    two_tc = ("v7" in kind) or ("tpu7" in kind)
    return block_rows, two_tc


def _dot_kernel(x_ref, y_ref, o_ref, acc_ref, *, rows, block_rows, needs_mask):
    c = pl.program_id(0)            # core axis (size 1 on v5e/v6e, 2 on v7x)
    i = pl.program_id(1)            # reduction axis (accumulator resident)
    n_i = pl.num_programs(1)

    @pl.when(i == 0)
    def _():
        acc_ref[...] = jnp.zeros_like(acc_ref)

    prod = x_ref[...].astype(jnp.float32) * y_ref[...].astype(jnp.float32)

    def accumulate(p):
        # Fold the block's sublane-groups onto a single (8, 128) accumulator:
        # pure VPU vreg adds (no XLU, no big-scratch VMEM traffic per step).
        acc_ref[...] += p.reshape(-1, SUBLANES, LANES).sum(axis=0)

    if needs_mask:
        blk = c * n_i + i                           # logical block index
        is_boundary = (blk + 1) * block_rows > rows

        @pl.when(jnp.logical_not(is_boundary))
        def _():
            accumulate(prod)

        @pl.when(is_boundary)
        def _():
            # Ragged / overhang block: discard rows past the logical end with a
            # select (NOT a multiply -- OOB VMEM contents may be NaN/Inf).
            row_ids = jax.lax.broadcasted_iota(jnp.int32, prod.shape, 0)
            accumulate(jnp.where(blk * block_rows + row_ids < rows, prod, 0.0))
    else:
        accumulate(prod)

    @pl.when(i == n_i - 1)
    def _():
        # One single-vreg cross-lane/sublane reduce per core, once per kernel.
        total = jnp.sum(acc_ref[...])
        o_ref[...] = jnp.broadcast_to(total, o_ref.shape).astype(o_ref.dtype)


def _pallas_dot(x, y):
    d = x.shape[0]
    block_rows_cfg, two_tc = _device_config()

    # Pad only up to the next lane row (<= 127 zeros). When d % 128 == 0 the
    # reshape below is a zero-copy relabeling (no extra HBM traffic).
    pad = (-d) % LANES
    if pad:
        x = jnp.pad(x, (0, pad))
        y = jnp.pad(y, (0, pad))
    rows = (d + pad) // LANES
    x2 = x.reshape(rows, LANES)
    y2 = y.reshape(rows, LANES)

    # Keep block_rows a multiple of 8 so the in-kernel (n, 8, 128) fold is a
    # pure relabeling; any overhang past `rows` is handled by the mask.
    block_rows = min(block_rows_cfg, _round_up(rows, SUBLANES))
    n_blocks = _cdiv(rows, block_rows)

    ncores = 2 if (two_tc and n_blocks >= 2) else 1
    bpc = _cdiv(n_blocks, ncores)                   # blocks per core
    needs_mask = (block_rows * bpc * ncores) != rows

    def in_map(c, i):
        # Clamp keeps every DMA in bounds; overhang/duplicate blocks are
        # zeroed by the in-kernel mask (which uses the *logical* block index).
        return (jnp.minimum(c * bpc + i, n_blocks - 1), 0)

    if ncores == 2:
        dims = (getattr(pltpu, "CORE_PARALLEL", "parallel"),
                getattr(pltpu, "ARBITRARY", "arbitrary"))
    else:
        dims = ("arbitrary", "arbitrary")

    kernel = functools.partial(
        _dot_kernel, rows=rows, block_rows=block_rows, needs_mask=needs_mask)

    out = pl.pallas_call(
        kernel,
        out_shape=jax.ShapeDtypeStruct((ncores * SUBLANES, LANES), jnp.float32),
        grid_spec=pltpu.PrefetchScalarGridSpec(
            num_scalar_prefetch=0,
            grid=(ncores, bpc),
            in_specs=[
                pl.BlockSpec((block_rows, LANES), in_map),
                pl.BlockSpec((block_rows, LANES), in_map),
            ],
            out_specs=pl.BlockSpec((SUBLANES, LANES), lambda c, i: (c, 0)),
            scratch_shapes=[pltpu.VMEM((SUBLANES, LANES), jnp.float32)],
        ),
        compiler_params=pltpu.CompilerParams(
            dimension_semantics=dims,
            # 2 inputs x 2 pipeline buffers x 4 MiB (worst case) = 16 MiB;
            # 32 MiB fits inside every generation's physical VMEM.
            vmem_limit_bytes=32 * 1024 * 1024,
        ),
        cost_estimate=pl.CostEstimate(
            flops=2 * d,
            bytes_accessed=2 * (d + pad) * x.dtype.itemsize
            + ncores * SUBLANES * LANES * 4,
            transcendentals=0,
        ),
    )(x2, y2)

    # Each core produced a broadcast (8, 128) partial; take one element each.
    partials = out.reshape(ncores, SUBLANES, LANES)[:, 0, 0]
    return jnp.sum(partials)


@jax.jit
def euclidean_metric_forward(x, y, base_point=None):
    """Pallas equivalent of EuclideanMetric.forward: dot(x, y) -> scalar."""
    assert x.ndim == 1 and y.ndim == 1 and x.shape == y.shape
    d = x.shape[0]
    out_dtype = jnp.result_type(x.dtype, y.dtype)

    # Small-D fast path: XLA's fused reduce already hits the HBM roofline and
    # avoids the custom-call launch + pipeline prologue cost.
    if d < SMALL_D:
        return jnp.dot(x, y)

    return _pallas_dot(x, y).astype(out_dtype)


# TODO(synk): RiemannianMetric.get_metric_tensor / get_christoffels use
# torch.autograd + torch.linalg.inv over Python double loops; for the
# Euclidean metric the tensor is the identity and Christoffels are 0, so no
# kernel is provided.


if __name__ == "__main__":
    key = jax.random.PRNGKey(0)
    kx, ky = jax.random.split(key)

    # --- Pallas path (D >= SMALL_D) ---------------------------------------
    # rows = 10_000 (multiple of 8, not a multiple of block_rows) exercises the
    # multi-step reduction grid and the boundary-block mask; D % 128 == 0 keeps
    # the (rows, 128) reshape a zero-copy relabeling.
    D = 1_280_000
    x = jax.random.normal(kx, (D,), dtype=jnp.float32)
    y = jax.random.normal(ky, (D,), dtype=jnp.float32)

    result = euclidean_metric_forward(x, y)
    jax.block_until_ready(result)
    expected = jnp.dot(x, y)
    scale = float(jnp.sum(jnp.abs(x) * jnp.abs(y)))
    assert abs(float(result) - float(expected)) <= 1e-5 * scale + 1e-6, (
        f"pallas-path mismatch: {result} vs {expected}"
    )

    # Ragged length (D % 128 != 0) -> lane-row pad + masked boundary block.
    D2 = D + 77
    x2 = jax.random.normal(kx, (D2,), dtype=jnp.float32)
    y2 = jax.random.normal(ky, (D2,), dtype=jnp.float32)
    r2 = euclidean_metric_forward(x2, y2)
    jax.block_until_ready(r2)
    e2 = jnp.dot(x2, y2)
    s2 = float(jnp.sum(jnp.abs(x2) * jnp.abs(y2)))
    assert abs(float(r2) - float(e2)) <= 1e-5 * s2 + 1e-6, (
        f"ragged-path mismatch: {r2} vs {e2}"
    )

    # --- Small-D fast path (plain jnp.dot) ---------------------------------
    xs = jax.random.normal(kx, (4096,), dtype=jnp.float32)
    ys = jax.random.normal(ky, (4096,), dtype=jnp.float32)
    rs = euclidean_metric_forward(xs, ys)
    jax.block_until_ready(rs)
    assert jnp.allclose(rs, jnp.dot(xs, ys), rtol=1e-5, atol=1e-3)

    print("KERNEL_OK")
</pallas_src>

<mosaic_0001>
module attributes {stable_mosaic.version = 11 : i64} {
  func.func @_dot_kernel(%arg0: i32, %arg1: i32, %arg2: memref<8192x128xf32, #tpu.memory_space<vmem>>, %arg3: memref<8192x128xf32, #tpu.memory_space<vmem>>, %arg4: memref<8x128xf32, #tpu.memory_space<vmem>>, %arg5: memref<8x128xf32, #tpu.memory_space<vmem>>) attributes {dimension_semantics = [#tpu.dimension_semantics<arbitrary>, #tpu.dimension_semantics<arbitrary>], iteration_bounds = array<i64: 1, 2>, scalar_prefetch = 0 : i64, scratch_operands = 1 : i64, tpu.core_type = #tpu.core_type<tc>, window_params = [{transform_indices = @transform_0, window_bounds = array<i64: 8192, 128>}, {transform_indices = @transform_1, window_bounds = array<i64: 8192, 128>}, {transform_indices = @transform_2, window_bounds = array<i64: 8, 128>}]} {
    %c0_i32 = arith.constant 0 : i32
    %0 = arith.cmpi eq, %arg1, %c0_i32 : i32
    %1 = arith.extui %0 : i1 to i32
    %c0_i32_0 = arith.constant 0 : i32
    %2 = arith.cmpi ne, %1, %c0_i32_0 : i32
    scf.if %2 {
      %cst = arith.constant 0.000000e+00 : f32
      %19 = vector.broadcast %cst : f32 to vector<8x128xf32>
      %c0_8 = arith.constant 0 : index
      %c0_9 = arith.constant 0 : index
      %20 = vector.load %arg5[%c0_8, %c0_9] : memref<8x128xf32, #tpu.memory_space<vmem>>, vector<8x128xf32>
      tpu.vector_store %arg5[%c0_8, %c0_9], %19 {strides = array<i32>} : memref<8x128xf32, #tpu.memory_space<vmem>>, vector<8x128xf32>,
    } else {
    }
    %c0 = arith.constant 0 : index
    %c0_1 = arith.constant 0 : index
    %3 = vector.load %arg2[%c0, %c0_1] : memref<8192x128xf32, #tpu.memory_space<vmem>>, vector<8192x128xf32>
    %c0_2 = arith.constant 0 : index
    %c0_3 = arith.constant 0 : index
    %4 = vector.load %arg3[%c0_2, %c0_3] : memref<8192x128xf32, #tpu.memory_space<vmem>>, vector<8192x128xf32>
    %5 = arith.mulf %3, %4 : vector<8192x128xf32>
    %c2_i32 = arith.constant 2 : i32
    %6 = arith.muli %arg0, %c2_i32 : i32
    %7 = arith.addi %6, %arg1 : i32
    %c1_i32 = arith.constant 1 : i32
    %8 = arith.addi %7, %c1_i32 : i32
    %c8192_i32 = arith.constant 8192 : i32
    %9 = arith.muli %8, %c8192_i32 : i32
    %c10000_i32 = arith.constant 10000 : i32
    %10 = arith.cmpi sgt, %9, %c10000_i32 : i32
    %true = arith.constant true
    %11 = arith.xori %10, %true : i1
    %12 = arith.extui %11 : i1 to i32
    %c0_i32_4 = arith.constant 0 : i32
    %13 = arith.cmpi ne, %12, %c0_i32_4 : i32
    scf.if %13 {
      %c0_8 = arith.constant 0 : index
      %c0_9 = arith.constant 0 : index
      %19 = vector.load %arg5[%c0_8, %c0_9] : memref<8x128xf32, #tpu.memory_space<vmem>>, vector<8x128xf32>
      %20 = vector.shape_cast %5 : vector<8192x128xf32> to vector<1024x8x128xf32>
      %cst = arith.constant dense<0.000000e+00> : vector<8x128xf32>
      %21 = vector.multi_reduction <add>, %20, %cst [0] : vector<1024x8x128xf32> to vector<8x128xf32>
      %22 = arith.addf %19, %21 : vector<8x128xf32>
      %c0_10 = arith.constant 0 : index
      %c0_11 = arith.constant 0 : index
      %23 = vector.load %arg5[%c0_10, %c0_11] : memref<8x128xf32, #tpu.memory_space<vmem>>, vector<8x128xf32>
      tpu.vector_store %arg5[%c0_10, %c0_11], %22 {strides = array<i32>} : memref<8x128xf32, #tpu.memory_space<vmem>>, vector<8x128xf32>,
    } else {
    }
    %14 = arith.extui %10 : i1 to i32
    %c0_i32_5 = arith.constant 0 : i32
    %15 = arith.cmpi ne, %14, %c0_i32_5 : i32
    scf.if %15 {
      %19 = tpu.iota {dimensions = array<i32: 0>} : vector<8192x128xi32>
      %c8192_i32_8 = arith.constant 8192 : i32
      %20 = arith.muli %7, %c8192_i32_8 : i32
      %21 = vector.broadcast %20 : i32 to vector<8192x128xi32>
      %22 = arith.addi %21, %19 : vector<8192x128xi32>
      %c10000_i32_9 = arith.constant 10000 : i32
      %23 = vector.broadcast %c10000_i32_9 : i32 to vector<8192x128xi32>
      %24 = arith.cmpi slt, %22, %23 : vector<8192x128xi32>
      %cst = arith.constant 0.000000e+00 : f32
      %25 = vector.broadcast %cst : f32 to vector<8192x128xf32>
      %26 = arith.select %24, %5, %25 : vector<8192x128xi1>, vector<8192x128xf32>
      %c0_10 = arith.constant 0 : index
      %c0_11 = arith.constant 0 : index
      %27 = vector.load %arg5[%c0_10, %c0_11] : memref<8x128xf32, #tpu.memory_space<vmem>>, vector<8x128xf32>
      %28 = vector.shape_cast %26 : vector<8192x128xf32> to vector<1024x8x128xf32>
      %cst_12 = arith.constant dense<0.000000e+00> : vector<8x128xf32>
      %29 = vector.multi_reduction <add>, %28, %cst_12 [0] : vector<1024x8x128xf32> to vector<8x128xf32>
      %30 = arith.addf %27, %29 : vector<8x128xf32>
      %c0_13 = arith.constant 0 : index
      %c0_14 = arith.constant 0 : index
      %31 = vector.load %arg5[%c0_13, %c0_14] : memref<8x128xf32, #tpu.memory_space<vmem>>, vector<8x128xf32>
      tpu.vector_store %arg5[%c0_13, %c0_14], %30 {strides = array<i32>} : memref<8x128xf32, #tpu.memory_space<vmem>>, vector<8x128xf32>,
    } else {
    }
    %c1_i32_6 = arith.constant 1 : i32
    %16 = arith.cmpi eq, %arg1, %c1_i32_6 : i32
    %17 = arith.extui %16 : i1 to i32
    %c0_i32_7 = arith.constant 0 : i32
    %18 = arith.cmpi ne, %17, %c0_i32_7 : i32
    scf.if %18 {
      %c0_8 = arith.constant 0 : index
      %c0_9 = arith.constant 0 : index
      %19 = vector.load %arg5[%c0_8, %c0_9] : memref<8x128xf32, #tpu.memory_space<vmem>>, vector<8x128xf32>
      %20 = vector.shape_cast %19 : vector<8x128xf32> to vector<1x8x128xf32>
      %cst = arith.constant dense<0.000000e+00> : vector<1xf32>
      %21 = vector.multi_reduction <add>, %20, %cst [1, 2] : vector<1x8x128xf32> to vector<1xf32>
      %22 = vector.shape_cast %21 : vector<1xf32> to vector<1x1x1xf32>
      %23 = vector.extract %22[0, 0, 0] : f32 from vector<1x1x1xf32>
      %24 = vector.broadcast %23 : f32 to vector<8x128xf32>
      %c0_10 = arith.constant 0 : index
      %c0_11 = arith.constant 0 : index
      %25 = vector.load %arg4[%c0_10, %c0_11] : memref<8x128xf32, #tpu.memory_space<vmem>>, vector<8x128xf32>
      tpu.vector_store %arg4[%c0_10, %c0_11], %24 {strides = array<i32>} : memref<8x128xf32, #tpu.memory_space<vmem>>, vector<8x128xf32>,
    } else {
    }
    return
  }
  func.func @transform_0(%arg0: i32, %arg1: i32) -> (i32, i32) {
    %c2_i32 = arith.constant 2 : i32
    %0 = arith.muli %arg0, %c2_i32 : i32
    %1 = arith.addi %0, %arg1 : i32
    %c1_i32 = arith.constant 1 : i32
    %2 = arith.minsi %1, %c1_i32 : i32
    %c0_i32 = arith.constant 0 : i32
    %c0_i32_0 = arith.constant 0 : i32
    return %2, %c0_i32 : i32, i32
  }
  func.func @transform_1(%arg0: i32, %arg1: i32) -> (i32, i32) {
    %c2_i32 = arith.constant 2 : i32
    %0 = arith.muli %arg0, %c2_i32 : i32
    %1 = arith.addi %0, %arg1 : i32
    %c1_i32 = arith.constant 1 : i32
    %2 = arith.minsi %1, %c1_i32 : i32
    %c0_i32 = arith.constant 0 : i32
    %c0_i32_0 = arith.constant 0 : i32
    return %2, %c0_i32 : i32, i32
  }
  func.func @transform_2(%arg0: i32, %arg1: i32) -> (i32, i32) {
    %c0_i32 = arith.constant 0 : i32
    %c0_i32_0 = arith.constant 0 : i32
    return %arg0, %c0_i32 : i32, i32
  }
}

</mosaic_0001>

<llo_original>
// kernel: euclidean_metric_forward.1
$region0: #{euclidean_metric_forward.1}
  #allocation0 [shape = 'u32[]', space=smem, size = 0x4, offset = 0x4, fixed_abs, tag = 'smem constant byte address 0x4 - core index']
  #allocation1 [shape = 'u32[72,128]{1,0:T(1,128)}', space=vmem, size = 0x9000, scoped, tag = 'internal scratch']
  #allocation2 [shape = 'f32[8,128]{1,0:T(8,128)}', space=vmem, size = 0x1000, scoped, tag = 'scratch operand']
  %s0 = inlined_call_operand.hbm [shape: f32[10000,128], index: 0, kind: input, shape index: {}]
  %s1 = inlined_call_operand.hbm [shape: f32[10000,128], index: 1, kind: input, shape index: {}]
  %s2 = inlined_call_operand.vmem [shape: f32[8,128], index: 2, kind: output, shape index: {}]
  %s3 = sld [smem:[#allocation0]]
  $region65: #{euclidean_metric_forward.1} parent=0
    _
  %s5 = ssub.s32 1, %s3
  %s6 = scalar_select 0, %s5, %s3
  $region1: #{euclidean_metric_forward.1} parent=0
    #allocation3 [shape = 'u8[8388608]{0}', space=vmem, size = 0x800000, scoped, tag = 'input window, operand 0']
    #allocation4 [shape = 's32[2]{0}', space=sflag, size = 0x8, scoped, tag = 'scoped memory for euclidean_metric_forward.1']
    #allocation5 [shape = 'u8[8388608]{0}', space=vmem, size = 0x800000, scoped, tag = 'input window, operand 1']
    #allocation6 [shape = 's32[2]{0}', space=sflag, size = 0x8, scoped, tag = 'scoped memory for euclidean_metric_forward.1']
    %7 = vsyncpa [#allocation4], 0
    %s8 = scalar_lea.sflag [#allocation4], 1
    %9 = vsyncpa %s8, 0
    %10 = vsyncpa [#allocation6], 0
    %s11 = scalar_lea.sflag [#allocation6], 1
    %12 = vsyncpa %s11, 0
    loop: start=0, step=1, limit=4
    $region2: #{euclidean_metric_forward.1} parent=1 // loop_pre_header
      _
    $region3: #{euclidean_metric_forward.1} parent=1 // loop_header
      %s14 = sphi 0, %s18
      %p15 = scmp.ge.s32.totalorder %s14, 4
      %s21 = sphi 0, %s33
      %s22 = sphi 0, %s29
      %s23 = sphi 0, %s21
      %s24 = sphi 0, %s22
      %s25 = sphi 0, %s23
      %s26 = sphi 0, %s24
      %s44 = sphi 0, %s46
      %s47 = sphi 0, %s44
      %s48 = sphi 0, %s47
      %s64 = sphi 0, %s48
      %s78 = sphi 0, %s80
      %s81 = sphi 0, %s78
      %s82 = sphi 0, %s81
      %s98 = sphi 0, %s82
      %s104 = sphi 0, %s106
      %s107 = sphi 0, %s104
      %s108 = sphi 0, %s107
      %s124 = sphi 0, %s108
    $region4: #{euclidean_metric_forward.1} parent=1 // loop_header_branch
      %17 = sbr.rel (%p15) target = $region8
    $region5: #{euclidean_metric_forward.1} parent=1 // loop_body
      %s19 = ssub.s32 %s14, 1
      %s20 = ssub.s32 %s14, 2
      %s27 = sadd.s32 1, %s22
      %p28 = scmp.ge.s32.totalorder %s27, 2
      %s29 = scalar_select %p28, 0, %s27
      %s30 = sadd.s32 1, %s21
      %s31 = scalar_select %p28, %s30, %s21
      %p32 = scmp.ge.s32.totalorder %s31, 1
      %s33 = scalar_select %p32, 0, %s31
      %s34 = smul.u32 %s21, 2
      %s35 = sadd.s32 %s34, %s22
      %p36 = scmp.lt.s32.totalorder %s35, 1
      %s37 = scalar_select %p36, %s35, 1
      %s38 = smul.u32 %s33, 2
      %s39 = sadd.s32 %s38, %s29
      %p40 = scmp.lt.s32.totalorder %s39, 1
      %s41 = scalar_select %p40, %s39, 1
      %s42 = ssub.s32 %s37, %s41
      %p43 = scmp.eq.s32.totalorder %s42, 0
      %s45 = sadd.s32 %s44, 1
      %s46 = scalar_select %p43, %s44, %s45
      %p49 = pneg %p43
      %p50 = scmp.eq.s32.totalorder %s14, 1
      %p51 = por %p49, %p50
      %p52 = scmp.ne.s32.totalorder %s44, %s47
      %p53 = scmp.eq.s32.totalorder %s14, 0
      %p54 = por %p52, %p53
      %p55 = scmp.ne.s32.totalorder %s44, %s47
      %p56 = scmp.eq.s32.totalorder %s19, 1
      %p57 = por %p55, %p56
      %p58 = scmp.ne.s32.totalorder %s47, %s48
      %p59 = scmp.eq.s32.totalorder %s19, 0
      %p60 = por %p58, %p59
      %p61 = scmp.ne.s32.totalorder %s47, %s48
      %p62 = scmp.eq.s32.totalorder %s20, 1
      %p63 = por %p61, %p62
      %p65 = scmp.ne.s32.totalorder %s48, %s64
      %p66 = scmp.eq.s32.totalorder %s20, 0
      %p67 = por %p65, %p66
      %s68 = smul.u32 %s21, 2
      %s69 = sadd.s32 %s68, %s22
      %p70 = scmp.lt.s32.totalorder %s69, 1
      %s71 = scalar_select %p70, %s69, 1
      %s72 = smul.u32 %s33, 2
      %s73 = sadd.s32 %s72, %s29
      %p74 = scmp.lt.s32.totalorder %s73, 1
      %s75 = scalar_select %p74, %s73, 1
      %s76 = ssub.s32 %s71, %s75
      %p77 = scmp.eq.s32.totalorder %s76, 0
      %s79 = sadd.s32 %s78, 1
      %s80 = scalar_select %p77, %s78, %s79
      %p83 = pneg %p77
      %p84 = scmp.eq.s32.totalorder %s14, 1
      %p85 = por %p83, %p84
      %p86 = scmp.ne.s32.totalorder %s78, %s81
      %p87 = scmp.eq.s32.totalorder %s14, 0
      %p88 = por %p86, %p87
      %p89 = scmp.ne.s32.totalorder %s78, %s81
      %p90 = scmp.eq.s32.totalorder %s19, 1
      %p91 = por %p89, %p90
      %p92 = scmp.ne.s32.totalorder %s81, %s82
      %p93 = scmp.eq.s32.totalorder %s19, 0
      %p94 = por %p92, %p93
      %p95 = scmp.ne.s32.totalorder %s81, %s82
      %p96 = scmp.eq.s32.totalorder %s20, 1
      %p97 = por %p95, %p96
      %p99 = scmp.ne.s32.totalorder %s82, %s98
      %p100 = scmp.eq.s32.totalorder %s20, 0
      %p101 = por %p99, %p100
      %s102 = ssub.s32 %s21, %s33
      %p103 = scmp.eq.s32.totalorder %s102, 0
      %s105 = sadd.s32 %s104, 1
      %s106 = scalar_select %p103, %s104, %s105
      %p109 = pneg %p103
      %p110 = scmp.eq.s32.totalorder %s14, 1
      %p111 = por %p109, %p110
      %p112 = scmp.ne.s32.totalorder %s104, %s107
      %p113 = scmp.eq.s32.totalorder %s14, 0
      %p114 = por %p112, %p113
      %p115 = scmp.ne.s32.totalorder %s104, %s107
      %p116 = scmp.eq.s32.totalorder %s19, 1
      %p117 = por %p115, %p116
      %p118 = scmp.ne.s32.totalorder %s107, %s108
      %p119 = scmp.eq.s32.totalorder %s19, 0
      %p120 = por %p118, %p119
      %p121 = scmp.ne.s32.totalorder %s107, %s108
      %p122 = scmp.eq.s32.totalorder %s20, 1
      %p123 = por %p121, %p122
      %p125 = scmp.ne.s32.totalorder %s108, %s124
      %p126 = scmp.eq.s32.totalorder %s20, 0
      %p127 = por %p125, %p126
      %p128 = scmp.le.s32.totalorder 1, %s14
      %p129 = scmp.lt.s32.totalorder %s14, 3
      %p130 = pnand %p128, %p129
      %p131 = pneg %p130
      // Predicated region
      $region9: #{euclidean_metric_forward.1} parent=5 // pred_check
        _
      $region10: #{euclidean_metric_forward.1} parent=5 // pred_check_branch
        %133 = sbr.rel (%p130) target = $region12
      $region11: #{euclidean_metric_forward.1} parent=5 // pred_region
        %s134 = ssub.s32 %s14, 1
      $region12: #{euclidean_metric_forward.1} parent=5 // pred_fallthru
        _
      %p135 = scmp.lt.s32.totalorder %s14, 2
      // Predicated region
      $region13: #{euclidean_metric_forward.1} parent=5 // pred_check
        %p136 = pneg %p135
      $region14: #{euclidean_metric_forward.1} parent=5 // pred_check_branch
        %138 = sbr.rel (%p136) target = $region16
      $region15: #{euclidean_metric_forward.1} parent=5 // pred_region
        // Predicated region
        $region17: #{euclidean_metric_forward.1} parent=15 // pred_check
          %p139 = pneg %p54
        $region18: #{euclidean_metric_forward.1} parent=15 // pred_check_branch
          %141 = sbr.rel (%p139) target = $region20
        $region19: #{euclidean_metric_forward.1} parent=15 // pred_region
          %s142 = sand.u32 %s44, 1
          %s143 = scalar_lea.sflag [#allocation4], %s142
          %s144 = sand.u32 %s44, 1
          %s145 = smul.addr %s144, 8192
          %s146 = scalar_lea.vmem [#allocation3], %s145
          %s147 = smul.u32 %s21, 2
          %s148 = sadd.s32 %s147, %s22
          %p149 = scmp.lt.s32.totalorder %s148, 1
          %s150 = scalar_select %p149, %s148, 1
          %s151 = smul.u32 1024, %s150
          %s152 = ssub.s32 1250, %s151
          %p153 = scmp.lt.s32.totalorder %s152, 1024
          %s154 = scalar_select %p153, %s152, 1024
          %s155 = smul.u32 8, %s154
          %s156 = ssub.s32 8192, %s155
          %s157 = sshll.u32 %s156, 4
          %158 = vsyncadd %s143, %s157
          %p159 = scmp.ne.s32.totalorder 0, %s155
          %s160 = smul.addr %s151, 8
          %s161 = scalar_lea.hbm %s0, %s160
          %s162 = smul.u32 8, %s154
          %s163 = sshll.u32 %s161, 4
          %s164 = int_to_ptr.hbm [resolvable:$true] %s163
          %s165 = sshll.u32 %s146, 4
          %s166 = int_to_ptr.vmem [resolvable:$true] %s165
          %s167 = sshll.u32 %s162, 4
          %171 = dma.hbm_to_vmem [thread:$0]  (%p159), %s164, %s167, %s166, %s143, 128, 128, 8
        $region20: #{euclidean_metric_forward.1} parent=15 // pred_fallthru
          _
        // Predicated region
        $region21: #{euclidean_metric_forward.1} parent=15 // pred_check
          %p172 = pneg %p88
        $region22: #{euclidean_metric_forward.1} parent=15 // pred_check_branch
          %174 = sbr.rel (%p172) target = $region24
        $region23: #{euclidean_metric_forward.1} parent=15 // pred_region
          %s175 = sand.u32 %s78, 1
          %s176 = scalar_lea.sflag [#allocation6], %s175
          %s177 = sand.u32 %s78, 1
          %s178 = smul.addr %s177, 8192
          %s179 = scalar_lea.vmem [#allocation5], %s178
          %s180 = smul.u32 %s21, 2
          %s181 = sadd.s32 %s180, %s22
          %p182 = scmp.lt.s32.totalorder %s181, 1
          %s183 = scalar_select %p182, %s181, 1
          %s184 = smul.u32 1024, %s183
          %s185 = ssub.s32 1250, %s184
          %p186 = scmp.lt.s32.totalorder %s185, 1024
          %s187 = scalar_select %p186, %s185, 1024
          %s188 = smul.u32 8, %s187
          %s189 = ssub.s32 8192, %s188
          %s190 = sshll.u32 %s189, 4
          %191 = vsyncadd %s176, %s190
          %p192 = scmp.ne.s32.totalorder 0, %s188
          %s193 = smul.addr %s184, 8
          %s194 = scalar_lea.hbm %s1, %s193
          %s195 = smul.u32 8, %s187
          %s196 = sshll.u32 %s194, 4
          %s197 = int_to_ptr.hbm [resolvable:$true] %s196
          %s198 = sshll.u32 %s179, 4
          %s199 = int_to_ptr.vmem [resolvable:$true] %s198
          %s200 = sshll.u32 %s195, 4
          %204 = dma.hbm_to_vmem [thread:$0]  (%p192), %s197, %s200, %s199, %s176, 128, 128, 8
        $region24: #{euclidean_metric_forward.1} parent=15 // pred_fallthru
          _
      $region16: #{euclidean_metric_forward.1} parent=5 // pred_fallthru
        _
      %p205 = scmp.le.s32.totalorder 1, %s14
      %p206 = scmp.lt.s32.totalorder %s14, 3
      %p207 = pnand %p205, %p206
      %p208 = pneg %p207
      // Predicated region
      $region25: #{euclidean_metric_forward.1} parent=5 // pred_check
        _
      $region26: #{euclidean_metric_forward.1} parent=5 // pred_check_branch
        %210 = sbr.rel (%p207) target = $region28
      $region27: #{euclidean_metric_forward.1} parent=5 // pred_region
        %s211 = ssub.s32 %s14, 1
        %s212 = sand.u32 %s47, 1
        %s213 = scalar_lea.sflag [#allocation4], %s212
        %s214 = sand.u32 %s47, 1
        %s215 = smul.addr %s214, 8192
        %s216 = scalar_lea.vmem [#allocation3], %s215
        // Predicated region
        $region29: #{euclidean_metric_forward.1} parent=27 // pred_check
          %p217 = pneg %p60
        $region30: #{euclidean_metric_forward.1} parent=27 // pred_check_branch
          %219 = sbr.rel (%p217) target = $region32
        $region31: #{euclidean_metric_forward.1} parent=27 // pred_region
          %221 = dma.done %s213, 131072
        $region32: #{euclidean_metric_forward.1} parent=27 // pred_fallthru
          _
        %s222 = sand.u32 %s81, 1
        %s223 = scalar_lea.sflag [#allocation6], %s222
        %s224 = sand.u32 %s81, 1
        %s225 = smul.addr %s224, 8192
        %s226 = scalar_lea.vmem [#allocation5], %s225
        // Predicated region
        $region33: #{euclidean_metric_forward.1} parent=27 // pred_check
          %p227 = pneg %p94
        $region34: #{euclidean_metric_forward.1} parent=27 // pred_check_branch
          %229 = sbr.rel (%p227) target = $region36
        $region35: #{euclidean_metric_forward.1} parent=27 // pred_region
          %231 = dma.done %s223, 131072
        $region36: #{euclidean_metric_forward.1} parent=27 // pred_fallthru
          _
        %s232 = sand.u32 %s47, 1
        %s233 = scalar_lea.sflag [#allocation4], %s232
        %s234 = sand.u32 %s47, 1
        %s235 = smul.addr %s234, 8192
        %s236 = scalar_lea.vmem [#allocation3], %s235
        %p237 = pneg %p60
        %p238 = pneg %p57
        %s239 = sand.u32 %s81, 1
        %s240 = scalar_lea.sflag [#allocation6], %s239
        %s241 = sand.u32 %s81, 1
        %s242 = smul.addr %s241, 8192
        %s243 = scalar_lea.vmem [#allocation5], %s242
        %p244 = pneg %p94
        %p245 = pneg %p91
        %p246 = pneg %p120
        %p247 = pneg %p117
        %p248 = scmp.lt.s32.totalorder %s23, 0
        %s249 = scalar_select %p248, %s23, 0
        %s250 = smul.addr %s249, 8
        %s251 = scalar_lea.vmem %s2, %s250
        %s252 = smul.u32 %s23, 2
        %s253 = sadd.s32 %s252, %s24
        %p254 = scmp.lt.s32.totalorder %s253, 1
        %s255 = scalar_select %p254, %s253, 1
        %s256 = smul.u32 1024, %s255
        %s257 = ssub.s32 1250, %s256
        %p258 = scmp.lt.s32.totalorder %s257, 1024
        %s259 = scalar_select %p258, %s257, 1024
        %s260 = smul.u32 8, %s259
        %s261 = smul.u32 %s23, 2
        %s262 = sadd.s32 %s261, %s24
        %p263 = scmp.lt.s32.totalorder %s262, 1
        %s264 = scalar_select %p263, %s262, 1
        %s265 = smul.u32 1024, %s264
        %s266 = ssub.s32 1250, %s265
        %p267 = scmp.lt.s32.totalorder %s266, 1024
        %s268 = scalar_select %p267, %s266, 1024
        %s269 = smul.u32 8, %s268
        %p270 = scmp.lt.s32.totalorder %s23, 0
        %s271 = scalar_select %p270, %s23, 0
        %s272 = smul.addr %s271, 8
        %s273 = scalar_lea.vmem %s2, %s272
        %p274 = scmp.eq.s32.totalorder %s24, 0
        // Predicated region
        $region37: #{euclidean_metric_forward.1} parent=27 // pred_check
          %p275 = pneg %p274
        $region38: #{euclidean_metric_forward.1} parent=27 // pred_check_branch
          %277 = sbr.rel (%p275) target = $region40
        $region39: #{euclidean_metric_forward.1} parent=27 // pred_region
          %278 = vst [vmem:[#allocation2] sm:$0xff] 0.0
        $region40: #{euclidean_metric_forward.1} parent=27 // pred_fallthru
          _
        %v279 = vld [vmem:[%s216] sm:$0xff]
        %v280 = vld [vmem:[%s216 + $0x8] sm:$0xff]
        %v281 = vld [vmem:[%s216 + $0x10] sm:$0xff]
        %v282 = vld [vmem:[%s216 + $0x18] sm:$0xff]
        %v283 = vld [vmem:[%s216 + $0x20] sm:$0xff]
        %v284 = vld [vmem:[%s216 + $0x28] sm:$0xff]
        %v285 = vld [vmem:[%s216 + $0x30] sm:$0xff]
        %v286 = vld [vmem:[%s216 + $0x38] sm:$0xff]
        %v287 = vld [vmem:[%s216 + $0x40] sm:$0xff]
        %v288 = vld [vmem:[%s216 + $0x48] sm:$0xff]
        %v289 = vld [vmem:[%s216 + $0x50] sm:$0xff]
        %v290 = vld [vmem:[%s216 + $0x58] sm:$0xff]
        %v291 = vld [vmem:[%s216 + $0x60] sm:$0xff]
        %v292 = vld [vmem:[%s216 + $0x68] sm:$0xff]
        %v293 = vld [vmem:[%s216 + $0x70] sm:$0xff]
        %v294 = vld [vmem:[%s216 + $0x78] sm:$0xff]
        %v295 = vld [vmem:[%s216 + $0x80] sm:$0xff]
        %v296 = vld [vmem:[%s216 + $0x88] sm:$0xff]
        %v297 = vld [vmem:[%s216 + $0x90] sm:$0xff]
        %v298 = vld [vmem:[%s216 + $0x98] sm:$0xff]
        %v299 = vld [vmem:[%s216 + $0xa0] sm:$0xff]
        %v300 = vld [vmem:[%s216 + $0xa8] sm:$0xff]
        %v301 = vld [vmem:[%s216 + $0xb0] sm:$0xff]
        %v302 = vld [vmem:[%s216 + $0xb8] sm:$0xff]
        %v303 = vld [vmem:[%s216 + $0xc0] sm:$0xff]
        %v304 = vld [vmem:[%s216 + $0xc8] sm:$0xff]
        %v305 = vld [vmem:[%s216 + $0xd0] sm:$0xff]
        %v306 = vld [vmem:[%s216 + $0xd8] sm:$0xff]
        %v307 = vld [vmem:[%s216 + $0xe0] sm:$0xff]
        %v308 = vld [vmem:[%s216 + $0xe8] sm:$0xff]
        %v309 = vld [vmem:[%s216 + $0xf0] sm:$0xff]
        %v310 = vld [vmem:[%s216 + $0xf8] sm:$0xff]
        %v311 = vld [vmem:[%s216 + $0x100] sm:$0xff]
        %v312 = vld [vmem:[%s216 + $0x108] sm:$0xff]
        %v313 = vld [vmem:[%s216 + $0x110] sm:$0xff]
        %v314 = vld [vmem:[%s216 + $0x118] sm:$0xff]
        %v315 = vld [vmem:[%s216 + $0x120] sm:$0xff]
        %v316 = vld [vmem:[%s216 + $0x128] sm:$0xff]
        %v317 = vld [vmem:[%s216 + $0x130] sm:$0xff]
        %v318 = vld [vmem:[%s216 + $0x138] sm:$0xff]
        %v319 = vld [vmem:[%s216 + $0x140] sm:$0xff]
        %v320 = vld [vmem:[%s216 + $0x148] sm:$0xff]
        %v321 = vld [vmem:[%s216 + $0x150] sm:$0xff]
        %v322 = vld [vmem:[%s216 + $0x158] sm:$0xff]
        %v323 = vld [vmem:[%s216 + $0x160] sm:$0xff]
        %v324 = vld [vmem:[%s216 + $0x168] sm:$0xff]
        %v325 = vld [vmem:[%s216 + $0x170] sm:$0xff]
        %v326 = vld [vmem:[%s216 + $0x178] sm:$0xff]
        %v327 = vld [vmem:[%s216 + $0x180] sm:$0xff]
        %v328 = vld [vmem:[%s216 + $0x188] sm:$0xff]
        %v329 = vld [vmem:[%s216 + $0x190] sm:$0xff]
        %v330 = vld [vmem:[%s216 + $0x198] sm:$0xff]
        %v331 = vld [vmem:[%s216 + $0x1a0] sm:$0xff]
        %v332 = vld [vmem:[%s216 + $0x1a8] sm:$0xff]
        %v333 = vld [vmem:[%s216 + $0x1b0] sm:$0xff]
        %v334 = vld [vmem:[%s216 + $0x1b8] sm:$0xff]
        %v335 = vld [vmem:[%s216 + $0x1c0] sm:$0xff]
        %v336 = vld [vmem:[%s216 + $0x1c8] sm:$0xff]
        %v337 = vld [vmem:[%s216 + $0x1d0] sm:$0xff]
        %v338 = vld [vmem:[%s216 + $0x1d8] sm:$0xff]
        %v339 = vld [vmem:[%s216 + $0x1e0] sm:$0xff]
        %v340 = vld [vmem:[%s216 + $0x1e8] sm:$0xff]
        %v341 = vld [vmem:[%s216 + $0x1f0] sm:$0xff]
        %v342 = vld [vmem:[%s216 + $0x1f8] sm:$0xff]
        %v343 = vld [vmem:[%s216 + $0x200] sm:$0xff]
        %v344 = vld [vmem:[%s216 + $0x208] sm:$0xff]
        %v345 = vld [vmem:[%s216 + $0x210] sm:$0xff]
        %v346 = vld [vmem:[%s216 + $0x218] sm:$0xff]
        %v347 = vld [vmem:[%s216 + $0x220] sm:$0xff]
        %v348 = vld [vmem:[%s216 + $0x228] sm:$0xff]
        %v349 = vld [vmem:[%s216 + $0x230] sm:$0xff]
        %v350 = vld [vmem:[%s216 + $0x238] sm:$0xff]
        %v351 = vld [vmem:[%s216 + $0x240] sm:$0xff]
        %v352 = vld [vmem:[%s216 + $0x248] sm:$0xff]
        %v353 = vld [vmem:[%s216 + $0x250] sm:$0xff]
        %v354 = vld [vmem:[%s216 + $0x258] sm:$0xff]
        %v355 = vld [vmem:[%s216 + $0x260] sm:$0xff]
        %v356 = vld [vmem:[%s216 + $0x268] sm:$0xff]
        %v357 = vld [vmem:[%s216 + $0x270] sm:$0xff]
        %v358 = vld [vmem:[%s216 + $0x278] sm:$0xff]
        %v359 = vld [vmem:[%s216 + $0x280] sm:$0xff]
        %v360 = vld [vmem:[%s216 + $0x288] sm:$0xff]
        %v361 = vld [vmem:[%s216 + $0x290] sm:$0xff]
        %v362 = vld [vmem:[%s216 + $0x298] sm:$0xff]
        %v363 = vld [vmem:[%s216 + $0x2a0] sm:$0xff]
        %v364 = vld [vmem:[%s216 + $0x2a8] sm:$0xff]
        %v365 = vld [vmem:[%s216 + $0x2b0] sm:$0xff]
        %v366 = vld [vmem:[%s216 + $0x2b8] sm:$0xff]
        %v367 = vld [vmem:[%s216 + $0x2c0] sm:$0xff]
        %v368 = vld [vmem:[%s216 + $0x2c8] sm:$0xff]
        %v369 = vld [vmem:[%s216 + $0x2d0] sm:$0xff]
        %v370 = vld [vmem:[%s216 + $0x2d8] sm:$0xff]
        %v371 = vld [vmem:[%s216 + $0x2e0] sm:$0xff]
        %v372 = vld [vmem:[%s216 + $0x2e8] sm:$0xff]
        %v373 = vld [vmem:[%s216 + $0x2f0] sm:$0xff]
        %v374 = vld [vmem:[%s216 + $0x2f8] sm:$0xff]
        %v375 = vld [vmem:[%s216 + $0x300] sm:$0xff]
        %v376 = vld [vmem:[%s216 + $0x308] sm:$0xff]
        %v377 = vld [vmem:[%s216 + $0x310] sm:$0xff]
        %v378 = vld [vmem:[%s216 + $0x318] sm:$0xff]
        %v379 = vld [vmem:[%s216 + $0x320] sm:$0xff]
        %v380 = vld [vmem:[%s216 + $0x328] sm:$0xff]
        %v381 = vld [vmem:[%s216 + $0x330] sm:$0xff]
        %v382 = vld [vmem:[%s216 + $0x338] sm:$0xff]
        %v383 = vld [vmem:[%s216 + $0x340] sm:$0xff]
        %v384 = vld [vmem:[%s216 + $0x348] sm:$0xff]
        %v385 = vld [vmem:[%s216 + $0x350] sm:$0xff]
        %v386 = vld [vmem:[%s216 + $0x358] sm:$0xff]
        %v387 = vld [vmem:[%s216 + $0x360] sm:$0xff]
        %v388 = vld [vmem:[%s216 + $0x368] sm:$0xff]
        %v389 = vld [vmem:[%s216 + $0x370] sm:$0xff]
        %v390 = vld [vmem:[%s216 + $0x378] sm:$0xff]
        %v391 = vld [vmem:[%s216 + $0x380] sm:$0xff]
        %v392 = vld [vmem:[%s216 + $0x388] sm:$0xff]
        %v393 = vld [vmem:[%s216 + $0x390] sm:$0xff]
        %v394 = vld [vmem:[%s216 + $0x398] sm:$0xff]
        %v395 = vld [vmem:[%s216 + $0x3a0] sm:$0xff]
        %v396 = vld [vmem:[%s216 + $0x3a8] sm:$0xff]
        %v397 = vld [vmem:[%s216 + $0x3b0] sm:$0xff]
        %v398 = vld [vmem:[%s216 + $0x3b8] sm:$0xff]
        %v399 = vld [vmem:[%s216 + $0x3c0] sm:$0xff]
        %v400 = vld [vmem:[%s216 + $0x3c8] sm:$0xff]
        %v401 = vld [vmem:[%s216 + $0x3d0] sm:$0xff]
        %v402 = vld [vmem:[%s216 + $0x3d8] sm:$0xff]
        %v403 = vld [vmem:[%s216 + $0x3e0] sm:$0xff]
        %v404 = vld [vmem:[%s216 + $0x3e8] sm:$0xff]
        %v405 = vld [vmem:[%s216 + $0x3f0] sm:$0xff]
        %v406 = vld [vmem:[%s216 + $0x3f8] sm:$0xff]
        %v407 = vld [vmem:[%s216 + $0x400] sm:$0xff]
        %v408 = vld [vmem:[%s216 + $0x408] sm:$0xff]
        %v409 = vld [vmem:[%s216 + $0x410] sm:$0xff]
        %v410 = vld [vmem:[%s216 + $0x418] sm:$0xff]
        %v411 = vld [vmem:[%s216 + $0x420] sm:$0xff]
        %v412 = vld [vmem:[%s216 + $0x428] sm:$0xff]
        %v413 = vld [vmem:[%s216 + $0x430] sm:$0xff]
        %v414 = vld [vmem:[%s216 + $0x438] sm:$0xff]
        %v415 = vld [vmem:[%s216 + $0x440] sm:$0xff]
        %v416 = vld [vmem:[%s216 + $0x448] sm:$0xff]
        %v417 = vld [vmem:[%s216 + $0x450] sm:$0xff]
        %v418 = vld [vmem:[%s216 + $0x458] sm:$0xff]
        %v419 = vld [vmem:[%s216 + $0x460] sm:$0xff]
        %v420 = vld [vmem:[%s216 + $0x468] sm:$0xff]
        %v421 = vld [vmem:[%s216 + $0x470] sm:$0xff]
        %v422 = vld [vmem:[%s216 + $0x478] sm:$0xff]
        %v423 = vld [vmem:[%s216 + $0x480] sm:$0xff]
        %v424 = vld [vmem:[%s216 + $0x488] sm:$0xff]
        %v425 = vld [vmem:[%s216 + $0x490] sm:$0xff]
        %v426 = vld [vmem:[%s216 + $0x498] sm:$0xff]
        %v427 = vld [vmem:[%s216 + $0x4a0] sm:$0xff]
        %v428 = vld [vmem:[%s216 + $0x4a8] sm:$0xff]
        %v429 = vld [vmem:[%s216 + $0x4b0] sm:$0xff]
        %v430 = vld [vmem:[%s216 + $0x4b8] sm:$0xff]
        %v431 = vld [vmem:[%s216 + $0x4c0] sm:$0xff]
        %v432 = vld [vmem:[%s216 + $0x4c8] sm:$0xff]
        %v433 = vld [vmem:[%s216 + $0x4d0] sm:$0xff]
        %v434 = vld [vmem:[%s216 + $0x4d8] sm:$0xff]
        %v435 = vld [vmem:[%s216 + $0x4e0] sm:$0xff]
        %v436 = vld [vmem:[%s216 + $0x4e8] sm:$0xff]
        %v437 = vld [vmem:[%s216 + $0x4f0] sm:$0xff]
        %v438 = vld [vmem:[%s216 + $0x4f8] sm:$0xff]
        %v439 = vld [vmem:[%s216 + $0x500] sm:$0xff]
        %v440 = vld [vmem:[%s216 + $0x508] sm:$0xff]
        %v441 = vld [vmem:[%s216 + $0x510] sm:$0xff]
        %v442 = vld [vmem:[%s216 + $0x518] sm:$0xff]
        %v443 = vld [vmem:[%s216 + $0x520] sm:$0xff]
        %v444 = vld [vmem:[%s216 + $0x528] sm:$0xff]
        %v445 = vld [vmem:[%s216 + $0x530] sm:$0xff]
        %v446 = vld [vmem:[%s216 + $0x538] sm:$0xff]
        %v447 = vld [vmem:[%s216 + $0x540] sm:$0xff]
        %v448 = vld [vmem:[%s216 + $0x548] sm:$0xff]
        %v449 = vld [vmem:[%s216 + $0x550] sm:$0xff]
        %v450 = vld [vmem:[%s216 + $0x558] sm:$0xff]
        %v451 = vld [vmem:[%s216 + $0x560] sm:$0xff]
        %v452 = vld [vmem:[%s216 + $0x568] sm:$0xff]
        %v453 = vld [vmem:[%s216 + $0x570] sm:$0xff]
        %v454 = vld [vmem:[%s216 + $0x578] sm:$0xff]
        %v455 = vld [vmem:[%s216 + $0x580] sm:$0xff]
        %v456 = vld [vmem:[%s216 + $0x588] sm:$0xff]
        %v457 = vld [vmem:[%s216 + $0x590] sm:$0xff]
        %v458 = vld [vmem:[%s216 + $0x598] sm:$0xff]
        %v459 = vld [vmem:[%s216 + $0x5a0] sm:$0xff]
        %v460 = vld [vmem:[%s216 + $0x5a8] sm:$0xff]
        %v461 = vld [vmem:[%s216 + $0x5b0] sm:$0xff]
        %v462 = vld [vmem:[%s216 + $0x5b8] sm:$0xff]
        %v463 = vld [vmem:[%s216 + $0x5c0] sm:$0xff]
        %v464 = vld [vmem:[%s216 + $0x5c8] sm:$0xff]
        %v465 = vld [vmem:[%s216 + $0x5d0] sm:$0xff]
        %v466 = vld [vmem:[%s216 + $0x5d8] sm:$0xff]
        %v467 = vld [vmem:[%s216 + $0x5e0] sm:$0xff]
        %v468 = vld [vmem:[%s216 + $0x5e8] sm:$0xff]
        %v469 = vld [vmem:[%s216 + $0x5f0] sm:$0xff]
        %v470 = vld [vmem:[%s216 + $0x5f8] sm:$0xff]
        %v471 = vld [vmem:[%s216 + $0x600] sm:$0xff]
        %v472 = vld [vmem:[%s216 + $0x608] sm:$0xff]
        %v473 = vld [vmem:[%s216 + $0x610] sm:$0xff]
        %v474 = vld [vmem:[%s216 + $0x618] sm:$0xff]
        %v475 = vld [vmem:[%s216 + $0x620] sm:$0xff]
        %v476 = vld [vmem:[%s216 + $0x628] sm:$0xff]
        %v477 = vld [vmem:[%s216 + $0x630] sm:$0xff]
        %v478 = vld [vmem:[%s216 + $0x638] sm:$0xff]
        %v479 = vld [vmem:[%s216 + $0x640] sm:$0xff]
        %v480 = vld [vmem:[%s216 + $0x648] sm:$0xff]
        %v481 = vld [vmem:[%s216 + $0x650] sm:$0xff]
        %v482 = vld [vmem:[%s216 + $0x658] sm:$0xff]
        %v483 = vld [vmem:[%s216 + $0x660] sm:$0xff]
        %v484 = vld [vmem:[%s216 + $0x668] sm:$0xff]
        %v485 = vld [vmem:[%s216 + $0x670] sm:$0xff]
        %v486 = vld [vmem:[%s216 + $0x678] sm:$0xff]
        %v487 = vld [vmem:[%s216 + $0x680] sm:$0xff]
        %v488 = vld [vmem:[%s216 + $0x688] sm:$0xff]
        %v489 = vld [vmem:[%s216 + $0x690] sm:$0xff]
        %v490 = vld [vmem:[%s216 + $0x698] sm:$0xff]
        %v491 = vld [vmem:[%s216 + $0x6a0] sm:$0xff]
        %v492 = vld [vmem:[%s216 + $0x6a8] sm:$0xff]
        %v493 = vld [vmem:[%s216 + $0x6b0] sm:$0xff]
        %v494 = vld [vmem:[%s216 + $0x6b8] sm:$0xff]
        %v495 = vld [vmem:[%s216 + $0x6c0] sm:$0xff]
        %v496 = vld [vmem:[%s216 + $0x6c8] sm:$0xff]
        %v497 = vld [vmem:[%s216 + $0x6d0] sm:$0xff]
        %v498 = vld [vmem:[%s216 + $0x6d8] sm:$0xff]
        %v499 = vld [vmem:[%s216 + $0x6e0] sm:$0xff]
        %v500 = vld [vmem:[%s216 + $0x6e8] sm:$0xff]
        %v501 = vld [vmem:[%s216 + $0x6f0] sm:$0xff]
        %v502 = vld [vmem:[%s216 + $0x6f8] sm:$0xff]
        %v503 = vld [vmem:[%s216 + $0x700] sm:$0xff]
        %v504 = vld [vmem:[%s216 + $0x708] sm:$0xff]
        %v505 = vld [vmem:[%s216 + $0x710] sm:$0xff]
        %v506 = vld [vmem:[%s216 + $0x718] sm:$0xff]
        %v507 = vld [vmem:[%s216 + $0x720] sm:$0xff]
        %v508 = vld [vmem:[%s216 + $0x728] sm:$0xff]
        %v509 = vld [vmem:[%s216 + $0x730] sm:$0xff]
        %v510 = vld [vmem:[%s216 + $0x738] sm:$0xff]
        %v511 = vld [vmem:[%s216 + $0x740] sm:$0xff]
        %v512 = vld [vmem:[%s216 + $0x748] sm:$0xff]
        %v513 = vld [vmem:[%s216 + $0x750] sm:$0xff]
        %v514 = vld [vmem:[%s216 + $0x758] sm:$0xff]
        %v515 = vld [vmem:[%s216 + $0x760] sm:$0xff]
        %v516 = vld [vmem:[%s216 + $0x768] sm:$0xff]
        %v517 = vld [vmem:[%s216 + $0x770] sm:$0xff]
        %v518 = vld [vmem:[%s216 + $0x778] sm:$0xff]
        %v519 = vld [vmem:[%s216 + $0x780] sm:$0xff]
        %v520 = vld [vmem:[%s216 + $0x788] sm:$0xff]
        %v521 = vld [vmem:[%s216 + $0x790] sm:$0xff]
        %v522 = vld [vmem:[%s216 + $0x798] sm:$0xff]
        %v523 = vld [vmem:[%s216 + $0x7a0] sm:$0xff]
        %v524 = vld [vmem:[%s216 + $0x7a8] sm:$0xff]
        %v525 = vld [vmem:[%s216 + $0x7b0] sm:$0xff]
        %v526 = vld [vmem:[%s216 + $0x7b8] sm:$0xff]
        %v527 = vld [vmem:[%s216 + $0x7c0] sm:$0xff]
        %v528 = vld [vmem:[%s216 + $0x7c8] sm:$0xff]
        %v529 = vld [vmem:[%s216 + $0x7d0] sm:$0xff]
        %v530 = vld [vmem:[%s216 + $0x7d8] sm:$0xff]
        %v531 = vld [vmem:[%s216 + $0x7e0] sm:$0xff]
        %v532 = vld [vmem:[%s216 + $0x7e8] sm:$0xff]
        %v533 = vld [vmem:[%s216 + $0x7f0] sm:$0xff]
        %v534 = vld [vmem:[%s216 + $0x7f8] sm:$0xff]
        %v535 = vld [vmem:[%s216 + $0x800] sm:$0xff]
        %v536 = vld [vmem:[%s216 + $0x808] sm:$0xff]
        %v537 = vld [vmem:[%s216 + $0x810] sm:$0xff]
        %v538 = vld [vmem:[%s216 + $0x818] sm:$0xff]
        %v539 = vld [vmem:[%s216 + $0x820] sm:$0xff]
        %v540 = vld [vmem:[%s216 + $0x828] sm:$0xff]
        %v541 = vld [vmem:[%s216 + $0x830] sm:$0xff]
        %v542 = vld [vmem:[%s216 + $0x838] sm:$0xff]
        %v543 = vld [vmem:[%s216 + $0x840] sm:$0xff]
        %v544 = vld [vmem:[%s216 + $0x848] sm:$0xff]
        %v545 = vld [vmem:[%s216 + $0x850] sm:$0xff]
        %v546 = vld [vmem:[%s216 + $0x858] sm:$0xff]
        %v547 = vld [vmem:[%s216 + $0x860] sm:$0xff]
        %v548 = vld [vmem:[%s216 + $0x868] sm:$0xff]
        %v549 = vld [vmem:[%s216 + $0x870] sm:$0xff]
        %v550 = vld [vmem:[%s216 + $0x878] sm:$0xff]
        %v551 = vld [vmem:[%s216 + $0x880] sm:$0xff]
        %v552 = vld [vmem:[%s216 + $0x888] sm:$0xff]
        %v553 = vld [vmem:[%s216 + $0x890] sm:$0xff]
        %v554 = vld [vmem:[%s216 + $0x898] sm:$0xff]
        %v555 = vld [vmem:[%s216 + $0x8a0] sm:$0xff]
        %v556 = vld [vmem:[%s216 + $0x8a8] sm:$0xff]
        %v557 = vld [vmem:[%s216 + $0x8b0] sm:$0xff]
        %v558 = vld [vmem:[%s216 + $0x8b8] sm:$0xff]
        %v559 = vld [vmem:[%s216 + $0x8c0] sm:$0xff]
        %v560 = vld [vmem:[%s216 + $0x8c8] sm:$0xff]
        %v561 = vld [vmem:[%s216 + $0x8d0] sm:$0xff]
        %v562 = vld [vmem:[%s216 + $0x8d8] sm:$0xff]
        %v563 = vld [vmem:[%s216 + $0x8e0] sm:$0xff]
        %v564 = vld [vmem:[%s216 + $0x8e8] sm:$0xff]
        %v565 = vld [vmem:[%s216 + $0x8f0] sm:$0xff]
        %v566 = vld [vmem:[%s216 + $0x8f8] sm:$0xff]
        %v567 = vld [vmem:[%s216 + $0x900] sm:$0xff]
        %v568 = vld [vmem:[%s216 + $0x908] sm:$0xff]
        %v569 = vld [vmem:[%s216 + $0x910] sm:$0xff]
        %v570 = vld [vmem:[%s216 + $0x918] sm:$0xff]
        %v571 = vld [vmem:[%s216 + $0x920] sm:$0xff]
        %v572 = vld [vmem:[%s216 + $0x928] sm:$0xff]
        %v573 = vld [vmem:[%s216 + $0x930] sm:$0xff]
        %v574 = vld [vmem:[%s216 + $0x938] sm:$0xff]
        %v575 = vld [vmem:[%s216 + $0x940] sm:$0xff]
        %v576 = vld [vmem:[%s216 + $0x948] sm:$0xff]
        %v577 = vld [vmem:[%s216 + $0x950] sm:$0xff]
        %v578 = vld [vmem:[%s216 + $0x958] sm:$0xff]
        %v579 = vld [vmem:[%s216 + $0x960] sm:$0xff]
        %v580 = vld [vmem:[%s216 + $0x968] sm:$0xff]
        %v581 = vld [vmem:[%s216 + $0x970] sm:$0xff]
        %v582 = vld [vmem:[%s216 + $0x978] sm:$0xff]
        %v583 = vld [vmem:[%s216 + $0x980] sm:$0xff]
        %v584 = vld [vmem:[%s216 + $0x988] sm:$0xff]
        %v585 = vld [vmem:[%s216 + $0x990] sm:$0xff]
        %v586 = vld [vmem:[%s216 + $0x998] sm:$0xff]
        %v587 = vld [vmem:[%s216 + $0x9a0] sm:$0xff]
        %v588 = vld [vmem:[%s216 + $0x9a8] sm:$0xff]
        %v589 = vld [vmem:[%s216 + $0x9b0] sm:$0xff]
        %v590 = vld [vmem:[%s216 + $0x9b8] sm:$0xff]
        %v591 = vld [vmem:[%s216 + $0x9c0] sm:$0xff]
        %v592 = vld [vmem:[%s216 + $0x9c8] sm:$0xff]
        %v593 = vld [vmem:[%s216 + $0x9d0] sm:$0xff]
        %v594 = vld [vmem:[%s216 + $0x9d8] sm:$0xff]
        %v595 = vld [vmem:[%s216 + $0x9e0] sm:$0xff]
        %v596 = vld [vmem:[%s216 + $0x9e8] sm:$0xff]
        %v597 = vld [vmem:[%s216 + $0x9f0] sm:$0xff]
        %v598 = vld [vmem:[%s216 + $0x9f8] sm:$0xff]
        %v599 = vld [vmem:[%s216 + $0xa00] sm:$0xff]
        %v600 = vld [vmem:[%s216 + $0xa08] sm:$0xff]
        %v601 = vld [vmem:[%s216 + $0xa10] sm:$0xff]
        %v602 = vld [vmem:[%s216 + $0xa18] sm:$0xff]
        %v603 = vld [vmem:[%s216 + $0xa20] sm:$0xff]
        %v604 = vld [vmem:[%s216 + $0xa28] sm:$0xff]
        %v605 = vld [vmem:[%s216 + $0xa30] sm:$0xff]
        %v606 = vld [vmem:[%s216 + $0xa38] sm:$0xff]
        %v607 = vld [vmem:[%s216 + $0xa40] sm:$0xff]
        %v608 = vld [vmem:[%s216 + $0xa48] sm:$0xff]
        %v609 = vld [vmem:[%s216 + $0xa50] sm:$0xff]
        %v610 = vld [vmem:[%s216 + $0xa58] sm:$0xff]
        %v611 = vld [vmem:[%s216 + $0xa60] sm:$0xff]
        %v612 = vld [vmem:[%s216 + $0xa68] sm:$0xff]
        %v613 = vld [vmem:[%s216 + $0xa70] sm:$0xff]
        %v614 = vld [vmem:[%s216 + $0xa78] sm:$0xff]
        %v615 = vld [vmem:[%s216 + $0xa80] sm:$0xff]
        %v616 = vld [vmem:[%s216 + $0xa88] sm:$0xff]
        %v617 = vld [vmem:[%s216 + $0xa90] sm:$0xff]
        %v618 = vld [vmem:[%s216 + $0xa98] sm:$0xff]
        %v619 = vld [vmem:[%s216 + $0xaa0] sm:$0xff]
        %v620 = vld [vmem:[%s216 + $0xaa8] sm:$0xff]
        %v621 = vld [vmem:[%s216 + $0xab0] sm:$0xff]
        %v622 = vld [vmem:[%s216 + $0xab8] sm:$0xff]
        %v623 = vld [vmem:[%s216 + $0xac0] sm:$0xff]
        %v624 = vld [vmem:[%s216 + $0xac8] sm:$0xff]
        %v625 = vld [vmem:[%s216 + $0xad0] sm:$0xff]
        %v626 = vld [vmem:[%s216 + $0xad8] sm:$0xff]
        %v627 = vld [vmem:[%s216 + $0xae0] sm:$0xff]
        %v628 = vld [vmem:[%s216 + $0xae8] sm:$0xff]
        %v629 = vld [vmem:[%s216 + $0xaf0] sm:$0xff]
        %v630 = vld [vmem:[%s216 + $0xaf8] sm:$0xff]
        %v631 = vld [vmem:[%s216 + $0xb00] sm:$0xff]
        %v632 = vld [vmem:[%s216 + $0xb08] sm:$0xff]
        %v633 = vld [vmem:[%s216 + $0xb10] sm:$0xff]
        %v634 = vld [vmem:[%s216 + $0xb18] sm:$0xff]
        %v635 = vld [vmem:[%s216 + $0xb20] sm:$0xff]
        %v636 = vld [vmem:[%s216 + $0xb28] sm:$0xff]
        %v637 = vld [vmem:[%s216 + $0xb30] sm:$0xff]
        %v638 = vld [vmem:[%s216 + $0xb38] sm:$0xff]
        %v639 = vld [vmem:[%s216 + $0xb40] sm:$0xff]
        %v640 = vld [vmem:[%s216 + $0xb48] sm:$0xff]
        %v641 = vld [vmem:[%s216 + $0xb50] sm:$0xff]
        %v642 = vld [vmem:[%s216 + $0xb58] sm:$0xff]
        %v643 = vld [vmem:[%s216 + $0xb60] sm:$0xff]
        %v644 = vld [vmem:[%s216 + $0xb68] sm:$0xff]
        %v645 = vld [vmem:[%s216 + $0xb70] sm:$0xff]
        %v646 = vld [vmem:[%s216 + $0xb78] sm:$0xff]
        %v647 = vld [vmem:[%s216 + $0xb80] sm:$0xff]
        %v648 = vld [vmem:[%s216 + $0xb88] sm:$0xff]
        %v649 = vld [vmem:[%s216 + $0xb90] sm:$0xff]
        %v650 = vld [vmem:[%s216 + $0xb98] sm:$0xff]
        %v651 = vld [vmem:[%s216 + $0xba0] sm:$0xff]
        %v652 = vld [vmem:[%s216 + $0xba8] sm:$0xff]
        %v653 = vld [vmem:[%s216 + $0xbb0] sm:$0xff]
        %v654 = vld [vmem:[%s216 + $0xbb8] sm:$0xff]
        %v655 = vld [vmem:[%s216 + $0xbc0] sm:$0xff]
        %v656 = vld [vmem:[%s216 + $0xbc8] sm:$0xff]
        %v657 = vld [vmem:[%s216 + $0xbd0] sm:$0xff]
        %v658 = vld [vmem:[%s216 + $0xbd8] sm:$0xff]
        %v659 = vld [vmem:[%s216 + $0xbe0] sm:$0xff]
        %v660 = vld [vmem:[%s216 + $0xbe8] sm:$0xff]
        %v661 = vld [vmem:[%s216 + $0xbf0] sm:$0xff]
        %v662 = vld [vmem:[%s216 + $0xbf8] sm:$0xff]
        %v663 = vld [vmem:[%s216 + $0xc00] sm:$0xff]
        %v664 = vld [vmem:[%s216 + $0xc08] sm:$0xff]
        %v665 = vld [vmem:[%s216 + $0xc10] sm:$0xff]
        %v666 = vld [vmem:[%s216 + $0xc18] sm:$0xff]
        %v667 = vld [vmem:[%s216 + $0xc20] sm:$0xff]
        %v668 = vld [vmem:[%s216 + $0xc28] sm:$0xff]
        %v669 = vld [vmem:[%s216 + $0xc30] sm:$0xff]
        %v670 = vld [vmem:[%s216 + $0xc38] sm:$0xff]
        %v671 = vld [vmem:[%s216 + $0xc40] sm:$0xff]
        %v672 = vld [vmem:[%s216 + $0xc48] sm:$0xff]
        %v673 = vld [vmem:[%s216 + $0xc50] sm:$0xff]
        %v674 = vld [vmem:[%s216 + $0xc58] sm:$0xff]
        %v675 = vld [vmem:[%s216 + $0xc60] sm:$0xff]
        %v676 = vld [vmem:[%s216 + $0xc68] sm:$0xff]
        %v677 = vld [vmem:[%s216 + $0xc70] sm:$0xff]
        %v678 = vld [vmem:[%s216 + $0xc78] sm:$0xff]
        %v679 = vld [vmem:[%s216 + $0xc80] sm:$0xff]
        %v680 = vld [vmem:[%s216 + $0xc88] sm:$0xff]
        %v681 = vld [vmem:[%s216 + $0xc90] sm:$0xff]
        %v682 = vld [vmem:[%s216 + $0xc98] sm:$0xff]
        %v683 = vld [vmem:[%s216 + $0xca0] sm:$0xff]
        %v684 = vld [vmem:[%s216 + $0xca8] sm:$0xff]
        %v685 = vld [vmem:[%s216 + $0xcb0] sm:$0xff]
        %v686 = vld [vmem:[%s216 + $0xcb8] sm:$0xff]
        %v687 = vld [vmem:[%s216 + $0xcc0] sm:$0xff]
        %v688 = vld [vmem:[%s216 + $0xcc8] sm:$0xff]
        %v689 = vld [vmem:[%s216 + $0xcd0] sm:$0xff]
        %v690 = vld [vmem:[%s216 + $0xcd8] sm:$0xff]
        %v691 = vld [vmem:[%s216 + $0xce0] sm:$0xff]
        %v692 = vld [vmem:[%s216 + $0xce8] sm:$0xff]
        %v693 = vld [vmem:[%s216 + $0xcf0] sm:$0xff]
        %v694 = vld [vmem:[%s216 + $0xcf8] sm:$0xff]
        %v695 = vld [vmem:[%s216 + $0xd00] sm:$0xff]
        %v696 = vld [vmem:[%s216 + $0xd08] sm:$0xff]
        %v697 = vld [vmem:[%s216 + $0xd10] sm:$0xff]
        %v698 = vld [vmem:[%s216 + $0xd18] sm:$0xff]
        %v699 = vld [vmem:[%s216 + $0xd20] sm:$0xff]
        %v700 = vld [vmem:[%s216 + $0xd28] sm:$0xff]
        %v701 = vld [vmem:[%s216 + $0xd30] sm:$0xff]
        %v702 = vld [vmem:[%s216 + $0xd38] sm:$0xff]
        %v703 = vld [vmem:[%s216 + $0xd40] sm:$0xff]
        %v704 = vld [vmem:[%s216 + $0xd48] sm:$0xff]
        %v705 = vld [vmem:[%s216 + $0xd50] sm:$0xff]
        %v706 = vld [vmem:[%s216 + $0xd58] sm:$0xff]
        %v707 = vld [vmem:[%s216 + $0xd60] sm:$0xff]
        %v708 = vld [vmem:[%s216 + $0xd68] sm:$0xff]
        %v709 = vld [vmem:[%s216 + $0xd70] sm:$0xff]
        %v710 = vld [vmem:[%s216 + $0xd78] sm:$0xff]
        %v711 = vld [vmem:[%s216 + $0xd80] sm:$0xff]
        %v712 = vld [vmem:[%s216 + $0xd88] sm:$0xff]
        %v713 = vld [vmem:[%s216 + $0xd90] sm:$0xff]
        %v714 = vld [vmem:[%s216 + $0xd98] sm:$0xff]
        %v715 = vld [vmem:[%s216 + $0xda0] sm:$0xff]
        %v716 = vld [vmem:[%s216 + $0xda8] sm:$0xff]
        %v717 = vld [vmem:[%s216 + $0xdb0] sm:$0xff]
        %v718 = vld [vmem:[%s216 + $0xdb8] sm:$0xff]
        %v719 = vld [vmem:[%s216 + $0xdc0] sm:$0xff]
        %v720 = vld [vmem:[%s216 + $0xdc8] sm:$0xff]
        %v721 = vld [vmem:[%s216 + $0xdd0] sm:$0xff]
        %v722 = vld [vmem:[%s216 + $0xdd8] sm:$0xff]
        %v723 = vld [vmem:[%s216 + $0xde0] sm:$0xff]
        %v724 = vld [vmem:[%s216 + $0xde8] sm:$0xff]
        %v725 = vld [vmem:[%s216 + $0xdf0] sm:$0xff]
        %v726 = vld [vmem:[%s216 + $0xdf8] sm:$0xff]
        %v727 = vld [vmem:[%s216 + $0xe00] sm:$0xff]
        %v728 = vld [vmem:[%s216 + $0xe08] sm:$0xff]
        %v729 = vld [vmem:[%s216 + $0xe10] sm:$0xff]
        %v730 = vld [vmem:[%s216 + $0xe18] sm:$0xff]
        %v731 = vld [vmem:[%s216 + $0xe20] sm:$0xff]
        %v732 = vld [vmem:[%s216 + $0xe28] sm:$0xff]
        %v733 = vld [vmem:[%s216 + $0xe30] sm:$0xff]
        %v734 = vld [vmem:[%s216 + $0xe38] sm:$0xff]
        %v735 = vld [vmem:[%s216 + $0xe40] sm:$0xff]
        %v736 = vld [vmem:[%s216 + $0xe48] sm:$0xff]
        %v737 = vld [vmem:[%s216 + $0xe50] sm:$0xff]
        %v738 = vld [vmem:[%s216 + $0xe58] sm:$0xff]
        %v739 = vld [vmem:[%s216 + $0xe60] sm:$0xff]
        %v740 = vld [vmem:[%s216 + $0xe68] sm:$0xff]
        %v741 = vld [vmem:[%s216 + $0xe70] sm:$0xff]
        %v742 = vld [vmem:[%s216 + $0xe78] sm:$0xff]
        %v743 = vld [vmem:[%s216 + $0xe80] sm:$0xff]
        %v744 = vld [vmem:[%s216 + $0xe88] sm:$0xff]
        %v745 = vld [vmem:[%s216 + $0xe90] sm:$0xff]
        %v746 = vld [vmem:[%s216 + $0xe98] sm:$0xff]
        %v747 = vld [vmem:[%s216 + $0xea0] sm:$0xff]
        %v748 = vld [vmem:[%s216 + $0xea8] sm:$0xff]
        %v749 = vld [vmem:[%s216 + $0xeb0] sm:$0xff]
        %v750 = vld [vmem:[%s216 + $0xeb8] sm:$0xff]
        %v751 = vld [vmem:[%s216 + $0xec0] sm:$0xff]
        %v752 = vld [vmem:[%s216 + $0xec8] sm:$0xff]
        %v753 = vld [vmem:[%s216 + $0xed0] sm:$0xff]
        %v754 = vld [vmem:[%s216 + $0xed8] sm:$0xff]
        %v755 = vld [vmem:[%s216 + $0xee0] sm:$0xff]
        %v756 = vld [vmem:[%s216 + $0xee8] sm:$0xff]
        %v757 = vld [vmem:[%s216 + $0xef0] sm:$0xff]
        %v758 = vld [vmem:[%s216 + $0xef8] sm:$0xff]
        %v759 = vld [vmem:[%s216 + $0xf00] sm:$0xff]
        %v760 = vld [vmem:[%s216 + $0xf08] sm:$0xff]
        %v761 = vld [vmem:[%s216 + $0xf10] sm:$0xff]
        %v762 = vld [vmem:[%s216 + $0xf18] sm:$0xff]
        %v763 = vld [vmem:[%s216 + $0xf20] sm:$0xff]
        %v764 = vld [vmem:[%s216 + $0xf28] sm:$0xff]
        %v765 = vld [vmem:[%s216 + $0xf30] sm:$0xff]
        %v766 = vld [vmem:[%s216 + $0xf38] sm:$0xff]
        %v767 = vld [vmem:[%s216 + $0xf40] sm:$0xff]
        %v768 = vld [vmem:[%s216 + $0xf48] sm:$0xff]
        %v769 = vld [vmem:[%s216 + $0xf50] sm:$0xff]
        %v770 = vld [vmem:[%s216 + $0xf58] sm:$0xff]
        %v771 = vld [vmem:[%s216 + $0xf60] sm:$0xff]
        %v772 = vld [vmem:[%s216 + $0xf68] sm:$0xff]
        %v773 = vld [vmem:[%s216 + $0xf70] sm:$0xff]
        %v774 = vld [vmem:[%s216 + $0xf78] sm:$0xff]
        %v775 = vld [vmem:[%s216 + $0xf80] sm:$0xff]
        %v776 = vld [vmem:[%s216 + $0xf88] sm:$0xff]
        %v777 = vld [vmem:[%s216 + $0xf90] sm:$0xff]
        %v778 = vld [vmem:[%s216 + $0xf98] sm:$0xff]
        %v779 = vld [vmem:[%s216 + $0xfa0] sm:$0xff]
        %v780 = vld [vmem:[%s216 + $0xfa8] sm:$0xff]
        %v781 = vld [vmem:[%s216 + $0xfb0] sm:$0xff]
        %v782 = vld [vmem:[%s216 + $0xfb8] sm:$0xff]
        %v783 = vld [vmem:[%s216 + $0xfc0] sm:$0xff]
        %v784 = vld [vmem:[%s216 + $0xfc8] sm:$0xff]
        %v785 = vld [vmem:[%s216 + $0xfd0] sm:$0xff]
        %v786 = vld [vmem:[%s216 + $0xfd8] sm:$0xff]
        %v787 = vld [vmem:[%s216 + $0xfe0] sm:$0xff]
        %v788 = vld [vmem:[%s216 + $0xfe8] sm:$0xff]
        %v789 = vld [vmem:[%s216 + $0xff0] sm:$0xff]
        %v790 = vld [vmem:[%s216 + $0xff8] sm:$0xff]
        %v791 = vld [vmem:[%s216 + $0x1000] sm:$0xff]
        %v792 = vld [vmem:[%s216 + $0x1008] sm:$0xff]
        %v793 = vld [vmem:[%s216 + $0x1010] sm:$0xff]
        %v794 = vld [vmem:[%s216 + $0x1018] sm:$0xff]
        %v795 = vld [vmem:[%s216 + $0x1020] sm:$0xff]
        %v796 = vld [vmem:[%s216 + $0x1028] sm:$0xff]
        %v797 = vld [vmem:[%s216 + $0x1030] sm:$0xff]
        %v798 = vld [vmem:[%s216 + $0x1038] sm:$0xff]
        %v799 = vld [vmem:[%s216 + $0x1040] sm:$0xff]
        %v800 = vld [vmem:[%s216 + $0x1048] sm:$0xff]
        %v801 = vld [vmem:[%s216 + $0x1050] sm:$0xff]
        %v802 = vld [vmem:[%s216 + $0x1058] sm:$0xff]
        %v803 = vld [vmem:[%s216 + $0x1060] sm:$0xff]
        %v804 = vld [vmem:[%s216 + $0x1068] sm:$0xff]
        %v805 = vld [vmem:[%s216 + $0x1070] sm:$0xff]
        %v806 = vld [vmem:[%s216 + $0x1078] sm:$0xff]
        %v807 = vld [vmem:[%s216 + $0x1080] sm:$0xff]
        %v808 = vld [vmem:[%s216 + $0x1088] sm:$0xff]
        %v809 = vld [vmem:[%s216 + $0x1090] sm:$0xff]
        %v810 = vld [vmem:[%s216 + $0x1098] sm:$0xff]
        %v811 = vld [vmem:[%s216 + $0x10a0] sm:$0xff]
        %v812 = vld [vmem:[%s216 + $0x10a8] sm:$0xff]
        %v813 = vld [vmem:[%s216 + $0x10b0] sm:$0xff]
        %v814 = vld [vmem:[%s216 + $0x10b8] sm:$0xff]
        %v815 = vld [vmem:[%s216 + $0x10c0] sm:$0xff]
        %v816 = vld [vmem:[%s216 + $0x10c8] sm:$0xff]
        %v817 = vld [vmem:[%s216 + $0x10d0] sm:$0xff]
        %v818 = vld [vmem:[%s216 + $0x10d8] sm:$0xff]
        %v819 = vld [vmem:[%s216 + $0x10e0] sm:$0xff]
        %v820 = vld [vmem:[%s216 + $0x10e8] sm:$0xff]
        %v821 = vld [vmem:[%s216 + $0x10f0] sm:$0xff]
        %v822 = vld [vmem:[%s216 + $0x10f8] sm:$0xff]
        %v823 = vld [vmem:[%s216 + $0x1100] sm:$0xff]
        %v824 = vld [vmem:[%s216 + $0x1108] sm:$0xff]
        %v825 = vld [vmem:[%s216 + $0x1110] sm:$0xff]
        %v826 = vld [vmem:[%s216 + $0x1118] sm:$0xff]
        %v827 = vld [vmem:[%s216 + $0x1120] sm:$0xff]
        %v828 = vld [vmem:[%s216 + $0x1128] sm:$0xff]
        %v829 = vld [vmem:[%s216 + $0x1130] sm:$0xff]
        %v830 = vld [vmem:[%s216 + $0x1138] sm:$0xff]
        %v831 = vld [vmem:[%s216 + $0x1140] sm:$0xff]
        %v832 = vld [vmem:[%s216 + $0x1148] sm:$0xff]
        %v833 = vld [vmem:[%s216 + $0x1150] sm:$0xff]
        %v834 = vld [vmem:[%s216 + $0x1158] sm:$0xff]
        %v835 = vld [vmem:[%s216 + $0x1160] sm:$0xff]
        %v836 = vld [vmem:[%s216 + $0x1168] sm:$0xff]
        %v837 = vld [vmem:[%s216 + $0x1170] sm:$0xff]
        %v838 = vld [vmem:[%s216 + $0x1178] sm:$0xff]
        %v839 = vld [vmem:[%s216 + $0x1180] sm:$0xff]
        %v840 = vld [vmem:[%s216 + $0x1188] sm:$0xff]
        %v841 = vld [vmem:[%s216 + $0x1190] sm:$0xff]
        %v842 = vld [vmem:[%s216 + $0x1198] sm:$0xff]
        %v843 = vld [vmem:[%s216 + $0x11a0] sm:$0xff]
        %v844 = vld [vmem:[%s216 + $0x11a8] sm:$0xff]
        %v845 = vld [vmem:[%s216 + $0x11b0] sm:$0xff]
        %v846 = vld [vmem:[%s216 + $0x11b8] sm:$0xff]
        %v847 = vld [vmem:[%s216 + $0x11c0] sm:$0xff]
        %v848 = vld [vmem:[%s216 + $0x11c8] sm:$0xff]
        %v849 = vld [vmem:[%s216 + $0x11d0] sm:$0xff]
        %v850 = vld [vmem:[%s216 + $0x11d8] sm:$0xff]
        %v851 = vld [vmem:[%s216 + $0x11e0] sm:$0xff]
        %v852 = vld [vmem:[%s216 + $0x11e8] sm:$0xff]
        %v853 = vld [vmem:[%s216 + $0x11f0] sm:$0xff]
        %v854 = vld [vmem:[%s216 + $0x11f8] sm:$0xff]
        %v855 = vld [vmem:[%s216 + $0x1200] sm:$0xff]
        %v856 = vld [vmem:[%s216 + $0x1208] sm:$0xff]
        %v857 = vld [vmem:[%s216 + $0x1210] sm:$0xff]
        %v858 = vld [vmem:[%s216 + $0x1218] sm:$0xff]
        %v859 = vld [vmem:[%s216 + $0x1220] sm:$0xff]
        %v860 = vld [vmem:[%s216 + $0x1228] sm:$0xff]
        %v861 = vld [vmem:[%s216 + $0x1230] sm:$0xff]
        %v862 = vld [vmem:[%s216 + $0x1238] sm:$0xff]
        %v863 = vld [vmem:[%s216 + $0x1240] sm:$0xff]
        %v864 = vld [vmem:[%s216 + $0x1248] sm:$0xff]
        %v865 = vld [vmem:[%s216 + $0x1250] sm:$0xff]
        %v866 = vld [vmem:[%s216 + $0x1258] sm:$0xff]
        %v867 = vld [vmem:[%s216 + $0x1260] sm:$0xff]
        %v868 = vld [vmem:[%s216 + $0x1268] sm:$0xff]
        %v869 = vld [vmem:[%s216 + $0x1270] sm:$0xff]
        %v870 = vld [vmem:[%s216 + $0x1278] sm:$0xff]
        %v871 = vld [vmem:[%s216 + $0x1280] sm:$0xff]
        %v872 = vld [vmem:[%s216 + $0x1288] sm:$0xff]
        %v873 = vld [vmem:[%s216 + $0x1290] sm:$0xff]
        %v874 = vld [vmem:[%s216 + $0x1298] sm:$0xff]
        %v875 = vld [vmem:[%s216 + $0x12a0] sm:$0xff]
        %v876 = vld [vmem:[%s216 + $0x12a8] sm:$0xff]
        %v877 = vld [vmem:[%s216 + $0x12b0] sm:$0xff]
        %v878 = vld [vmem:[%s216 + $0x12b8] sm:$0xff]
        %v879 = vld [vmem:[%s216 + $0x12c0] sm:$0xff]
        %v880 = vld [vmem:[%s216 + $0x12c8] sm:$0xff]
        %v881 = vld [vmem:[%s216 + $0x12d0] sm:$0xff]
        %v882 = vld [vmem:[%s216 + $0x12d8] sm:$0xff]
        %v883 = vld [vmem:[%s216 + $0x12e0] sm:$0xff]
        %v884 = vld [vmem:[%s216 + $0x12e8] sm:$0xff]
        %v885 = vld [vmem:[%s216 + $0x12f0] sm:$0xff]
        %v886 = vld [vmem:[%s216 + $0x12f8] sm:$0xff]
        %v887 = vld [vmem:[%s216 + $0x1300] sm:$0xff]
        %v888 = vld [vmem:[%s216 + $0x1308] sm:$0xff]
        %v889 = vld [vmem:[%s216 + $0x1310] sm:$0xff]
        %v890 = vld [vmem:[%s216 + $0x1318] sm:$0xff]
        %v891 = vld [vmem:[%s216 + $0x1320] sm:$0xff]
        %v892 = vld [vmem:[%s216 + $0x1328] sm:$0xff]
        %v893 = vld [vmem:[%s216 + $0x1330] sm:$0xff]
        %v894 = vld [vmem:[%s216 + $0x1338] sm:$0xff]
        %v895 = vld [vmem:[%s216 + $0x1340] sm:$0xff]
        %v896 = vld [vmem:[%s216 + $0x1348] sm:$0xff]
        %v897 = vld [vmem:[%s216 + $0x1350] sm:$0xff]
        %v898 = vld [vmem:[%s216 + $0x1358] sm:$0xff]
        %v899 = vld [vmem:[%s216 + $0x1360] sm:$0xff]
        %v900 = vld [vmem:[%s216 + $0x1368] sm:$0xff]
        %v901 = vld [vmem:[%s216 + $0x1370] sm:$0xff]
        %v902 = vld [vmem:[%s216 + $0x1378] sm:$0xff]
        %v903 = vld [vmem:[%s216 + $0x1380] sm:$0xff]
        %v904 = vld [vmem:[%s216 + $0x1388] sm:$0xff]
        %v905 = vld [vmem:[%s216 + $0x1390] sm:$0xff]
        %v906 = vld [vmem:[%s216 + $0x1398] sm:$0xff]
        %v907 = vld [vmem:[%s216 + $0x13a0] sm:$0xff]
        %v908 = vld [vmem:[%s216 + $0x13a8] sm:$0xff]
        %v909 = vld [vmem:[%s216 + $0x13b0] sm:$0xff]
        %v910 = vld [vmem:[%s216 + $0x13b8] sm:$0xff]
        %v911 = vld [vmem:[%s216 + $0x13c0] sm:$0xff]
        %v912 = vld [vmem:[%s216 + $0x13c8] sm:$0xff]
        %v913 = vld [vmem:[%s216 + $0x13d0] sm:$0xff]
        %v914 = vld [vmem:[%s216 + $0x13d8] sm:$0xff]
        %v915 = vld [vmem:[%s216 + $0x13e0] sm:$0xff]
        %v916 = vld [vmem:[%s216 + $0x13e8] sm:$0xff]
        %v917 = vld [vmem:[%s216 + $0x13f0] sm:$0xff]
        %v918 = vld [vmem:[%s216 + $0x13f8] sm:$0xff]
        %v919 = vld [vmem:[%s216 + $0x1400] sm:$0xff]
        %v920 = vld [vmem:[%s216 + $0x1408] sm:$0xff]
        %v921 = vld [vmem:[%s216 + $0x1410] sm:$0xff]
        %v922 = vld [vmem:[%s216 + $0x1418] sm:$0xff]
        %v923 = vld [vmem:[%s216 + $0x1420] sm:$0xff]
        %v924 = vld [vmem:[%s216 + $0x1428] sm:$0xff]
        %v925 = vld [vmem:[%s216 + $0x1430] sm:$0xff]
        %v926 = vld [vmem:[%s216 + $0x1438] sm:$0xff]
        %v927 = vld [vmem:[%s216 + $0x1440] sm:$0xff]
        %v928 = vld [vmem:[%s216 + $0x1448] sm:$0xff]
        %v929 = vld [vmem:[%s216 + $0x1450] sm:$0xff]
        %v930 = vld [vmem:[%s216 + $0x1458] sm:$0xff]
        %v931 = vld [vmem:[%s216 + $0x1460] sm:$0xff]
        %v932 = vld [vmem:[%s216 + $0x1468] sm:$0xff]
        %v933 = vld [vmem:[%s216 + $0x1470] sm:$0xff]
        %v934 = vld [vmem:[%s216 + $0x1478] sm:$0xff]
        %v935 = vld [vmem:[%s216 + $0x1480] sm:$0xff]
        %v936 = vld [vmem:[%s216 + $0x1488] sm:$0xff]
        %v937 = vld [vmem:[%s216 + $0x1490] sm:$0xff]
        %v938 = vld [vmem:[%s216 + $0x1498] sm:$0xff]
        %v939 = vld [vmem:[%s216 + $0x14a0] sm:$0xff]
        %v940 = vld [vmem:[%s216 + $0x14a8] sm:$0xff]
        %v941 = vld [vmem:[%s216 + $0x14b0] sm:$0xff]
        %v942 = vld [vmem:[%s216 + $0x14b8] sm:$0xff]
        %v943 = vld [vmem:[%s216 + $0x14c0] sm:$0xff]
        %v944 = vld [vmem:[%s216 + $0x14c8] sm:$0xff]
        %v945 = vld [vmem:[%s216 + $0x14d0] sm:$0xff]
        %v946 = vld [vmem:[%s216 + $0x14d8] sm:$0xff]
        %v947 = vld [vmem:[%s216 + $0x14e0] sm:$0xff]
        %v948 = vld [vmem:[%s216 + $0x14e8] sm:$0xff]
        %v949 = vld [vmem:[%s216 + $0x14f0] sm:$0xff]
        %v950 = vld [vmem:[%s216 + $0x14f8] sm:$0xff]
        %v951 = vld [vmem:[%s216 + $0x1500] sm:$0xff]
        %v952 = vld [vmem:[%s216 + $0x1508] sm:$0xff]
        %v953 = vld [vmem:[%s216 + $0x1510] sm:$0xff]
        %v954 = vld [vmem:[%s216 + $0x1518] sm:$0xff]
        %v955 = vld [vmem:[%s216 + $0x1520] sm:$0xff]
        %v956 = vld [vmem:[%s216 + $0x1528] sm:$0xff]
        %v957 = vld [vmem:[%s216 + $0x1530] sm:$0xff]
        %v958 = vld [vmem:[%s216 + $0x1538] sm:$0xff]
        %v959 = vld [vmem:[%s216 + $0x1540] sm:$0xff]
        %v960 = vld [vmem:[%s216 + $0x1548] sm:$0xff]
        %v961 = vld [vmem:[%s216 + $0x1550] sm:$0xff]
        %v962 = vld [vmem:[%s216 + $0x1558] sm:$0xff]
        %v963 = vld [vmem:[%s216 + $0x1560] sm:$0xff]
        %v964 = vld [vmem:[%s216 + $0x1568] sm:$0xff]
        %v965 = vld [vmem:[%s216 + $0x1570] sm:$0xff]
        %v966 = vld [vmem:[%s216 + $0x1578] sm:$0xff]
        %v967 = vld [vmem:[%s216 + $0x1580] sm:$0xff]
        %v968 = vld [vmem:[%s216 + $0x1588] sm:$0xff]
        %v969 = vld [vmem:[%s216 + $0x1590] sm:$0xff]
        %v970 = vld [vmem:[%s216 + $0x1598] sm:$0xff]
        %v971 = vld [vmem:[%s216 + $0x15a0] sm:$0xff]
        %v972 = vld [vmem:[%s216 + $0x15a8] sm:$0xff]
        %v973 = vld [vmem:[%s216 + $0x15b0] sm:$0xff]
        %v974 = vld [vmem:[%s216 + $0x15b8] sm:$0xff]
        %v975 = vld [vmem:[%s216 + $0x15c0] sm:$0xff]
        %v976 = vld [vmem:[%s216 + $0x15c8] sm:$0xff]
        %v977 = vld [vmem:[%s216 + $0x15d0] sm:$0xff]
        %v978 = vld [vmem:[%s216 + $0x15d8] sm:$0xff]
        %v979 = vld [vmem:[%s216 + $0x15e0] sm:$0xff]
        %v980 = vld [vmem:[%s216 + $0x15e8] sm:$0xff]
        %v981 = vld [vmem:[%s216 + $0x15f0] sm:$0xff]
        %v982 = vld [vmem:[%s216 + $0x15f8] sm:$0xff]
        %v983 = vld [vmem:[%s216 + $0x1600] sm:$0xff]
        %v984 = vld [vmem:[%s216 + $0x1608] sm:$0xff]
        %v985 = vld [vmem:[%s216 + $0x1610] sm:$0xff]
        %v986 = vld [vmem:[%s216 + $0x1618] sm:$0xff]
        %v987 = vld [vmem:[%s216 + $0x1620] sm:$0xff]
        %v988 = vld [vmem:[%s216 + $0x1628] sm:$0xff]
        %v989 = vld [vmem:[%s216 + $0x1630] sm:$0xff]
        %v990 = vld [vmem:[%s216 + $0x1638] sm:$0xff]
        %v991 = vld [vmem:[%s216 + $0x1640] sm:$0xff]
        %v992 = vld [vmem:[%s216 + $0x1648] sm:$0xff]
        %v993 = vld [vmem:[%s216 + $0x1650] sm:$0xff]
        %v994 = vld [vmem:[%s216 + $0x1658] sm:$0xff]
        %v995 = vld [vmem:[%s216 + $0x1660] sm:$0xff]
        %v996 = vld [vmem:[%s216 + $0x1668] sm:$0xff]
        %v997 = vld [vmem:[%s216 + $0x1670] sm:$0xff]
        %v998 = vld [vmem:[%s216 + $0x1678] sm:$0xff]
        %v999 = vld [vmem:[%s216 + $0x1680] sm:$0xff]
        %v1000 = vld [vmem:[%s216 + $0x1688] sm:$0xff]
        %v1001 = vld [vmem:[%s216 + $0x1690] sm:$0xff]
        %v1002 = vld [vmem:[%s216 + $0x1698] sm:$0xff]
        %v1003 = vld [vmem:[%s216 + $0x16a0] sm:$0xff]
        %v1004 = vld [vmem:[%s216 + $0x16a8] sm:$0xff]
        %v1005 = vld [vmem:[%s216 + $0x16b0] sm:$0xff]
        %v1006 = vld [vmem:[%s216 + $0x16b8] sm:$0xff]
        %v1007 = vld [vmem:[%s216 + $0x16c0] sm:$0xff]
        %v1008 = vld [vmem:[%s216 + $0x16c8] sm:$0xff]
        %v1009 = vld [vmem:[%s216 + $0x16d0] sm:$0xff]
        %v1010 = vld [vmem:[%s216 + $0x16d8] sm:$0xff]
        %v1011 = vld [vmem:[%s216 + $0x16e0] sm:$0xff]
        %v1012 = vld [vmem:[%s216 + $0x16e8] sm:$0xff]
        %v1013 = vld [vmem:[%s216 + $0x16f0] sm:$0xff]
        %v1014 = vld [vmem:[%s216 + $0x16f8] sm:$0xff]
        %v1015 = vld [vmem:[%s216 + $0x1700] sm:$0xff]
        %v1016 = vld [vmem:[%s216 + $0x1708] sm:$0xff]
        %v1017 = vld [vmem:[%s216 + $0x1710] sm:$0xff]
        %v1018 = vld [vmem:[%s216 + $0x1718] sm:$0xff]
        %v1019 = vld [vmem:[%s216 + $0x1720] sm:$0xff]
        %v1020 = vld [vmem:[%s216 + $0x1728] sm:$0xff]
        %v1021 = vld [vmem:[%s216 + $0x1730] sm:$0xff]
        %v1022 = vld [vmem:[%s216 + $0x1738] sm:$0xff]
        %v1023 = vld [vmem:[%s216 + $0x1740] sm:$0xff]
        %v1024 = vld [vmem:[%s216 + $0x1748] sm:$0xff]
        %v1025 = vld [vmem:[%s216 + $0x1750] sm:$0xff]
        %v1026 = vld [vmem:[%s216 + $0x1758] sm:$0xff]
        %v1027 = vld [vmem:[%s216 + $0x1760] sm:$0xff]
        %v1028 = vld [vmem:[%s216 + $0x1768] sm:$0xff]
        %v1029 = vld [vmem:[%s216 + $0x1770] sm:$0xff]
        %v1030 = vld [vmem:[%s216 + $0x1778] sm:$0xff]
        %v1031 = vld [vmem:[%s216 + $0x1780] sm:$0xff]
        %v1032 = vld [vmem:[%s216 + $0x1788] sm:$0xff]
        %v1033 = vld [vmem:[%s216 + $0x1790] sm:$0xff]
        %v1034 = vld [vmem:[%s216 + $0x1798] sm:$0xff]
        %v1035 = vld [vmem:[%s216 + $0x17a0] sm:$0xff]
        %v1036 = vld [vmem:[%s216 + $0x17a8] sm:$0xff]
        %v1037 = vld [vmem:[%s216 + $0x17b0] sm:$0xff]
        %v1038 = vld [vmem:[%s216 + $0x17b8] sm:$0xff]
        %v1039 = vld [vmem:[%s216 + $0x17c0] sm:$0xff]
        %v1040 = vld [vmem:[%s216 + $0x17c8] sm:$0xff]
        %v1041 = vld [vmem:[%s216 + $0x17d0] sm:$0xff]
        %v1042 = vld [vmem:[%s216 + $0x17d8] sm:$0xff]
        %v1043 = vld [vmem:[%s216 + $0x17e0] sm:$0xff]
        %v1044 = vld [vmem:[%s216 + $0x17e8] sm:$0xff]
        %v1045 = vld [vmem:[%s216 + $0x17f0] sm:$0xff]
        %v1046 = vld [vmem:[%s216 + $0x17f8] sm:$0xff]
        %v1047 = vld [vmem:[%s216 + $0x1800] sm:$0xff]
        %v1048 = vld [vmem:[%s216 + $0x1808] sm:$0xff]
        %v1049 = vld [vmem:[%s216 + $0x1810] sm:$0xff]
        %v1050 = vld [vmem:[%s216 + $0x1818] sm:$0xff]
        %v1051 = vld [vmem:[%s216 + $0x1820] sm:$0xff]
        %v1052 = vld [vmem:[%s216 + $0x1828] sm:$0xff]
        %v1053 = vld [vmem:[%s216 + $0x1830] sm:$0xff]
        %v1054 = vld [vmem:[%s216 + $0x1838] sm:$0xff]
        %v1055 = vld [vmem:[%s216 + $0x1840] sm:$0xff]
        %v1056 = vld [vmem:[%s216 + $0x1848] sm:$0xff]
        %v1057 = vld [vmem:[%s216 + $0x1850] sm:$0xff]
        %v1058 = vld [vmem:[%s216 + $0x1858] sm:$0xff]
        %v1059 = vld [vmem:[%s216 + $0x1860] sm:$0xff]
        %v1060 = vld [vmem:[%s216 + $0x1868] sm:$0xff]
        %v1061 = vld [vmem:[%s216 + $0x1870] sm:$0xff]
        %v1062 = vld [vmem:[%s216 + $0x1878] sm:$0xff]
        %v1063 = vld [vmem:[%s216 + $0x1880] sm:$0xff]
        %v1064 = vld [vmem:[%s216 + $0x1888] sm:$0xff]
        %v1065 = vld [vmem:[%s216 + $0x1890] sm:$0xff]
        %v1066 = vld [vmem:[%s216 + $0x1898] sm:$0xff]
        %v1067 = vld [vmem:[%s216 + $0x18a0] sm:$0xff]
        %v1068 = vld [vmem:[%s216 + $0x18a8] sm:$0xff]
        %v1069 = vld [vmem:[%s216 + $0x18b0] sm:$0xff]
        %v1070 = vld [vmem:[%s216 + $0x18b8] sm:$0xff]
        %v1071 = vld [vmem:[%s216 + $0x18c0] sm:$0xff]
        %v1072 = vld [vmem:[%s216 + $0x18c8] sm:$0xff]
        %v1073 = vld [vmem:[%s216 + $0x18d0] sm:$0xff]
        %v1074 = vld [vmem:[%s216 + $0x18d8] sm:$0xff]
        %v1075 = vld [vmem:[%s216 + $0x18e0] sm:$0xff]
        %v1076 = vld [vmem:[%s216 + $0x18e8] sm:$0xff]
        %v1077 = vld [vmem:[%s216 + $0x18f0] sm:$0xff]
        %v1078 = vld [vmem:[%s216 + $0x18f8] sm:$0xff]
        %v1079 = vld [vmem:[%s216 + $0x1900] sm:$0xff]
        %v1080 = vld [vmem:[%s216 + $0x1908] sm:$0xff]
        %v1081 = vld [vmem:[%s216 + $0x1910] sm:$0xff]
        %v1082 = vld [vmem:[%s216 + $0x1918] sm:$0xff]
        %v1083 = vld [vmem:[%s216 + $0x1920] sm:$0xff]
        %v1084 = vld [vmem:[%s216 + $0x1928] sm:$0xff]
        %v1085 = vld [vmem:[%s216 + $0x1930] sm:$0xff]
        %v1086 = vld [vmem:[%s216 + $0x1938] sm:$0xff]
        %v1087 = vld [vmem:[%s216 + $0x1940] sm:$0xff]
        %v1088 = vld [vmem:[%s216 + $0x1948] sm:$0xff]
        %v1089 = vld [vmem:[%s216 + $0x1950] sm:$0xff]
        %v1090 = vld [vmem:[%s216 + $0x1958] sm:$0xff]
        %v1091 = vld [vmem:[%s216 + $0x1960] sm:$0xff]
        %v1092 = vld [vmem:[%s216 + $0x1968] sm:$0xff]
        %v1093 = vld [vmem:[%s216 + $0x1970] sm:$0xff]
        %v1094 = vld [vmem:[%s216 + $0x1978] sm:$0xff]
        %v1095 = vld [vmem:[%s216 + $0x1980] sm:$0xff]
        %v1096 = vld [vmem:[%s216 + $0x1988] sm:$0xff]
        %v1097 = vld [vmem:[%s216 + $0x1990] sm:$0xff]
        %v1098 = vld [vmem:[%s216 + $0x1998] sm:$0xff]
        %v1099 = vld [vmem:[%s216 + $0x19a0] sm:$0xff]
        %v1100 = vld [vmem:[%s216 + $0x19a8] sm:$0xff]
        %v1101 = vld [vmem:[%s216 + $0x19b0] sm:$0xff]
        %v1102 = vld [vmem:[%s216 + $0x19b8] sm:$0xff]
        %v1103 = vld [vmem:[%s216 + $0x19c0] sm:$0xff]
        %v1104 = vld [vmem:[%s216 + $0x19c8] sm:$0xff]
        %v1105 = vld [vmem:[%s216 + $0x19d0] sm:$0xff]
        %v1106 = vld [vmem:[%s216 + $0x19d8] sm:$0xff]
        %v1107 = vld [vmem:[%s216 + $0x19e0] sm:$0xff]
        %v1108 = vld [vmem:[%s216 + $0x19e8] sm:$0xff]
        %v1109 = vld [vmem:[%s216 + $0x19f0] sm:$0xff]
        %v1110 = vld [vmem:[%s216 + $0x19f8] sm:$0xff]
        %v1111 = vld [vmem:[%s216 + $0x1a00] sm:$0xff]
        %v1112 = vld [vmem:[%s216 + $0x1a08] sm:$0xff]
        %v1113 = vld [vmem:[%s216 + $0x1a10] sm:$0xff]
        %v1114 = vld [vmem:[%s216 + $0x1a18] sm:$0xff]
        %v1115 = vld [vmem:[%s216 + $0x1a20] sm:$0xff]
        %v1116 = vld [vmem:[%s216 + $0x1a28] sm:$0xff]
        %v1117 = vld [vmem:[%s216 + $0x1a30] sm:$0xff]
        %v1118 = vld [vmem:[%s216 + $0x1a38] sm:$0xff]
        %v1119 = vld [vmem:[%s216 + $0x1a40] sm:$0xff]
        %v1120 = vld [vmem:[%s216 + $0x1a48] sm:$0xff]
        %v1121 = vld [vmem:[%s216 + $0x1a50] sm:$0xff]
        %v1122 = vld [vmem:[%s216 + $0x1a58] sm:$0xff]
        %v1123 = vld [vmem:[%s216 + $0x1a60] sm:$0xff]
        %v1124 = vld [vmem:[%s216 + $0x1a68] sm:$0xff]
        %v1125 = vld [vmem:[%s216 + $0x1a70] sm:$0xff]
        %v1126 = vld [vmem:[%s216 + $0x1a78] sm:$0xff]
        %v1127 = vld [vmem:[%s216 + $0x1a80] sm:$0xff]
        %v1128 = vld [vmem:[%s216 + $0x1a88] sm:$0xff]
        %v1129 = vld [vmem:[%s216 + $0x1a90] sm:$0xff]
        %v1130 = vld [vmem:[%s216 + $0x1a98] sm:$0xff]
        %v1131 = vld [vmem:[%s216 + $0x1aa0] sm:$0xff]
        %v1132 = vld [vmem:[%s216 + $0x1aa8] sm:$0xff]
        %v1133 = vld [vmem:[%s216 + $0x1ab0] sm:$0xff]
        %v1134 = vld [vmem:[%s216 + $0x1ab8] sm:$0xff]
        %v1135 = vld [vmem:[%s216 + $0x1ac0] sm:$0xff]
        %v1136 = vld [vmem:[%s216 + $0x1ac8] sm:$0xff]
        %v1137 = vld [vmem:[%s216 + $0x1ad0] sm:$0xff]
        %v1138 = vld [vmem:[%s216 + $0x1ad8] sm:$0xff]
        %v1139 = vld [vmem:[%s216 + $0x1ae0] sm:$0xff]
        %v1140 = vld [vmem:[%s216 + $0x1ae8] sm:$0xff]
        %v1141 = vld [vmem:[%s216 + $0x1af0] sm:$0xff]
        %v1142 = vld [vmem:[%s216 + $0x1af8] sm:$0xff]
        %v1143 = vld [vmem:[%s216 + $0x1b00] sm:$0xff]
        %v1144 = vld [vmem:[%s216 + $0x1b08] sm:$0xff]
        %v1145 = vld [vmem:[%s216 + $0x1b10] sm:$0xff]
        %v1146 = vld [vmem:[%s216 + $0x1b18] sm:$0xff]
        %v1147 = vld [vmem:[%s216 + $0x1b20] sm:$0xff]
        %v1148 = vld [vmem:[%s216 + $0x1b28] sm:$0xff]
        %v1149 = vld [vmem:[%s216 + $0x1b30] sm:$0xff]
        %v1150 = vld [vmem:[%s216 + $0x1b38] sm:$0xff]
        %v1151 = vld [vmem:[%s216 + $0x1b40] sm:$0xff]
        %v1152 = vld [vmem:[%s216 + $0x1b48] sm:$0xff]
        %v1153 = vld [vmem:[%s216 + $0x1b50] sm:$0xff]
        %v1154 = vld [vmem:[%s216 + $0x1b58] sm:$0xff]
        %v1155 = vld [vmem:[%s216 + $0x1b60] sm:$0xff]
        %v1156 = vld [vmem:[%s216 + $0x1b68] sm:$0xff]
        %v1157 = vld [vmem:[%s216 + $0x1b70] sm:$0xff]
        %v1158 = vld [vmem:[%s216 + $0x1b78] sm:$0xff]
        %v1159 = vld [vmem:[%s216 + $0x1b80] sm:$0xff]
        %v1160 = vld [vmem:[%s216 + $0x1b88] sm:$0xff]
        %v1161 = vld [vmem:[%s216 + $0x1b90] sm:$0xff]
        %v1162 = vld [vmem:[%s216 + $0x1b98] sm:$0xff]
        %v1163 = vld [vmem:[%s216 + $0x1ba0] sm:$0xff]
        %v1164 = vld [vmem:[%s216 + $0x1ba8] sm:$0xff]
        %v1165 = vld [vmem:[%s216 + $0x1bb0] sm:$0xff]
        %v1166 = vld [vmem:[%s216 + $0x1bb8] sm:$0xff]
        %v1167 = vld [vmem:[%s216 + $0x1bc0] sm:$0xff]
        %v1168 = vld [vmem:[%s216 + $0x1bc8] sm:$0xff]
        %v1169 = vld [vmem:[%s216 + $0x1bd0] sm:$0xff]
        %v1170 = vld [vmem:[%s216 + $0x1bd8] sm:$0xff]
        %v1171 = vld [vmem:[%s216 + $0x1be0] sm:$0xff]
        %v1172 = vld [vmem:[%s216 + $0x1be8] sm:$0xff]
        %v1173 = vld [vmem:[%s216 + $0x1bf0] sm:$0xff]
        %v1174 = vld [vmem:[%s216 + $0x1bf8] sm:$0xff]
        %v1175 = vld [vmem:[%s216 + $0x1c00] sm:$0xff]
        %v1176 = vld [vmem:[%s216 + $0x1c08] sm:$0xff]
        %v1177 = vld [vmem:[%s216 + $0x1c10] sm:$0xff]
        %v1178 = vld [vmem:[%s216 + $0x1c18] sm:$0xff]
        %v1179 = vld [vmem:[%s216 + $0x1c20] sm:$0xff]
        %v1180 = vld [vmem:[%s216 + $0x1c28] sm:$0xff]
        %v1181 = vld [vmem:[%s216 + $0x1c30] sm:$0xff]
        %v1182 = vld [vmem:[%s216 + $0x1c38] sm:$0xff]
        %v1183 = vld [vmem:[%s216 + $0x1c40] sm:$0xff]
        %v1184 = vld [vmem:[%s216 + $0x1c48] sm:$0xff]
        %v1185 = vld [vmem:[%s216 + $0x1c50] sm:$0xff]
        %v1186 = vld [vmem:[%s216 + $0x1c58] sm:$0xff]
        %v1187 = vld [vmem:[%s216 + $0x1c60] sm:$0xff]
        %v1188 = vld [vmem:[%s216 + $0x1c68] sm:$0xff]
        %v1189 = vld [vmem:[%s216 + $0x1c70] sm:$0xff]
        %v1190 = vld [vmem:[%s216 + $0x1c78] sm:$0xff]
        %v1191 = vld [vmem:[%s216 + $0x1c80] sm:$0xff]
        %v1192 = vld [vmem:[%s216 + $0x1c88] sm:$0xff]
        %v1193 = vld [vmem:[%s216 + $0x1c90] sm:$0xff]
        %v1194 = vld [vmem:[%s216 + $0x1c98] sm:$0xff]
        %v1195 = vld [vmem:[%s216 + $0x1ca0] sm:$0xff]
        %v1196 = vld [vmem:[%s216 + $0x1ca8] sm:$0xff]
        %v1197 = vld [vmem:[%s216 + $0x1cb0] sm:$0xff]
        %v1198 = vld [vmem:[%s216 + $0x1cb8] sm:$0xff]
        %v1199 = vld [vmem:[%s216 + $0x1cc0] sm:$0xff]
        %v1200 = vld [vmem:[%s216 + $0x1cc8] sm:$0xff]
        %v1201 = vld [vmem:[%s216 + $0x1cd0] sm:$0xff]
        %v1202 = vld [vmem:[%s216 + $0x1cd8] sm:$0xff]
        %v1203 = vld [vmem:[%s216 + $0x1ce0] sm:$0xff]
        %v1204 = vld [vmem:[%s216 + $0x1ce8] sm:$0xff]
        %v1205 = vld [vmem:[%s216 + $0x1cf0] sm:$0xff]
        %v1206 = vld [vmem:[%s216 + $0x1cf8] sm:$0xff]
        %v1207 = vld [vmem:[%s216 + $0x1d00] sm:$0xff]
        %v1208 = vld [vmem:[%s216 + $0x1d08] sm:$0xff]
        %v1209 = vld [vmem:[%s216 + $0x1d10] sm:$0xff]
        %v1210 = vld [vmem:[%s216 + $0x1d18] sm:$0xff]
        %v1211 = vld [vmem:[%s216 + $0x1d20] sm:$0xff]
        %v1212 = vld [vmem:[%s216 + $0x1d28] sm:$0xff]
        %v1213 = vld [vmem:[%s216 + $0x1d30] sm:$0xff]
        %v1214 = vld [vmem:[%s216 + $0x1d38] sm:$0xff]
        %v1215 = vld [vmem:[%s216 + $0x1d40] sm:$0xff]
        %v1216 = vld [vmem:[%s216 + $0x1d48] sm:$0xff]
        %v1217 = vld [vmem:[%s216 + $0x1d50] sm:$0xff]
        %v1218 = vld [vmem:[%s216 + $0x1d58] sm:$0xff]
        %v1219 = vld [vmem:[%s216 + $0x1d60] sm:$0xff]
        %v1220 = vld [vmem:[%s216 + $0x1d68] sm:$0xff]
        %v1221 = vld [vmem:[%s216 + $0x1d70] sm:$0xff]
        %v1222 = vld [vmem:[%s216 + $0x1d78] sm:$0xff]
        %v1223 = vld [vmem:[%s216 + $0x1d80] sm:$0xff]
        %v1224 = vld [vmem:[%s216 + $0x1d88] sm:$0xff]
        %v1225 = vld [vmem:[%s216 + $0x1d90] sm:$0xff]
        %v1226 = vld [vmem:[%s216 + $0x1d98] sm:$0xff]
        %v1227 = vld [vmem:[%s216 + $0x1da0] sm:$0xff]
        %v1228 = vld [vmem:[%s216 + $0x1da8] sm:$0xff]
        %v1229 = vld [vmem:[%s216 + $0x1db0] sm:$0xff]
        %v1230 = vld [vmem:[%s216 + $0x1db8] sm:$0xff]
        %v1231 = vld [vmem:[%s216 + $0x1dc0] sm:$0xff]
        %v1232 = vld [vmem:[%s216 + $0x1dc8] sm:$0xff]
        %v1233 = vld [vmem:[%s216 + $0x1dd0] sm:$0xff]
        %v1234 = vld [vmem:[%s216 + $0x1dd8] sm:$0xff]
        %v1235 = vld [vmem:[%s216 + $0x1de0] sm:$0xff]
        %v1236 = vld [vmem:[%s216 + $0x1de8] sm:$0xff]
        %v1237 = vld [vmem:[%s216 + $0x1df0] sm:$0xff]
        %v1238 = vld [vmem:[%s216 + $0x1df8] sm:$0xff]
        %v1239 = vld [vmem:[%s216 + $0x1e00] sm:$0xff]
        %v1240 = vld [vmem:[%s216 + $0x1e08] sm:$0xff]
        %v1241 = vld [vmem:[%s216 + $0x1e10] sm:$0xff]
        %v1242 = vld [vmem:[%s216 + $0x1e18] sm:$0xff]
        %v1243 = vld [vmem:[%s216 + $0x1e20] sm:$0xff]
        %v1244 = vld [vmem:[%s216 + $0x1e28] sm:$0xff]
        %v1245 = vld [vmem:[%s216 + $0x1e30] sm:$0xff]
        %v1246 = vld [vmem:[%s216 + $0x1e38] sm:$0xff]
        %v1247 = vld [vmem:[%s216 + $0x1e40] sm:$0xff]
        %v1248 = vld [vmem:[%s216 + $0x1e48] sm:$0xff]
        %v1249 = vld [vmem:[%s216 + $0x1e50] sm:$0xff]
        %v1250 = vld [vmem:[%s216 + $0x1e58] sm:$0xff]
        %v1251 = vld [vmem:[%s216 + $0x1e60] sm:$0xff]
        %v1252 = vld [vmem:[%s216 + $0x1e68] sm:$0xff]
        %v1253 = vld [vmem:[%s216 + $0x1e70] sm:$0xff]
        %v1254 = vld [vmem:[%s216 + $0x1e78] sm:$0xff]
        %v1255 = vld [vmem:[%s216 + $0x1e80] sm:$0xff]
        %v1256 = vld [vmem:[%s216 + $0x1e88] sm:$0xff]
        %v1257 = vld [vmem:[%s216 + $0x1e90] sm:$0xff]
        %v1258 = vld [vmem:[%s216 + $0x1e98] sm:$0xff]
        %v1259 = vld [vmem:[%s216 + $0x1ea0] sm:$0xff]
        %v1260 = vld [vmem:[%s216 + $0x1ea8] sm:$0xff]
        %v1261 = vld [vmem:[%s216 + $0x1eb0] sm:$0xff]
        %v1262 = vld [vmem:[%s216 + $0x1eb8] sm:$0xff]
        %v1263 = vld [vmem:[%s216 + $0x1ec0] sm:$0xff]
        %v1264 = vld [vmem:[%s216 + $0x1ec8] sm:$0xff]
        %v1265 = vld [vmem:[%s216 + $0x1ed0] sm:$0xff]
        %v1266 = vld [vmem:[%s216 + $0x1ed8] sm:$0xff]
        %v1267 = vld [vmem:[%s216 + $0x1ee0] sm:$0xff]
        %v1268 = vld [vmem:[%s216 + $0x1ee8] sm:$0xff]
        %v1269 = vld [vmem:[%s216 + $0x1ef0] sm:$0xff]
        %v1270 = vld [vmem:[%s216 + $0x1ef8] sm:$0xff]
        %v1271 = vld [vmem:[%s216 + $0x1f00] sm:$0xff]
        %v1272 = vld [vmem:[%s216 + $0x1f08] sm:$0xff]
        %v1273 = vld [vmem:[%s216 + $0x1f10] sm:$0xff]
        %v1274 = vld [vmem:[%s216 + $0x1f18] sm:$0xff]
        %v1275 = vld [vmem:[%s216 + $0x1f20] sm:$0xff]
        %v1276 = vld [vmem:[%s216 + $0x1f28] sm:$0xff]
        %v1277 = vld [vmem:[%s216 + $0x1f30] sm:$0xff]
        %v1278 = vld [vmem:[%s216 + $0x1f38] sm:$0xff]
        %v1279 = vld [vmem:[%s216 + $0x1f40] sm:$0xff]
        %v1280 = vld [vmem:[%s216 + $0x1f48] sm:$0xff]
        %v1281 = vld [vmem:[%s216 + $0x1f50] sm:$0xff]
        %v1282 = vld [vmem:[%s216 + $0x1f58] sm:$0xff]
        %v1283 = vld [vmem:[%s216 + $0x1f60] sm:$0xff]
        %v1284 = vld [vmem:[%s216 + $0x1f68] sm:$0xff]
        %v1285 = vld [vmem:[%s216 + $0x1f70] sm:$0xff]
        %v1286 = vld [vmem:[%s216 + $0x1f78] sm:$0xff]
        %v1287 = vld [vmem:[%s216 + $0x1f80] sm:$0xff]
        %v1288 = vld [vmem:[%s216 + $0x1f88] sm:$0xff]
        %v1289 = vld [vmem:[%s216 + $0x1f90] sm:$0xff]
        %v1290 = vld [vmem:[%s216 + $0x1f98] sm:$0xff]
        %v1291 = vld [vmem:[%s216 + $0x1fa0] sm:$0xff]
        %v1292 = vld [vmem:[%s216 + $0x1fa8] sm:$0xff]
        %v1293 = vld [vmem:[%s216 + $0x1fb0] sm:$0xff]
        %v1294 = vld [vmem:[%s216 + $0x1fb8] sm:$0xff]
        %v1295 = vld [vmem:[%s216 + $0x1fc0] sm:$0xff]
        %v1296 = vld [vmem:[%s216 + $0x1fc8] sm:$0xff]
        %v1297 = vld [vmem:[%s216 + $0x1fd0] sm:$0xff]
        %v1298 = vld [vmem:[%s216 + $0x1fd8] sm:$0xff]
        %v1299 = vld [vmem:[%s216 + $0x1fe0] sm:$0xff]
        %v1300 = vld [vmem:[%s216 + $0x1fe8] sm:$0xff]
        %v1301 = vld [vmem:[%s216 + $0x1ff0] sm:$0xff]
        %v1302 = vld [vmem:[%s216 + $0x1ff8] sm:$0xff]
        %v1303 = vld [vmem:[%s226] sm:$0xff]
        %v1304 = vld [vmem:[%s226 + $0x8] sm:$0xff]
        %v1305 = vld [vmem:[%s226 + $0x10] sm:$0xff]
        %v1306 = vld [vmem:[%s226 + $0x18] sm:$0xff]
        %v1307 = vld [vmem:[%s226 + $0x20] sm:$0xff]
        %v1308 = vld [vmem:[%s226 + $0x28] sm:$0xff]
        %v1309 = vld [vmem:[%s226 + $0x30] sm:$0xff]
        %v1310 = vld [vmem:[%s226 + $0x38] sm:$0xff]
        %v1311 = vld [vmem:[%s226 + $0x40] sm:$0xff]
        %v1312 = vld [vmem:[%s226 + $0x48] sm:$0xff]
        %v1313 = vld [vmem:[%s226 + $0x50] sm:$0xff]
        %v1314 = vld [vmem:[%s226 + $0x58] sm:$0xff]
        %v1315 = vld [vmem:[%s226 + $0x60] sm:$0xff]
        %v1316 = vld [vmem:[%s226 + $0x68] sm:$0xff]
        %v1317 = vld [vmem:[%s226 + $0x70] sm:$0xff]
        %v1318 = vld [vmem:[%s226 + $0x78] sm:$0xff]
        %v1319 = vld [vmem:[%s226 + $0x80] sm:$0xff]
        %v1320 = vld [vmem:[%s226 + $0x88] sm:$0xff]
        %v1321 = vld [vmem:[%s226 + $0x90] sm:$0xff]
        %v1322 = vld [vmem:[%s226 + $0x98] sm:$0xff]
        %v1323 = vld [vmem:[%s226 + $0xa0] sm:$0xff]
        %v1324 = vld [vmem:[%s226 + $0xa8] sm:$0xff]
        %v1325 = vld [vmem:[%s226 + $0xb0] sm:$0xff]
        %v1326 = vld [vmem:[%s226 + $0xb8] sm:$0xff]
        %v1327 = vld [vmem:[%s226 + $0xc0] sm:$0xff]
        %v1328 = vld [vmem:[%s226 + $0xc8] sm:$0xff]
        %v1329 = vld [vmem:[%s226 + $0xd0] sm:$0xff]
        %v1330 = vld [vmem:[%s226 + $0xd8] sm:$0xff]
        %v1331 = vld [vmem:[%s226 + $0xe0] sm:$0xff]
        %v1332 = vld [vmem:[%s226 + $0xe8] sm:$0xff]
        %v1333 = vld [vmem:[%s226 + $0xf0] sm:$0xff]
        %v1334 = vld [vmem:[%s226 + $0xf8] sm:$0xff]
        %v1335 = vld [vmem:[%s226 + $0x100] sm:$0xff]
        %v1336 = vld [vmem:[%s226 + $0x108] sm:$0xff]
        %v1337 = vld [vmem:[%s226 + $0x110] sm:$0xff]
        %v1338 = vld [vmem:[%s226 + $0x118] sm:$0xff]
        %v1339 = vld [vmem:[%s226 + $0x120] sm:$0xff]
        %v1340 = vld [vmem:[%s226 + $0x128] sm:$0xff]
        %v1341 = vld [vmem:[%s226 + $0x130] sm:$0xff]
        %v1342 = vld [vmem:[%s226 + $0x138] sm:$0xff]
        %v1343 = vld [vmem:[%s226 + $0x140] sm:$0xff]
        %v1344 = vld [vmem:[%s226 + $0x148] sm:$0xff]
        %v1345 = vld [vmem:[%s226 + $0x150] sm:$0xff]
        %v1346 = vld [vmem:[%s226 + $0x158] sm:$0xff]
        %v1347 = vld [vmem:[%s226 + $0x160] sm:$0xff]
        %v1348 = vld [vmem:[%s226 + $0x168] sm:$0xff]
        %v1349 = vld [vmem:[%s226 + $0x170] sm:$0xff]
        %v1350 = vld [vmem:[%s226 + $0x178] sm:$0xff]
        %v1351 = vld [vmem:[%s226 + $0x180] sm:$0xff]
        %v1352 = vld [vmem:[%s226 + $0x188] sm:$0xff]
        %v1353 = vld [vmem:[%s226 + $0x190] sm:$0xff]
        %v1354 = vld [vmem:[%s226 + $0x198] sm:$0xff]
        %v1355 = vld [vmem:[%s226 + $0x1a0] sm:$0xff]
        %v1356 = vld [vmem:[%s226 + $0x1a8] sm:$0xff]
        %v1357 = vld [vmem:[%s226 + $0x1b0] sm:$0xff]
        %v1358 = vld [vmem:[%s226 + $0x1b8] sm:$0xff]
        %v1359 = vld [vmem:[%s226 + $0x1c0] sm:$0xff]
        %v1360 = vld [vmem:[%s226 + $0x1c8] sm:$0xff]
        %v1361 = vld [vmem:[%s226 + $0x1d0] sm:$0xff]
        %v1362 = vld [vmem:[%s226 + $0x1d8] sm:$0xff]
        %v1363 = vld [vmem:[%s226 + $0x1e0] sm:$0xff]
        %v1364 = vld [vmem:[%s226 + $0x1e8] sm:$0xff]
        %v1365 = vld [vmem:[%s226 + $0x1f0] sm:$0xff]
        %v1366 = vld [vmem:[%s226 + $0x1f8] sm:$0xff]
        %v1367 = vld [vmem:[%s226 + $0x200] sm:$0xff]
        %v1368 = vld [vmem:[%s226 + $0x208] sm:$0xff]
        %v1369 = vld [vmem:[%s226 + $0x210] sm:$0xff]
        %v1370 = vld [vmem:[%s226 + $0x218] sm:$0xff]
        %v1371 = vld [vmem:[%s226 + $0x220] sm:$0xff]
        %v1372 = vld [vmem:[%s226 + $0x228] sm:$0xff]
        %v1373 = vld [vmem:[%s226 + $0x230] sm:$0xff]
        %v1374 = vld [vmem:[%s226 + $0x238] sm:$0xff]
        %v1375 = vld [vmem:[%s226 + $0x240] sm:$0xff]
        %v1376 = vld [vmem:[%s226 + $0x248] sm:$0xff]
        %v1377 = vld [vmem:[%s226 + $0x250] sm:$0xff]
        %v1378 = vld [vmem:[%s226 + $0x258] sm:$0xff]
        %v1379 = vld [vmem:[%s226 + $0x260] sm:$0xff]
        %v1380 = vld [vmem:[%s226 + $0x268] sm:$0xff]
        %v1381 = vld [vmem:[%s226 + $0x270] sm:$0xff]
        %v1382 = vld [vmem:[%s226 + $0x278] sm:$0xff]
        %v1383 = vld [vmem:[%s226 + $0x280] sm:$0xff]
        %v1384 = vld [vmem:[%s226 + $0x288] sm:$0xff]
        %v1385 = vld [vmem:[%s226 + $0x290] sm:$0xff]
        %v1386 = vld [vmem:[%s226 + $0x298] sm:$0xff]
        %v1387 = vld [vmem:[%s226 + $0x2a0] sm:$0xff]
        %v1388 = vld [vmem:[%s226 + $0x2a8] sm:$0xff]
        %v1389 = vld [vmem:[%s226 + $0x2b0] sm:$0xff]
        %v1390 = vld [vmem:[%s226 + $0x2b8] sm:$0xff]
        %v1391 = vld [vmem:[%s226 + $0x2c0] sm:$0xff]
        %v1392 = vld [vmem:[%s226 + $0x2c8] sm:$0xff]
        %v1393 = vld [vmem:[%s226 + $0x2d0] sm:$0xff]
        %v1394 = vld [vmem:[%s226 + $0x2d8] sm:$0xff]
        %v1395 = vld [vmem:[%s226 + $0x2e0] sm:$0xff]
        %v1396 = vld [vmem:[%s226 + $0x2e8] sm:$0xff]
        %v1397 = vld [vmem:[%s226 + $0x2f0] sm:$0xff]
        %v1398 = vld [vmem:[%s226 + $0x2f8] sm:$0xff]
        %v1399 = vld [vmem:[%s226 + $0x300] sm:$0xff]
        %v1400 = vld [vmem:[%s226 + $0x308] sm:$0xff]
        %v1401 = vld [vmem:[%s226 + $0x310] sm:$0xff]
        %v1402 = vld [vmem:[%s226 + $0x318] sm:$0xff]
        %v1403 = vld [vmem:[%s226 + $0x320] sm:$0xff]
        %v1404 = vld [vmem:[%s226 + $0x328] sm:$0xff]
        %v1405 = vld [vmem:[%s226 + $0x330] sm:$0xff]
        %v1406 = vld [vmem:[%s226 + $0x338] sm:$0xff]
        %v1407 = vld [vmem:[%s226 + $0x340] sm:$0xff]
        %v1408 = vld [vmem:[%s226 + $0x348] sm:$0xff]
        %v1409 = vld [vmem:[%s226 + $0x350] sm:$0xff]
        %v1410 = vld [vmem:[%s226 + $0x358] sm:$0xff]
        %v1411 = vld [vmem:[%s226 + $0x360] sm:$0xff]
        %v1412 = vld [vmem:[%s226 + $0x368] sm:$0xff]
        %v1413 = vld [vmem:[%s226 + $0x370] sm:$0xff]
        %v1414 = vld [vmem:[%s226 + $0x378] sm:$0xff]
        %v1415 = vld [vmem:[%s226 + $0x380] sm:$0xff]
        %v1416 = vld [vmem:[%s226 + $0x388] sm:$0xff]
        %v1417 = vld [vmem:[%s226 + $0x390] sm:$0xff]
        %v1418 = vld [vmem:[%s226 + $0x398] sm:$0xff]
        %v1419 = vld [vmem:[%s226 + $0x3a0] sm:$0xff]
        %v1420 = vld [vmem:[%s226 + $0x3a8] sm:$0xff]
        %v1421 = vld [vmem:[%s226 + $0x3b0] sm:$0xff]
        %v1422 = vld [vmem:[%s226 + $0x3b8] sm:$0xff]
        %v1423 = vld [vmem:[%s226 + $0x3c0] sm:$0xff]
        %v1424 = vld [vmem:[%s226 + $0x3c8] sm:$0xff]
        %v1425 = vld [vmem:[%s226 + $0x3d0] sm:$0xff]
        %v1426 = vld [vmem:[%s226 + $0x3d8] sm:$0xff]
        %v1427 = vld [vmem:[%s226 + $0x3e0] sm:$0xff]
        %v1428 = vld [vmem:[%s226 + $0x3e8] sm:$0xff]
        %v1429 = vld [vmem:[%s226 + $0x3f0] sm:$0xff]
        %v1430 = vld [vmem:[%s226 + $0x3f8] sm:$0xff]
        %v1431 = vld [vmem:[%s226 + $0x400] sm:$0xff]
        %v1432 = vld [vmem:[%s226 + $0x408] sm:$0xff]
        %v1433 = vld [vmem:[%s226 + $0x410] sm:$0xff]
        %v1434 = vld [vmem:[%s226 + $0x418] sm:$0xff]
        %v1435 = vld [vmem:[%s226 + $0x420] sm:$0xff]
        %v1436 = vld [vmem:[%s226 + $0x428] sm:$0xff]
        %v1437 = vld [vmem:[%s226 + $0x430] sm:$0xff]
        %v1438 = vld [vmem:[%s226 + $0x438] sm:$0xff]
        %v1439 = vld [vmem:[%s226 + $0x440] sm:$0xff]
        %v1440 = vld [vmem:[%s226 + $0x448] sm:$0xff]
        %v1441 = vld [vmem:[%s226 + $0x450] sm:$0xff]
        %v1442 = vld [vmem:[%s226 + $0x458] sm:$0xff]
        %v1443 = vld [vmem:[%s226 + $0x460] sm:$0xff]
        %v1444 = vld [vmem:[%s226 + $0x468] sm:$0xff]
        %v1445 = vld [vmem:[%s226 + $0x470] sm:$0xff]
        %v1446 = vld [vmem:[%s226 + $0x478] sm:$0xff]
        %v1447 = vld [vmem:[%s226 + $0x480] sm:$0xff]
        %v1448 = vld [vmem:[%s226 + $0x488] sm:$0xff]
        %v1449 = vld [vmem:[%s226 + $0x490] sm:$0xff]
        %v1450 = vld [vmem:[%s226 + $0x498] sm:$0xff]
        %v1451 = vld [vmem:[%s226 + $0x4a0] sm:$0xff]
        %v1452 = vld [vmem:[%s226 + $0x4a8] sm:$0xff]
        %v1453 = vld [vmem:[%s226 + $0x4b0] sm:$0xff]
        %v1454 = vld [vmem:[%s226 + $0x4b8] sm:$0xff]
        %v1455 = vld [vmem:[%s226 + $0x4c0] sm:$0xff]
        %v1456 = vld [vmem:[%s226 + $0x4c8] sm:$0xff]
        %v1457 = vld [vmem:[%s226 + $0x4d0] sm:$0xff]
        %v1458 = vld [vmem:[%s226 + $0x4d8] sm:$0xff]
        %v1459 = vld [vmem:[%s226 + $0x4e0] sm:$0xff]
        %v1460 = vld [vmem:[%s226 + $0x4e8] sm:$0xff]
        %v1461 = vld [vmem:[%s226 + $0x4f0] sm:$0xff]
        %v1462 = vld [vmem:[%s226 + $0x4f8] sm:$0xff]
        %v1463 = vld [vmem:[%s226 + $0x500] sm:$0xff]
        %v1464 = vld [vmem:[%s226 + $0x508] sm:$0xff]
        %v1465 = vld [vmem:[%s226 + $0x510] sm:$0xff]
        %v1466 = vld [vmem:[%s226 + $0x518] sm:$0xff]
        %v1467 = vld [vmem:[%s226 + $0x520] sm:$0xff]
        %v1468 = vld [vmem:[%s226 + $0x528] sm:$0xff]
        %v1469 = vld [vmem:[%s226 + $0x530] sm:$0xff]
        %v1470 = vld [vmem:[%s226 + $0x538] sm:$0xff]
        %v1471 = vld [vmem:[%s226 + $0x540] sm:$0xff]
        %v1472 = vld [vmem:[%s226 + $0x548] sm:$0xff]
        %v1473 = vld [vmem:[%s226 + $0x550] sm:$0xff]
        %v1474 = vld [vmem:[%s226 + $0x558] sm:$0xff]
        %v1475 = vld [vmem:[%s226 + $0x560] sm:$0xff]
        %v1476 = vld [vmem:[%s226 + $0x568] sm:$0xff]
        %v1477 = vld [vmem:[%s226 + $0x570] sm:$0xff]
        %v1478 = vld [vmem:[%s226 + $0x578] sm:$0xff]
        %v1479 = vld [vmem:[%s226 + $0x580] sm:$0xff]
        %v1480 = vld [vmem:[%s226 + $0x588] sm:$0xff]
        %v1481 = vld [vmem:[%s226 + $0x590] sm:$0xff]
        %v1482 = vld [vmem:[%s226 + $0x598] sm:$0xff]
        %v1483 = vld [vmem:[%s226 + $0x5a0] sm:$0xff]
        %v1484 = vld [vmem:[%s226 + $0x5a8] sm:$0xff]
        %v1485 = vld [vmem:[%s226 + $0x5b0] sm:$0xff]
        %v1486 = vld [vmem:[%s226 + $0x5b8] sm:$0xff]
        %v1487 = vld [vmem:[%s226 + $0x5c0] sm:$0xff]
        %v1488 = vld [vmem:[%s226 + $0x5c8] sm:$0xff]
        %v1489 = vld [vmem:[%s226 + $0x5d0] sm:$0xff]
        %v1490 = vld [vmem:[%s226 + $0x5d8] sm:$0xff]
        %v1491 = vld [vmem:[%s226 + $0x5e0] sm:$0xff]
        %v1492 = vld [vmem:[%s226 + $0x5e8] sm:$0xff]
        %v1493 = vld [vmem:[%s226 + $0x5f0] sm:$0xff]
        %v1494 = vld [vmem:[%s226 + $0x5f8] sm:$0xff]
        %v1495 = vld [vmem:[%s226 + $0x600] sm:$0xff]
        %v1496 = vld [vmem:[%s226 + $0x608] sm:$0xff]
        %v1497 = vld [vmem:[%s226 + $0x610] sm:$0xff]
        %v1498 = vld [vmem:[%s226 + $0x618] sm:$0xff]
        %v1499 = vld [vmem:[%s226 + $0x620] sm:$0xff]
        %v1500 = vld [vmem:[%s226 + $0x628] sm:$0xff]
        %v1501 = vld [vmem:[%s226 + $0x630] sm:$0xff]
        %v1502 = vld [vmem:[%s226 + $0x638] sm:$0xff]
        %v1503 = vld [vmem:[%s226 + $0x640] sm:$0xff]
        %v1504 = vld [vmem:[%s226 + $0x648] sm:$0xff]
        %v1505 = vld [vmem:[%s226 + $0x650] sm:$0xff]
        %v1506 = vld [vmem:[%s226 + $0x658] sm:$0xff]
        %v1507 = vld [vmem:[%s226 + $0x660] sm:$0xff]
        %v1508 = vld [vmem:[%s226 + $0x668] sm:$0xff]
        %v1509 = vld [vmem:[%s226 + $0x670] sm:$0xff]
        %v1510 = vld [vmem:[%s226 + $0x678] sm:$0xff]
        %v1511 = vld [vmem:[%s226 + $0x680] sm:$0xff]
        %v1512 = vld [vmem:[%s226 + $0x688] sm:$0xff]
        %v1513 = vld [vmem:[%s226 + $0x690] sm:$0xff]
        %v1514 = vld [vmem:[%s226 + $0x698] sm:$0xff]
        %v1515 = vld [vmem:[%s226 + $0x6a0] sm:$0xff]
        %v1516 = vld [vmem:[%s226 + $0x6a8] sm:$0xff]
        %v1517 = vld [vmem:[%s226 + $0x6b0] sm:$0xff]
        %v1518 = vld [vmem:[%s226 + $0x6b8] sm:$0xff]
        %v1519 = vld [vmem:[%s226 + $0x6c0] sm:$0xff]
        %v1520 = vld [vmem:[%s226 + $0x6c8] sm:$0xff]
        %v1521 = vld [vmem:[%s226 + $0x6d0] sm:$0xff]
        %v1522 = vld [vmem:[%s226 + $0x6d8] sm:$0xff]
        %v1523 = vld [vmem:[%s226 + $0x6e0] sm:$0xff]
        %v1524 = vld [vmem:[%s226 + $0x6e8] sm:$0xff]
        %v1525 = vld [vmem:[%s226 + $0x6f0] sm:$0xff]
        %v1526 = vld [vmem:[%s226 + $0x6f8] sm:$0xff]
        %v1527 = vld [vmem:[%s226 + $0x700] sm:$0xff]
        %v1528 = vld [vmem:[%s226 + $0x708] sm:$0xff]
        %v1529 = vld [vmem:[%s226 + $0x710] sm:$0xff]
        %v1530 = vld [vmem:[%s226 + $0x718] sm:$0xff]
        %v1531 = vld [vmem:[%s226 + $0x720] sm:$0xff]
        %v1532 = vld [vmem:[%s226 + $0x728] sm:$0xff]
        %v1533 = vld [vmem:[%s226 + $0x730] sm:$0xff]
        %v1534 = vld [vmem:[%s226 + $0x738] sm:$0xff]
        %v1535 = vld [vmem:[%s226 + $0x740] sm:$0xff]
        %v1536 = vld [vmem:[%s226 + $0x748] sm:$0xff]
        %v1537 = vld [vmem:[%s226 + $0x750] sm:$0xff]
        %v1538 = vld [vmem:[%s226 + $0x758] sm:$0xff]
        %v1539 = vld [vmem:[%s226 + $0x760] sm:$0xff]
        %v1540 = vld [vmem:[%s226 + $0x768] sm:$0xff]
        %v1541 = vld [vmem:[%s226 + $0x770] sm:$0xff]
        %v1542 = vld [vmem:[%s226 + $0x778] sm:$0xff]
        %v1543 = vld [vmem:[%s226 + $0x780] sm:$0xff]
        %v1544 = vld [vmem:[%s226 + $0x788] sm:$0xff]
        %v1545 = vld [vmem:[%s226 + $0x790] sm:$0xff]
        %v1546 = vld [vmem:[%s226 + $0x798] sm:$0xff]
        %v1547 = vld [vmem:[%s226 + $0x7a0] sm:$0xff]
        %v1548 = vld [vmem:[%s226 + $0x7a8] sm:$0xff]
        %v1549 = vld [vmem:[%s226 + $0x7b0] sm:$0xff]
        %v1550 = vld [vmem:[%s226 + $0x7b8] sm:$0xff]
        %v1551 = vld [vmem:[%s226 + $0x7c0] sm:$0xff]
        %v1552 = vld [vmem:[%s226 + $0x7c8] sm:$0xff]
        %v1553 = vld [vmem:[%s226 + $0x7d0] sm:$0xff]
        %v1554 = vld [vmem:[%s226 + $0x7d8] sm:$0xff]
        %v1555 = vld [vmem:[%s226 + $0x7e0] sm:$0xff]
        %v1556 = vld [vmem:[%s226 + $0x7e8] sm:$0xff]
        %v1557 = vld [vmem:[%s226 + $0x7f0] sm:$0xff]
        %v1558 = vld [vmem:[%s226 + $0x7f8] sm:$0xff]
        %v1559 = vld [vmem:[%s226 + $0x800] sm:$0xff]
        %v1560 = vld [vmem:[%s226 + $0x808] sm:$0xff]
        %v1561 = vld [vmem:[%s226 + $0x810] sm:$0xff]
        %v1562 = vld [vmem:[%s226 + $0x818] sm:$0xff]
        %v1563 = vld [vmem:[%s226 + $0x820] sm:$0xff]
        %v1564 = vld [vmem:[%s226 + $0x828] sm:$0xff]
        %v1565 = vld [vmem:[%s226 + $0x830] sm:$0xff]
        %v1566 = vld [vmem:[%s226 + $0x838] sm:$0xff]
        %v1567 = vld [vmem:[%s226 + $0x840] sm:$0xff]
        %v1568 = vld [vmem:[%s226 + $0x848] sm:$0xff]
        %v1569 = vld [vmem:[%s226 + $0x850] sm:$0xff]
        %v1570 = vld [vmem:[%s226 + $0x858] sm:$0xff]
        %v1571 = vld [vmem:[%s226 + $0x860] sm:$0xff]
        %v1572 = vld [vmem:[%s226 + $0x868] sm:$0xff]
        %v1573 = vld [vmem:[%s226 + $0x870] sm:$0xff]
        %v1574 = vld [vmem:[%s226 + $0x878] sm:$0xff]
        %v1575 = vld [vmem:[%s226 + $0x880] sm:$0xff]
        %v1576 = vld [vmem:[%s226 + $0x888] sm:$0xff]
        %v1577 = vld [vmem:[%s226 + $0x890] sm:$0xff]
        %v1578 = vld [vmem:[%s226 + $0x898] sm:$0xff]
        %v1579 = vld [vmem:[%s226 + $0x8a0] sm:$0xff]
        %v1580 = vld [vmem:[%s226 + $0x8a8] sm:$0xff]
        %v1581 = vld [vmem:[%s226 + $0x8b0] sm:$0xff]
        %v1582 = vld [vmem:[%s226 + $0x8b8] sm:$0xff]
        %v1583 = vld [vmem:[%s226 + $0x8c0] sm:$0xff]
        %v1584 = vld [vmem:[%s226 + $0x8c8] sm:$0xff]
        %v1585 = vld [vmem:[%s226 + $0x8d0] sm:$0xff]
        %v1586 = vld [vmem:[%s226 + $0x8d8] sm:$0xff]
        %v1587 = vld [vmem:[%s226 + $0x8e0] sm:$0xff]
        %v1588 = vld [vmem:[%s226 + $0x8e8] sm:$0xff]
        %v1589 = vld [vmem:[%s226 + $0x8f0] sm:$0xff]
        %v1590 = vld [vmem:[%s226 + $0x8f8] sm:$0xff]
        %v1591 = vld [vmem:[%s226 + $0x900] sm:$0xff]
        %v1592 = vld [vmem:[%s226 + $0x908] sm:$0xff]
        %v1593 = vld [vmem:[%s226 + $0x910] sm:$0xff]
        %v1594 = vld [vmem:[%s226 + $0x918] sm:$0xff]
        %v1595 = vld [vmem:[%s226 + $0x920] sm:$0xff]
        %v1596 = vld [vmem:[%s226 + $0x928] sm:$0xff]
        %v1597 = vld [vmem:[%s226 + $0x930] sm:$0xff]
        %v1598 = vld [vmem:[%s226 + $0x938] sm:$0xff]
        %v1599 = vld [vmem:[%s226 + $0x940] sm:$0xff]
        %v1600 = vld [vmem:[%s226 + $0x948] sm:$0xff]
        %v1601 = vld [vmem:[%s226 + $0x950] sm:$0xff]
        %v1602 = vld [vmem:[%s226 + $0x958] sm:$0xff]
        %v1603 = vld [vmem:[%s226 + $0x960] sm:$0xff]
        %v1604 = vld [vmem:[%s226 + $0x968] sm:$0xff]
        %v1605 = vld [vmem:[%s226 + $0x970] sm:$0xff]
        %v1606 = vld [vmem:[%s226 + $0x978] sm:$0xff]
        %v1607 = vld [vmem:[%s226 + $0x980] sm:$0xff]
        %v1608 = vld [vmem:[%s226 + $0x988] sm:$0xff]
        %v1609 = vld [vmem:[%s226 + $0x990] sm:$0xff]
        %v1610 = vld [vmem:[%s226 + $0x998] sm:$0xff]
        %v1611 = vld [vmem:[%s226 + $0x9a0] sm:$0xff]
        %v1612 = vld [vmem:[%s226 + $0x9a8] sm:$0xff]
        %v1613 = vld [vmem:[%s226 + $0x9b0] sm:$0xff]
        %v1614 = vld [vmem:[%s226 + $0x9b8] sm:$0xff]
        %v1615 = vld [vmem:[%s226 + $0x9c0] sm:$0xff]
        %v1616 = vld [vmem:[%s226 + $0x9c8] sm:$0xff]
        %v1617 = vld [vmem:[%s226 + $0x9d0] sm:$0xff]
        %v1618 = vld [vmem:[%s226 + $0x9d8] sm:$0xff]
        %v1619 = vld [vmem:[%s226 + $0x9e0] sm:$0xff]
        %v1620 = vld [vmem:[%s226 + $0x9e8] sm:$0xff]
        %v1621 = vld [vmem:[%s226 + $0x9f0] sm:$0xff]
        %v1622 = vld [vmem:[%s226 + $0x9f8] sm:$0xff]
        %v1623 = vld [vmem:[%s226 + $0xa00] sm:$0xff]
        %v1624 = vld [vmem:[%s226 + $0xa08] sm:$0xff]
        %v1625 = vld [vmem:[%s226 + $0xa10] sm:$0xff]
        %v1626 = vld [vmem:[%s226 + $0xa18] sm:$0xff]
        %v1627 = vld [vmem:[%s226 + $0xa20] sm:$0xff]
        %v1628 = vld [vmem:[%s226 + $0xa28] sm:$0xff]
        %v1629 = vld [vmem:[%s226 + $0xa30] sm:$0xff]
        %v1630 = vld [vmem:[%s226 + $0xa38] sm:$0xff]
        %v1631 = vld [vmem:[%s226 + $0xa40] sm:$0xff]
        %v1632 = vld [vmem:[%s226 + $0xa48] sm:$0xff]
        %v1633 = vld [vmem:[%s226 + $0xa50] sm:$0xff]
        %v1634 = vld [vmem:[%s226 + $0xa58] sm:$0xff]
        %v1635 = vld [vmem:[%s226 + $0xa60] sm:$0xff]
        %v1636 = vld [vmem:[%s226 + $0xa68] sm:$0xff]
        %v1637 = vld [vmem:[%s226 + $0xa70] sm:$0xff]
        %v1638 = vld [vmem:[%s226 + $0xa78] sm:$0xff]
        %v1639 = vld [vmem:[%s226 + $0xa80] sm:$0xff]
        %v1640 = vld [vmem:[%s226 + $0xa88] sm:$0xff]
        %v1641 = vld [vmem:[%s226 + $0xa90] sm:$0xff]
        %v1642 = vld [vmem:[%s226 + $0xa98] sm:$0xff]
        %v1643 = vld [vmem:[%s226 + $0xaa0] sm:$0xff]
        %v1644 = vld [vmem:[%s226 + $0xaa8] sm:$0xff]
        %v1645 = vld [vmem:[%s226 + $0xab0] sm:$0xff]
        %v1646 = vld [vmem:[%s226 + $0xab8] sm:$0xff]
        %v1647 = vld [vmem:[%s226 + $0xac0] sm:$0xff]
        %v1648 = vld [vmem:[%s226 + $0xac8] sm:$0xff]
        %v1649 = vld [vmem:[%s226 + $0xad0] sm:$0xff]
        %v1650 = vld [vmem:[%s226 + $0xad8] sm:$0xff]
        %v1651 = vld [vmem:[%s226 + $0xae0] sm:$0xff]
        %v1652 = vld [vmem:[%s226 + $0xae8] sm:$0xff]
        %v1653 = vld [vmem:[%s226 + $0xaf0] sm:$0xff]
        %v1654 = vld [vmem:[%s226 + $0xaf8] sm:$0xff]
        %v1655 = vld [vmem:[%s226 + $0xb00] sm:$0xff]
        %v1656 = vld [vmem:[%s226 + $0xb08] sm:$0xff]
        %v1657 = vld [vmem:[%s226 + $0xb10] sm:$0xff]
        %v1658 = vld [vmem:[%s226 + $0xb18] sm:$0xff]
        %v1659 = vld [vmem:[%s226 + $0xb20] sm:$0xff]
        %v1660 = vld [vmem:[%s226 + $0xb28] sm:$0xff]
        %v1661 = vld [vmem:[%s226 + $0xb30] sm:$0xff]
        %v1662 = vld [vmem:[%s226 + $0xb38] sm:$0xff]
        %v1663 = vld [vmem:[%s226 + $0xb40] sm:$0xff]
        %v1664 = vld [vmem:[%s226 + $0xb48] sm:$0xff]
        %v1665 = vld [vmem:[%s226 + $0xb50] sm:$0xff]
        %v1666 = vld [vmem:[%s226 + $0xb58] sm:$0xff]
        %v1667 = vld [vmem:[%s226 + $0xb60] sm:$0xff]
        %v1668 = vld [vmem:[%s226 + $0xb68] sm:$0xff]
        %v1669 = vld [vmem:[%s226 + $0xb70] sm:$0xff]
        %v1670 = vld [vmem:[%s226 + $0xb78] sm:$0xff]
        %v1671 = vld [vmem:[%s226 + $0xb80] sm:$0xff]
        %v1672 = vld [vmem:[%s226 + $0xb88] sm:$0xff]
        %v1673 = vld [vmem:[%s226 + $0xb90] sm:$0xff]
        %v1674 = vld [vmem:[%s226 + $0xb98] sm:$0xff]
        %v1675 = vld [vmem:[%s226 + $0xba0] sm:$0xff]
        %v1676 = vld [vmem:[%s226 + $0xba8] sm:$0xff]
        %v1677 = vld [vmem:[%s226 + $0xbb0] sm:$0xff]
        %v1678 = vld [vmem:[%s226 + $0xbb8] sm:$0xff]
        %v1679 = vld [vmem:[%s226 + $0xbc0] sm:$0xff]
        %v1680 = vld [vmem:[%s226 + $0xbc8] sm:$0xff]
        %v1681 = vld [vmem:[%s226 + $0xbd0] sm:$0xff]
        %v1682 = vld [vmem:[%s226 + $0xbd8] sm:$0xff]
        %v1683 = vld [vmem:[%s226 + $0xbe0] sm:$0xff]
        %v1684 = vld [vmem:[%s226 + $0xbe8] sm:$0xff]
        %v1685 = vld [vmem:[%s226 + $0xbf0] sm:$0xff]
        %v1686 = vld [vmem:[%s226 + $0xbf8] sm:$0xff]
        %v1687 = vld [vmem:[%s226 + $0xc00] sm:$0xff]
        %v1688 = vld [vmem:[%s226 + $0xc08] sm:$0xff]
        %v1689 = vld [vmem:[%s226 + $0xc10] sm:$0xff]
        %v1690 = vld [vmem:[%s226 + $0xc18] sm:$0xff]
        %v1691 = vld [vmem:[%s226 + $0xc20] sm:$0xff]
        %v1692 = vld [vmem:[%s226 + $0xc28] sm:$0xff]
        %v1693 = vld [vmem:[%s226 + $0xc30] sm:$0xff]
        %v1694 = vld [vmem:[%s226 + $0xc38] sm:$0xff]
        %v1695 = vld [vmem:[%s226 + $0xc40] sm:$0xff]
        %v1696 = vld [vmem:[%s226 + $0xc48] sm:$0xff]
        %v1697 = vld [vmem:[%s226 + $0xc50] sm:$0xff]
        %v1698 = vld [vmem:[%s226 + $0xc58] sm:$0xff]
        %v1699 = vld [vmem:[%s226 + $0xc60] sm:$0xff]
        %v1700 = vld [vmem:[%s226 + $0xc68] sm:$0xff]
        %v1701 = vld [vmem:[%s226 + $0xc70] sm:$0xff]
        %v1702 = vld [vmem:[%s226 + $0xc78] sm:$0xff]
        %v1703 = vld [vmem:[%s226 + $0xc80] sm:$0xff]
        %v1704 = vld [vmem:[%s226 + $0xc88] sm:$0xff]
        %v1705 = vld [vmem:[%s226 + $0xc90] sm:$0xff]
        %v1706 = vld [vmem:[%s226 + $0xc98] sm:$0xff]
        %v1707 = vld [vmem:[%s226 + $0xca0] sm:$0xff]
        %v1708 = vld [vmem:[%s226 + $0xca8] sm:$0xff]
        %v1709 = vld [vmem:[%s226 + $0xcb0] sm:$0xff]
        %v1710 = vld [vmem:[%s226 + $0xcb8] sm:$0xff]
        %v1711 = vld [vmem:[%s226 + $0xcc0] sm:$0xff]
        %v1712 = vld [vmem:[%s226 + $0xcc8] sm:$0xff]
        %v1713 = vld [vmem:[%s226 + $0xcd0] sm:$0xff]
        %v1714 = vld [vmem:[%s226 + $0xcd8] sm:$0xff]
        %v1715 = vld [vmem:[%s226 + $0xce0] sm:$0xff]
        %v1716 = vld [vmem:[%s226 + $0xce8] sm:$0xff]
        %v1717 = vld [vmem:[%s226 + $0xcf0] sm:$0xff]
        %v1718 = vld [vmem:[%s226 + $0xcf8] sm:$0xff]
        %v1719 = vld [vmem:[%s226 + $0xd00] sm:$0xff]
        %v1720 = vld [vmem:[%s226 + $0xd08] sm:$0xff]
        %v1721 = vld [vmem:[%s226 + $0xd10] sm:$0xff]
        %v1722 = vld [vmem:[%s226 + $0xd18] sm:$0xff]
        %v1723 = vld [vmem:[%s226 + $0xd20] sm:$0xff]
        %v1724 = vld [vmem:[%s226 + $0xd28] sm:$0xff]
        %v1725 = vld [vmem:[%s226 + $0xd30] sm:$0xff]
        %v1726 = vld [vmem:[%s226 + $0xd38] sm:$0xff]
        %v1727 = vld [vmem:[%s226 + $0xd40] sm:$0xff]
        %v1728 = vld [vmem:[%s226 + $0xd48] sm:$0xff]
        %v1729 = vld [vmem:[%s226 + $0xd50] sm:$0xff]
        %v1730 = vld [vmem:[%s226 + $0xd58] sm:$0xff]
        %v1731 = vld [vmem:[%s226 + $0xd60] sm:$0xff]
        %v1732 = vld [vmem:[%s226 + $0xd68] sm:$0xff]
        %v1733 = vld [vmem:[%s226 + $0xd70] sm:$0xff]
        %v1734 = vld [vmem:[%s226 + $0xd78] sm:$0xff]
        %v1735 = vld [vmem:[%s226 + $0xd80] sm:$0xff]
        %v1736 = vld [vmem:[%s226 + $0xd88] sm:$0xff]
        %v1737 = vld [vmem:[%s226 + $0xd90] sm:$0xff]
        %v1738 = vld [vmem:[%s226 + $0xd98] sm:$0xff]
        %v1739 = vld [vmem:[%s226 + $0xda0] sm:$0xff]
        %v1740 = vld [vmem:[%s226 + $0xda8] sm:$0xff]
        %v1741 = vld [vmem:[%s226 + $0xdb0] sm:$0xff]
        %v1742 = vld [vmem:[%s226 + $0xdb8] sm:$0xff]
        %v1743 = vld [vmem:[%s226 + $0xdc0] sm:$0xff]
        %v1744 = vld [vmem:[%s226 + $0xdc8] sm:$0xff]
        %v1745 = vld [vmem:[%s226 + $0xdd0] sm:$0xff]
        %v1746 = vld [vmem:[%s226 + $0xdd8] sm:$0xff]
        %v1747 = vld [vmem:[%s226 + $0xde0] sm:$0xff]
        %v1748 = vld [vmem:[%s226 + $0xde8] sm:$0xff]
        %v1749 = vld [vmem:[%s226 + $0xdf0] sm:$0xff]
        %v1750 = vld [vmem:[%s226 + $0xdf8] sm:$0xff]
        %v1751 = vld [vmem:[%s226 + $0xe00] sm:$0xff]
        %v1752 = vld [vmem:[%s226 + $0xe08] sm:$0xff]
        %v1753 = vld [vmem:[%s226 + $0xe10] sm:$0xff]
        %v1754 = vld [vmem:[%s226 + $0xe18] sm:$0xff]
        %v1755 = vld [vmem:[%s226 + $0xe20] sm:$0xff]
        %v1756 = vld [vmem:[%s226 + $0xe28] sm:$0xff]
        %v1757 = vld [vmem:[%s226 + $0xe30] sm:$0xff]
        %v1758 = vld [vmem:[%s226 + $0xe38] sm:$0xff]
        %v1759 = vld [vmem:[%s226 + $0xe40] sm:$0xff]
        %v1760 = vld [vmem:[%s226 + $0xe48] sm:$0xff]
        %v1761 = vld [vmem:[%s226 + $0xe50] sm:$0xff]
        %v1762 = vld [vmem:[%s226 + $0xe58] sm:$0xff]
        %v1763 = vld [vmem:[%s226 + $0xe60] sm:$0xff]
        %v1764 = vld [vmem:[%s226 + $0xe68] sm:$0xff]
        %v1765 = vld [vmem:[%s226 + $0xe70] sm:$0xff]
        %v1766 = vld [vmem:[%s226 + $0xe78] sm:$0xff]
        %v1767 = vld [vmem:[%s226 + $0xe80] sm:$0xff]
        %v1768 = vld [vmem:[%s226 + $0xe88] sm:$0xff]
        %v1769 = vld [vmem:[%s226 + $0xe90] sm:$0xff]
        %v1770 = vld [vmem:[%s226 + $0xe98] sm:$0xff]
        %v1771 = vld [vmem:[%s226 + $0xea0] sm:$0xff]
        %v1772 = vld [vmem:[%s226 + $0xea8] sm:$0xff]
        %v1773 = vld [vmem:[%s226 + $0xeb0] sm:$0xff]
        %v1774 = vld [vmem:[%s226 + $0xeb8] sm:$0xff]
        %v1775 = vld [vmem:[%s226 + $0xec0] sm:$0xff]
        %v1776 = vld [vmem:[%s226 + $0xec8] sm:$0xff]
        %v1777 = vld [vmem:[%s226 + $0xed0] sm:$0xff]
        %v1778 = vld [vmem:[%s226 + $0xed8] sm:$0xff]
        %v1779 = vld [vmem:[%s226 + $0xee0] sm:$0xff]
        %v1780 = vld [vmem:[%s226 + $0xee8] sm:$0xff]
        %v1781 = vld [vmem:[%s226 + $0xef0] sm:$0xff]
        %v1782 = vld [vmem:[%s226 + $0xef8] sm:$0xff]
        %v1783 = vld [vmem:[%s226 + $0xf00] sm:$0xff]
        %v1784 = vld [vmem:[%s226 + $0xf08] sm:$0xff]
        %v1785 = vld [vmem:[%s226 + $0xf10] sm:$0xff]
        %v1786 = vld [vmem:[%s226 + $0xf18] sm:$0xff]
        %v1787 = vld [vmem:[%s226 + $0xf20] sm:$0xff]
        %v1788 = vld [vmem:[%s226 + $0xf28] sm:$0xff]
        %v1789 = vld [vmem:[%s226 + $0xf30] sm:$0xff]
        %v1790 = vld [vmem:[%s226 + $0xf38] sm:$0xff]
        %v1791 = vld [vmem:[%s226 + $0xf40] sm:$0xff]
        %v1792 = vld [vmem:[%s226 + $0xf48] sm:$0xff]
        %v1793 = vld [vmem:[%s226 + $0xf50] sm:$0xff]
        %v1794 = vld [vmem:[%s226 + $0xf58] sm:$0xff]
        %v1795 = vld [vmem:[%s226 + $0xf60] sm:$0xff]
        %v1796 = vld [vmem:[%s226 + $0xf68] sm:$0xff]
        %v1797 = vld [vmem:[%s226 + $0xf70] sm:$0xff]
        %v1798 = vld [vmem:[%s226 + $0xf78] sm:$0xff]
        %v1799 = vld [vmem:[%s226 + $0xf80] sm:$0xff]
        %v1800 = vld [vmem:[%s226 + $0xf88] sm:$0xff]
        %v1801 = vld [vmem:[%s226 + $0xf90] sm:$0xff]
        %v1802 = vld [vmem:[%s226 + $0xf98] sm:$0xff]
        %v1803 = vld [vmem:[%s226 + $0xfa0] sm:$0xff]
        %v1804 = vld [vmem:[%s226 + $0xfa8] sm:$0xff]
        %v1805 = vld [vmem:[%s226 + $0xfb0] sm:$0xff]
        %v1806 = vld [vmem:[%s226 + $0xfb8] sm:$0xff]
        %v1807 = vld [vmem:[%s226 + $0xfc0] sm:$0xff]
        %v1808 = vld [vmem:[%s226 + $0xfc8] sm:$0xff]
        %v1809 = vld [vmem:[%s226 + $0xfd0] sm:$0xff]
        %v1810 = vld [vmem:[%s226 + $0xfd8] sm:$0xff]
        %v1811 = vld [vmem:[%s226 + $0xfe0] sm:$0xff]
        %v1812 = vld [vmem:[%s226 + $0xfe8] sm:$0xff]
        %v1813 = vld [vmem:[%s226 + $0xff0] sm:$0xff]
        %v1814 = vld [vmem:[%s226 + $0xff8] sm:$0xff]
        %v1815 = vld [vmem:[%s226 + $0x1000] sm:$0xff]
        %v1816 = vld [vmem:[%s226 + $0x1008] sm:$0xff]
        %v1817 = vld [vmem:[%s226 + $0x1010] sm:$0xff]
        %v1818 = vld [vmem:[%s226 + $0x1018] sm:$0xff]
        %v1819 = vld [vmem:[%s226 + $0x1020] sm:$0xff]
        %v1820 = vld [vmem:[%s226 + $0x1028] sm:$0xff]
        %v1821 = vld [vmem:[%s226 + $0x1030] sm:$0xff]
        %v1822 = vld [vmem:[%s226 + $0x1038] sm:$0xff]
        %v1823 = vld [vmem:[%s226 + $0x1040] sm:$0xff]
        %v1824 = vld [vmem:[%s226 + $0x1048] sm:$0xff]
        %v1825 = vld [vmem:[%s226 + $0x1050] sm:$0xff]
        %v1826 = vld [vmem:[%s226 + $0x1058] sm:$0xff]
        %v1827 = vld [vmem:[%s226 + $0x1060] sm:$0xff]
        %v1828 = vld [vmem:[%s226 + $0x1068] sm:$0xff]
        %v1829 = vld [vmem:[%s226 + $0x1070] sm:$0xff]
        %v1830 = vld [vmem:[%s226 + $0x1078] sm:$0xff]
        %v1831 = vld [vmem:[%s226 + $0x1080] sm:$0xff]
        %v1832 = vld [vmem:[%s226 + $0x1088] sm:$0xff]
        %v1833 = vld [vmem:[%s226 + $0x1090] sm:$0xff]
        %v1834 = vld [vmem:[%s226 + $0x1098] sm:$0xff]
        %v1835 = vld [vmem:[%s226 + $0x10a0] sm:$0xff]
        %v1836 = vld [vmem:[%s226 + $0x10a8] sm:$0xff]
        %v1837 = vld [vmem:[%s226 + $0x10b0] sm:$0xff]
        %v1838 = vld [vmem:[%s226 + $0x10b8] sm:$0xff]
        %v1839 = vld [vmem:[%s226 + $0x10c0] sm:$0xff]
        %v1840 = vld [vmem:[%s226 + $0x10c8] sm:$0xff]
        %v1841 = vld [vmem:[%s226 + $0x10d0] sm:$0xff]
        %v1842 = vld [vmem:[%s226 + $0x10d8] sm:$0xff]
        %v1843 = vld [vmem:[%s226 + $0x10e0] sm:$0xff]
        %v1844 = vld [vmem:[%s226 + $0x10e8] sm:$0xff]
        %v1845 = vld [vmem:[%s226 + $0x10f0] sm:$0xff]
        %v1846 = vld [vmem:[%s226 + $0x10f8] sm:$0xff]
        %v1847 = vld [vmem:[%s226 + $0x1100] sm:$0xff]
        %v1848 = vld [vmem:[%s226 + $0x1108] sm:$0xff]
        %v1849 = vld [vmem:[%s226 + $0x1110] sm:$0xff]
        %v1850 = vld [vmem:[%s226 + $0x1118] sm:$0xff]
        %v1851 = vld [vmem:[%s226 + $0x1120] sm:$0xff]
        %v1852 = vld [vmem:[%s226 + $0x1128] sm:$0xff]
        %v1853 = vld [vmem:[%s226 + $0x1130] sm:$0xff]
        %v1854 = vld [vmem:[%s226 + $0x1138] sm:$0xff]
        %v1855 = vld [vmem:[%s226 + $0x1140] sm:$0xff]
        %v1856 = vld [vmem:[%s226 + $0x1148] sm:$0xff]
        %v1857 = vld [vmem:[%s226 + $0x1150] sm:$0xff]
        %v1858 = vld [vmem:[%s226 + $0x1158] sm:$0xff]
        %v1859 = vld [vmem:[%s226 + $0x1160] sm:$0xff]
        %v1860 = vld [vmem:[%s226 + $0x1168] sm:$0xff]
        %v1861 = vld [vmem:[%s226 + $0x1170] sm:$0xff]
        %v1862 = vld [vmem:[%s226 + $0x1178] sm:$0xff]
        %v1863 = vld [vmem:[%s226 + $0x1180] sm:$0xff]
        %v1864 = vld [vmem:[%s226 + $0x1188] sm:$0xff]
        %v1865 = vld [vmem:[%s226 + $0x1190] sm:$0xff]
        %v1866 = vld [vmem:[%s226 + $0x1198] sm:$0xff]
        %v1867 = vld [vmem:[%s226 + $0x11a0] sm:$0xff]
        %v1868 = vld [vmem:[%s226 + $0x11a8] sm:$0xff]
        %v1869 = vld [vmem:[%s226 + $0x11b0] sm:$0xff]
        %v1870 = vld [vmem:[%s226 + $0x11b8] sm:$0xff]
        %v1871 = vld [vmem:[%s226 + $0x11c0] sm:$0xff]
        %v1872 = vld [vmem:[%s226 + $0x11c8] sm:$0xff]
        %v1873 = vld [vmem:[%s226 + $0x11d0] sm:$0xff]
        %v1874 = vld [vmem:[%s226 + $0x11d8] sm:$0xff]
        %v1875 = vld [vmem:[%s226 + $0x11e0] sm:$0xff]
        %v1876 = vld [vmem:[%s226 + $0x11e8] sm:$0xff]
        %v1877 = vld [vmem:[%s226 + $0x11f0] sm:$0xff]
        %v1878 = vld [vmem:[%s226 + $0x11f8] sm:$0xff]
        %v1879 = vld [vmem:[%s226 + $0x1200] sm:$0xff]
        %v1880 = vld [vmem:[%s226 + $0x1208] sm:$0xff]
        %v1881 = vld [vmem:[%s226 + $0x1210] sm:$0xff]
        %v1882 = vld [vmem:[%s226 + $0x1218] sm:$0xff]
        %v1883 = vld [vmem:[%s226 + $0x1220] sm:$0xff]
        %v1884 = vld [vmem:[%s226 + $0x1228] sm:$0xff]
        %v1885 = vld [vmem:[%s226 + $0x1230] sm:$0xff]
        %v1886 = vld [vmem:[%s226 + $0x1238] sm:$0xff]
        %v1887 = vld [vmem:[%s226 + $0x1240] sm:$0xff]
        %v1888 = vld [vmem:[%s226 + $0x1248] sm:$0xff]
        %v1889 = vld [vmem:[%s226 + $0x1250] sm:$0xff]
        %v1890 = vld [vmem:[%s226 + $0x1258] sm:$0xff]
        %v1891 = vld [vmem:[%s226 + $0x1260] sm:$0xff]
        %v1892 = vld [vmem:[%s226 + $0x1268] sm:$0xff]
        %v1893 = vld [vmem:[%s226 + $0x1270] sm:$0xff]
        %v1894 = vld [vmem:[%s226 + $0x1278] sm:$0xff]
        %v1895 = vld [vmem:[%s226 + $0x1280] sm:$0xff]
        %v1896 = vld [vmem:[%s226 + $0x1288] sm:$0xff]
        %v1897 = vld [vmem:[%s226 + $0x1290] sm:$0xff]
        %v1898 = vld [vmem:[%s226 + $0x1298] sm:$0xff]
        %v1899 = vld [vmem:[%s226 + $0x12a0] sm:$0xff]
        %v1900 = vld [vmem:[%s226 + $0x12a8] sm:$0xff]
        %v1901 = vld [vmem:[%s226 + $0x12b0] sm:$0xff]
        %v1902 = vld [vmem:[%s226 + $0x12b8] sm:$0xff]
        %v1903 = vld [vmem:[%s226 + $0x12c0] sm:$0xff]
        %v1904 = vld [vmem:[%s226 + $0x12c8] sm:$0xff]
        %v1905 = vld [vmem:[%s226 + $0x12d0] sm:$0xff]
        %v1906 = vld [vmem:[%s226 + $0x12d8] sm:$0xff]
        %v1907 = vld [vmem:[%s226 + $0x12e0] sm:$0xff]
        %v1908 = vld [vmem:[%s226 + $0x12e8] sm:$0xff]
        %v1909 = vld [vmem:[%s226 + $0x12f0] sm:$0xff]
        %v1910 = vld [vmem:[%s226 + $0x12f8] sm:$0xff]
        %v1911 = vld [vmem:[%s226 + $0x1300] sm:$0xff]
        %v1912 = vld [vmem:[%s226 + $0x1308] sm:$0xff]
        %v1913 = vld [vmem:[%s226 + $0x1310] sm:$0xff]
        %v1914 = vld [vmem:[%s226 + $0x1318] sm:$0xff]
        %v1915 = vld [vmem:[%s226 + $0x1320] sm:$0xff]
        %v1916 = vld [vmem:[%s226 + $0x1328] sm:$0xff]
        %v1917 = vld [vmem:[%s226 + $0x1330] sm:$0xff]
        %v1918 = vld [vmem:[%s226 + $0x1338] sm:$0xff]
        %v1919 = vld [vmem:[%s226 + $0x1340] sm:$0xff]
        %v1920 = vld [vmem:[%s226 + $0x1348] sm:$0xff]
        %v1921 = vld [vmem:[%s226 + $0x1350] sm:$0xff]
        %v1922 = vld [vmem:[%s226 + $0x1358] sm:$0xff]
        %v1923 = vld [vmem:[%s226 + $0x1360] sm:$0xff]
        %v1924 = vld [vmem:[%s226 + $0x1368] sm:$0xff]
        %v1925 = vld [vmem:[%s226 + $0x1370] sm:$0xff]
        %v1926 = vld [vmem:[%s226 + $0x1378] sm:$0xff]
        %v1927 = vld [vmem:[%s226 + $0x1380] sm:$0xff]
        %v1928 = vld [vmem:[%s226 + $0x1388] sm:$0xff]
        %v1929 = vld [vmem:[%s226 + $0x1390] sm:$0xff]
        %v1930 = vld [vmem:[%s226 + $0x1398] sm:$0xff]
        %v1931 = vld [vmem:[%s226 + $0x13a0] sm:$0xff]
        %v1932 = vld [vmem:[%s226 + $0x13a8] sm:$0xff]
        %v1933 = vld [vmem:[%s226 + $0x13b0] sm:$0xff]
        %v1934 = vld [vmem:[%s226 + $0x13b8] sm:$0xff]
        %v1935 = vld [vmem:[%s226 + $0x13c0] sm:$0xff]
        %v1936 = vld [vmem:[%s226 + $0x13c8] sm:$0xff]
        %v1937 = vld [vmem:[%s226 + $0x13d0] sm:$0xff]
        %v1938 = vld [vmem:[%s226 + $0x13d8] sm:$0xff]
        %v1939 = vld [vmem:[%s226 + $0x13e0] sm:$0xff]
        %v1940 = vld [vmem:[%s226 + $0x13e8] sm:$0xff]
        %v1941 = vld [vmem:[%s226 + $0x13f0] sm:$0xff]
        %v1942 = vld [vmem:[%s226 + $0x13f8] sm:$0xff]
        %v1943 = vld [vmem:[%s226 + $0x1400] sm:$0xff]
        %v1944 = vld [vmem:[%s226 + $0x1408] sm:$0xff]
        %v1945 = vld [vmem:[%s226 + $0x1410] sm:$0xff]
        %v1946 = vld [vmem:[%s226 + $0x1418] sm:$0xff]
        %v1947 = vld [vmem:[%s226 + $0x1420] sm:$0xff]
        %v1948 = vld [vmem:[%s226 + $0x1428] sm:$0xff]
        %v1949 = vld [vmem:[%s226 + $0x1430] sm:$0xff]
        %v1950 = vld [vmem:[%s226 + $0x1438] sm:$0xff]
        %v1951 = vld [vmem:[%s226 + $0x1440] sm:$0xff]
        %v1952 = vld [vmem:[%s226 + $0x1448] sm:$0xff]
        %v1953 = vld [vmem:[%s226 + $0x1450] sm:$0xff]
        %v1954 = vld [vmem:[%s226 + $0x1458] sm:$0xff]
        %v1955 = vld [vmem:[%s226 + $0x1460] sm:$0xff]
        %v1956 = vld [vmem:[%s226 + $0x1468] sm:$0xff]
        %v1957 = vld [vmem:[%s226 + $0x1470] sm:$0xff]
        %v1958 = vld [vmem:[%s226 + $0x1478] sm:$0xff]
        %v1959 = vld [vmem:[%s226 + $0x1480] sm:$0xff]
        %v1960 = vld [vmem:[%s226 + $0x1488] sm:$0xff]
        %v1961 = vld [vmem:[%s226 + $0x1490] sm:$0xff]
        %v1962 = vld [vmem:[%s226 + $0x1498] sm:$0xff]
        %v1963 = vld [vmem:[%s226 + $0x14a0] sm:$0xff]
        %v1964 = vld [vmem:[%s226 + $0x14a8] sm:$0xff]
        %v1965 = vld [vmem:[%s226 + $0x14b0] sm:$0xff]
        %v1966 = vld [vmem:[%s226 + $0x14b8] sm:$0xff]
        %v1967 = vld [vmem:[%s226 + $0x14c0] sm:$0xff]
        %v1968 = vld [vmem:[%s226 + $0x14c8] sm:$0xff]
        %v1969 = vld [vmem:[%s226 + $0x14d0] sm:$0xff]
        %v1970 = vld [vmem:[%s226 + $0x14d8] sm:$0xff]
        %v1971 = vld [vmem:[%s226 + $0x14e0] sm:$0xff]
        %v1972 = vld [vmem:[%s226 + $0x14e8] sm:$0xff]
        %v1973 = vld [vmem:[%s226 + $0x14f0] sm:$0xff]
        %v1974 = vld [vmem:[%s226 + $0x14f8] sm:$0xff]
        %v1975 = vld [vmem:[%s226 + $0x1500] sm:$0xff]
        %v1976 = vld [vmem:[%s226 + $0x1508] sm:$0xff]
        %v1977 = vld [vmem:[%s226 + $0x1510] sm:$0xff]
        %v1978 = vld [vmem:[%s226 + $0x1518] sm:$0xff]
        %v1979 = vld [vmem:[%s226 + $0x1520] sm:$0xff]
        %v1980 = vld [vmem:[%s226 + $0x1528] sm:$0xff]
        %v1981 = vld [vmem:[%s226 + $0x1530] sm:$0xff]
        %v1982 = vld [vmem:[%s226 + $0x1538] sm:$0xff]
        %v1983 = vld [vmem:[%s226 + $0x1540] sm:$0xff]
        %v1984 = vld [vmem:[%s226 + $0x1548] sm:$0xff]
        %v1985 = vld [vmem:[%s226 + $0x1550] sm:$0xff]
        %v1986 = vld [vmem:[%s226 + $0x1558] sm:$0xff]
        %v1987 = vld [vmem:[%s226 + $0x1560] sm:$0xff]
        %v1988 = vld [vmem:[%s226 + $0x1568] sm:$0xff]
        %v1989 = vld [vmem:[%s226 + $0x1570] sm:$0xff]
        %v1990 = vld [vmem:[%s226 + $0x1578] sm:$0xff]
        %v1991 = vld [vmem:[%s226 + $0x1580] sm:$0xff]
        %v1992 = vld [vmem:[%s226 + $0x1588] sm:$0xff]
        %v1993 = vld [vmem:[%s226 + $0x1590] sm:$0xff]
        %v1994 = vld [vmem:[%s226 + $0x1598] sm:$0xff]
        %v1995 = vld [vmem:[%s226 + $0x15a0] sm:$0xff]
        %v1996 = vld [vmem:[%s226 + $0x15a8] sm:$0xff]
        %v1997 = vld [vmem:[%s226 + $0x15b0] sm:$0xff]
        %v1998 = vld [vmem:[%s226 + $0x15b8] sm:$0xff]
        %v1999 = vld [vmem:[%s226 + $0x15c0] sm:$0xff]
        %v2000 = vld [vmem:[%s226 + $0x15c8] sm:$0xff]
        %v2001 = vld [vmem:[%s226 + $0x15d0] sm:$0xff]
        %v2002 = vld [vmem:[%s226 + $0x15d8] sm:$0xff]
        %v2003 = vld [vmem:[%s226 + $0x15e0] sm:$0xff]
        %v2004 = vld [vmem:[%s226 + $0x15e8] sm:$0xff]
        %v2005 = vld [vmem:[%s226 + $0x15f0] sm:$0xff]
        %v2006 = vld [vmem:[%s226 + $0x15f8] sm:$0xff]
        %v2007 = vld [vmem:[%s226 + $0x1600] sm:$0xff]
        %v2008 = vld [vmem:[%s226 + $0x1608] sm:$0xff]
        %v2009 = vld [vmem:[%s226 + $0x1610] sm:$0xff]
        %v2010 = vld [vmem:[%s226 + $0x1618] sm:$0xff]
        %v2011 = vld [vmem:[%s226 + $0x1620] sm:$0xff]
        %v2012 = vld [vmem:[%s226 + $0x1628] sm:$0xff]
        %v2013 = vld [vmem:[%s226 + $0x1630] sm:$0xff]
        %v2014 = vld [vmem:[%s226 + $0x1638] sm:$0xff]
        %v2015 = vld [vmem:[%s226 + $0x1640] sm:$0xff]
        %v2016 = vld [vmem:[%s226 + $0x1648] sm:$0xff]
        %v2017 = vld [vmem:[%s226 + $0x1650] sm:$0xff]
        %v2018 = vld [vmem:[%s226 + $0x1658] sm:$0xff]
        %v2019 = vld [vmem:[%s226 + $0x1660] sm:$0xff]
        %v2020 = vld [vmem:[%s226 + $0x1668] sm:$0xff]
        %v2021 = vld [vmem:[%s226 + $0x1670] sm:$0xff]
        %v2022 = vld [vmem:[%s226 + $0x1678] sm:$0xff]
        %v2023 = vld [vmem:[%s226 + $0x1680] sm:$0xff]
        %v2024 = vld [vmem:[%s226 + $0x1688] sm:$0xff]
        %v2025 = vld [vmem:[%s226 + $0x1690] sm:$0xff]
        %v2026 = vld [vmem:[%s226 + $0x1698] sm:$0xff]
        %v2027 = vld [vmem:[%s226 + $0x16a0] sm:$0xff]
        %v2028 = vld [vmem:[%s226 + $0x16a8] sm:$0xff]
        %v2029 = vld [vmem:[%s226 + $0x16b0] sm:$0xff]
        %v2030 = vld [vmem:[%s226 + $0x16b8] sm:$0xff]
        %v2031 = vld [vmem:[%s226 + $0x16c0] sm:$0xff]
        %v2032 = vld [vmem:[%s226 + $0x16c8] sm:$0xff]
        %v2033 = vld [vmem:[%s226 + $0x16d0] sm:$0xff]
        %v2034 = vld [vmem:[%s226 + $0x16d8] sm:$0xff]
        %v2035 = vld [vmem:[%s226 + $0x16e0] sm:$0xff]
        %v2036 = vld [vmem:[%s226 + $0x16e8] sm:$0xff]
        %v2037 = vld [vmem:[%s226 + $0x16f0] sm:$0xff]
        %v2038 = vld [vmem:[%s226 + $0x16f8] sm:$0xff]
        %v2039 = vld [vmem:[%s226 + $0x1700] sm:$0xff]
        %v2040 = vld [vmem:[%s226 + $0x1708] sm:$0xff]
        %v2041 = vld [vmem:[%s226 + $0x1710] sm:$0xff]
        %v2042 = vld [vmem:[%s226 + $0x1718] sm:$0xff]
        %v2043 = vld [vmem:[%s226 + $0x1720] sm:$0xff]
        %v2044 = vld [vmem:[%s226 + $0x1728] sm:$0xff]
        %v2045 = vld [vmem:[%s226 + $0x1730] sm:$0xff]
        %v2046 = vld [vmem:[%s226 + $0x1738] sm:$0xff]
        %v2047 = vld [vmem:[%s226 + $0x1740] sm:$0xff]
        %v2048 = vld [vmem:[%s226 + $0x1748] sm:$0xff]
        %v2049 = vld [vmem:[%s226 + $0x1750] sm:$0xff]
        %v2050 = vld [vmem:[%s226 + $0x1758] sm:$0xff]
        %v2051 = vld [vmem:[%s226 + $0x1760] sm:$0xff]
        %v2052 = vld [vmem:[%s226 + $0x1768] sm:$0xff]
        %v2053 = vld [vmem:[%s226 + $0x1770] sm:$0xff]
        %v2054 = vld [vmem:[%s226 + $0x1778] sm:$0xff]
        %v2055 = vld [vmem:[%s226 + $0x1780] sm:$0xff]
        %v2056 = vld [vmem:[%s226 + $0x1788] sm:$0xff]
        %v2057 = vld [vmem:[%s226 + $0x1790] sm:$0xff]
        %v2058 = vld [vmem:[%s226 + $0x1798] sm:$0xff]
        %v2059 = vld [vmem:[%s226 + $0x17a0] sm:$0xff]
        %v2060 = vld [vmem:[%s226 + $0x17a8] sm:$0xff]
        %v2061 = vld [vmem:[%s226 + $0x17b0] sm:$0xff]
        %v2062 = vld [vmem:[%s226 + $0x17b8] sm:$0xff]
        %v2063 = vld [vmem:[%s226 + $0x17c0] sm:$0xff]
        %v2064 = vld [vmem:[%s226 + $0x17c8] sm:$0xff]
        %v2065 = vld [vmem:[%s226 + $0x17d0] sm:$0xff]
        %v2066 = vld [vmem:[%s226 + $0x17d8] sm:$0xff]
        %v2067 = vld [vmem:[%s226 + $0x17e0] sm:$0xff]
        %v2068 = vld [vmem:[%s226 + $0x17e8] sm:$0xff]
        %v2069 = vld [vmem:[%s226 + $0x17f0] sm:$0xff]
        %v2070 = vld [vmem:[%s226 + $0x17f8] sm:$0xff]
        %v2071 = vld [vmem:[%s226 + $0x1800] sm:$0xff]
        %v2072 = vld [vmem:[%s226 + $0x1808] sm:$0xff]
        %v2073 = vld [vmem:[%s226 + $0x1810] sm:$0xff]
        %v2074 = vld [vmem:[%s226 + $0x1818] sm:$0xff]
        %v2075 = vld [vmem:[%s226 + $0x1820] sm:$0xff]
        %v2076 = vld [vmem:[%s226 + $0x1828] sm:$0xff]
        %v2077 = vld [vmem:[%s226 + $0x1830] sm:$0xff]
        %v2078 = vld [vmem:[%s226 + $0x1838] sm:$0xff]
        %v2079 = vld [vmem:[%s226 + $0x1840] sm:$0xff]
        %v2080 = vld [vmem:[%s226 + $0x1848] sm:$0xff]
        %v2081 = vld [vmem:[%s226 + $0x1850] sm:$0xff]
        %v2082 = vld [vmem:[%s226 + $0x1858] sm:$0xff]
        %v2083 = vld [vmem:[%s226 + $0x1860] sm:$0xff]
        %v2084 = vld [vmem:[%s226 + $0x1868] sm:$0xff]
        %v2085 = vld [vmem:[%s226 + $0x1870] sm:$0xff]
        %v2086 = vld [vmem:[%s226 + $0x1878] sm:$0xff]
        %v2087 = vld [vmem:[%s226 + $0x1880] sm:$0xff]
        %v2088 = vld [vmem:[%s226 + $0x1888] sm:$0xff]
        %v2089 = vld [vmem:[%s226 + $0x1890] sm:$0xff]
        %v2090 = vld [vmem:[%s226 + $0x1898] sm:$0xff]
        %v2091 = vld [vmem:[%s226 + $0x18a0] sm:$0xff]
        %v2092 = vld [vmem:[%s226 + $0x18a8] sm:$0xff]
        %v2093 = vld [vmem:[%s226 + $0x18b0] sm:$0xff]
        %v2094 = vld [vmem:[%s226 + $0x18b8] sm:$0xff]
        %v2095 = vld [vmem:[%s226 + $0x18c0] sm:$0xff]
        %v2096 = vld [vmem:[%s226 + $0x18c8] sm:$0xff]
        %v2097 = vld [vmem:[%s226 + $0x18d0] sm:$0xff]
        %v2098 = vld [vmem:[%s226 + $0x18d8] sm:$0xff]
        %v2099 = vld [vmem:[%s226 + $0x18e0] sm:$0xff]
        %v2100 = vld [vmem:[%s226 + $0x18e8] sm:$0xff]
        %v2101 = vld [vmem:[%s226 + $0x18f0] sm:$0xff]
        %v2102 = vld [vmem:[%s226 + $0x18f8] sm:$0xff]
        %v2103 = vld [vmem:[%s226 + $0x1900] sm:$0xff]
        %v2104 = vld [vmem:[%s226 + $0x1908] sm:$0xff]
        %v2105 = vld [vmem:[%s226 + $0x1910] sm:$0xff]
        %v2106 = vld [vmem:[%s226 + $0x1918] sm:$0xff]
        %v2107 = vld [vmem:[%s226 + $0x1920] sm:$0xff]
        %v2108 = vld [vmem:[%s226 + $0x1928] sm:$0xff]
        %v2109 = vld [vmem:[%s226 + $0x1930] sm:$0xff]
        %v2110 = vld [vmem:[%s226 + $0x1938] sm:$0xff]
        %v2111 = vld [vmem:[%s226 + $0x1940] sm:$0xff]
        %v2112 = vld [vmem:[%s226 + $0x1948] sm:$0xff]
        %v2113 = vld [vmem:[%s226 + $0x1950] sm:$0xff]
        %v2114 = vld [vmem:[%s226 + $0x1958] sm:$0xff]
        %v2115 = vld [vmem:[%s226 + $0x1960] sm:$0xff]
        %v2116 = vld [vmem:[%s226 + $0x1968] sm:$0xff]
        %v2117 = vld [vmem:[%s226 + $0x1970] sm:$0xff]
        %v2118 = vld [vmem:[%s226 + $0x1978] sm:$0xff]
        %v2119 = vld [vmem:[%s226 + $0x1980] sm:$0xff]
        %v2120 = vld [vmem:[%s226 + $0x1988] sm:$0xff]
        %v2121 = vld [vmem:[%s226 + $0x1990] sm:$0xff]
        %v2122 = vld [vmem:[%s226 + $0x1998] sm:$0xff]
        %v2123 = vld [vmem:[%s226 + $0x19a0] sm:$0xff]
        %v2124 = vld [vmem:[%s226 + $0x19a8] sm:$0xff]
        %v2125 = vld [vmem:[%s226 + $0x19b0] sm:$0xff]
        %v2126 = vld [vmem:[%s226 + $0x19b8] sm:$0xff]
        %v2127 = vld [vmem:[%s226 + $0x19c0] sm:$0xff]
        %v2128 = vld [vmem:[%s226 + $0x19c8] sm:$0xff]
        %v2129 = vld [vmem:[%s226 + $0x19d0] sm:$0xff]
        %v2130 = vld [vmem:[%s226 + $0x19d8] sm:$0xff]
        %v2131 = vld [vmem:[%s226 + $0x19e0] sm:$0xff]
        %v2132 = vld [vmem:[%s226 + $0x19e8] sm:$0xff]
        %v2133 = vld [vmem:[%s226 + $0x19f0] sm:$0xff]
        %v2134 = vld [vmem:[%s226 + $0x19f8] sm:$0xff]
        %v2135 = vld [vmem:[%s226 + $0x1a00] sm:$0xff]
        %v2136 = vld [vmem:[%s226 + $0x1a08] sm:$0xff]
        %v2137 = vld [vmem:[%s226 + $0x1a10] sm:$0xff]
        %v2138 = vld [vmem:[%s226 + $0x1a18] sm:$0xff]
        %v2139 = vld [vmem:[%s226 + $0x1a20] sm:$0xff]
        %v2140 = vld [vmem:[%s226 + $0x1a28] sm:$0xff]
        %v2141 = vld [vmem:[%s226 + $0x1a30] sm:$0xff]
        %v2142 = vld [vmem:[%s226 + $0x1a38] sm:$0xff]
        %v2143 = vld [vmem:[%s226 + $0x1a40] sm:$0xff]
        %v2144 = vld [vmem:[%s226 + $0x1a48] sm:$0xff]
        %v2145 = vld [vmem:[%s226 + $0x1a50] sm:$0xff]
        %v2146 = vld [vmem:[%s226 + $0x1a58] sm:$0xff]
        %v2147 = vld [vmem:[%s226 + $0x1a60] sm:$0xff]
        %v2148 = vld [vmem:[%s226 + $0x1a68] sm:$0xff]
        %v2149 = vld [vmem:[%s226 + $0x1a70] sm:$0xff]
        %v2150 = vld [vmem:[%s226 + $0x1a78] sm:$0xff]
        %v2151 = vld [vmem:[%s226 + $0x1a80] sm:$0xff]
        %v2152 = vld [vmem:[%s226 + $0x1a88] sm:$0xff]
        %v2153 = vld [vmem:[%s226 + $0x1a90] sm:$0xff]
        %v2154 = vld [vmem:[%s226 + $0x1a98] sm:$0xff]
        %v2155 = vld [vmem:[%s226 + $0x1aa0] sm:$0xff]
        %v2156 = vld [vmem:[%s226 + $0x1aa8] sm:$0xff]
        %v2157 = vld [vmem:[%s226 + $0x1ab0] sm:$0xff]
        %v2158 = vld [vmem:[%s226 + $0x1ab8] sm:$0xff]
        %v2159 = vld [vmem:[%s226 + $0x1ac0] sm:$0xff]
        %v2160 = vld [vmem:[%s226 + $0x1ac8] sm:$0xff]
        %v2161 = vld [vmem:[%s226 + $0x1ad0] sm:$0xff]
        %v2162 = vld [vmem:[%s226 + $0x1ad8] sm:$0xff]
        %v2163 = vld [vmem:[%s226 + $0x1ae0] sm:$0xff]
        %v2164 = vld [vmem:[%s226 + $0x1ae8] sm:$0xff]
        %v2165 = vld [vmem:[%s226 + $0x1af0] sm:$0xff]
        %v2166 = vld [vmem:[%s226 + $0x1af8] sm:$0xff]
        %v2167 = vld [vmem:[%s226 + $0x1b00] sm:$0xff]
        %v2168 = vld [vmem:[%s226 + $0x1b08] sm:$0xff]
        %v2169 = vld [vmem:[%s226 + $0x1b10] sm:$0xff]
        %v2170 = vld [vmem:[%s226 + $0x1b18] sm:$0xff]
        %v2171 = vld [vmem:[%s226 + $0x1b20] sm:$0xff]
        %v2172 = vld [vmem:[%s226 + $0x1b28] sm:$0xff]
        %v2173 = vld [vmem:[%s226 + $0x1b30] sm:$0xff]
        %v2174 = vld [vmem:[%s226 + $0x1b38] sm:$0xff]
        %v2175 = vld [vmem:[%s226 + $0x1b40] sm:$0xff]
        %v2176 = vld [vmem:[%s226 + $0x1b48] sm:$0xff]
        %v2177 = vld [vmem:[%s226 + $0x1b50] sm:$0xff]
        %v2178 = vld [vmem:[%s226 + $0x1b58] sm:$0xff]
        %v2179 = vld [vmem:[%s226 + $0x1b60] sm:$0xff]
        %v2180 = vld [vmem:[%s226 + $0x1b68] sm:$0xff]
        %v2181 = vld [vmem:[%s226 + $0x1b70] sm:$0xff]
        %v2182 = vld [vmem:[%s226 + $0x1b78] sm:$0xff]
        %v2183 = vld [vmem:[%s226 + $0x1b80] sm:$0xff]
        %v2184 = vld [vmem:[%s226 + $0x1b88] sm:$0xff]
        %v2185 = vld [vmem:[%s226 + $0x1b90] sm:$0xff]
        %v2186 = vld [vmem:[%s226 + $0x1b98] sm:$0xff]
        %v2187 = vld [vmem:[%s226 + $0x1ba0] sm:$0xff]
        %v2188 = vld [vmem:[%s226 + $0x1ba8] sm:$0xff]
        %v2189 = vld [vmem:[%s226 + $0x1bb0] sm:$0xff]
        %v2190 = vld [vmem:[%s226 + $0x1bb8] sm:$0xff]
        %v2191 = vld [vmem:[%s226 + $0x1bc0] sm:$0xff]
        %v2192 = vld [vmem:[%s226 + $0x1bc8] sm:$0xff]
        %v2193 = vld [vmem:[%s226 + $0x1bd0] sm:$0xff]
        %v2194 = vld [vmem:[%s226 + $0x1bd8] sm:$0xff]
        %v2195 = vld [vmem:[%s226 + $0x1be0] sm:$0xff]
        %v2196 = vld [vmem:[%s226 + $0x1be8] sm:$0xff]
        %v2197 = vld [vmem:[%s226 + $0x1bf0] sm:$0xff]
        %v2198 = vld [vmem:[%s226 + $0x1bf8] sm:$0xff]
        %v2199 = vld [vmem:[%s226 + $0x1c00] sm:$0xff]
        %v2200 = vld [vmem:[%s226 + $0x1c08] sm:$0xff]
        %v2201 = vld [vmem:[%s226 + $0x1c10] sm:$0xff]
        %v2202 = vld [vmem:[%s226 + $0x1c18] sm:$0xff]
        %v2203 = vld [vmem:[%s226 + $0x1c20] sm:$0xff]
        %v2204 = vld [vmem:[%s226 + $0x1c28] sm:$0xff]
        %v2205 = vld [vmem:[%s226 + $0x1c30] sm:$0xff]
        %v2206 = vld [vmem:[%s226 + $0x1c38] sm:$0xff]
        %v2207 = vld [vmem:[%s226 + $0x1c40] sm:$0xff]
        %v2208 = vld [vmem:[%s226 + $0x1c48] sm:$0xff]
        %v2209 = vld [vmem:[%s226 + $0x1c50] sm:$0xff]
        %v2210 = vld [vmem:[%s226 + $0x1c58] sm:$0xff]
        %v2211 = vld [vmem:[%s226 + $0x1c60] sm:$0xff]
        %v2212 = vld [vmem:[%s226 + $0x1c68] sm:$0xff]
        %v2213 = vld [vmem:[%s226 + $0x1c70] sm:$0xff]
        %v2214 = vld [vmem:[%s226 + $0x1c78] sm:$0xff]
        %v2215 = vld [vmem:[%s226 + $0x1c80] sm:$0xff]
        %v2216 = vld [vmem:[%s226 + $0x1c88] sm:$0xff]
        %v2217 = vld [vmem:[%s226 + $0x1c90] sm:$0xff]
        %v2218 = vld [vmem:[%s226 + $0x1c98] sm:$0xff]
        %v2219 = vld [vmem:[%s226 + $0x1ca0] sm:$0xff]
        %v2220 = vld [vmem:[%s226 + $0x1ca8] sm:$0xff]
        %v2221 = vld [vmem:[%s226 + $0x1cb0] sm:$0xff]
        %v2222 = vld [vmem:[%s226 + $0x1cb8] sm:$0xff]
        %v2223 = vld [vmem:[%s226 + $0x1cc0] sm:$0xff]
        %v2224 = vld [vmem:[%s226 + $0x1cc8] sm:$0xff]
        %v2225 = vld [vmem:[%s226 + $0x1cd0] sm:$0xff]
        %v2226 = vld [vmem:[%s226 + $0x1cd8] sm:$0xff]
        %v2227 = vld [vmem:[%s226 + $0x1ce0] sm:$0xff]
        %v2228 = vld [vmem:[%s226 + $0x1ce8] sm:$0xff]
        %v2229 = vld [vmem:[%s226 + $0x1cf0] sm:$0xff]
        %v2230 = vld [vmem:[%s226 + $0x1cf8] sm:$0xff]
        %v2231 = vld [vmem:[%s226 + $0x1d00] sm:$0xff]
        %v2232 = vld [vmem:[%s226 + $0x1d08] sm:$0xff]
        %v2233 = vld [vmem:[%s226 + $0x1d10] sm:$0xff]
        %v2234 = vld [vmem:[%s226 + $0x1d18] sm:$0xff]
        %v2235 = vld [vmem:[%s226 + $0x1d20] sm:$0xff]
        %v2236 = vld [vmem:[%s226 + $0x1d28] sm:$0xff]
        %v2237 = vld [vmem:[%s226 + $0x1d30] sm:$0xff]
        %v2238 = vld [vmem:[%s226 + $0x1d38] sm:$0xff]
        %v2239 = vld [vmem:[%s226 + $0x1d40] sm:$0xff]
        %v2240 = vld [vmem:[%s226 + $0x1d48] sm:$0xff]
        %v2241 = vld [vmem:[%s226 + $0x1d50] sm:$0xff]
        %v2242 = vld [vmem:[%s226 + $0x1d58] sm:$0xff]
        %v2243 = vld [vmem:[%s226 + $0x1d60] sm:$0xff]
        %v2244 = vld [vmem:[%s226 + $0x1d68] sm:$0xff]
        %v2245 = vld [vmem:[%s226 + $0x1d70] sm:$0xff]
        %v2246 = vld [vmem:[%s226 + $0x1d78] sm:$0xff]
        %v2247 = vld [vmem:[%s226 + $0x1d80] sm:$0xff]
        %v2248 = vld [vmem:[%s226 + $0x1d88] sm:$0xff]
        %v2249 = vld [vmem:[%s226 + $0x1d90] sm:$0xff]
        %v2250 = vld [vmem:[%s226 + $0x1d98] sm:$0xff]
        %v2251 = vld [vmem:[%s226 + $0x1da0] sm:$0xff]
        %v2252 = vld [vmem:[%s226 + $0x1da8] sm:$0xff]
        %v2253 = vld [vmem:[%s226 + $0x1db0] sm:$0xff]
        %v2254 = vld [vmem:[%s226 + $0x1db8] sm:$0xff]
        %v2255 = vld [vmem:[%s226 + $0x1dc0] sm:$0xff]
        %v2256 = vld [vmem:[%s226 + $0x1dc8] sm:$0xff]
        %v2257 = vld [vmem:[%s226 + $0x1dd0] sm:$0xff]
        %v2258 = vld [vmem:[%s226 + $0x1dd8] sm:$0xff]
        %v2259 = vld [vmem:[%s226 + $0x1de0] sm:$0xff]
        %v2260 = vld [vmem:[%s226 + $0x1de8] sm:$0xff]
        %v2261 = vld [vmem:[%s226 + $0x1df0] sm:$0xff]
        %v2262 = vld [vmem:[%s226 + $0x1df8] sm:$0xff]
        %v2263 = vld [vmem:[%s226 + $0x1e00] sm:$0xff]
        %v2264 = vld [vmem:[%s226 + $0x1e08] sm:$0xff]
        %v2265 = vld [vmem:[%s226 + $0x1e10] sm:$0xff]
        %v2266 = vld [vmem:[%s226 + $0x1e18] sm:$0xff]
        %v2267 = vld [vmem:[%s226 + $0x1e20] sm:$0xff]
        %v2268 = vld [vmem:[%s226 + $0x1e28] sm:$0xff]
        %v2269 = vld [vmem:[%s226 + $0x1e30] sm:$0xff]
        %v2270 = vld [vmem:[%s226 + $0x1e38] sm:$0xff]
        %v2271 = vld [vmem:[%s226 + $0x1e40] sm:$0xff]
        %v2272 = vld [vmem:[%s226 + $0x1e48] sm:$0xff]
        %v2273 = vld [vmem:[%s226 + $0x1e50] sm:$0xff]
        %v2274 = vld [vmem:[%s226 + $0x1e58] sm:$0xff]
        %v2275 = vld [vmem:[%s226 + $0x1e60] sm:$0xff]
        %v2276 = vld [vmem:[%s226 + $0x1e68] sm:$0xff]
        %v2277 = vld [vmem:[%s226 + $0x1e70] sm:$0xff]
        %v2278 = vld [vmem:[%s226 + $0x1e78] sm:$0xff]
        %v2279 = vld [vmem:[%s226 + $0x1e80] sm:$0xff]
        %v2280 = vld [vmem:[%s226 + $0x1e88] sm:$0xff]
        %v2281 = vld [vmem:[%s226 + $0x1e90] sm:$0xff]
        %v2282 = vld [vmem:[%s226 + $0x1e98] sm:$0xff]
        %v2283 = vld [vmem:[%s226 + $0x1ea0] sm:$0xff]
        %v2284 = vld [vmem:[%s226 + $0x1ea8] sm:$0xff]
        %v2285 = vld [vmem:[%s226 + $0x1eb0] sm:$0xff]
        %v2286 = vld [vmem:[%s226 + $0x1eb8] sm:$0xff]
        %v2287 = vld [vmem:[%s226 + $0x1ec0] sm:$0xff]
        %v2288 = vld [vmem:[%s226 + $0x1ec8] sm:$0xff]
        %v2289 = vld [vmem:[%s226 + $0x1ed0] sm:$0xff]
        %v2290 = vld [vmem:[%s226 + $0x1ed8] sm:$0xff]
        %v2291 = vld [vmem:[%s226 + $0x1ee0] sm:$0xff]
        %v2292 = vld [vmem:[%s226 + $0x1ee8] sm:$0xff]
        %v2293 = vld [vmem:[%s226 + $0x1ef0] sm:$0xff]
        %v2294 = vld [vmem:[%s226 + $0x1ef8] sm:$0xff]
        %v2295 = vld [vmem:[%s226 + $0x1f00] sm:$0xff]
        %v2296 = vld [vmem:[%s226 + $0x1f08] sm:$0xff]
        %v2297 = vld [vmem:[%s226 + $0x1f10] sm:$0xff]
        %v2298 = vld [vmem:[%s226 + $0x1f18] sm:$0xff]
        %v2299 = vld [vmem:[%s226 + $0x1f20] sm:$0xff]
        %v2300 = vld [vmem:[%s226 + $0x1f28] sm:$0xff]
        %v2301 = vld [vmem:[%s226 + $0x1f30] sm:$0xff]
        %v2302 = vld [vmem:[%s226 + $0x1f38] sm:$0xff]
        %v2303 = vld [vmem:[%s226 + $0x1f40] sm:$0xff]
        %v2304 = vld [vmem:[%s226 + $0x1f48] sm:$0xff]
        %v2305 = vld [vmem:[%s226 + $0x1f50] sm:$0xff]
        %v2306 = vld [vmem:[%s226 + $0x1f58] sm:$0xff]
        %v2307 = vld [vmem:[%s226 + $0x1f60] sm:$0xff]
        %v2308 = vld [vmem:[%s226 + $0x1f68] sm:$0xff]
        %v2309 = vld [vmem:[%s226 + $0x1f70] sm:$0xff]
        %v2310 = vld [vmem:[%s226 + $0x1f78] sm:$0xff]
        %v2311 = vld [vmem:[%s226 + $0x1f80] sm:$0xff]
        %v2312 = vld [vmem:[%s226 + $0x1f88] sm:$0xff]
        %v2313 = vld [vmem:[%s226 + $0x1f90] sm:$0xff]
        %v2314 = vld [vmem:[%s226 + $0x1f98] sm:$0xff]
        %v2315 = vld [vmem:[%s226 + $0x1fa0] sm:$0xff]
        %v2316 = vld [vmem:[%s226 + $0x1fa8] sm:$0xff]
        %v2317 = vld [vmem:[%s226 + $0x1fb0] sm:$0xff]
        %v2318 = vld [vmem:[%s226 + $0x1fb8] sm:$0xff]
        %v2319 = vld [vmem:[%s226 + $0x1fc0] sm:$0xff]
        %v2320 = vld [vmem:[%s226 + $0x1fc8] sm:$0xff]
        %v2321 = vld [vmem:[%s226 + $0x1fd0] sm:$0xff]
        %v2322 = vld [vmem:[%s226 + $0x1fd8] sm:$0xff]
        %v2323 = vld [vmem:[%s226 + $0x1fe0] sm:$0xff]
        %v2324 = vld [vmem:[%s226 + $0x1fe8] sm:$0xff]
        %v2325 = vld [vmem:[%s226 + $0x1ff0] sm:$0xff]
        %v2326 = vld [vmem:[%s226 + $0x1ff8] sm:$0xff]
        %v2327 = vmul.f32 %v279, %v1303
        %v2328 = vmul.f32 %v280, %v1304
        %v2329 = vmul.f32 %v281, %v1305
        %v2330 = vmul.f32 %v282, %v1306
        %v2331 = vmul.f32 %v283, %v1307
        %v2332 = vmul.f32 %v284, %v1308
        %v2333 = vmul.f32 %v285, %v1309
        %v2334 = vmul.f32 %v286, %v1310
        %v2335 = vmul.f32 %v287, %v1311
        %v2336 = vmul.f32 %v288, %v1312
        %v2337 = vmul.f32 %v289, %v1313
        %v2338 = vmul.f32 %v290, %v1314
        %v2339 = vmul.f32 %v291, %v1315
        %v2340 = vmul.f32 %v292, %v1316
        %v2341 = vmul.f32 %v293, %v1317
        %v2342 = vmul.f32 %v294, %v1318
        %v2343 = vmul.f32 %v295, %v1319
        %v2344 = vmul.f32 %v296, %v1320
        %v2345 = vmul.f32 %v297, %v1321
        %v2346 = vmul.f32 %v298, %v1322
        %v2347 = vmul.f32 %v299, %v1323
        %v2348 = vmul.f32 %v300, %v1324
        %v2349 = vmul.f32 %v301, %v1325
        %v2350 = vmul.f32 %v302, %v1326
        %v2351 = vmul.f32 %v303, %v1327
        %v2352 = vmul.f32 %v304, %v1328
        %v2353 = vmul.f32 %v305, %v1329
        %v2354 = vmul.f32 %v306, %v1330
        %v2355 = vmul.f32 %v307, %v1331
        %v2356 = vmul.f32 %v308, %v1332
        %v2357 = vmul.f32 %v309, %v1333
        %v2358 = vmul.f32 %v310, %v1334
        %v2359 = vmul.f32 %v311, %v1335
        %v2360 = vmul.f32 %v312, %v1336
        %v2361 = vmul.f32 %v313, %v1337
        %v2362 = vmul.f32 %v314, %v1338
        %v2363 = vmul.f32 %v315, %v1339
        %v2364 = vmul.f32 %v316, %v1340
        %v2365 = vmul.f32 %v317, %v1341
        %v2366 = vmul.f32 %v318, %v1342
        %v2367 = vmul.f32 %v319, %v1343
        %v2368 = vmul.f32 %v320, %v1344
        %v2369 = vmul.f32 %v321, %v1345
        %v2370 = vmul.f32 %v322, %v1346
        %v2371 = vmul.f32 %v323, %v1347
        %v2372 = vmul.f32 %v324, %v1348
        %v2373 = vmul.f32 %v325, %v1349
        %v2374 = vmul.f32 %v326, %v1350
        %v2375 = vmul.f32 %v327, %v1351
        %v2376 = vmul.f32 %v328, %v1352
        %v2377 = vmul.f32 %v329, %v1353
        %v2378 = vmul.f32 %v330, %v1354
        %v2379 = vmul.f32 %v331, %v1355
        %v2380 = vmul.f32 %v332, %v1356
        %v2381 = vmul.f32 %v333, %v1357
        %v2382 = vmul.f32 %v334, %v1358
        %v2383 = vmul.f32 %v335, %v1359
        %v2384 = vmul.f32 %v336, %v1360
        %v2385 = vmul.f32 %v337, %v1361
        %v2386 = vmul.f32 %v338, %v1362
        %v2387 = vmul.f32 %v339, %v1363
        %v2388 = vmul.f32 %v340, %v1364
        %v2389 = vmul.f32 %v341, %v1365
        %v2390 = vmul.f32 %v342, %v1366
        %v2391 = vmul.f32 %v343, %v1367
        %v2392 = vmul.f32 %v344, %v1368
        %v2393 = vmul.f32 %v345, %v1369
        %v2394 = vmul.f32 %v346, %v1370
        %v2395 = vmul.f32 %v347, %v1371
        %v2396 = vmul.f32 %v348, %v1372
        %v2397 = vmul.f32 %v349, %v1373
        %v2398 = vmul.f32 %v350, %v1374
        %v2399 = vmul.f32 %v351, %v1375
        %v2400 = vmul.f32 %v352, %v1376
        %v2401 = vmul.f32 %v353, %v1377
        %v2402 = vmul.f32 %v354, %v1378
        %v2403 = vmul.f32 %v355, %v1379
        %v2404 = vmul.f32 %v356, %v1380
        %v2405 = vmul.f32 %v357, %v1381
        %v2406 = vmul.f32 %v358, %v1382
        %v2407 = vmul.f32 %v359, %v1383
        %v2408 = vmul.f32 %v360, %v1384
        %v2409 = vmul.f32 %v361, %v1385
        %v2410 = vmul.f32 %v362, %v1386
        %v2411 = vmul.f32 %v363, %v1387
        %v2412 = vmul.f32 %v364, %v1388
        %v2413 = vmul.f32 %v365, %v1389
        %v2414 = vmul.f32 %v366, %v1390
        %v2415 = vmul.f32 %v367, %v1391
        %v2416 = vmul.f32 %v368, %v1392
        %v2417 = vmul.f32 %v369, %v1393
        %v2418 = vmul.f32 %v370, %v1394
        %v2419 = vmul.f32 %v371, %v1395
        %v2420 = vmul.f32 %v372, %v1396
        %v2421 = vmul.f32 %v373, %v1397
        %v2422 = vmul.f32 %v374, %v1398
        %v2423 = vmul.f32 %v375, %v1399
        %v2424 = vmul.f32 %v376, %v1400
        %v2425 = vmul.f32 %v377, %v1401
        %v2426 = vmul.f32 %v378, %v1402
        %v2427 = vmul.f32 %v379, %v1403
        %v2428 = vmul.f32 %v380, %v1404
        %v2429 = vmul.f32 %v381, %v1405
        %v2430 = vmul.f32 %v382, %v1406
        %v2431 = vmul.f32 %v383, %v1407
        %v2432 = vmul.f32 %v384, %v1408
        %v2433 = vmul.f32 %v385, %v1409
        %v2434 = vmul.f32 %v386, %v1410
        %v2435 = vmul.f32 %v387, %v1411
        %v2436 = vmul.f32 %v388, %v1412
        %v2437 = vmul.f32 %v389, %v1413
        %v2438 = vmul.f32 %v390, %v1414
        %v2439 = vmul.f32 %v391, %v1415
        %v2440 = vmul.f32 %v392, %v1416
        %v2441 = vmul.f32 %v393, %v1417
        %v2442 = vmul.f32 %v394, %v1418
        %v2443 = vmul.f32 %v395, %v1419
        %v2444 = vmul.f32 %v396, %v1420
        %v2445 = vmul.f32 %v397, %v1421
        %v2446 = vmul.f32 %v398, %v1422
        %v2447 = vmul.f32 %v399, %v1423
        %v2448 = vmul.f32 %v400, %v1424
        %v2449 = vmul.f32 %v401, %v1425
        %v2450 = vmul.f32 %v402, %v1426
        %v2451 = vmul.f32 %v403, %v1427
        %v2452 = vmul.f32 %v404, %v1428
        %v2453 = vmul.f32 %v405, %v1429
        %v2454 = vmul.f32 %v406, %v1430
        %v2455 = vmul.f32 %v407, %v1431
        %v2456 = vmul.f32 %v408, %v1432
        %v2457 = vmul.f32 %v409, %v1433
        %v2458 = vmul.f32 %v410, %v1434
        %v2459 = vmul.f32 %v411, %v1435
        %v2460 = vmul.f32 %v412, %v1436
        %v2461 = vmul.f32 %v413, %v1437
        %v2462 = vmul.f32 %v414, %v1438
        %v2463 = vmul.f32 %v415, %v1439
        %v2464 = vmul.f32 %v416, %v1440
        %v2465 = vmul.f32 %v417, %v1441
        %v2466 = vmul.f32 %v418, %v1442
        %v2467 = vmul.f32 %v419, %v1443
        %v2468 = vmul.f32 %v420, %v1444
        %v2469 = vmul.f32 %v421, %v1445
        %v2470 = vmul.f32 %v422, %v1446
        %v2471 = vmul.f32 %v423, %v1447
        %v2472 = vmul.f32 %v424, %v1448
        %v2473 = vmul.f32 %v425, %v1449
        %v2474 = vmul.f32 %v426, %v1450
        %v2475 = vmul.f32 %v427, %v1451
        %v2476 = vmul.f32 %v428, %v1452
        %v2477 = vmul.f32 %v429, %v1453
        %v2478 = vmul.f32 %v430, %v1454
        %v2479 = vmul.f32 %v431, %v1455
        %v2480 = vmul.f32 %v432, %v1456
        %v2481 = vmul.f32 %v433, %v1457
        %v2482 = vmul.f32 %v434, %v1458
        %v2483 = vmul.f32 %v435, %v1459
        %v2484 = vmul.f32 %v436, %v1460
        %v2485 = vmul.f32 %v437, %v1461
        %v2486 = vmul.f32 %v438, %v1462
        %v2487 = vmul.f32 %v439, %v1463
        %v2488 = vmul.f32 %v440, %v1464
        %v2489 = vmul.f32 %v441, %v1465
        %v2490 = vmul.f32 %v442, %v1466
        %v2491 = vmul.f32 %v443, %v1467
        %v2492 = vmul.f32 %v444, %v1468
        %v2493 = vmul.f32 %v445, %v1469
        %v2494 = vmul.f32 %v446, %v1470
        %v2495 = vmul.f32 %v447, %v1471
        %v2496 = vmul.f32 %v448, %v1472
        %v2497 = vmul.f32 %v449, %v1473
        %v2498 = vmul.f32 %v450, %v1474
        %v2499 = vmul.f32 %v451, %v1475
        %v2500 = vmul.f32 %v452, %v1476
        %v2501 = vmul.f32 %v453, %v1477
        %v2502 = vmul.f32 %v454, %v1478
        %v2503 = vmul.f32 %v455, %v1479
        %v2504 = vmul.f32 %v456, %v1480
        %v2505 = vmul.f32 %v457, %v1481
        %v2506 = vmul.f32 %v458, %v1482
        %v2507 = vmul.f32 %v459, %v1483
        %v2508 = vmul.f32 %v460, %v1484
        %v2509 = vmul.f32 %v461, %v1485
        %v2510 = vmul.f32 %v462, %v1486
        %v2511 = vmul.f32 %v463, %v1487
        %v2512 = vmul.f32 %v464, %v1488
        %v2513 = vmul.f32 %v465, %v1489
        %v2514 = vmul.f32 %v466, %v1490
        %v2515 = vmul.f32 %v467, %v1491
        %v2516 = vmul.f32 %v468, %v1492
        %v2517 = vmul.f32 %v469, %v1493
        %v2518 = vmul.f32 %v470, %v1494
        %v2519 = vmul.f32 %v471, %v1495
        %v2520 = vmul.f32 %v472, %v1496
        %v2521 = vmul.f32 %v473, %v1497
        %v2522 = vmul.f32 %v474, %v1498
        %v2523 = vmul.f32 %v475, %v1499
        %v2524 = vmul.f32 %v476, %v1500
        %v2525 = vmul.f32 %v477, %v1501
        %v2526 = vmul.f32 %v478, %v1502
        %v2527 = vmul.f32 %v479, %v1503
        %v2528 = vmul.f32 %v480, %v1504
        %v2529 = vmul.f32 %v481, %v1505
        %v2530 = vmul.f32 %v482, %v1506
        %v2531 = vmul.f32 %v483, %v1507
        %v2532 = vmul.f32 %v484, %v1508
        %v2533 = vmul.f32 %v485, %v1509
        %v2534 = vmul.f32 %v486, %v1510
        %v2535 = vmul.f32 %v487, %v1511
        %v2536 = vmul.f32 %v488, %v1512
        %v2537 = vmul.f32 %v489, %v1513
        %v2538 = vmul.f32 %v490, %v1514
        %v2539 = vmul.f32 %v491, %v1515
        %v2540 = vmul.f32 %v492, %v1516
        %v2541 = vmul.f32 %v493, %v1517
        %v2542 = vmul.f32 %v494, %v1518
        %v2543 = vmul.f32 %v495, %v1519
        %v2544 = vmul.f32 %v496, %v1520
        %v2545 = vmul.f32 %v497, %v1521
        %v2546 = vmul.f32 %v498, %v1522
        %v2547 = vmul.f32 %v499, %v1523
        %v2548 = vmul.f32 %v500, %v1524
        %v2549 = vmul.f32 %v501, %v1525
        %v2550 = vmul.f32 %v502, %v1526
        %v2551 = vmul.f32 %v503, %v1527
        %v2552 = vmul.f32 %v504, %v1528
        %v2553 = vmul.f32 %v505, %v1529
        %v2554 = vmul.f32 %v506, %v1530
        %v2555 = vmul.f32 %v507, %v1531
        %v2556 = vmul.f32 %v508, %v1532
        %v2557 = vmul.f32 %v509, %v1533
        %v2558 = vmul.f32 %v510, %v1534
        %v2559 = vmul.f32 %v511, %v1535
        %v2560 = vmul.f32 %v512, %v1536
        %v2561 = vmul.f32 %v513, %v1537
        %v2562 = vmul.f32 %v514, %v1538
        %v2563 = vmul.f32 %v515, %v1539
        %v2564 = vmul.f32 %v516, %v1540
        %v2565 = vmul.f32 %v517, %v1541
        %v2566 = vmul.f32 %v518, %v1542
        %v2567 = vmul.f32 %v519, %v1543
        %v2568 = vmul.f32 %v520, %v1544
        %v2569 = vmul.f32 %v521, %v1545
        %v2570 = vmul.f32 %v522, %v1546
        %v2571 = vmul.f32 %v523, %v1547
        %v2572 = vmul.f32 %v524, %v1548
        %v2573 = vmul.f32 %v525, %v1549
        %v2574 = vmul.f32 %v526, %v1550
        %v2575 = vmul.f32 %v527, %v1551
        %v2576 = vmul.f32 %v528, %v1552
        %v2577 = vmul.f32 %v529, %v1553
        %v2578 = vmul.f32 %v530, %v1554
        %v2579 = vmul.f32 %v531, %v1555
        %v2580 = vmul.f32 %v532, %v1556
        %v2581 = vmul.f32 %v533, %v1557
        %v2582 = vmul.f32 %v534, %v1558
        %v2583 = vmul.f32 %v535, %v1559
        %v2584 = vmul.f32 %v536, %v1560
        %v2585 = vmul.f32 %v537, %v1561
        %v2586 = vmul.f32 %v538, %v1562
        %v2587 = vmul.f32 %v539, %v1563
        %v2588 = vmul.f32 %v540, %v1564
        %v2589 = vmul.f32 %v541, %v1565
        %v2590 = vmul.f32 %v542, %v1566
        %v2591 = vmul.f32 %v543, %v1567
        %v2592 = vmul.f32 %v544, %v1568
        %v2593 = vmul.f32 %v545, %v1569
        %v2594 = vmul.f32 %v546, %v1570
        %v2595 = vmul.f32 %v547, %v1571
        %v2596 = vmul.f32 %v548, %v1572
        %v2597 = vmul.f32 %v549, %v1573
        %v2598 = vmul.f32 %v550, %v1574
        %v2599 = vmul.f32 %v551, %v1575
        %v2600 = vmul.f32 %v552, %v1576
        %v2601 = vmul.f32 %v553, %v1577
        %v2602 = vmul.f32 %v554, %v1578
        %v2603 = vmul.f32 %v555, %v1579
        %v2604 = vmul.f32 %v556, %v1580
        %v2605 = vmul.f32 %v557, %v1581
        %v2606 = vmul.f32 %v558, %v1582
        %v2607 = vmul.f32 %v559, %v1583
        %v2608 = vmul.f32 %v560, %v1584
        %v2609 = vmul.f32 %v561, %v1585
        %v2610 = vmul.f32 %v562, %v1586
        %v2611 = vmul.f32 %v563, %v1587
        %v2612 = vmul.f32 %v564, %v1588
        %v2613 = vmul.f32 %v565, %v1589
        %v2614 = vmul.f32 %v566, %v1590
        %v2615 = vmul.f32 %v567, %v1591
        %v2616 = vmul.f32 %v568, %v1592
        %v2617 = vmul.f32 %v569, %v1593
        %v2618 = vmul.f32 %v570, %v1594
        %v2619 = vmul.f32 %v571, %v1595
        %v2620 = vmul.f32 %v572, %v1596
        %v2621 = vmul.f32 %v573, %v1597
        %v2622 = vmul.f32 %v574, %v1598
        %v2623 = vmul.f32 %v575, %v1599
        %v2624 = vmul.f32 %v576, %v1600
        %v2625 = vmul.f32 %v577, %v1601
        %v2626 = vmul.f32 %v578, %v1602
        %v2627 = vmul.f32 %v579, %v1603
        %v2628 = vmul.f32 %v580, %v1604
        %v2629 = vmul.f32 %v581, %v1605
        %v2630 = vmul.f32 %v582, %v1606
        %v2631 = vmul.f32 %v583, %v1607
        %v2632 = vmul.f32 %v584, %v1608
        %v2633 = vmul.f32 %v585, %v1609
        %v2634 = vmul.f32 %v586, %v1610
        %v2635 = vmul.f32 %v587, %v1611
        %v2636 = vmul.f32 %v588, %v1612
        %v2637 = vmul.f32 %v589, %v1613
        %v2638 = vmul.f32 %v590, %v1614
        %v2639 = vmul.f32 %v591, %v1615
        %v2640 = vmul.f32 %v592, %v1616
        %v2641 = vmul.f32 %v593, %v1617
        %v2642 = vmul.f32 %v594, %v1618
        %v2643 = vmul.f32 %v595, %v1619
        %v2644 = vmul.f32 %v596, %v1620
        %v2645 = vmul.f32 %v597, %v1621
        %v2646 = vmul.f32 %v598, %v1622
        %v2647 = vmul.f32 %v599, %v1623
        %v2648 = vmul.f32 %v600, %v1624
        %v2649 = vmul.f32 %v601, %v1625
        %v2650 = vmul.f32 %v602, %v1626
        %v2651 = vmul.f32 %v603, %v1627
        %v2652 = vmul.f32 %v604, %v1628
        %v2653 = vmul.f32 %v605, %v1629
        %v2654 = vmul.f32 %v606, %v1630
        %v2655 = vmul.f32 %v607, %v1631
        %v2656 = vmul.f32 %v608, %v1632
        %v2657 = vmul.f32 %v609, %v1633
        %v2658 = vmul.f32 %v610, %v1634
        %v2659 = vmul.f32 %v611, %v1635
        %v2660 = vmul.f32 %v612, %v1636
        %v2661 = vmul.f32 %v613, %v1637
        %v2662 = vmul.f32 %v614, %v1638
        %v2663 = vmul.f32 %v615, %v1639
        %v2664 = vmul.f32 %v616, %v1640
        %v2665 = vmul.f32 %v617, %v1641
        %v2666 = vmul.f32 %v618, %v1642
        %v2667 = vmul.f32 %v619, %v1643
        %v2668 = vmul.f32 %v620, %v1644
        %v2669 = vmul.f32 %v621, %v1645
        %v2670 = vmul.f32 %v622, %v1646
        %v2671 = vmul.f32 %v623, %v1647
        %v2672 = vmul.f32 %v624, %v1648
        %v2673 = vmul.f32 %v625, %v1649
        %v2674 = vmul.f32 %v626, %v1650
        %v2675 = vmul.f32 %v627, %v1651
        %v2676 = vmul.f32 %v628, %v1652
        %v2677 = vmul.f32 %v629, %v1653
        %v2678 = vmul.f32 %v630, %v1654
        %v2679 = vmul.f32 %v631, %v1655
        %v2680 = vmul.f32 %v632, %v1656
        %v2681 = vmul.f32 %v633, %v1657
        %v2682 = vmul.f32 %v634, %v1658
        %v2683 = vmul.f32 %v635, %v1659
        %v2684 = vmul.f32 %v636, %v1660
        %v2685 = vmul.f32 %v637, %v1661
        %v2686 = vmul.f32 %v638, %v1662
        %v2687 = vmul.f32 %v639, %v1663
        %v2688 = vmul.f32 %v640, %v1664
        %v2689 = vmul.f32 %v641, %v1665
        %v2690 = vmul.f32 %v642, %v1666
        %v2691 = vmul.f32 %v643, %v1667
        %v2692 = vmul.f32 %v644, %v1668
        %v2693 = vmul.f32 %v645, %v1669
        %v2694 = vmul.f32 %v646, %v1670
        %v2695 = vmul.f32 %v647, %v1671
        %v2696 = vmul.f32 %v648, %v1672
        %v2697 = vmul.f32 %v649, %v1673
        %v2698 = vmul.f32 %v650, %v1674
        %v2699 = vmul.f32 %v651, %v1675
        %v2700 = vmul.f32 %v652, %v1676
        %v2701 = vmul.f32 %v653, %v1677
        %v2702 = vmul.f32 %v654, %v1678
        %v2703 = vmul.f32 %v655, %v1679
        %v2704 = vmul.f32 %v656, %v1680
        %v2705 = vmul.f32 %v657, %v1681
        %v2706 = vmul.f32 %v658, %v1682
        %v2707 = vmul.f32 %v659, %v1683
        %v2708 = vmul.f32 %v660, %v1684
        %v2709 = vmul.f32 %v661, %v1685
        %v2710 = vmul.f32 %v662, %v1686
        %v2711 = vmul.f32 %v663, %v1687
        %v2712 = vmul.f32 %v664, %v1688
        %v2713 = vmul.f32 %v665, %v1689
        %v2714 = vmul.f32 %v666, %v1690
        %v2715 = vmul.f32 %v667, %v1691
        %v2716 = vmul.f32 %v668, %v1692
        %v2717 = vmul.f32 %v669, %v1693
        %v2718 = vmul.f32 %v670, %v1694
        %v2719 = vmul.f32 %v671, %v1695
        %v2720 = vmul.f32 %v672, %v1696
        %v2721 = vmul.f32 %v673, %v1697
        %v2722 = vmul.f32 %v674, %v1698
        %v2723 = vmul.f32 %v675, %v1699
        %v2724 = vmul.f32 %v676, %v1700
        %v2725 = vmul.f32 %v677, %v1701
        %v2726 = vmul.f32 %v678, %v1702
        %v2727 = vmul.f32 %v679, %v1703
        %v2728 = vmul.f32 %v680, %v1704
        %v2729 = vmul.f32 %v681, %v1705
        %v2730 = vmul.f32 %v682, %v1706
        %v2731 = vmul.f32 %v683, %v1707
        %v2732 = vmul.f32 %v684, %v1708
        %v2733 = vmul.f32 %v685, %v1709
        %v2734 = vmul.f32 %v686, %v1710
        %v2735 = vmul.f32 %v687, %v1711
        %v2736 = vmul.f32 %v688, %v1712
        %v2737 = vmul.f32 %v689, %v1713
        %v2738 = vmul.f32 %v690, %v1714
        %v2739 = vmul.f32 %v691, %v1715
        %v2740 = vmul.f32 %v692, %v1716
        %v2741 = vmul.f32 %v693, %v1717
        %v2742 = vmul.f32 %v694, %v1718
        %v2743 = vmul.f32 %v695, %v1719
        %v2744 = vmul.f32 %v696, %v1720
        %v2745 = vmul.f32 %v697, %v1721
        %v2746 = vmul.f32 %v698, %v1722
        %v2747 = vmul.f32 %v699, %v1723
        %v2748 = vmul.f32 %v700, %v1724
        %v2749 = vmul.f32 %v701, %v1725
        %v2750 = vmul.f32 %v702, %v1726
        %v2751 = vmul.f32 %v703, %v1727
        %v2752 = vmul.f32 %v704, %v1728
        %v2753 = vmul.f32 %v705, %v1729
        %v2754 = vmul.f32 %v706, %v1730
        %v2755 = vmul.f32 %v707, %v1731
        %v2756 = vmul.f32 %v708, %v1732
        %v2757 = vmul.f32 %v709, %v1733
        %v2758 = vmul.f32 %v710, %v1734
        %v2759 = vmul.f32 %v711, %v1735
        %v2760 = vmul.f32 %v712, %v1736
        %v2761 = vmul.f32 %v713, %v1737
        %v2762 = vmul.f32 %v714, %v1738
        %v2763 = vmul.f32 %v715, %v1739
        %v2764 = vmul.f32 %v716, %v1740
        %v2765 = vmul.f32 %v717, %v1741
        %v2766 = vmul.f32 %v718, %v1742
        %v2767 = vmul.f32 %v719, %v1743
        %v2768 = vmul.f32 %v720, %v1744
        %v2769 = vmul.f32 %v721, %v1745
        %v2770 = vmul.f32 %v722, %v1746
        %v2771 = vmul.f32 %v723, %v1747
        %v2772 = vmul.f32 %v724, %v1748
        %v2773 = vmul.f32 %v725, %v1749
        %v2774 = vmul.f32 %v726, %v1750
        %v2775 = vmul.f32 %v727, %v1751
        %v2776 = vmul.f32 %v728, %v1752
        %v2777 = vmul.f32 %v729, %v1753
        %v2778 = vmul.f32 %v730, %v1754
        %v2779 = vmul.f32 %v731, %v1755
        %v2780 = vmul.f32 %v732, %v1756
        %v2781 = vmul.f32 %v733, %v1757
        %v2782 = vmul.f32 %v734, %v1758
        %v2783 = vmul.f32 %v735, %v1759
        %v2784 = vmul.f32 %v736, %v1760
        %v2785 = vmul.f32 %v737, %v1761
        %v2786 = vmul.f32 %v738, %v1762
        %v2787 = vmul.f32 %v739, %v1763
        %v2788 = vmul.f32 %v740, %v1764
        %v2789 = vmul.f32 %v741, %v1765
        %v2790 = vmul.f32 %v742, %v1766
        %v2791 = vmul.f32 %v743, %v1767
        %v2792 = vmul.f32 %v744, %v1768
        %v2793 = vmul.f32 %v745, %v1769
        %v2794 = vmul.f32 %v746, %v1770
        %v2795 = vmul.f32 %v747, %v1771
        %v2796 = vmul.f32 %v748, %v1772
        %v2797 = vmul.f32 %v749, %v1773
        %v2798 = vmul.f32 %v750, %v1774
        %v2799 = vmul.f32 %v751, %v1775
        %v2800 = vmul.f32 %v752, %v1776
        %v2801 = vmul.f32 %v753, %v1777
        %v2802 = vmul.f32 %v754, %v1778
        %v2803 = vmul.f32 %v755, %v1779
        %v2804 = vmul.f32 %v756, %v1780
        %v2805 = vmul.f32 %v757, %v1781
        %v2806 = vmul.f32 %v758, %v1782
        %v2807 = vmul.f32 %v759, %v1783
        %v2808 = vmul.f32 %v760, %v1784
        %v2809 = vmul.f32 %v761, %v1785
        %v2810 = vmul.f32 %v762, %v1786
        %v2811 = vmul.f32 %v763, %v1787
        %v2812 = vmul.f32 %v764, %v1788
        %v2813 = vmul.f32 %v765, %v1789
        %v2814 = vmul.f32 %v766, %v1790
        %v2815 = vmul.f32 %v767, %v1791
        %v2816 = vmul.f32 %v768, %v1792
        %v2817 = vmul.f32 %v769, %v1793
        %v2818 = vmul.f32 %v770, %v1794
        %v2819 = vmul.f32 %v771, %v1795
        %v2820 = vmul.f32 %v772, %v1796
        %v2821 = vmul.f32 %v773, %v1797
        %v2822 = vmul.f32 %v774, %v1798
        %v2823 = vmul.f32 %v775, %v1799
        %v2824 = vmul.f32 %v776, %v1800
        %v2825 = vmul.f32 %v777, %v1801
        %v2826 = vmul.f32 %v778, %v1802
        %v2827 = vmul.f32 %v779, %v1803
        %v2828 = vmul.f32 %v780, %v1804
        %v2829 = vmul.f32 %v781, %v1805
        %v2830 = vmul.f32 %v782, %v1806
        %v2831 = vmul.f32 %v783, %v1807
        %v2832 = vmul.f32 %v784, %v1808
        %v2833 = vmul.f32 %v785, %v1809
        %v2834 = vmul.f32 %v786, %v1810
        %v2835 = vmul.f32 %v787, %v1811
        %v2836 = vmul.f32 %v788, %v1812
        %v2837 = vmul.f32 %v789, %v1813
        %v2838 = vmul.f32 %v790, %v1814
        %v2839 = vmul.f32 %v791, %v1815
        %v2840 = vmul.f32 %v792, %v1816
        %v2841 = vmul.f32 %v793, %v1817
        %v2842 = vmul.f32 %v794, %v1818
        %v2843 = vmul.f32 %v795, %v1819
        %v2844 = vmul.f32 %v796, %v1820
        %v2845 = vmul.f32 %v797, %v1821
        %v2846 = vmul.f32 %v798, %v1822
        %v2847 = vmul.f32 %v799, %v1823
        %v2848 = vmul.f32 %v800, %v1824
        %v2849 = vmul.f32 %v801, %v1825
        %v2850 = vmul.f32 %v802, %v1826
        %v2851 = vmul.f32 %v803, %v1827
        %v2852 = vmul.f32 %v804, %v1828
        %v2853 = vmul.f32 %v805, %v1829
        %v2854 = vmul.f32 %v806, %v1830
        %v2855 = vmul.f32 %v807, %v1831
        %v2856 = vmul.f32 %v808, %v1832
        %v2857 = vmul.f32 %v809, %v1833
        %v2858 = vmul.f32 %v810, %v1834
        %v2859 = vmul.f32 %v811, %v1835
        %v2860 = vmul.f32 %v812, %v1836
        %v2861 = vmul.f32 %v813, %v1837
        %v2862 = vmul.f32 %v814, %v1838
        %v2863 = vmul.f32 %v815, %v1839
        %v2864 = vmul.f32 %v816, %v1840
        %v2865 = vmul.f32 %v817, %v1841
        %v2866 = vmul.f32 %v818, %v1842
        %v2867 = vmul.f32 %v819, %v1843
        %v2868 = vmul.f32 %v820, %v1844
        %v2869 = vmul.f32 %v821, %v1845
        %v2870 = vmul.f32 %v822, %v1846
        %v2871 = vmul.f32 %v823, %v1847
        %v2872 = vmul.f32 %v824, %v1848
        %v2873 = vmul.f32 %v825, %v1849
        %v2874 = vmul.f32 %v826, %v1850
        %v2875 = vmul.f32 %v827, %v1851
        %v2876 = vmul.f32 %v828, %v1852
        %v2877 = vmul.f32 %v829, %v1853
        %v2878 = vmul.f32 %v830, %v1854
        %v2879 = vmul.f32 %v831, %v1855
        %v2880 = vmul.f32 %v832, %v1856
        %v2881 = vmul.f32 %v833, %v1857
        %v2882 = vmul.f32 %v834, %v1858
        %v2883 = vmul.f32 %v835, %v1859
        %v2884 = vmul.f32 %v836, %v1860
        %v2885 = vmul.f32 %v837, %v1861
        %v2886 = vmul.f32 %v838, %v1862
        %v2887 = vmul.f32 %v839, %v1863
        %v2888 = vmul.f32 %v840, %v1864
        %v2889 = vmul.f32 %v841, %v1865
        %v2890 = vmul.f32 %v842, %v1866
        %v2891 = vmul.f32 %v843, %v1867
        %v2892 = vmul.f32 %v844, %v1868
        %v2893 = vmul.f32 %v845, %v1869
        %v2894 = vmul.f32 %v846, %v1870
        %v2895 = vmul.f32 %v847, %v1871
        %v2896 = vmul.f32 %v848, %v1872
        %v2897 = vmul.f32 %v849, %v1873
        %v2898 = vmul.f32 %v850, %v1874
        %v2899 = vmul.f32 %v851, %v1875
        %v2900 = vmul.f32 %v852, %v1876
        %v2901 = vmul.f32 %v853, %v1877
        %v2902 = vmul.f32 %v854, %v1878
        %v2903 = vmul.f32 %v855, %v1879
        %v2904 = vmul.f32 %v856, %v1880
        %v2905 = vmul.f32 %v857, %v1881
        %v2906 = vmul.f32 %v858, %v1882
        %v2907 = vmul.f32 %v859, %v1883
        %v2908 = vmul.f32 %v860, %v1884
        %v2909 = vmul.f32 %v861, %v1885
        %v2910 = vmul.f32 %v862, %v1886
        %v2911 = vmul.f32 %v863, %v1887
        %v2912 = vmul.f32 %v864, %v1888
        %v2913 = vmul.f32 %v865, %v1889
        %v2914 = vmul.f32 %v866, %v1890
        %v2915 = vmul.f32 %v867, %v1891
        %v2916 = vmul.f32 %v868, %v1892
        %v2917 = vmul.f32 %v869, %v1893
        %v2918 = vmul.f32 %v870, %v1894
        %v2919 = vmul.f32 %v871, %v1895
        %v2920 = vmul.f32 %v872, %v1896
        %v2921 = vmul.f32 %v873, %v1897
        %v2922 = vmul.f32 %v874, %v1898
        %v2923 = vmul.f32 %v875, %v1899
        %v2924 = vmul.f32 %v876, %v1900
        %v2925 = vmul.f32 %v877, %v1901
        %v2926 = vmul.f32 %v878, %v1902
        %v2927 = vmul.f32 %v879, %v1903
        %v2928 = vmul.f32 %v880, %v1904
        %v2929 = vmul.f32 %v881, %v1905
        %v2930 = vmul.f32 %v882, %v1906
        %v2931 = vmul.f32 %v883, %v1907
        %v2932 = vmul.f32 %v884, %v1908
        %v2933 = vmul.f32 %v885, %v1909
        %v2934 = vmul.f32 %v886, %v1910
        %v2935 = vmul.f32 %v887, %v1911
        %v2936 = vmul.f32 %v888, %v1912
        %v2937 = vmul.f32 %v889, %v1913
        %v2938 = vmul.f32 %v890, %v1914
        %v2939 = vmul.f32 %v891, %v1915
        %v2940 = vmul.f32 %v892, %v1916
        %v2941 = vmul.f32 %v893, %v1917
        %v2942 = vmul.f32 %v894, %v1918
        %v2943 = vmul.f32 %v895, %v1919
        %v2944 = vmul.f32 %v896, %v1920
        %v2945 = vmul.f32 %v897, %v1921
        %v2946 = vmul.f32 %v898, %v1922
        %v2947 = vmul.f32 %v899, %v1923
        %v2948 = vmul.f32 %v900, %v1924
        %v2949 = vmul.f32 %v901, %v1925
        %v2950 = vmul.f32 %v902, %v1926
        %v2951 = vmul.f32 %v903, %v1927
        %v2952 = vmul.f32 %v904, %v1928
        %v2953 = vmul.f32 %v905, %v1929
        %v2954 = vmul.f32 %v906, %v1930
        %v2955 = vmul.f32 %v907, %v1931
        %v2956 = vmul.f32 %v908, %v1932
        %v2957 = vmul.f32 %v909, %v1933
        %v2958 = vmul.f32 %v910, %v1934
        %v2959 = vmul.f32 %v911, %v1935
        %v2960 = vmul.f32 %v912, %v1936
        %v2961 = vmul.f32 %v913, %v1937
        %v2962 = vmul.f32 %v914, %v1938
        %v2963 = vmul.f32 %v915, %v1939
        %v2964 = vmul.f32 %v916, %v1940
        %v2965 = vmul.f32 %v917, %v1941
        %v2966 = vmul.f32 %v918, %v1942
        %v2967 = vmul.f32 %v919, %v1943
        %v2968 = vmul.f32 %v920, %v1944
        %v2969 = vmul.f32 %v921, %v1945
        %v2970 = vmul.f32 %v922, %v1946
        %v2971 = vmul.f32 %v923, %v1947
        %v2972 = vmul.f32 %v924, %v1948
        %v2973 = vmul.f32 %v925, %v1949
        %v2974 = vmul.f32 %v926, %v1950
        %v2975 = vmul.f32 %v927, %v1951
        %v2976 = vmul.f32 %v928, %v1952
        %v2977 = vmul.f32 %v929, %v1953
        %v2978 = vmul.f32 %v930, %v1954
        %v2979 = vmul.f32 %v931, %v1955
        %v2980 = vmul.f32 %v932, %v1956
        %v2981 = vmul.f32 %v933, %v1957
        %v2982 = vmul.f32 %v934, %v1958
        %v2983 = vmul.f32 %v935, %v1959
        %v2984 = vmul.f32 %v936, %v1960
        %v2985 = vmul.f32 %v937, %v1961
        %v2986 = vmul.f32 %v938, %v1962
        %v2987 = vmul.f32 %v939, %v1963
        %v2988 = vmul.f32 %v940, %v1964
        %v2989 = vmul.f32 %v941, %v1965
        %v2990 = vmul.f32 %v942, %v1966
        %v2991 = vmul.f32 %v943, %v1967
        %v2992 = vmul.f32 %v944, %v1968
        %v2993 = vmul.f32 %v945, %v1969
        %v2994 = vmul.f32 %v946, %v1970
        %v2995 = vmul.f32 %v947, %v1971
        %v2996 = vmul.f32 %v948, %v1972
        %v2997 = vmul.f32 %v949, %v1973
        %v2998 = vmul.f32 %v950, %v1974
        %v2999 = vmul.f32 %v951, %v1975
        %v3000 = vmul.f32 %v952, %v1976
        %v3001 = vmul.f32 %v953, %v1977
        %v3002 = vmul.f32 %v954, %v1978
        %v3003 = vmul.f32 %v955, %v1979
        %v3004 = vmul.f32 %v956, %v1980
        %v3005 = vmul.f32 %v957, %v1981
        %v3006 = vmul.f32 %v958, %v1982
        %v3007 = vmul.f32 %v959, %v1983
        %v3008 = vmul.f32 %v960, %v1984
        %v3009 = vmul.f32 %v961, %v1985
        %v3010 = vmul.f32 %v962, %v1986
        %v3011 = vmul.f32 %v963, %v1987
        %v3012 = vmul.f32 %v964, %v1988
        %v3013 = vmul.f32 %v965, %v1989
        %v3014 = vmul.f32 %v966, %v1990
        %v3015 = vmul.f32 %v967, %v1991
        %v3016 = vmul.f32 %v968, %v1992
        %v3017 = vmul.f32 %v969, %v1993
        %v3018 = vmul.f32 %v970, %v1994
        %v3019 = vmul.f32 %v971, %v1995
        %v3020 = vmul.f32 %v972, %v1996
        %v3021 = vmul.f32 %v973, %v1997
        %v3022 = vmul.f32 %v974, %v1998
        %v3023 = vmul.f32 %v975, %v1999
        %v3024 = vmul.f32 %v976, %v2000
        %v3025 = vmul.f32 %v977, %v2001
        %v3026 = vmul.f32 %v978, %v2002
        %v3027 = vmul.f32 %v979, %v2003
        %v3028 = vmul.f32 %v980, %v2004
        %v3029 = vmul.f32 %v981, %v2005
        %v3030 = vmul.f32 %v982, %v2006
        %v3031 = vmul.f32 %v983, %v2007
        %v3032 = vmul.f32 %v984, %v2008
        %v3033 = vmul.f32 %v985, %v2009
        %v3034 = vmul.f32 %v986, %v2010
        %v3035 = vmul.f32 %v987, %v2011
        %v3036 = vmul.f32 %v988, %v2012
        %v3037 = vmul.f32 %v989, %v2013
        %v3038 = vmul.f32 %v990, %v2014
        %v3039 = vmul.f32 %v991, %v2015
        %v3040 = vmul.f32 %v992, %v2016
        %v3041 = vmul.f32 %v993, %v2017
        %v3042 = vmul.f32 %v994, %v2018
        %v3043 = vmul.f32 %v995, %v2019
        %v3044 = vmul.f32 %v996, %v2020
        %v3045 = vmul.f32 %v997, %v2021
        %v3046 = vmul.f32 %v998, %v2022
        %v3047 = vmul.f32 %v999, %v2023
        %v3048 = vmul.f32 %v1000, %v2024
        %v3049 = vmul.f32 %v1001, %v2025
        %v3050 = vmul.f32 %v1002, %v2026
        %v3051 = vmul.f32 %v1003, %v2027
        %v3052 = vmul.f32 %v1004, %v2028
        %v3053 = vmul.f32 %v1005, %v2029
        %v3054 = vmul.f32 %v1006, %v2030
        %v3055 = vmul.f32 %v1007, %v2031
        %v3056 = vmul.f32 %v1008, %v2032
        %v3057 = vmul.f32 %v1009, %v2033
        %v3058 = vmul.f32 %v1010, %v2034
        %v3059 = vmul.f32 %v1011, %v2035
        %v3060 = vmul.f32 %v1012, %v2036
        %v3061 = vmul.f32 %v1013, %v2037
        %v3062 = vmul.f32 %v1014, %v2038
        %v3063 = vmul.f32 %v1015, %v2039
        %v3064 = vmul.f32 %v1016, %v2040
        %v3065 = vmul.f32 %v1017, %v2041
        %v3066 = vmul.f32 %v1018, %v2042
        %v3067 = vmul.f32 %v1019, %v2043
        %v3068 = vmul.f32 %v1020, %v2044
        %v3069 = vmul.f32 %v1021, %v2045
        %v3070 = vmul.f32 %v1022, %v2046
        %v3071 = vmul.f32 %v1023, %v2047
        %v3072 = vmul.f32 %v1024, %v2048
        %v3073 = vmul.f32 %v1025, %v2049
        %v3074 = vmul.f32 %v1026, %v2050
        %v3075 = vmul.f32 %v1027, %v2051
        %v3076 = vmul.f32 %v1028, %v2052
        %v3077 = vmul.f32 %v1029, %v2053
        %v3078 = vmul.f32 %v1030, %v2054
        %v3079 = vmul.f32 %v1031, %v2055
        %v3080 = vmul.f32 %v1032, %v2056
        %v3081 = vmul.f32 %v1033, %v2057
        %v3082 = vmul.f32 %v1034, %v2058
        %v3083 = vmul.f32 %v1035, %v2059
        %v3084 = vmul.f32 %v1036, %v2060
        %v3085 = vmul.f32 %v1037, %v2061
        %v3086 = vmul.f32 %v1038, %v2062
        %v3087 = vmul.f32 %v1039, %v2063
        %v3088 = vmul.f32 %v1040, %v2064
        %v3089 = vmul.f32 %v1041, %v2065
        %v3090 = vmul.f32 %v1042, %v2066
        %v3091 = vmul.f32 %v1043, %v2067
        %v3092 = vmul.f32 %v1044, %v2068
        %v3093 = vmul.f32 %v1045, %v2069
        %v3094 = vmul.f32 %v1046, %v2070
        %v3095 = vmul.f32 %v1047, %v2071
        %v3096 = vmul.f32 %v1048, %v2072
        %v3097 = vmul.f32 %v1049, %v2073
        %v3098 = vmul.f32 %v1050, %v2074
        %v3099 = vmul.f32 %v1051, %v2075
        %v3100 = vmul.f32 %v1052, %v2076
        %v3101 = vmul.f32 %v1053, %v2077
        %v3102 = vmul.f32 %v1054, %v2078
        %v3103 = vmul.f32 %v1055, %v2079
        %v3104 = vmul.f32 %v1056, %v2080
        %v3105 = vmul.f32 %v1057, %v2081
        %v3106 = vmul.f32 %v1058, %v2082
        %v3107 = vmul.f32 %v1059, %v2083
        %v3108 = vmul.f32 %v1060, %v2084
        %v3109 = vmul.f32 %v1061, %v2085
        %v3110 = vmul.f32 %v1062, %v2086
        %v3111 = vmul.f32 %v1063, %v2087
        %v3112 = vmul.f32 %v1064, %v2088
        %v3113 = vmul.f32 %v1065, %v2089
        %v3114 = vmul.f32 %v1066, %v2090
        %v3115 = vmul.f32 %v1067, %v2091
        %v3116 = vmul.f32 %v1068, %v2092
        %v3117 = vmul.f32 %v1069, %v2093
        %v3118 = vmul.f32 %v1070, %v2094
        %v3119 = vmul.f32 %v1071, %v2095
        %v3120 = vmul.f32 %v1072, %v2096
        %v3121 = vmul.f32 %v1073, %v2097
        %v3122 = vmul.f32 %v1074, %v2098
        %v3123 = vmul.f32 %v1075, %v2099
        %v3124 = vmul.f32 %v1076, %v2100
        %v3125 = vmul.f32 %v1077, %v2101
        %v3126 = vmul.f32 %v1078, %v2102
        %v3127 = vmul.f32 %v1079, %v2103
        %v3128 = vmul.f32 %v1080, %v2104
        %v3129 = vmul.f32 %v1081, %v2105
        %v3130 = vmul.f32 %v1082, %v2106
        %v3131 = vmul.f32 %v1083, %v2107
        %v3132 = vmul.f32 %v1084, %v2108
        %v3133 = vmul.f32 %v1085, %v2109
        %v3134 = vmul.f32 %v1086, %v2110
        %v3135 = vmul.f32 %v1087, %v2111
        %v3136 = vmul.f32 %v1088, %v2112
        %v3137 = vmul.f32 %v1089, %v2113
        %v3138 = vmul.f32 %v1090, %v2114
        %v3139 = vmul.f32 %v1091, %v2115
        %v3140 = vmul.f32 %v1092, %v2116
        %v3141 = vmul.f32 %v1093, %v2117
        %v3142 = vmul.f32 %v1094, %v2118
        %v3143 = vmul.f32 %v1095, %v2119
        %v3144 = vmul.f32 %v1096, %v2120
        %v3145 = vmul.f32 %v1097, %v2121
        %v3146 = vmul.f32 %v1098, %v2122
        %v3147 = vmul.f32 %v1099, %v2123
        %v3148 = vmul.f32 %v1100, %v2124
        %v3149 = vmul.f32 %v1101, %v2125
        %v3150 = vmul.f32 %v1102, %v2126
        %v3151 = vmul.f32 %v1103, %v2127
        %v3152 = vmul.f32 %v1104, %v2128
        %v3153 = vmul.f32 %v1105, %v2129
        %v3154 = vmul.f32 %v1106, %v2130
        %v3155 = vmul.f32 %v1107, %v2131
        %v3156 = vmul.f32 %v1108, %v2132
        %v3157 = vmul.f32 %v1109, %v2133
        %v3158 = vmul.f32 %v1110, %v2134
        %v3159 = vmul.f32 %v1111, %v2135
        %v3160 = vmul.f32 %v1112, %v2136
        %v3161 = vmul.f32 %v1113, %v2137
        %v3162 = vmul.f32 %v1114, %v2138
        %v3163 = vmul.f32 %v1115, %v2139
        %v3164 = vmul.f32 %v1116, %v2140
        %v3165 = vmul.f32 %v1117, %v2141
        %v3166 = vmul.f32 %v1118, %v2142
        %v3167 = vmul.f32 %v1119, %v2143
        %v3168 = vmul.f32 %v1120, %v2144
        %v3169 = vmul.f32 %v1121, %v2145
        %v3170 = vmul.f32 %v1122, %v2146
        %v3171 = vmul.f32 %v1123, %v2147
        %v3172 = vmul.f32 %v1124, %v2148
        %v3173 = vmul.f32 %v1125, %v2149
        %v3174 = vmul.f32 %v1126, %v2150
        %v3175 = vmul.f32 %v1127, %v2151
        %v3176 = vmul.f32 %v1128, %v2152
        %v3177 = vmul.f32 %v1129, %v2153
        %v3178 = vmul.f32 %v1130, %v2154
        %v3179 = vmul.f32 %v1131, %v2155
        %v3180 = vmul.f32 %v1132, %v2156
        %v3181 = vmul.f32 %v1133, %v2157
        %v3182 = vmul.f32 %v1134, %v2158
        %v3183 = vmul.f32 %v1135, %v2159
        %v3184 = vmul.f32 %v1136, %v2160
        %v3185 = vmul.f32 %v1137, %v2161
        %v3186 = vmul.f32 %v1138, %v2162
        %v3187 = vmul.f32 %v1139, %v2163
        %v3188 = vmul.f32 %v1140, %v2164
        %v3189 = vmul.f32 %v1141, %v2165
        %v3190 = vmul.f32 %v1142, %v2166
        %v3191 = vmul.f32 %v1143, %v2167
        %v3192 = vmul.f32 %v1144, %v2168
        %v3193 = vmul.f32 %v1145, %v2169
        %v3194 = vmul.f32 %v1146, %v2170
        %v3195 = vmul.f32 %v1147, %v2171
        %v3196 = vmul.f32 %v1148, %v2172
        %v3197 = vmul.f32 %v1149, %v2173
        %v3198 = vmul.f32 %v1150, %v2174
        %v3199 = vmul.f32 %v1151, %v2175
        %v3200 = vmul.f32 %v1152, %v2176
        %v3201 = vmul.f32 %v1153, %v2177
        %v3202 = vmul.f32 %v1154, %v2178
        %v3203 = vmul.f32 %v1155, %v2179
        %v3204 = vmul.f32 %v1156, %v2180
        %v3205 = vmul.f32 %v1157, %v2181
        %v3206 = vmul.f32 %v1158, %v2182
        %v3207 = vmul.f32 %v1159, %v2183
        %v3208 = vmul.f32 %v1160, %v2184
        %v3209 = vmul.f32 %v1161, %v2185
        %v3210 = vmul.f32 %v1162, %v2186
        %v3211 = vmul.f32 %v1163, %v2187
        %v3212 = vmul.f32 %v1164, %v2188
        %v3213 = vmul.f32 %v1165, %v2189
        %v3214 = vmul.f32 %v1166, %v2190
        %v3215 = vmul.f32 %v1167, %v2191
        %v3216 = vmul.f32 %v1168, %v2192
        %v3217 = vmul.f32 %v1169, %v2193
        %v3218 = vmul.f32 %v1170, %v2194
        %v3219 = vmul.f32 %v1171, %v2195
        %v3220 = vmul.f32 %v1172, %v2196
        %v3221 = vmul.f32 %v1173, %v2197
        %v3222 = vmul.f32 %v1174, %v2198
        %v3223 = vmul.f32 %v1175, %v2199
        %v3224 = vmul.f32 %v1176, %v2200
        %v3225 = vmul.f32 %v1177, %v2201
        %v3226 = vmul.f32 %v1178, %v2202
        %v3227 = vmul.f32 %v1179, %v2203
        %v3228 = vmul.f32 %v1180, %v2204
        %v3229 = vmul.f32 %v1181, %v2205
        %v3230 = vmul.f32 %v1182, %v2206
        %v3231 = vmul.f32 %v1183, %v2207
        %v3232 = vmul.f32 %v1184, %v2208
        %v3233 = vmul.f32 %v1185, %v2209
        %v3234 = vmul.f32 %v1186, %v2210
        %v3235 = vmul.f32 %v1187, %v2211
        %v3236 = vmul.f32 %v1188, %v2212
        %v3237 = vmul.f32 %v1189, %v2213
        %v3238 = vmul.f32 %v1190, %v2214
        %v3239 = vmul.f32 %v1191, %v2215
        %v3240 = vmul.f32 %v1192, %v2216
        %v3241 = vmul.f32 %v1193, %v2217
        %v3242 = vmul.f32 %v1194, %v2218
        %v3243 = vmul.f32 %v1195, %v2219
        %v3244 = vmul.f32 %v1196, %v2220
        %v3245 = vmul.f32 %v1197, %v2221
        %v3246 = vmul.f32 %v1198, %v2222
        %v3247 = vmul.f32 %v1199, %v2223
        %v3248 = vmul.f32 %v1200, %v2224
        %v3249 = vmul.f32 %v1201, %v2225
        %v3250 = vmul.f32 %v1202, %v2226
        %v3251 = vmul.f32 %v1203, %v2227
        %v3252 = vmul.f32 %v1204, %v2228
        %v3253 = vmul.f32 %v1205, %v2229
        %v3254 = vmul.f32 %v1206, %v2230
        %v3255 = vmul.f32 %v1207, %v2231
        %v3256 = vmul.f32 %v1208, %v2232
        %v3257 = vmul.f32 %v1209, %v2233
        %v3258 = vmul.f32 %v1210, %v2234
        %v3259 = vmul.f32 %v1211, %v2235
        %v3260 = vmul.f32 %v1212, %v2236
        %v3261 = vmul.f32 %v1213, %v2237
        %v3262 = vmul.f32 %v1214, %v2238
        %v3263 = vmul.f32 %v1215, %v2239
        %v3264 = vmul.f32 %v1216, %v2240
        %v3265 = vmul.f32 %v1217, %v2241
        %v3266 = vmul.f32 %v1218, %v2242
        %v3267 = vmul.f32 %v1219, %v2243
        %v3268 = vmul.f32 %v1220, %v2244
        %v3269 = vmul.f32 %v1221, %v2245
        %v3270 = vmul.f32 %v1222, %v2246
        %v3271 = vmul.f32 %v1223, %v2247
        %v3272 = vmul.f32 %v1224, %v2248
        %v3273 = vmul.f32 %v1225, %v2249
        %v3274 = vmul.f32 %v1226, %v2250
        %v3275 = vmul.f32 %v1227, %v2251
        %v3276 = vmul.f32 %v1228, %v2252
        %v3277 = vmul.f32 %v1229, %v2253
        %v3278 = vmul.f32 %v1230, %v2254
        %v3279 = vmul.f32 %v1231, %v2255
        %v3280 = vmul.f32 %v1232, %v2256
        %v3281 = vmul.f32 %v1233, %v2257
        %v3282 = vmul.f32 %v1234, %v2258
        %v3283 = vmul.f32 %v1235, %v2259
        %v3284 = vmul.f32 %v1236, %v2260
        %v3285 = vmul.f32 %v1237, %v2261
        %v3286 = vmul.f32 %v1238, %v2262
        %v3287 = vmul.f32 %v1239, %v2263
        %v3288 = vmul.f32 %v1240, %v2264
        %v3289 = vmul.f32 %v1241, %v2265
        %v3290 = vmul.f32 %v1242, %v2266
        %v3291 = vmul.f32 %v1243, %v2267
        %v3292 = vmul.f32 %v1244, %v2268
        %v3293 = vmul.f32 %v1245, %v2269
        %v3294 = vmul.f32 %v1246, %v2270
        %v3295 = vmul.f32 %v1247, %v2271
        %v3296 = vmul.f32 %v1248, %v2272
        %v3297 = vmul.f32 %v1249, %v2273
        %v3298 = vmul.f32 %v1250, %v2274
        %v3299 = vmul.f32 %v1251, %v2275
        %v3300 = vmul.f32 %v1252, %v2276
        %v3301 = vmul.f32 %v1253, %v2277
        %v3302 = vmul.f32 %v1254, %v2278
        %v3303 = vmul.f32 %v1255, %v2279
        %v3304 = vmul.f32 %v1256, %v2280
        %v3305 = vmul.f32 %v1257, %v2281
        %v3306 = vmul.f32 %v1258, %v2282
        %v3307 = vmul.f32 %v1259, %v2283
        %v3308 = vmul.f32 %v1260, %v2284
        %v3309 = vmul.f32 %v1261, %v2285
        %v3310 = vmul.f32 %v1262, %v2286
        %v3311 = vmul.f32 %v1263, %v2287
        %v3312 = vmul.f32 %v1264, %v2288
        %v3313 = vmul.f32 %v1265, %v2289
        %v3314 = vmul.f32 %v1266, %v2290
        %v3315 = vmul.f32 %v1267, %v2291
        %v3316 = vmul.f32 %v1268, %v2292
        %v3317 = vmul.f32 %v1269, %v2293
        %v3318 = vmul.f32 %v1270, %v2294
        %v3319 = vmul.f32 %v1271, %v2295
        %v3320 = vmul.f32 %v1272, %v2296
        %v3321 = vmul.f32 %v1273, %v2297
        %v3322 = vmul.f32 %v1274, %v2298
        %v3323 = vmul.f32 %v1275, %v2299
        %v3324 = vmul.f32 %v1276, %v2300
        %v3325 = vmul.f32 %v1277, %v2301
        %v3326 = vmul.f32 %v1278, %v2302
        %v3327 = vmul.f32 %v1279, %v2303
        %v3328 = vmul.f32 %v1280, %v2304
        %v3329 = vmul.f32 %v1281, %v2305
        %v3330 = vmul.f32 %v1282, %v2306
        %v3331 = vmul.f32 %v1283, %v2307
        %v3332 = vmul.f32 %v1284, %v2308
        %v3333 = vmul.f32 %v1285, %v2309
        %v3334 = vmul.f32 %v1286, %v2310
        %v3335 = vmul.f32 %v1287, %v2311
        %v3336 = vmul.f32 %v1288, %v2312
        %v3337 = vmul.f32 %v1289, %v2313
        %v3338 = vmul.f32 %v1290, %v2314
        %v3339 = vmul.f32 %v1291, %v2315
        %v3340 = vmul.f32 %v1292, %v2316
        %v3341 = vmul.f32 %v1293, %v2317
        %v3342 = vmul.f32 %v1294, %v2318
        %v3343 = vmul.f32 %v1295, %v2319
        %v3344 = vmul.f32 %v1296, %v2320
        %v3345 = vmul.f32 %v1297, %v2321
        %v3346 = vmul.f32 %v1298, %v2322
        %v3347 = vmul.f32 %v1299, %v2323
        %v3348 = vmul.f32 %v1300, %v2324
        %v3349 = vmul.f32 %v1301, %v2325
        %v3350 = vmul.f32 %v1302, %v2326
        %s3351 = smul.u32 %s23, 2
        %s3352 = sadd.s32 %s3351, %s24
        %s3353 = sadd.s32 %s3352, 1
        %s3354 = smul.u32 %s3353, 8192
        %p3355 = scmp.gt.s32.totalorder %s3354, 10000
        %p3356 = scmp.le.s32.totalorder %s3354, 10000
        // Predicated region
        $region41: #{euclidean_metric_forward.1} parent=27 // pred_check
          %p3357 = pneg %p3356
        $region42: #{euclidean_metric_forward.1} parent=27 // pred_check_branch
          %3359 = sbr.rel (%p3357) target = $region44
        $region43: #{euclidean_metric_forward.1} parent=27 // pred_region
          %v3360 = vld [vmem:[#allocation2] sm:$0xff]
          %v3361 = vadd.f32 %v2327, %v2328
          %v3362 = vadd.f32 %v3361, %v2329
          %v3363 = vadd.f32 %v3362, %v2330
          %v3364 = vadd.f32 %v3363, %v2331
          %v3365 = vadd.f32 %v3364, %v2332
          %v3366 = vadd.f32 %v3365, %v2333
          %v3367 = vadd.f32 %v3366, %v2334
          %v3368 = vadd.f32 %v3367, %v2335
          %v3369 = vadd.f32 %v3368, %v2336
          %v3370 = vadd.f32 %v3369, %v2337
          %v3371 = vadd.f32 %v3370, %v2338
          %v3372 = vadd.f32 %v3371, %v2339
          %v3373 = vadd.f32 %v3372, %v2340
          %v3374 = vadd.f32 %v3373, %v2341
          %v3375 = vadd.f32 %v3374, %v2342
          %v3376 = vadd.f32 %v3375, %v2343
          %v3377 = vadd.f32 %v3376, %v2344
          %v3378 = vadd.f32 %v3377, %v2345
          %v3379 = vadd.f32 %v3378, %v2346
          %v3380 = vadd.f32 %v3379, %v2347
          %v3381 = vadd.f32 %v3380, %v2348
          %v3382 = vadd.f32 %v3381, %v2349
          %v3383 = vadd.f32 %v3382, %v2350
          %v3384 = vadd.f32 %v3383, %v2351
          %v3385 = vadd.f32 %v3384, %v2352
          %v3386 = vadd.f32 %v3385, %v2353
          %v3387 = vadd.f32 %v3386, %v2354
          %v3388 = vadd.f32 %v3387, %v2355
          %v3389 = vadd.f32 %v3388, %v2356
          %v3390 = vadd.f32 %v3389, %v2357
          %v3391 = vadd.f32 %v3390, %v2358
          %v3392 = vadd.f32 %v3391, %v2359
          %v3393 = vadd.f32 %v3392, %v2360
          %v3394 = vadd.f32 %v3393, %v2361
          %v3395 = vadd.f32 %v3394, %v2362
          %v3396 = vadd.f32 %v3395, %v2363
          %v3397 = vadd.f32 %v3396, %v2364
          %v3398 = vadd.f32 %v3397, %v2365
          %v3399 = vadd.f32 %v3398, %v2366
          %v3400 = vadd.f32 %v3399, %v2367
          %v3401 = vadd.f32 %v3400, %v2368
          %v3402 = vadd.f32 %v3401, %v2369
          %v3403 = vadd.f32 %v3402, %v2370
          %v3404 = vadd.f32 %v3403, %v2371
          %v3405 = vadd.f32 %v3404, %v2372
          %v3406 = vadd.f32 %v3405, %v2373
          %v3407 = vadd.f32 %v3406, %v2374
          %v3408 = vadd.f32 %v3407, %v2375
          %v3409 = vadd.f32 %v3408, %v2376
          %v3410 = vadd.f32 %v3409, %v2377
          %v3411 = vadd.f32 %v3410, %v2378
          %v3412 = vadd.f32 %v3411, %v2379
          %v3413 = vadd.f32 %v3412, %v2380
          %v3414 = vadd.f32 %v3413, %v2381
          %v3415 = vadd.f32 %v3414, %v2382
          %v3416 = vadd.f32 %v3415, %v2383
          %v3417 = vadd.f32 %v3416, %v2384
          %v3418 = vadd.f32 %v3417, %v2385
          %v3419 = vadd.f32 %v3418, %v2386
          %v3420 = vadd.f32 %v3419, %v2387
          %v3421 = vadd.f32 %v3420, %v2388
          %v3422 = vadd.f32 %v3421, %v2389
          %v3423 = vadd.f32 %v3422, %v2390
          %v3424 = vadd.f32 %v3423, %v2391
          %v3425 = vadd.f32 %v3424, %v2392
          %v3426 = vadd.f32 %v3425, %v2393
          %v3427 = vadd.f32 %v3426, %v2394
          %v3428 = vadd.f32 %v3427, %v2395
          %v3429 = vadd.f32 %v3428, %v2396
          %v3430 = vadd.f32 %v3429, %v2397
          %v3431 = vadd.f32 %v3430, %v2398
          %v3432 = vadd.f32 %v3431, %v2399
          %v3433 = vadd.f32 %v3432, %v2400
          %v3434 = vadd.f32 %v3433, %v2401
          %v3435 = vadd.f32 %v3434, %v2402
          %v3436 = vadd.f32 %v3435, %v2403
          %v3437 = vadd.f32 %v3436, %v2404
          %v3438 = vadd.f32 %v3437, %v2405
          %v3439 = vadd.f32 %v3438, %v2406
          %v3440 = vadd.f32 %v3439, %v2407
          %v3441 = vadd.f32 %v3440, %v2408
          %v3442 = vadd.f32 %v3441, %v2409
          %v3443 = vadd.f32 %v3442, %v2410
          %v3444 = vadd.f32 %v3443, %v2411
          %v3445 = vadd.f32 %v3444, %v2412
          %v3446 = vadd.f32 %v3445, %v2413
          %v3447 = vadd.f32 %v3446, %v2414
          %v3448 = vadd.f32 %v3447, %v2415
          %v3449 = vadd.f32 %v3448, %v2416
          %v3450 = vadd.f32 %v3449, %v2417
          %v3451 = vadd.f32 %v3450, %v2418
          %v3452 = vadd.f32 %v3451, %v2419
          %v3453 = vadd.f32 %v3452, %v2420
          %v3454 = vadd.f32 %v3453, %v2421
          %v3455 = vadd.f32 %v3454, %v2422
          %v3456 = vadd.f32 %v3455, %v2423
          %v3457 = vadd.f32 %v3456, %v2424
          %v3458 = vadd.f32 %v3457, %v2425
          %v3459 = vadd.f32 %v3458, %v2426
          %v3460 = vadd.f32 %v3459, %v2427
          %v3461 = vadd.f32 %v3460, %v2428
          %v3462 = vadd.f32 %v3461, %v2429
          %v3463 = vadd.f32 %v3462, %v2430
          %v3464 = vadd.f32 %v3463, %v2431
          %v3465 = vadd.f32 %v3464, %v2432
          %v3466 = vadd.f32 %v3465, %v2433
          %v3467 = vadd.f32 %v3466, %v2434
          %v3468 = vadd.f32 %v3467, %v2435
          %v3469 = vadd.f32 %v3468, %v2436
          %v3470 = vadd.f32 %v3469, %v2437
          %v3471 = vadd.f32 %v3470, %v2438
          %v3472 = vadd.f32 %v3471, %v2439
          %v3473 = vadd.f32 %v3472, %v2440
          %v3474 = vadd.f32 %v3473, %v2441
          %v3475 = vadd.f32 %v3474, %v2442
          %v3476 = vadd.f32 %v3475, %v2443
          %v3477 = vadd.f32 %v3476, %v2444
          %v3478 = vadd.f32 %v3477, %v2445
          %v3479 = vadd.f32 %v3478, %v2446
          %v3480 = vadd.f32 %v3479, %v2447
          %v3481 = vadd.f32 %v3480, %v2448
          %v3482 = vadd.f32 %v3481, %v2449
          %v3483 = vadd.f32 %v3482, %v2450
          %v3484 = vadd.f32 %v3483, %v2451
          %v3485 = vadd.f32 %v3484, %v2452
          %v3486 = vadd.f32 %v3485, %v2453
          %v3487 = vadd.f32 %v3486, %v2454
          %v3488 = vadd.f32 %v3487, %v2455
          %v3489 = vadd.f32 %v3488, %v2456
          %v3490 = vadd.f32 %v3489, %v2457
          %v3491 = vadd.f32 %v3490, %v2458
          %v3492 = vadd.f32 %v3491, %v2459
          %v3493 = vadd.f32 %v3492, %v2460
          %v3494 = vadd.f32 %v3493, %v2461
          %v3495 = vadd.f32 %v3494, %v2462
          %v3496 = vadd.f32 %v3495, %v2463
          %v3497 = vadd.f32 %v3496, %v2464
          %v3498 = vadd.f32 %v3497, %v2465
          %v3499 = vadd.f32 %v3498, %v2466
          %v3500 = vadd.f32 %v3499, %v2467
          %v3501 = vadd.f32 %v3500, %v2468
          %v3502 = vadd.f32 %v3501, %v2469
          %v3503 = vadd.f32 %v3502, %v2470
          %v3504 = vadd.f32 %v3503, %v2471
          %v3505 = vadd.f32 %v3504, %v2472
          %v3506 = vadd.f32 %v3505, %v2473
          %v3507 = vadd.f32 %v3506, %v2474
          %v3508 = vadd.f32 %v3507, %v2475
          %v3509 = vadd.f32 %v3508, %v2476
          %v3510 = vadd.f32 %v3509, %v2477
          %v3511 = vadd.f32 %v3510, %v2478
          %v3512 = vadd.f32 %v3511, %v2479
          %v3513 = vadd.f32 %v3512, %v2480
          %v3514 = vadd.f32 %v3513, %v2481
          %v3515 = vadd.f32 %v3514, %v2482
          %v3516 = vadd.f32 %v3515, %v2483
          %v3517 = vadd.f32 %v3516, %v2484
          %v3518 = vadd.f32 %v3517, %v2485
          %v3519 = vadd.f32 %v3518, %v2486
          %v3520 = vadd.f32 %v3519, %v2487
          %v3521 = vadd.f32 %v3520, %v2488
          %v3522 = vadd.f32 %v3521, %v2489
          %v3523 = vadd.f32 %v3522, %v2490
          %v3524 = vadd.f32 %v3523, %v2491
          %v3525 = vadd.f32 %v3524, %v2492
          %v3526 = vadd.f32 %v3525, %v2493
          %v3527 = vadd.f32 %v3526, %v2494
          %v3528 = vadd.f32 %v3527, %v2495
          %v3529 = vadd.f32 %v3528, %v2496
          %v3530 = vadd.f32 %v3529, %v2497
          %v3531 = vadd.f32 %v3530, %v2498
          %v3532 = vadd.f32 %v3531, %v2499
          %v3533 = vadd.f32 %v3532, %v2500
          %v3534 = vadd.f32 %v3533, %v2501
          %v3535 = vadd.f32 %v3534, %v2502
          %v3536 = vadd.f32 %v3535, %v2503
          %v3537 = vadd.f32 %v3536, %v2504
          %v3538 = vadd.f32 %v3537, %v2505
          %v3539 = vadd.f32 %v3538, %v2506
          %v3540 = vadd.f32 %v3539, %v2507
          %v3541 = vadd.f32 %v3540, %v2508
          %v3542 = vadd.f32 %v3541, %v2509
          %v3543 = vadd.f32 %v3542, %v2510
          %v3544 = vadd.f32 %v3543, %v2511
          %v3545 = vadd.f32 %v3544, %v2512
          %v3546 = vadd.f32 %v3545, %v2513
          %v3547 = vadd.f32 %v3546, %v2514
          %v3548 = vadd.f32 %v3547, %v2515
          %v3549 = vadd.f32 %v3548, %v2516
          %v3550 = vadd.f32 %v3549, %v2517
          %v3551 = vadd.f32 %v3550, %v2518
          %v3552 = vadd.f32 %v3551, %v2519
          %v3553 = vadd.f32 %v3552, %v2520
          %v3554 = vadd.f32 %v3553, %v2521
          %v3555 = vadd.f32 %v3554, %v2522
          %v3556 = vadd.f32 %v3555, %v2523
          %v3557 = vadd.f32 %v3556, %v2524
          %v3558 = vadd.f32 %v3557, %v2525
          %v3559 = vadd.f32 %v3558, %v2526
          %v3560 = vadd.f32 %v3559, %v2527
          %v3561 = vadd.f32 %v3560, %v2528
          %v3562 = vadd.f32 %v3561, %v2529
          %v3563 = vadd.f32 %v3562, %v2530
          %v3564 = vadd.f32 %v3563, %v2531
          %v3565 = vadd.f32 %v3564, %v2532
          %v3566 = vadd.f32 %v3565, %v2533
          %v3567 = vadd.f32 %v3566, %v2534
          %v3568 = vadd.f32 %v3567, %v2535
          %v3569 = vadd.f32 %v3568, %v2536
          %v3570 = vadd.f32 %v3569, %v2537
          %v3571 = vadd.f32 %v3570, %v2538
          %v3572 = vadd.f32 %v3571, %v2539
          %v3573 = vadd.f32 %v3572, %v2540
          %v3574 = vadd.f32 %v3573, %v2541
          %v3575 = vadd.f32 %v3574, %v2542
          %v3576 = vadd.f32 %v3575, %v2543
          %v3577 = vadd.f32 %v3576, %v2544
          %v3578 = vadd.f32 %v3577, %v2545
          %v3579 = vadd.f32 %v3578, %v2546
          %v3580 = vadd.f32 %v3579, %v2547
          %v3581 = vadd.f32 %v3580, %v2548
          %v3582 = vadd.f32 %v3581, %v2549
          %v3583 = vadd.f32 %v3582, %v2550
          %v3584 = vadd.f32 %v3583, %v2551
          %v3585 = vadd.f32 %v3584, %v2552
          %v3586 = vadd.f32 %v3585, %v2553
          %v3587 = vadd.f32 %v3586, %v2554
          %v3588 = vadd.f32 %v3587, %v2555
          %v3589 = vadd.f32 %v3588, %v2556
          %v3590 = vadd.f32 %v3589, %v2557
          %v3591 = vadd.f32 %v3590, %v2558
          %v3592 = vadd.f32 %v3591, %v2559
          %v3593 = vadd.f32 %v3592, %v2560
          %v3594 = vadd.f32 %v3593, %v2561
          %v3595 = vadd.f32 %v3594, %v2562
          %v3596 = vadd.f32 %v3595, %v2563
          %v3597 = vadd.f32 %v3596, %v2564
          %v3598 = vadd.f32 %v3597, %v2565
          %v3599 = vadd.f32 %v3598, %v2566
          %v3600 = vadd.f32 %v3599, %v2567
          %v3601 = vadd.f32 %v3600, %v2568
          %v3602 = vadd.f32 %v3601, %v2569
          %v3603 = vadd.f32 %v3602, %v2570
          %v3604 = vadd.f32 %v3603, %v2571
          %v3605 = vadd.f32 %v3604, %v2572
          %v3606 = vadd.f32 %v3605, %v2573
          %v3607 = vadd.f32 %v3606, %v2574
          %v3608 = vadd.f32 %v3607, %v2575
          %v3609 = vadd.f32 %v3608, %v2576
          %v3610 = vadd.f32 %v3609, %v2577
          %v3611 = vadd.f32 %v3610, %v2578
          %v3612 = vadd.f32 %v3611, %v2579
          %v3613 = vadd.f32 %v3612, %v2580
          %v3614 = vadd.f32 %v3613, %v2581
          %v3615 = vadd.f32 %v3614, %v2582
          %v3616 = vadd.f32 %v3615, %v2583
          %v3617 = vadd.f32 %v3616, %v2584
          %v3618 = vadd.f32 %v3617, %v2585
          %v3619 = vadd.f32 %v3618, %v2586
          %v3620 = vadd.f32 %v3619, %v2587
          %v3621 = vadd.f32 %v3620, %v2588
          %v3622 = vadd.f32 %v3621, %v2589
          %v3623 = vadd.f32 %v3622, %v2590
          %v3624 = vadd.f32 %v3623, %v2591
          %v3625 = vadd.f32 %v3624, %v2592
          %v3626 = vadd.f32 %v3625, %v2593
          %v3627 = vadd.f32 %v3626, %v2594
          %v3628 = vadd.f32 %v3627, %v2595
          %v3629 = vadd.f32 %v3628, %v2596
          %v3630 = vadd.f32 %v3629, %v2597
          %v3631 = vadd.f32 %v3630, %v2598
          %v3632 = vadd.f32 %v3631, %v2599
          %v3633 = vadd.f32 %v3632, %v2600
          %v3634 = vadd.f32 %v3633, %v2601
          %v3635 = vadd.f32 %v3634, %v2602
          %v3636 = vadd.f32 %v3635, %v2603
          %v3637 = vadd.f32 %v3636, %v2604
          %v3638 = vadd.f32 %v3637, %v2605
          %v3639 = vadd.f32 %v3638, %v2606
          %v3640 = vadd.f32 %v3639, %v2607
          %v3641 = vadd.f32 %v3640, %v2608
          %v3642 = vadd.f32 %v3641, %v2609
          %v3643 = vadd.f32 %v3642, %v2610
          %v3644 = vadd.f32 %v3643, %v2611
          %v3645 = vadd.f32 %v3644, %v2612
          %v3646 = vadd.f32 %v3645, %v2613
          %v3647 = vadd.f32 %v3646, %v2614
          %v3648 = vadd.f32 %v3647, %v2615
          %v3649 = vadd.f32 %v3648, %v2616
          %v3650 = vadd.f32 %v3649, %v2617
          %v3651 = vadd.f32 %v3650, %v2618
          %v3652 = vadd.f32 %v3651, %v2619
          %v3653 = vadd.f32 %v3652, %v2620
          %v3654 = vadd.f32 %v3653, %v2621
          %v3655 = vadd.f32 %v3654, %v2622
          %v3656 = vadd.f32 %v3655, %v2623
          %v3657 = vadd.f32 %v3656, %v2624
          %v3658 = vadd.f32 %v3657, %v2625
          %v3659 = vadd.f32 %v3658, %v2626
          %v3660 = vadd.f32 %v3659, %v2627
          %v3661 = vadd.f32 %v3660, %v2628
          %v3662 = vadd.f32 %v3661, %v2629
          %v3663 = vadd.f32 %v3662, %v2630
          %v3664 = vadd.f32 %v3663, %v2631
          %v3665 = vadd.f32 %v3664, %v2632
          %v3666 = vadd.f32 %v3665, %v2633
          %v3667 = vadd.f32 %v3666, %v2634
          %v3668 = vadd.f32 %v3667, %v2635
          %v3669 = vadd.f32 %v3668, %v2636
          %v3670 = vadd.f32 %v3669, %v2637
          %v3671 = vadd.f32 %v3670, %v2638
          %v3672 = vadd.f32 %v3671, %v2639
          %v3673 = vadd.f32 %v3672, %v2640
          %v3674 = vadd.f32 %v3673, %v2641
          %v3675 = vadd.f32 %v3674, %v2642
          %v3676 = vadd.f32 %v3675, %v2643
          %v3677 = vadd.f32 %v3676, %v2644
          %v3678 = vadd.f32 %v3677, %v2645
          %v3679 = vadd.f32 %v3678, %v2646
          %v3680 = vadd.f32 %v3679, %v2647
          %v3681 = vadd.f32 %v3680, %v2648
          %v3682 = vadd.f32 %v3681, %v2649
          %v3683 = vadd.f32 %v3682, %v2650
          %v3684 = vadd.f32 %v3683, %v2651
          %v3685 = vadd.f32 %v3684, %v2652
          %v3686 = vadd.f32 %v3685, %v2653
          %v3687 = vadd.f32 %v3686, %v2654
          %v3688 = vadd.f32 %v3687, %v2655
          %v3689 = vadd.f32 %v3688, %v2656
          %v3690 = vadd.f32 %v3689, %v2657
          %v3691 = vadd.f32 %v3690, %v2658
          %v3692 = vadd.f32 %v3691, %v2659
          %v3693 = vadd.f32 %v3692, %v2660
          %v3694 = vadd.f32 %v3693, %v2661
          %v3695 = vadd.f32 %v3694, %v2662
          %v3696 = vadd.f32 %v3695, %v2663
          %v3697 = vadd.f32 %v3696, %v2664
          %v3698 = vadd.f32 %v3697, %v2665
          %v3699 = vadd.f32 %v3698, %v2666
          %v3700 = vadd.f32 %v3699, %v2667
          %v3701 = vadd.f32 %v3700, %v2668
          %v3702 = vadd.f32 %v3701, %v2669
          %v3703 = vadd.f32 %v3702, %v2670
          %v3704 = vadd.f32 %v3703, %v2671
          %v3705 = vadd.f32 %v3704, %v2672
          %v3706 = vadd.f32 %v3705, %v2673
          %v3707 = vadd.f32 %v3706, %v2674
          %v3708 = vadd.f32 %v3707, %v2675
          %v3709 = vadd.f32 %v3708, %v2676
          %v3710 = vadd.f32 %v3709, %v2677
          %v3711 = vadd.f32 %v3710, %v2678
          %v3712 = vadd.f32 %v3711, %v2679
          %v3713 = vadd.f32 %v3712, %v2680
          %v3714 = vadd.f32 %v3713, %v2681
          %v3715 = vadd.f32 %v3714, %v2682
          %v3716 = vadd.f32 %v3715, %v2683
          %v3717 = vadd.f32 %v3716, %v2684
          %v3718 = vadd.f32 %v3717, %v2685
          %v3719 = vadd.f32 %v3718, %v2686
          %v3720 = vadd.f32 %v3719, %v2687
          %v3721 = vadd.f32 %v3720, %v2688
          %v3722 = vadd.f32 %v3721, %v2689
          %v3723 = vadd.f32 %v3722, %v2690
          %v3724 = vadd.f32 %v3723, %v2691
          %v3725 = vadd.f32 %v3724, %v2692
          %v3726 = vadd.f32 %v3725, %v2693
          %v3727 = vadd.f32 %v3726, %v2694
          %v3728 = vadd.f32 %v3727, %v2695
          %v3729 = vadd.f32 %v3728, %v2696
          %v3730 = vadd.f32 %v3729, %v2697
          %v3731 = vadd.f32 %v3730, %v2698
          %v3732 = vadd.f32 %v3731, %v2699
          %v3733 = vadd.f32 %v3732, %v2700
          %v3734 = vadd.f32 %v3733, %v2701
          %v3735 = vadd.f32 %v3734, %v2702
          %v3736 = vadd.f32 %v3735, %v2703
          %v3737 = vadd.f32 %v3736, %v2704
          %v3738 = vadd.f32 %v3737, %v2705
          %v3739 = vadd.f32 %v3738, %v2706
          %v3740 = vadd.f32 %v3739, %v2707
          %v3741 = vadd.f32 %v3740, %v2708
          %v3742 = vadd.f32 %v3741, %v2709
          %v3743 = vadd.f32 %v3742, %v2710
          %v3744 = vadd.f32 %v3743, %v2711
          %v3745 = vadd.f32 %v3744, %v2712
          %v3746 = vadd.f32 %v3745, %v2713
          %v3747 = vadd.f32 %v3746, %v2714
          %v3748 = vadd.f32 %v3747, %v2715
          %v3749 = vadd.f32 %v3748, %v2716
          %v3750 = vadd.f32 %v3749, %v2717
          %v3751 = vadd.f32 %v3750, %v2718
          %v3752 = vadd.f32 %v3751, %v2719
          %v3753 = vadd.f32 %v3752, %v2720
          %v3754 = vadd.f32 %v3753, %v2721
          %v3755 = vadd.f32 %v3754, %v2722
          %v3756 = vadd.f32 %v3755, %v2723
          %v3757 = vadd.f32 %v3756, %v2724
          %v3758 = vadd.f32 %v3757, %v2725
          %v3759 = vadd.f32 %v3758, %v2726
          %v3760 = vadd.f32 %v3759, %v2727
          %v3761 = vadd.f32 %v3760, %v2728
          %v3762 = vadd.f32 %v3761, %v2729
          %v3763 = vadd.f32 %v3762, %v2730
          %v3764 = vadd.f32 %v3763, %v2731
          %v3765 = vadd.f32 %v3764, %v2732
          %v3766 = vadd.f32 %v3765, %v2733
          %v3767 = vadd.f32 %v3766, %v2734
          %v3768 = vadd.f32 %v3767, %v2735
          %v3769 = vadd.f32 %v3768, %v2736
          %v3770 = vadd.f32 %v3769, %v2737
          %v3771 = vadd.f32 %v3770, %v2738
          %v3772 = vadd.f32 %v3771, %v2739
          %v3773 = vadd.f32 %v3772, %v2740
          %v3774 = vadd.f32 %v3773, %v2741
          %v3775 = vadd.f32 %v3774, %v2742
          %v3776 = vadd.f32 %v3775, %v2743
          %v3777 = vadd.f32 %v3776, %v2744
          %v3778 = vadd.f32 %v3777, %v2745
          %v3779 = vadd.f32 %v3778, %v2746
          %v3780 = vadd.f32 %v3779, %v2747
          %v3781 = vadd.f32 %v3780, %v2748
          %v3782 = vadd.f32 %v3781, %v2749
          %v3783 = vadd.f32 %v3782, %v2750
          %v3784 = vadd.f32 %v3783, %v2751
          %v3785 = vadd.f32 %v3784, %v2752
          %v3786 = vadd.f32 %v3785, %v2753
          %v3787 = vadd.f32 %v3786, %v2754
          %v3788 = vadd.f32 %v3787, %v2755
          %v3789 = vadd.f32 %v3788, %v2756
          %v3790 = vadd.f32 %v3789, %v2757
          %v3791 = vadd.f32 %v3790, %v2758
          %v3792 = vadd.f32 %v3791, %v2759
          %v3793 = vadd.f32 %v3792, %v2760
          %v3794 = vadd.f32 %v3793, %v2761
          %v3795 = vadd.f32 %v3794, %v2762
          %v3796 = vadd.f32 %v3795, %v2763
          %v3797 = vadd.f32 %v3796, %v2764
          %v3798 = vadd.f32 %v3797, %v2765
          %v3799 = vadd.f32 %v3798, %v2766
          %v3800 = vadd.f32 %v3799, %v2767
          %v3801 = vadd.f32 %v3800, %v2768
          %v3802 = vadd.f32 %v3801, %v2769
          %v3803 = vadd.f32 %v3802, %v2770
          %v3804 = vadd.f32 %v3803, %v2771
          %v3805 = vadd.f32 %v3804, %v2772
          %v3806 = vadd.f32 %v3805, %v2773
          %v3807 = vadd.f32 %v3806, %v2774
          %v3808 = vadd.f32 %v3807, %v2775
          %v3809 = vadd.f32 %v3808, %v2776
          %v3810 = vadd.f32 %v3809, %v2777
          %v3811 = vadd.f32 %v3810, %v2778
          %v3812 = vadd.f32 %v3811, %v2779
          %v3813 = vadd.f32 %v3812, %v2780
          %v3814 = vadd.f32 %v3813, %v2781
          %v3815 = vadd.f32 %v3814, %v2782
          %v3816 = vadd.f32 %v3815, %v2783
          %v3817 = vadd.f32 %v3816, %v2784
          %v3818 = vadd.f32 %v3817, %v2785
          %v3819 = vadd.f32 %v3818, %v2786
          %v3820 = vadd.f32 %v3819, %v2787
          %v3821 = vadd.f32 %v3820, %v2788
          %v3822 = vadd.f32 %v3821, %v2789
          %v3823 = vadd.f32 %v3822, %v2790
          %v3824 = vadd.f32 %v3823, %v2791
          %v3825 = vadd.f32 %v3824, %v2792
          %v3826 = vadd.f32 %v3825, %v2793
          %v3827 = vadd.f32 %v3826, %v2794
          %v3828 = vadd.f32 %v3827, %v2795
          %v3829 = vadd.f32 %v3828, %v2796
          %v3830 = vadd.f32 %v3829, %v2797
          %v3831 = vadd.f32 %v3830, %v2798
          %v3832 = vadd.f32 %v3831, %v2799
          %v3833 = vadd.f32 %v3832, %v2800
          %v3834 = vadd.f32 %v3833, %v2801
          %v3835 = vadd.f32 %v3834, %v2802
          %v3836 = vadd.f32 %v3835, %v2803
          %v3837 = vadd.f32 %v3836, %v2804
          %v3838 = vadd.f32 %v3837, %v2805
          %v3839 = vadd.f32 %v3838, %v2806
          %v3840 = vadd.f32 %v3839, %v2807
          %v3841 = vadd.f32 %v3840, %v2808
          %v3842 = vadd.f32 %v3841, %v2809
          %v3843 = vadd.f32 %v3842, %v2810
          %v3844 = vadd.f32 %v3843, %v2811
          %v3845 = vadd.f32 %v3844, %v2812
          %v3846 = vadd.f32 %v3845, %v2813
          %v3847 = vadd.f32 %v3846, %v2814
          %v3848 = vadd.f32 %v3847, %v2815
          %v3849 = vadd.f32 %v3848, %v2816
          %v3850 = vadd.f32 %v3849, %v2817
          %v3851 = vadd.f32 %v3850, %v2818
          %v3852 = vadd.f32 %v3851, %v2819
          %v3853 = vadd.f32 %v3852, %v2820
          %v3854 = vadd.f32 %v3853, %v2821
          %v3855 = vadd.f32 %v3854, %v2822
          %v3856 = vadd.f32 %v3855, %v2823
          %v3857 = vadd.f32 %v3856, %v2824
          %v3858 = vadd.f32 %v3857, %v2825
          %v3859 = vadd.f32 %v3858, %v2826
          %v3860 = vadd.f32 %v3859, %v2827
          %v3861 = vadd.f32 %v3860, %v2828
          %v3862 = vadd.f32 %v3861, %v2829
          %v3863 = vadd.f32 %v3862, %v2830
          %v3864 = vadd.f32 %v3863, %v2831
          %v3865 = vadd.f32 %v3864, %v2832
          %v3866 = vadd.f32 %v3865, %v2833
          %v3867 = vadd.f32 %v3866, %v2834
          %v3868 = vadd.f32 %v3867, %v2835
          %v3869 = vadd.f32 %v3868, %v2836
          %v3870 = vadd.f32 %v3869, %v2837
          %v3871 = vadd.f32 %v3870, %v2838
          %v3872 = vadd.f32 %v3871, %v2839
          %v3873 = vadd.f32 %v3872, %v2840
          %v3874 = vadd.f32 %v3873, %v2841
          %v3875 = vadd.f32 %v3874, %v2842
          %v3876 = vadd.f32 %v3875, %v2843
          %v3877 = vadd.f32 %v3876, %v2844
          %v3878 = vadd.f32 %v3877, %v2845
          %v3879 = vadd.f32 %v3878, %v2846
          %v3880 = vadd.f32 %v3879, %v2847
          %v3881 = vadd.f32 %v3880, %v2848
          %v3882 = vadd.f32 %v3881, %v2849
          %v3883 = vadd.f32 %v3882, %v2850
          %v3884 = vadd.f32 %v3883, %v2851
          %v3885 = vadd.f32 %v3884, %v2852
          %v3886 = vadd.f32 %v3885, %v2853
          %v3887 = vadd.f32 %v3886, %v2854
          %v3888 = vadd.f32 %v3887, %v2855
          %v3889 = vadd.f32 %v3888, %v2856
          %v3890 = vadd.f32 %v3889, %v2857
          %v3891 = vadd.f32 %v3890, %v2858
          %v3892 = vadd.f32 %v3891, %v2859
          %v3893 = vadd.f32 %v3892, %v2860
          %v3894 = vadd.f32 %v3893, %v2861
          %v3895 = vadd.f32 %v3894, %v2862
          %v3896 = vadd.f32 %v3895, %v2863
          %v3897 = vadd.f32 %v3896, %v2864
          %v3898 = vadd.f32 %v3897, %v2865
          %v3899 = vadd.f32 %v3898, %v2866
          %v3900 = vadd.f32 %v3899, %v2867
          %v3901 = vadd.f32 %v3900, %v2868
          %v3902 = vadd.f32 %v3901, %v2869
          %v3903 = vadd.f32 %v3902, %v2870
          %v3904 = vadd.f32 %v3903, %v2871
          %v3905 = vadd.f32 %v3904, %v2872
          %v3906 = vadd.f32 %v3905, %v2873
          %v3907 = vadd.f32 %v3906, %v2874
          %v3908 = vadd.f32 %v3907, %v2875
          %v3909 = vadd.f32 %v3908, %v2876
          %v3910 = vadd.f32 %v3909, %v2877
          %v3911 = vadd.f32 %v3910, %v2878
          %v3912 = vadd.f32 %v3911, %v2879
          %v3913 = vadd.f32 %v3912, %v2880
          %v3914 = vadd.f32 %v3913, %v2881
          %v3915 = vadd.f32 %v3914, %v2882
          %v3916 = vadd.f32 %v3915, %v2883
          %v3917 = vadd.f32 %v3916, %v2884
          %v3918 = vadd.f32 %v3917, %v2885
          %v3919 = vadd.f32 %v3918, %v2886
          %v3920 = vadd.f32 %v3919, %v2887
          %v3921 = vadd.f32 %v3920, %v2888
          %v3922 = vadd.f32 %v3921, %v2889
          %v3923 = vadd.f32 %v3922, %v2890
          %v3924 = vadd.f32 %v3923, %v2891
          %v3925 = vadd.f32 %v3924, %v2892
          %v3926 = vadd.f32 %v3925, %v2893
          %v3927 = vadd.f32 %v3926, %v2894
          %v3928 = vadd.f32 %v3927, %v2895
          %v3929 = vadd.f32 %v3928, %v2896
          %v3930 = vadd.f32 %v3929, %v2897
          %v3931 = vadd.f32 %v3930, %v2898
          %v3932 = vadd.f32 %v3931, %v2899
          %v3933 = vadd.f32 %v3932, %v2900
          %v3934 = vadd.f32 %v3933, %v2901
          %v3935 = vadd.f32 %v3934, %v2902
          %v3936 = vadd.f32 %v3935, %v2903
          %v3937 = vadd.f32 %v3936, %v2904
          %v3938 = vadd.f32 %v3937, %v2905
          %v3939 = vadd.f32 %v3938, %v2906
          %v3940 = vadd.f32 %v3939, %v2907
          %v3941 = vadd.f32 %v3940, %v2908
          %v3942 = vadd.f32 %v3941, %v2909
          %v3943 = vadd.f32 %v3942, %v2910
          %v3944 = vadd.f32 %v3943, %v2911
          %v3945 = vadd.f32 %v3944, %v2912
          %v3946 = vadd.f32 %v3945, %v2913
          %v3947 = vadd.f32 %v3946, %v2914
          %v3948 = vadd.f32 %v3947, %v2915
          %v3949 = vadd.f32 %v3948, %v2916
          %v3950 = vadd.f32 %v3949, %v2917
          %v3951 = vadd.f32 %v3950, %v2918
          %v3952 = vadd.f32 %v3951, %v2919
          %v3953 = vadd.f32 %v3952, %v2920
          %v3954 = vadd.f32 %v3953, %v2921
          %v3955 = vadd.f32 %v3954, %v2922
          %v3956 = vadd.f32 %v3955, %v2923
          %v3957 = vadd.f32 %v3956, %v2924
          %v3958 = vadd.f32 %v3957, %v2925
          %v3959 = vadd.f32 %v3958, %v2926
          %v3960 = vadd.f32 %v3959, %v2927
          %v3961 = vadd.f32 %v3960, %v2928
          %v3962 = vadd.f32 %v3961, %v2929
          %v3963 = vadd.f32 %v3962, %v2930
          %v3964 = vadd.f32 %v3963, %v2931
          %v3965 = vadd.f32 %v3964, %v2932
          %v3966 = vadd.f32 %v3965, %v2933
          %v3967 = vadd.f32 %v3966, %v2934
          %v3968 = vadd.f32 %v3967, %v2935
          %v3969 = vadd.f32 %v3968, %v2936
          %v3970 = vadd.f32 %v3969, %v2937
          %v3971 = vadd.f32 %v3970, %v2938
          %v3972 = vadd.f32 %v3971, %v2939
          %v3973 = vadd.f32 %v3972, %v2940
          %v3974 = vadd.f32 %v3973, %v2941
          %v3975 = vadd.f32 %v3974, %v2942
          %v3976 = vadd.f32 %v3975, %v2943
          %v3977 = vadd.f32 %v3976, %v2944
          %v3978 = vadd.f32 %v3977, %v2945
          %v3979 = vadd.f32 %v3978, %v2946
          %v3980 = vadd.f32 %v3979, %v2947
          %v3981 = vadd.f32 %v3980, %v2948
          %v3982 = vadd.f32 %v3981, %v2949
          %v3983 = vadd.f32 %v3982, %v2950
          %v3984 = vadd.f32 %v3983, %v2951
          %v3985 = vadd.f32 %v3984, %v2952
          %v3986 = vadd.f32 %v3985, %v2953
          %v3987 = vadd.f32 %v3986, %v2954
          %v3988 = vadd.f32 %v3987, %v2955
          %v3989 = vadd.f32 %v3988, %v2956
          %v3990 = vadd.f32 %v3989, %v2957
          %v3991 = vadd.f32 %v3990, %v2958
          %v3992 = vadd.f32 %v3991, %v2959
          %v3993 = vadd.f32 %v3992, %v2960
          %v3994 = vadd.f32 %v3993, %v2961
          %v3995 = vadd.f32 %v3994, %v2962
          %v3996 = vadd.f32 %v3995, %v2963
          %v3997 = vadd.f32 %v3996, %v2964
          %v3998 = vadd.f32 %v3997, %v2965
          %v3999 = vadd.f32 %v3998, %v2966
          %v4000 = vadd.f32 %v3999, %v2967
          %v4001 = vadd.f32 %v4000, %v2968
          %v4002 = vadd.f32 %v4001, %v2969
          %v4003 = vadd.f32 %v4002, %v2970
          %v4004 = vadd.f32 %v4003, %v2971
          %v4005 = vadd.f32 %v4004, %v2972
          %v4006 = vadd.f32 %v4005, %v2973
          %v4007 = vadd.f32 %v4006, %v2974
          %v4008 = vadd.f32 %v4007, %v2975
          %v4009 = vadd.f32 %v4008, %v2976
          %v4010 = vadd.f32 %v4009, %v2977
          %v4011 = vadd.f32 %v4010, %v2978
          %v4012 = vadd.f32 %v4011, %v2979
          %v4013 = vadd.f32 %v4012, %v2980
          %v4014 = vadd.f32 %v4013, %v2981
          %v4015 = vadd.f32 %v4014, %v2982
          %v4016 = vadd.f32 %v4015, %v2983
          %v4017 = vadd.f32 %v4016, %v2984
          %v4018 = vadd.f32 %v4017, %v2985
          %v4019 = vadd.f32 %v4018, %v2986
          %v4020 = vadd.f32 %v4019, %v2987
          %v4021 = vadd.f32 %v4020, %v2988
          %v4022 = vadd.f32 %v4021, %v2989
          %v4023 = vadd.f32 %v4022, %v2990
          %v4024 = vadd.f32 %v4023, %v2991
          %v4025 = vadd.f32 %v4024, %v2992
          %v4026 = vadd.f32 %v4025, %v2993
          %v4027 = vadd.f32 %v4026, %v2994
          %v4028 = vadd.f32 %v4027, %v2995
          %v4029 = vadd.f32 %v4028, %v2996
          %v4030 = vadd.f32 %v4029, %v2997
          %v4031 = vadd.f32 %v4030, %v2998
          %v4032 = vadd.f32 %v4031, %v2999
          %v4033 = vadd.f32 %v4032, %v3000
          %v4034 = vadd.f32 %v4033, %v3001
          %v4035 = vadd.f32 %v4034, %v3002
          %v4036 = vadd.f32 %v4035, %v3003
          %v4037 = vadd.f32 %v4036, %v3004
          %v4038 = vadd.f32 %v4037, %v3005
          %v4039 = vadd.f32 %v4038, %v3006
          %v4040 = vadd.f32 %v4039, %v3007
          %v4041 = vadd.f32 %v4040, %v3008
          %v4042 = vadd.f32 %v4041, %v3009
          %v4043 = vadd.f32 %v4042, %v3010
          %v4044 = vadd.f32 %v4043, %v3011
          %v4045 = vadd.f32 %v4044, %v3012
          %v4046 = vadd.f32 %v4045, %v3013
          %v4047 = vadd.f32 %v4046, %v3014
          %v4048 = vadd.f32 %v4047, %v3015
          %v4049 = vadd.f32 %v4048, %v3016
          %v4050 = vadd.f32 %v4049, %v3017
          %v4051 = vadd.f32 %v4050, %v3018
          %v4052 = vadd.f32 %v4051, %v3019
          %v4053 = vadd.f32 %v4052, %v3020
          %v4054 = vadd.f32 %v4053, %v3021
          %v4055 = vadd.f32 %v4054, %v3022
          %v4056 = vadd.f32 %v4055, %v3023
          %v4057 = vadd.f32 %v4056, %v3024
          %v4058 = vadd.f32 %v4057, %v3025
          %v4059 = vadd.f32 %v4058, %v3026
          %v4060 = vadd.f32 %v4059, %v3027
          %v4061 = vadd.f32 %v4060, %v3028
          %v4062 = vadd.f32 %v4061, %v3029
          %v4063 = vadd.f32 %v4062, %v3030
          %v4064 = vadd.f32 %v4063, %v3031
          %v4065 = vadd.f32 %v4064, %v3032
          %v4066 = vadd.f32 %v4065, %v3033
          %v4067 = vadd.f32 %v4066, %v3034
          %v4068 = vadd.f32 %v4067, %v3035
          %v4069 = vadd.f32 %v4068, %v3036
          %v4070 = vadd.f32 %v4069, %v3037
          %v4071 = vadd.f32 %v4070, %v3038
          %v4072 = vadd.f32 %v4071, %v3039
          %v4073 = vadd.f32 %v4072, %v3040
          %v4074 = vadd.f32 %v4073, %v3041
          %v4075 = vadd.f32 %v4074, %v3042
          %v4076 = vadd.f32 %v4075, %v3043
          %v4077 = vadd.f32 %v4076, %v3044
          %v4078 = vadd.f32 %v4077, %v3045
          %v4079 = vadd.f32 %v4078, %v3046
          %v4080 = vadd.f32 %v4079, %v3047
          %v4081 = vadd.f32 %v4080, %v3048
          %v4082 = vadd.f32 %v4081, %v3049
          %v4083 = vadd.f32 %v4082, %v3050
          %v4084 = vadd.f32 %v4083, %v3051
          %v4085 = vadd.f32 %v4084, %v3052
          %v4086 = vadd.f32 %v4085, %v3053
          %v4087 = vadd.f32 %v4086, %v3054
          %v4088 = vadd.f32 %v4087, %v3055
          %v4089 = vadd.f32 %v4088, %v3056
          %v4090 = vadd.f32 %v4089, %v3057
          %v4091 = vadd.f32 %v4090, %v3058
          %v4092 = vadd.f32 %v4091, %v3059
          %v4093 = vadd.f32 %v4092, %v3060
          %v4094 = vadd.f32 %v4093, %v3061
          %v4095 = vadd.f32 %v4094, %v3062
          %v4096 = vadd.f32 %v4095, %v3063
          %v4097 = vadd.f32 %v4096, %v3064
          %v4098 = vadd.f32 %v4097, %v3065
          %v4099 = vadd.f32 %v4098, %v3066
          %v4100 = vadd.f32 %v4099, %v3067
          %v4101 = vadd.f32 %v4100, %v3068
          %v4102 = vadd.f32 %v4101, %v3069
          %v4103 = vadd.f32 %v4102, %v3070
          %v4104 = vadd.f32 %v4103, %v3071
          %v4105 = vadd.f32 %v4104, %v3072
          %v4106 = vadd.f32 %v4105, %v3073
          %v4107 = vadd.f32 %v4106, %v3074
          %v4108 = vadd.f32 %v4107, %v3075
          %v4109 = vadd.f32 %v4108, %v3076
          %v4110 = vadd.f32 %v4109, %v3077
          %v4111 = vadd.f32 %v4110, %v3078
          %v4112 = vadd.f32 %v4111, %v3079
          %v4113 = vadd.f32 %v4112, %v3080
          %v4114 = vadd.f32 %v4113, %v3081
          %v4115 = vadd.f32 %v4114, %v3082
          %v4116 = vadd.f32 %v4115, %v3083
          %v4117 = vadd.f32 %v4116, %v3084
          %v4118 = vadd.f32 %v4117, %v3085
          %v4119 = vadd.f32 %v4118, %v3086
          %v4120 = vadd.f32 %v4119, %v3087
          %v4121 = vadd.f32 %v4120, %v3088
          %v4122 = vadd.f32 %v4121, %v3089
          %v4123 = vadd.f32 %v4122, %v3090
          %v4124 = vadd.f32 %v4123, %v3091
          %v4125 = vadd.f32 %v4124, %v3092
          %v4126 = vadd.f32 %v4125, %v3093
          %v4127 = vadd.f32 %v4126, %v3094
          %v4128 = vadd.f32 %v4127, %v3095
          %v4129 = vadd.f32 %v4128, %v3096
          %v4130 = vadd.f32 %v4129, %v3097
          %v4131 = vadd.f32 %v4130, %v3098
          %v4132 = vadd.f32 %v4131, %v3099
          %v4133 = vadd.f32 %v4132, %v3100
          %v4134 = vadd.f32 %v4133, %v3101
          %v4135 = vadd.f32 %v4134, %v3102
          %v4136 = vadd.f32 %v4135, %v3103
          %v4137 = vadd.f32 %v4136, %v3104
          %v4138 = vadd.f32 %v4137, %v3105
          %v4139 = vadd.f32 %v4138, %v3106
          %v4140 = vadd.f32 %v4139, %v3107
          %v4141 = vadd.f32 %v4140, %v3108
          %v4142 = vadd.f32 %v4141, %v3109
          %v4143 = vadd.f32 %v4142, %v3110
          %v4144 = vadd.f32 %v4143, %v3111
          %v4145 = vadd.f32 %v4144, %v3112
          %v4146 = vadd.f32 %v4145, %v3113
          %v4147 = vadd.f32 %v4146, %v3114
          %v4148 = vadd.f32 %v4147, %v3115
          %v4149 = vadd.f32 %v4148, %v3116
          %v4150 = vadd.f32 %v4149, %v3117
          %v4151 = vadd.f32 %v4150, %v3118
          %v4152 = vadd.f32 %v4151, %v3119
          %v4153 = vadd.f32 %v4152, %v3120
          %v4154 = vadd.f32 %v4153, %v3121
          %v4155 = vadd.f32 %v4154, %v3122
          %v4156 = vadd.f32 %v4155, %v3123
          %v4157 = vadd.f32 %v4156, %v3124
          %v4158 = vadd.f32 %v4157, %v3125
          %v4159 = vadd.f32 %v4158, %v3126
          %v4160 = vadd.f32 %v4159, %v3127
          %v4161 = vadd.f32 %v4160, %v3128
          %v4162 = vadd.f32 %v4161, %v3129
          %v4163 = vadd.f32 %v4162, %v3130
          %v4164 = vadd.f32 %v4163, %v3131
          %v4165 = vadd.f32 %v4164, %v3132
          %v4166 = vadd.f32 %v4165, %v3133
          %v4167 = vadd.f32 %v4166, %v3134
          %v4168 = vadd.f32 %v4167, %v3135
          %v4169 = vadd.f32 %v4168, %v3136
          %v4170 = vadd.f32 %v4169, %v3137
          %v4171 = vadd.f32 %v4170, %v3138
          %v4172 = vadd.f32 %v4171, %v3139
          %v4173 = vadd.f32 %v4172, %v3140
          %v4174 = vadd.f32 %v4173, %v3141
          %v4175 = vadd.f32 %v4174, %v3142
          %v4176 = vadd.f32 %v4175, %v3143
          %v4177 = vadd.f32 %v4176, %v3144
          %v4178 = vadd.f32 %v4177, %v3145
          %v4179 = vadd.f32 %v4178, %v3146
          %v4180 = vadd.f32 %v4179, %v3147
          %v4181 = vadd.f32 %v4180, %v3148
          %v4182 = vadd.f32 %v4181, %v3149
          %v4183 = vadd.f32 %v4182, %v3150
          %v4184 = vadd.f32 %v4183, %v3151
          %v4185 = vadd.f32 %v4184, %v3152
          %v4186 = vadd.f32 %v4185, %v3153
          %v4187 = vadd.f32 %v4186, %v3154
          %v4188 = vadd.f32 %v4187, %v3155
          %v4189 = vadd.f32 %v4188, %v3156
          %v4190 = vadd.f32 %v4189, %v3157
          %v4191 = vadd.f32 %v4190, %v3158
          %v4192 = vadd.f32 %v4191, %v3159
          %v4193 = vadd.f32 %v4192, %v3160
          %v4194 = vadd.f32 %v4193, %v3161
          %v4195 = vadd.f32 %v4194, %v3162
          %v4196 = vadd.f32 %v4195, %v3163
          %v4197 = vadd.f32 %v4196, %v3164
          %v4198 = vadd.f32 %v4197, %v3165
          %v4199 = vadd.f32 %v4198, %v3166
          %v4200 = vadd.f32 %v4199, %v3167
          %v4201 = vadd.f32 %v4200, %v3168
          %v4202 = vadd.f32 %v4201, %v3169
          %v4203 = vadd.f32 %v4202, %v3170
          %v4204 = vadd.f32 %v4203, %v3171
          %v4205 = vadd.f32 %v4204, %v3172
          %v4206 = vadd.f32 %v4205, %v3173
          %v4207 = vadd.f32 %v4206, %v3174
          %v4208 = vadd.f32 %v4207, %v3175
          %v4209 = vadd.f32 %v4208, %v3176
          %v4210 = vadd.f32 %v4209, %v3177
          %v4211 = vadd.f32 %v4210, %v3178
          %v4212 = vadd.f32 %v4211, %v3179
          %v4213 = vadd.f32 %v4212, %v3180
          %v4214 = vadd.f32 %v4213, %v3181
          %v4215 = vadd.f32 %v4214, %v3182
          %v4216 = vadd.f32 %v4215, %v3183
          %v4217 = vadd.f32 %v4216, %v3184
          %v4218 = vadd.f32 %v4217, %v3185
          %v4219 = vadd.f32 %v4218, %v3186
          %v4220 = vadd.f32 %v4219, %v3187
          %v4221 = vadd.f32 %v4220, %v3188
          %v4222 = vadd.f32 %v4221, %v3189
          %v4223 = vadd.f32 %v4222, %v3190
          %v4224 = vadd.f32 %v4223, %v3191
          %v4225 = vadd.f32 %v4224, %v3192
          %v4226 = vadd.f32 %v4225, %v3193
          %v4227 = vadd.f32 %v4226, %v3194
          %v4228 = vadd.f32 %v4227, %v3195
          %v4229 = vadd.f32 %v4228, %v3196
          %v4230 = vadd.f32 %v4229, %v3197
          %v4231 = vadd.f32 %v4230, %v3198
          %v4232 = vadd.f32 %v4231, %v3199
          %v4233 = vadd.f32 %v4232, %v3200
          %v4234 = vadd.f32 %v4233, %v3201
          %v4235 = vadd.f32 %v4234, %v3202
          %v4236 = vadd.f32 %v4235, %v3203
          %v4237 = vadd.f32 %v4236, %v3204
          %v4238 = vadd.f32 %v4237, %v3205
          %v4239 = vadd.f32 %v4238, %v3206
          %v4240 = vadd.f32 %v4239, %v3207
          %v4241 = vadd.f32 %v4240, %v3208
          %v4242 = vadd.f32 %v4241, %v3209
          %v4243 = vadd.f32 %v4242, %v3210
          %v4244 = vadd.f32 %v4243, %v3211
          %v4245 = vadd.f32 %v4244, %v3212
          %v4246 = vadd.f32 %v4245, %v3213
          %v4247 = vadd.f32 %v4246, %v3214
          %v4248 = vadd.f32 %v4247, %v3215
          %v4249 = vadd.f32 %v4248, %v3216
          %v4250 = vadd.f32 %v4249, %v3217
          %v4251 = vadd.f32 %v4250, %v3218
          %v4252 = vadd.f32 %v4251, %v3219
          %v4253 = vadd.f32 %v4252, %v3220
          %v4254 = vadd.f32 %v4253, %v3221
          %v4255 = vadd.f32 %v4254, %v3222
          %v4256 = vadd.f32 %v4255, %v3223
          %v4257 = vadd.f32 %v4256, %v3224
          %v4258 = vadd.f32 %v4257, %v3225
          %v4259 = vadd.f32 %v4258, %v3226
          %v4260 = vadd.f32 %v4259, %v3227
          %v4261 = vadd.f32 %v4260, %v3228
          %v4262 = vadd.f32 %v4261, %v3229
          %v4263 = vadd.f32 %v4262, %v3230
          %v4264 = vadd.f32 %v4263, %v3231
          %v4265 = vadd.f32 %v4264, %v3232
          %v4266 = vadd.f32 %v4265, %v3233
          %v4267 = vadd.f32 %v4266, %v3234
          %v4268 = vadd.f32 %v4267, %v3235
          %v4269 = vadd.f32 %v4268, %v3236
          %v4270 = vadd.f32 %v4269, %v3237
          %v4271 = vadd.f32 %v4270, %v3238
          %v4272 = vadd.f32 %v4271, %v3239
          %v4273 = vadd.f32 %v4272, %v3240
          %v4274 = vadd.f32 %v4273, %v3241
          %v4275 = vadd.f32 %v4274, %v3242
          %v4276 = vadd.f32 %v4275, %v3243
          %v4277 = vadd.f32 %v4276, %v3244
          %v4278 = vadd.f32 %v4277, %v3245
          %v4279 = vadd.f32 %v4278, %v3246
          %v4280 = vadd.f32 %v4279, %v3247
          %v4281 = vadd.f32 %v4280, %v3248
          %v4282 = vadd.f32 %v4281, %v3249
          %v4283 = vadd.f32 %v4282, %v3250
          %v4284 = vadd.f32 %v4283, %v3251
          %v4285 = vadd.f32 %v4284, %v3252
          %v4286 = vadd.f32 %v4285, %v3253
          %v4287 = vadd.f32 %v4286, %v3254
          %v4288 = vadd.f32 %v4287, %v3255
          %v4289 = vadd.f32 %v4288, %v3256
          %v4290 = vadd.f32 %v4289, %v3257
          %v4291 = vadd.f32 %v4290, %v3258
          %v4292 = vadd.f32 %v4291, %v3259
          %v4293 = vadd.f32 %v4292, %v3260
          %v4294 = vadd.f32 %v4293, %v3261
          %v4295 = vadd.f32 %v4294, %v3262
          %v4296 = vadd.f32 %v4295, %v3263
          %v4297 = vadd.f32 %v4296, %v3264
          %v4298 = vadd.f32 %v4297, %v3265
          %v4299 = vadd.f32 %v4298, %v3266
          %v4300 = vadd.f32 %v4299, %v3267
          %v4301 = vadd.f32 %v4300, %v3268
          %v4302 = vadd.f32 %v4301, %v3269
          %v4303 = vadd.f32 %v4302, %v3270
          %v4304 = vadd.f32 %v4303, %v3271
          %v4305 = vadd.f32 %v4304, %v3272
          %v4306 = vadd.f32 %v4305, %v3273
          %v4307 = vadd.f32 %v4306, %v3274
          %v4308 = vadd.f32 %v4307, %v3275
          %v4309 = vadd.f32 %v4308, %v3276
          %v4310 = vadd.f32 %v4309, %v3277
          %v4311 = vadd.f32 %v4310, %v3278
          %v4312 = vadd.f32 %v4311, %v3279
          %v4313 = vadd.f32 %v4312, %v3280
          %v4314 = vadd.f32 %v4313, %v3281
          %v4315 = vadd.f32 %v4314, %v3282
          %v4316 = vadd.f32 %v4315, %v3283
          %v4317 = vadd.f32 %v4316, %v3284
          %v4318 = vadd.f32 %v4317, %v3285
          %v4319 = vadd.f32 %v4318, %v3286
          %v4320 = vadd.f32 %v4319, %v3287
          %v4321 = vadd.f32 %v4320, %v3288
          %v4322 = vadd.f32 %v4321, %v3289
          %v4323 = vadd.f32 %v4322, %v3290
          %v4324 = vadd.f32 %v4323, %v3291
          %v4325 = vadd.f32 %v4324, %v3292
          %v4326 = vadd.f32 %v4325, %v3293
          %v4327 = vadd.f32 %v4326, %v3294
          %v4328 = vadd.f32 %v4327, %v3295
          %v4329 = vadd.f32 %v4328, %v3296
          %v4330 = vadd.f32 %v4329, %v3297
          %v4331 = vadd.f32 %v4330, %v3298
          %v4332 = vadd.f32 %v4331, %v3299
          %v4333 = vadd.f32 %v4332, %v3300
          %v4334 = vadd.f32 %v4333, %v3301
          %v4335 = vadd.f32 %v4334, %v3302
          %v4336 = vadd.f32 %v4335, %v3303
          %v4337 = vadd.f32 %v4336, %v3304
          %v4338 = vadd.f32 %v4337, %v3305
          %v4339 = vadd.f32 %v4338, %v3306
          %v4340 = vadd.f32 %v4339, %v3307
          %v4341 = vadd.f32 %v4340, %v3308
          %v4342 = vadd.f32 %v4341, %v3309
          %v4343 = vadd.f32 %v4342, %v3310
          %v4344 = vadd.f32 %v4343, %v3311
          %v4345 = vadd.f32 %v4344, %v3312
          %v4346 = vadd.f32 %v4345, %v3313
          %v4347 = vadd.f32 %v4346, %v3314
          %v4348 = vadd.f32 %v4347, %v3315
          %v4349 = vadd.f32 %v4348, %v3316
          %v4350 = vadd.f32 %v4349, %v3317
          %v4351 = vadd.f32 %v4350, %v3318
          %v4352 = vadd.f32 %v4351, %v3319
          %v4353 = vadd.f32 %v4352, %v3320
          %v4354 = vadd.f32 %v4353, %v3321
          %v4355 = vadd.f32 %v4354, %v3322
          %v4356 = vadd.f32 %v4355, %v3323
          %v4357 = vadd.f32 %v4356, %v3324
          %v4358 = vadd.f32 %v4357, %v3325
          %v4359 = vadd.f32 %v4358, %v3326
          %v4360 = vadd.f32 %v4359, %v3327
          %v4361 = vadd.f32 %v4360, %v3328
          %v4362 = vadd.f32 %v4361, %v3329
          %v4363 = vadd.f32 %v4362, %v3330
          %v4364 = vadd.f32 %v4363, %v3331
          %v4365 = vadd.f32 %v4364, %v3332
          %v4366 = vadd.f32 %v4365, %v3333
          %v4367 = vadd.f32 %v4366, %v3334
          %v4368 = vadd.f32 %v4367, %v3335
          %v4369 = vadd.f32 %v4368, %v3336
          %v4370 = vadd.f32 %v4369, %v3337
          %v4371 = vadd.f32 %v4370, %v3338
          %v4372 = vadd.f32 %v4371, %v3339
          %v4373 = vadd.f32 %v4372, %v3340
          %v4374 = vadd.f32 %v4373, %v3341
          %v4375 = vadd.f32 %v4374, %v3342
          %v4376 = vadd.f32 %v4375, %v3343
          %v4377 = vadd.f32 %v4376, %v3344
          %v4378 = vadd.f32 %v4377, %v3345
          %v4379 = vadd.f32 %v4378, %v3346
          %v4380 = vadd.f32 %v4379, %v3347
          %v4381 = vadd.f32 %v4380, %v3348
          %v4382 = vadd.f32 %v4381, %v3349
          %v4383 = vadd.f32 %v4382, %v3350
          %v4384 = vadd.f32 %v3360, %v4383
          %4385 = vst [vmem:[#allocation2] sm:$0xff] %v4384
        $region44: #{euclidean_metric_forward.1} parent=27 // pred_fallthru
          _
        // Predicated region
        $region45: #{euclidean_metric_forward.1} parent=27 // pred_check
          %p4386 = pneg %p3355
        $region46: #{euclidean_metric_forward.1} parent=27 // pred_check_branch
          %4388 = sbr.rel (%p4386) target = $region48
        $region47: #{euclidean_metric_forward.1} parent=27 // pred_region
          %v4389 = vlaneseq
          %v4390 = vshrl.u32 %v4389, 7
          %v4391 = vadd.s32 %v4390, 8
          %v4392 = vadd.s32 %v4390, 16
          %v4393 = vadd.s32 %v4390, 24
          %v4394 = vadd.s32 %v4390, 32
          %v4395 = vadd.s32 %v4390, 40
          %v4396 = vadd.s32 %v4390, 48
          %v4397 = vadd.s32 %v4390, 56
          %v4398 = vadd.s32 %v4390, 64
          %v4399 = vadd.s32 %v4390, 72
          %v4400 = vadd.s32 %v4390, 80
          %v4401 = vadd.s32 %v4390, 88
          %v4402 = vadd.s32 %v4390, 96
          %v4403 = vadd.s32 %v4390, 104
          %v4404 = vadd.s32 %v4390, 112
          %v4405 = vadd.s32 %v4390, 120
          %v4406 = vadd.s32 %v4390, 128
          %v4407 = vadd.s32 %v4390, 136
          %v4408 = vadd.s32 %v4390, 144
          %v4409 = vadd.s32 %v4390, 152
          %v4410 = vadd.s32 %v4390, 160
          %v4411 = vadd.s32 %v4390, 168
          %v4412 = vadd.s32 %v4390, 176
          %v4413 = vadd.s32 %v4390, 184
          %v4414 = vadd.s32 %v4390, 192
          %v4415 = vadd.s32 %v4390, 200
          %v4416 = vadd.s32 %v4390, 208
          %v4417 = vadd.s32 %v4390, 216
          %v4418 = vadd.s32 %v4390, 224
          %v4419 = vadd.s32 %v4390, 232
          %v4420 = vadd.s32 %v4390, 240
          %v4421 = vadd.s32 %v4390, 248
          %v4422 = vadd.s32 %v4390, 256
          %v4423 = vadd.s32 %v4390, 264
          %v4424 = vadd.s32 %v4390, 272
          %v4425 = vadd.s32 %v4390, 280
          %v4426 = vadd.s32 %v4390, 288
          %v4427 = vadd.s32 %v4390, 296
          %v4428 = vadd.s32 %v4390, 304
          %v4429 = vadd.s32 %v4390, 312
          %v4430 = vadd.s32 %v4390, 320
          %v4431 = vadd.s32 %v4390, 328
          %v4432 = vadd.s32 %v4390, 336
          %v4433 = vadd.s32 %v4390, 344
          %v4434 = vadd.s32 %v4390, 352
          %v4435 = vadd.s32 %v4390, 360
          %v4436 = vadd.s32 %v4390, 368
          %v4437 = vadd.s32 %v4390, 376
          %v4438 = vadd.s32 %v4390, 384
          %v4439 = vadd.s32 %v4390, 392
          %v4440 = vadd.s32 %v4390, 400
          %v4441 = vadd.s32 %v4390, 408
          %v4442 = vadd.s32 %v4390, 416
          %v4443 = vadd.s32 %v4390, 424
          %v4444 = vadd.s32 %v4390, 432
          %v4445 = vadd.s32 %v4390, 440
          %v4446 = vadd.s32 %v4390, 448
          %v4447 = vadd.s32 %v4390, 456
          %v4448 = vadd.s32 %v4390, 464
          %v4449 = vadd.s32 %v4390, 472
          %v4450 = vadd.s32 %v4390, 480
          %v4451 = vadd.s32 %v4390, 488
          %v4452 = vadd.s32 %v4390, 496
          %v4453 = vadd.s32 %v4390, 504
          %v4454 = vadd.s32 %v4390, 512
          %v4455 = vadd.s32 %v4390, 520
          %v4456 = vadd.s32 %v4390, 528
          %v4457 = vadd.s32 %v4390, 536
          %v4458 = vadd.s32 %v4390, 544
          %v4459 = vadd.s32 %v4390, 552
          %v4460 = vadd.s32 %v4390, 560
          %v4461 = vadd.s32 %v4390, 568
          %v4462 = vadd.s32 %v4390, 576
          %v4463 = vadd.s32 %v4390, 584
          %v4464 = vadd.s32 %v4390, 592
          %v4465 = vadd.s32 %v4390, 600
          %v4466 = vadd.s32 %v4390, 608
          %v4467 = vadd.s32 %v4390, 616
          %v4468 = vadd.s32 %v4390, 624
          %v4469 = vadd.s32 %v4390, 632
          %v4470 = vadd.s32 %v4390, 640
          %v4471 = vadd.s32 %v4390, 648
          %v4472 = vadd.s32 %v4390, 656
          %v4473 = vadd.s32 %v4390, 664
          %v4474 = vadd.s32 %v4390, 672
          %v4475 = vadd.s32 %v4390, 680
          %v4476 = vadd.s32 %v4390, 688
          %v4477 = vadd.s32 %v4390, 696
          %v4478 = vadd.s32 %v4390, 704
          %v4479 = vadd.s32 %v4390, 712
          %v4480 = vadd.s32 %v4390, 720
          %v4481 = vadd.s32 %v4390, 728
          %v4482 = vadd.s32 %v4390, 736
          %v4483 = vadd.s32 %v4390, 744
          %v4484 = vadd.s32 %v4390, 752
          %v4485 = vadd.s32 %v4390, 760
          %v4486 = vadd.s32 %v4390, 768
          %v4487 = vadd.s32 %v4390, 776
          %v4488 = vadd.s32 %v4390, 784
          %v4489 = vadd.s32 %v4390, 792
          %v4490 = vadd.s32 %v4390, 800
          %v4491 = vadd.s32 %v4390, 808
          %v4492 = vadd.s32 %v4390, 816
          %v4493 = vadd.s32 %v4390, 824
          %v4494 = vadd.s32 %v4390, 832
          %v4495 = vadd.s32 %v4390, 840
          %v4496 = vadd.s32 %v4390, 848
          %v4497 = vadd.s32 %v4390, 856
          %v4498 = vadd.s32 %v4390, 864
          %v4499 = vadd.s32 %v4390, 872
          %v4500 = vadd.s32 %v4390, 880
          %v4501 = vadd.s32 %v4390, 888
          %v4502 = vadd.s32 %v4390, 896
          %v4503 = vadd.s32 %v4390, 904
          %v4504 = vadd.s32 %v4390, 912
          %v4505 = vadd.s32 %v4390, 920
          %v4506 = vadd.s32 %v4390, 928
          %v4507 = vadd.s32 %v4390, 936
          %v4508 = vadd.s32 %v4390, 944
          %v4509 = vadd.s32 %v4390, 952
          %v4510 = vadd.s32 %v4390, 960
          %v4511 = vadd.s32 %v4390, 968
          %v4512 = vadd.s32 %v4390, 976
          %v4513 = vadd.s32 %v4390, 984
          %v4514 = vadd.s32 %v4390, 992
          %v4515 = vadd.s32 %v4390, 1000
          %v4516 = vadd.s32 %v4390, 1008
          %v4517 = vadd.s32 %v4390, 1016
          %v4518 = vadd.s32 %v4390, 1024
          %v4519 = vadd.s32 %v4390, 1032
          %v4520 = vadd.s32 %v4390, 1040
          %v4521 = vadd.s32 %v4390, 1048
          %v4522 = vadd.s32 %v4390, 1056
          %v4523 = vadd.s32 %v4390, 1064
          %v4524 = vadd.s32 %v4390, 1072
          %v4525 = vadd.s32 %v4390, 1080
          %v4526 = vadd.s32 %v4390, 1088
          %v4527 = vadd.s32 %v4390, 1096
          %v4528 = vadd.s32 %v4390, 1104
          %v4529 = vadd.s32 %v4390, 1112
          %v4530 = vadd.s32 %v4390, 1120
          %v4531 = vadd.s32 %v4390, 1128
          %v4532 = vadd.s32 %v4390, 1136
          %v4533 = vadd.s32 %v4390, 1144
          %v4534 = vadd.s32 %v4390, 1152
          %v4535 = vadd.s32 %v4390, 1160
          %v4536 = vadd.s32 %v4390, 1168
          %v4537 = vadd.s32 %v4390, 1176
          %v4538 = vadd.s32 %v4390, 1184
          %v4539 = vadd.s32 %v4390, 1192
          %v4540 = vadd.s32 %v4390, 1200
          %v4541 = vadd.s32 %v4390, 1208
          %v4542 = vadd.s32 %v4390, 1216
          %v4543 = vadd.s32 %v4390, 1224
          %v4544 = vadd.s32 %v4390, 1232
          %v4545 = vadd.s32 %v4390, 1240
          %v4546 = vadd.s32 %v4390, 1248
          %v4547 = vadd.s32 %v4390, 1256
          %v4548 = vadd.s32 %v4390, 1264
          %v4549 = vadd.s32 %v4390, 1272
          %v4550 = vadd.s32 %v4390, 1280
          %v4551 = vadd.s32 %v4390, 1288
          %v4552 = vadd.s32 %v4390, 1296
          %v4553 = vadd.s32 %v4390, 1304
          %v4554 = vadd.s32 %v4390, 1312
          %v4555 = vadd.s32 %v4390, 1320
          %v4556 = vadd.s32 %v4390, 1328
          %v4557 = vadd.s32 %v4390, 1336
          %v4558 = vadd.s32 %v4390, 1344
          %v4559 = vadd.s32 %v4390, 1352
          %v4560 = vadd.s32 %v4390, 1360
          %v4561 = vadd.s32 %v4390, 1368
          %v4562 = vadd.s32 %v4390, 1376
          %v4563 = vadd.s32 %v4390, 1384
          %v4564 = vadd.s32 %v4390, 1392
          %v4565 = vadd.s32 %v4390, 1400
          %v4566 = vadd.s32 %v4390, 1408
          %v4567 = vadd.s32 %v4390, 1416
          %v4568 = vadd.s32 %v4390, 1424
          %v4569 = vadd.s32 %v4390, 1432
          %v4570 = vadd.s32 %v4390, 1440
          %v4571 = vadd.s32 %v4390, 1448
          %v4572 = vadd.s32 %v4390, 1456
          %v4573 = vadd.s32 %v4390, 1464
          %v4574 = vadd.s32 %v4390, 1472
          %v4575 = vadd.s32 %v4390, 1480
          %v4576 = vadd.s32 %v4390, 1488
          %v4577 = vadd.s32 %v4390, 1496
          %v4578 = vadd.s32 %v4390, 1504
          %v4579 = vadd.s32 %v4390, 1512
          %v4580 = vadd.s32 %v4390, 1520
          %v4581 = vadd.s32 %v4390, 1528
          %v4582 = vadd.s32 %v4390, 1536
          %v4583 = vadd.s32 %v4390, 1544
          %v4584 = vadd.s32 %v4390, 1552
          %v4585 = vadd.s32 %v4390, 1560
          %v4586 = vadd.s32 %v4390, 1568
          %v4587 = vadd.s32 %v4390, 1576
          %v4588 = vadd.s32 %v4390, 1584
          %v4589 = vadd.s32 %v4390, 1592
          %v4590 = vadd.s32 %v4390, 1600
          %v4591 = vadd.s32 %v4390, 1608
          %v4592 = vadd.s32 %v4390, 1616
          %v4593 = vadd.s32 %v4390, 1624
          %v4594 = vadd.s32 %v4390, 1632
          %v4595 = vadd.s32 %v4390, 1640
          %v4596 = vadd.s32 %v4390, 1648
          %v4597 = vadd.s32 %v4390, 1656
          %v4598 = vadd.s32 %v4390, 1664
          %v4599 = vadd.s32 %v4390, 1672
          %v4600 = vadd.s32 %v4390, 1680
          %v4601 = vadd.s32 %v4390, 1688
          %v4602 = vadd.s32 %v4390, 1696
          %v4603 = vadd.s32 %v4390, 1704
          %v4604 = vadd.s32 %v4390, 1712
          %v4605 = vadd.s32 %v4390, 1720
          %v4606 = vadd.s32 %v4390, 1728
          %v4607 = vadd.s32 %v4390, 1736
          %v4608 = vadd.s32 %v4390, 1744
          %v4609 = vadd.s32 %v4390, 1752
          %v4610 = vadd.s32 %v4390, 1760
          %v4611 = vadd.s32 %v4390, 1768
          %v4612 = vadd.s32 %v4390, 1776
          %v4613 = vadd.s32 %v4390, 1784
          %v4614 = vadd.s32 %v4390, 1792
          %v4615 = vadd.s32 %v4390, 1800
          %v4616 = vadd.s32 %v4390, 1808
          %v4617 = vadd.s32 %v4390, 1816
          %v4618 = vadd.s32 %v4390, 1824
          %v4619 = vadd.s32 %v4390, 1832
          %v4620 = vadd.s32 %v4390, 1840
          %v4621 = vadd.s32 %v4390, 1848
          %v4622 = vadd.s32 %v4390, 1856
          %v4623 = vadd.s32 %v4390, 1864
          %v4624 = vadd.s32 %v4390, 1872
          %v4625 = vadd.s32 %v4390, 1880
          %v4626 = vadd.s32 %v4390, 1888
          %v4627 = vadd.s32 %v4390, 1896
          %v4628 = vadd.s32 %v4390, 1904
          %v4629 = vadd.s32 %v4390, 1912
          %v4630 = vadd.s32 %v4390, 1920
          %v4631 = vadd.s32 %v4390, 1928
          %v4632 = vadd.s32 %v4390, 1936
          %v4633 = vadd.s32 %v4390, 1944
          %v4634 = vadd.s32 %v4390, 1952
          %v4635 = vadd.s32 %v4390, 1960
          %v4636 = vadd.s32 %v4390, 1968
          %v4637 = vadd.s32 %v4390, 1976
          %v4638 = vadd.s32 %v4390, 1984
          %v4639 = vadd.s32 %v4390, 1992
          %v4640 = vadd.s32 %v4390, 2000
          %v4641 = vadd.s32 %v4390, 2008
          %v4642 = vadd.s32 %v4390, 2016
          %v4643 = vadd.s32 %v4390, 2024
          %v4644 = vadd.s32 %v4390, 2032
          %v4645 = vadd.s32 %v4390, 2040
          %v4646 = vadd.s32 %v4390, 2048
          %v4647 = vadd.s32 %v4390, 2056
          %v4648 = vadd.s32 %v4390, 2064
          %v4649 = vadd.s32 %v4390, 2072
          %v4650 = vadd.s32 %v4390, 2080
          %v4651 = vadd.s32 %v4390, 2088
          %v4652 = vadd.s32 %v4390, 2096
          %v4653 = vadd.s32 %v4390, 2104
          %v4654 = vadd.s32 %v4390, 2112
          %v4655 = vadd.s32 %v4390, 2120
          %v4656 = vadd.s32 %v4390, 2128
          %v4657 = vadd.s32 %v4390, 2136
          %v4658 = vadd.s32 %v4390, 2144
          %v4659 = vadd.s32 %v4390, 2152
          %v4660 = vadd.s32 %v4390, 2160
          %v4661 = vadd.s32 %v4390, 2168
          %v4662 = vadd.s32 %v4390, 2176
          %v4663 = vadd.s32 %v4390, 2184
          %v4664 = vadd.s32 %v4390, 2192
          %v4665 = vadd.s32 %v4390, 2200
          %v4666 = vadd.s32 %v4390, 2208
          %v4667 = vadd.s32 %v4390, 2216
          %v4668 = vadd.s32 %v4390, 2224
          %v4669 = vadd.s32 %v4390, 2232
          %v4670 = vadd.s32 %v4390, 2240
          %v4671 = vadd.s32 %v4390, 2248
          %v4672 = vadd.s32 %v4390, 2256
          %v4673 = vadd.s32 %v4390, 2264
          %v4674 = vadd.s32 %v4390, 2272
          %v4675 = vadd.s32 %v4390, 2280
          %v4676 = vadd.s32 %v4390, 2288
          %v4677 = vadd.s32 %v4390, 2296
          %v4678 = vadd.s32 %v4390, 2304
          %v4679 = vadd.s32 %v4390, 2312
          %v4680 = vadd.s32 %v4390, 2320
          %v4681 = vadd.s32 %v4390, 2328
          %v4682 = vadd.s32 %v4390, 2336
          %v4683 = vadd.s32 %v4390, 2344
          %v4684 = vadd.s32 %v4390, 2352
          %v4685 = vadd.s32 %v4390, 2360
          %v4686 = vadd.s32 %v4390, 2368
          %v4687 = vadd.s32 %v4390, 2376
          %v4688 = vadd.s32 %v4390, 2384
          %v4689 = vadd.s32 %v4390, 2392
          %v4690 = vadd.s32 %v4390, 2400
          %v4691 = vadd.s32 %v4390, 2408
          %v4692 = vadd.s32 %v4390, 2416
          %v4693 = vadd.s32 %v4390, 2424
          %v4694 = vadd.s32 %v4390, 2432
          %v4695 = vadd.s32 %v4390, 2440
          %v4696 = vadd.s32 %v4390, 2448
          %v4697 = vadd.s32 %v4390, 2456
          %v4698 = vadd.s32 %v4390, 2464
          %v4699 = vadd.s32 %v4390, 2472
          %v4700 = vadd.s32 %v4390, 2480
          %v4701 = vadd.s32 %v4390, 2488
          %v4702 = vadd.s32 %v4390, 2496
          %v4703 = vadd.s32 %v4390, 2504
          %v4704 = vadd.s32 %v4390, 2512
          %v4705 = vadd.s32 %v4390, 2520
          %v4706 = vadd.s32 %v4390, 2528
          %v4707 = vadd.s32 %v4390, 2536
          %v4708 = vadd.s32 %v4390, 2544
          %v4709 = vadd.s32 %v4390, 2552
          %v4710 = vadd.s32 %v4390, 2560
          %v4711 = vadd.s32 %v4390, 2568
          %v4712 = vadd.s32 %v4390, 2576
          %v4713 = vadd.s32 %v4390, 2584
          %v4714 = vadd.s32 %v4390, 2592
          %v4715 = vadd.s32 %v4390, 2600
          %v4716 = vadd.s32 %v4390, 2608
          %v4717 = vadd.s32 %v4390, 2616
          %v4718 = vadd.s32 %v4390, 2624
          %v4719 = vadd.s32 %v4390, 2632
          %v4720 = vadd.s32 %v4390, 2640
          %v4721 = vadd.s32 %v4390, 2648
          %v4722 = vadd.s32 %v4390, 2656
          %v4723 = vadd.s32 %v4390, 2664
          %v4724 = vadd.s32 %v4390, 2672
          %v4725 = vadd.s32 %v4390, 2680
          %v4726 = vadd.s32 %v4390, 2688
          %v4727 = vadd.s32 %v4390, 2696
          %v4728 = vadd.s32 %v4390, 2704
          %v4729 = vadd.s32 %v4390, 2712
          %v4730 = vadd.s32 %v4390, 2720
          %v4731 = vadd.s32 %v4390, 2728
          %v4732 = vadd.s32 %v4390, 2736
          %v4733 = vadd.s32 %v4390, 2744
          %v4734 = vadd.s32 %v4390, 2752
          %v4735 = vadd.s32 %v4390, 2760
          %v4736 = vadd.s32 %v4390, 2768
          %v4737 = vadd.s32 %v4390, 2776
          %v4738 = vadd.s32 %v4390, 2784
          %v4739 = vadd.s32 %v4390, 2792
          %v4740 = vadd.s32 %v4390, 2800
          %v4741 = vadd.s32 %v4390, 2808
          %v4742 = vadd.s32 %v4390, 2816
          %v4743 = vadd.s32 %v4390, 2824
          %v4744 = vadd.s32 %v4390, 2832
          %v4745 = vadd.s32 %v4390, 2840
          %v4746 = vadd.s32 %v4390, 2848
          %v4747 = vadd.s32 %v4390, 2856
          %v4748 = vadd.s32 %v4390, 2864
          %v4749 = vadd.s32 %v4390, 2872
          %v4750 = vadd.s32 %v4390, 2880
          %v4751 = vadd.s32 %v4390, 2888
          %v4752 = vadd.s32 %v4390, 2896
          %v4753 = vadd.s32 %v4390, 2904
          %v4754 = vadd.s32 %v4390, 2912
          %v4755 = vadd.s32 %v4390, 2920
          %v4756 = vadd.s32 %v4390, 2928
          %v4757 = vadd.s32 %v4390, 2936
          %v4758 = vadd.s32 %v4390, 2944
          %v4759 = vadd.s32 %v4390, 2952
          %v4760 = vadd.s32 %v4390, 2960
          %v4761 = vadd.s32 %v4390, 2968
          %v4762 = vadd.s32 %v4390, 2976
          %v4763 = vadd.s32 %v4390, 2984
          %v4764 = vadd.s32 %v4390, 2992
          %v4765 = vadd.s32 %v4390, 3000
          %v4766 = vadd.s32 %v4390, 3008
          %v4767 = vadd.s32 %v4390, 3016
          %v4768 = vadd.s32 %v4390, 3024
          %v4769 = vadd.s32 %v4390, 3032
          %v4770 = vadd.s32 %v4390, 3040
          %v4771 = vadd.s32 %v4390, 3048
          %v4772 = vadd.s32 %v4390, 3056
          %v4773 = vadd.s32 %v4390, 3064
          %v4774 = vadd.s32 %v4390, 3072
          %v4775 = vadd.s32 %v4390, 3080
          %v4776 = vadd.s32 %v4390, 3088
          %v4777 = vadd.s32 %v4390, 3096
          %v4778 = vadd.s32 %v4390, 3104
          %v4779 = vadd.s32 %v4390, 3112
          %v4780 = vadd.s32 %v4390, 3120
          %v4781 = vadd.s32 %v4390, 3128
          %v4782 = vadd.s32 %v4390, 3136
          %v4783 = vadd.s32 %v4390, 3144
          %v4784 = vadd.s32 %v4390, 3152
          %v4785 = vadd.s32 %v4390, 3160
          %v4786 = vadd.s32 %v4390, 3168
          %v4787 = vadd.s32 %v4390, 3176
          %v4788 = vadd.s32 %v4390, 3184
          %v4789 = vadd.s32 %v4390, 3192
          %v4790 = vadd.s32 %v4390, 3200
          %v4791 = vadd.s32 %v4390, 3208
          %v4792 = vadd.s32 %v4390, 3216
          %v4793 = vadd.s32 %v4390, 3224
          %v4794 = vadd.s32 %v4390, 3232
          %v4795 = vadd.s32 %v4390, 3240
          %v4796 = vadd.s32 %v4390, 3248
          %v4797 = vadd.s32 %v4390, 3256
          %v4798 = vadd.s32 %v4390, 3264
          %v4799 = vadd.s32 %v4390, 3272
          %v4800 = vadd.s32 %v4390, 3280
          %v4801 = vadd.s32 %v4390, 3288
          %v4802 = vadd.s32 %v4390, 3296
          %v4803 = vadd.s32 %v4390, 3304
          %v4804 = vadd.s32 %v4390, 3312
          %v4805 = vadd.s32 %v4390, 3320
          %v4806 = vadd.s32 %v4390, 3328
          %v4807 = vadd.s32 %v4390, 3336
          %v4808 = vadd.s32 %v4390, 3344
          %v4809 = vadd.s32 %v4390, 3352
          %v4810 = vadd.s32 %v4390, 3360
          %v4811 = vadd.s32 %v4390, 3368
          %v4812 = vadd.s32 %v4390, 3376
          %v4813 = vadd.s32 %v4390, 3384
          %v4814 = vadd.s32 %v4390, 3392
          %v4815 = vadd.s32 %v4390, 3400
          %v4816 = vadd.s32 %v4390, 3408
          %v4817 = vadd.s32 %v4390, 3416
          %v4818 = vadd.s32 %v4390, 3424
          %v4819 = vadd.s32 %v4390, 3432
          %v4820 = vadd.s32 %v4390, 3440
          %v4821 = vadd.s32 %v4390, 3448
          %v4822 = vadd.s32 %v4390, 3456
          %v4823 = vadd.s32 %v4390, 3464
          %v4824 = vadd.s32 %v4390, 3472
          %v4825 = vadd.s32 %v4390, 3480
          %v4826 = vadd.s32 %v4390, 3488
          %v4827 = vadd.s32 %v4390, 3496
          %v4828 = vadd.s32 %v4390, 3504
          %v4829 = vadd.s32 %v4390, 3512
          %v4830 = vadd.s32 %v4390, 3520
          %v4831 = vadd.s32 %v4390, 3528
          %v4832 = vadd.s32 %v4390, 3536
          %v4833 = vadd.s32 %v4390, 3544
          %v4834 = vadd.s32 %v4390, 3552
          %v4835 = vadd.s32 %v4390, 3560
          %v4836 = vadd.s32 %v4390, 3568
          %v4837 = vadd.s32 %v4390, 3576
          %v4838 = vadd.s32 %v4390, 3584
          %v4839 = vadd.s32 %v4390, 3592
          %v4840 = vadd.s32 %v4390, 3600
          %v4841 = vadd.s32 %v4390, 3608
          %v4842 = vadd.s32 %v4390, 3616
          %v4843 = vadd.s32 %v4390, 3624
          %v4844 = vadd.s32 %v4390, 3632
          %v4845 = vadd.s32 %v4390, 3640
          %v4846 = vadd.s32 %v4390, 3648
          %v4847 = vadd.s32 %v4390, 3656
          %v4848 = vadd.s32 %v4390, 3664
          %v4849 = vadd.s32 %v4390, 3672
          %v4850 = vadd.s32 %v4390, 3680
          %v4851 = vadd.s32 %v4390, 3688
          %v4852 = vadd.s32 %v4390, 3696
          %v4853 = vadd.s32 %v4390, 3704
          %v4854 = vadd.s32 %v4390, 3712
          %v4855 = vadd.s32 %v4390, 3720
          %v4856 = vadd.s32 %v4390, 3728
          %v4857 = vadd.s32 %v4390, 3736
          %v4858 = vadd.s32 %v4390, 3744
          %v4859 = vadd.s32 %v4390, 3752
          %v4860 = vadd.s32 %v4390, 3760
          %v4861 = vadd.s32 %v4390, 3768
          %v4862 = vadd.s32 %v4390, 3776
          %v4863 = vadd.s32 %v4390, 3784
          %v4864 = vadd.s32 %v4390, 3792
          %v4865 = vadd.s32 %v4390, 3800
          %v4866 = vadd.s32 %v4390, 3808
          %v4867 = vadd.s32 %v4390, 3816
          %v4868 = vadd.s32 %v4390, 3824
          %v4869 = vadd.s32 %v4390, 3832
          %v4870 = vadd.s32 %v4390, 3840
          %v4871 = vadd.s32 %v4390, 3848
          %v4872 = vadd.s32 %v4390, 3856
          %v4873 = vadd.s32 %v4390, 3864
          %v4874 = vadd.s32 %v4390, 3872
          %v4875 = vadd.s32 %v4390, 3880
          %v4876 = vadd.s32 %v4390, 3888
          %v4877 = vadd.s32 %v4390, 3896
          %v4878 = vadd.s32 %v4390, 3904
          %v4879 = vadd.s32 %v4390, 3912
          %v4880 = vadd.s32 %v4390, 3920
          %v4881 = vadd.s32 %v4390, 3928
          %v4882 = vadd.s32 %v4390, 3936
          %v4883 = vadd.s32 %v4390, 3944
          %v4884 = vadd.s32 %v4390, 3952
          %v4885 = vadd.s32 %v4390, 3960
          %v4886 = vadd.s32 %v4390, 3968
          %v4887 = vadd.s32 %v4390, 3976
          %v4888 = vadd.s32 %v4390, 3984
          %v4889 = vadd.s32 %v4390, 3992
          %v4890 = vadd.s32 %v4390, 4000
          %v4891 = vadd.s32 %v4390, 4008
          %v4892 = vadd.s32 %v4390, 4016
          %v4893 = vadd.s32 %v4390, 4024
          %v4894 = vadd.s32 %v4390, 4032
          %v4895 = vadd.s32 %v4390, 4040
          %v4896 = vadd.s32 %v4390, 4048
          %v4897 = vadd.s32 %v4390, 4056
          %v4898 = vadd.s32 %v4390, 4064
          %v4899 = vadd.s32 %v4390, 4072
          %v4900 = vadd.s32 %v4390, 4080
          %v4901 = vadd.s32 %v4390, 4088
          %v4902 = vadd.s32 %v4390, 4096
          %v4903 = vadd.s32 %v4390, 4104
          %v4904 = vadd.s32 %v4390, 4112
          %v4905 = vadd.s32 %v4390, 4120
          %v4906 = vadd.s32 %v4390, 4128
          %v4907 = vadd.s32 %v4390, 4136
          %v4908 = vadd.s32 %v4390, 4144
          %v4909 = vadd.s32 %v4390, 4152
          %v4910 = vadd.s32 %v4390, 4160
          %v4911 = vadd.s32 %v4390, 4168
          %v4912 = vadd.s32 %v4390, 4176
          %v4913 = vadd.s32 %v4390, 4184
          %v4914 = vadd.s32 %v4390, 4192
          %v4915 = vadd.s32 %v4390, 4200
          %v4916 = vadd.s32 %v4390, 4208
          %v4917 = vadd.s32 %v4390, 4216
          %v4918 = vadd.s32 %v4390, 4224
          %v4919 = vadd.s32 %v4390, 4232
          %v4920 = vadd.s32 %v4390, 4240
          %v4921 = vadd.s32 %v4390, 4248
          %v4922 = vadd.s32 %v4390, 4256
          %v4923 = vadd.s32 %v4390, 4264
          %v4924 = vadd.s32 %v4390, 4272
          %v4925 = vadd.s32 %v4390, 4280
          %v4926 = vadd.s32 %v4390, 4288
          %v4927 = vadd.s32 %v4390, 4296
          %v4928 = vadd.s32 %v4390, 4304
          %v4929 = vadd.s32 %v4390, 4312
          %v4930 = vadd.s32 %v4390, 4320
          %v4931 = vadd.s32 %v4390, 4328
          %v4932 = vadd.s32 %v4390, 4336
          %v4933 = vadd.s32 %v4390, 4344
          %v4934 = vadd.s32 %v4390, 4352
          %v4935 = vadd.s32 %v4390, 4360
          %v4936 = vadd.s32 %v4390, 4368
          %v4937 = vadd.s32 %v4390, 4376
          %v4938 = vadd.s32 %v4390, 4384
          %v4939 = vadd.s32 %v4390, 4392
          %v4940 = vadd.s32 %v4390, 4400
          %v4941 = vadd.s32 %v4390, 4408
          %v4942 = vadd.s32 %v4390, 4416
          %v4943 = vadd.s32 %v4390, 4424
          %v4944 = vadd.s32 %v4390, 4432
          %v4945 = vadd.s32 %v4390, 4440
          %v4946 = vadd.s32 %v4390, 4448
          %v4947 = vadd.s32 %v4390, 4456
          %v4948 = vadd.s32 %v4390, 4464
          %v4949 = vadd.s32 %v4390, 4472
          %v4950 = vadd.s32 %v4390, 4480
          %v4951 = vadd.s32 %v4390, 4488
          %v4952 = vadd.s32 %v4390, 4496
          %v4953 = vadd.s32 %v4390, 4504
          %v4954 = vadd.s32 %v4390, 4512
          %v4955 = vadd.s32 %v4390, 4520
          %v4956 = vadd.s32 %v4390, 4528
          %v4957 = vadd.s32 %v4390, 4536
          %v4958 = vadd.s32 %v4390, 4544
          %v4959 = vadd.s32 %v4390, 4552
          %v4960 = vadd.s32 %v4390, 4560
          %v4961 = vadd.s32 %v4390, 4568
          %v4962 = vadd.s32 %v4390, 4576
          %v4963 = vadd.s32 %v4390, 4584
          %v4964 = vadd.s32 %v4390, 4592
          %v4965 = vadd.s32 %v4390, 4600
          %v4966 = vadd.s32 %v4390, 4608
          %v4967 = vadd.s32 %v4390, 4616
          %v4968 = vadd.s32 %v4390, 4624
          %v4969 = vadd.s32 %v4390, 4632
          %v4970 = vadd.s32 %v4390, 4640
          %v4971 = vadd.s32 %v4390, 4648
          %v4972 = vadd.s32 %v4390, 4656
          %v4973 = vadd.s32 %v4390, 4664
          %v4974 = vadd.s32 %v4390, 4672
          %v4975 = vadd.s32 %v4390, 4680
          %v4976 = vadd.s32 %v4390, 4688
          %v4977 = vadd.s32 %v4390, 4696
          %v4978 = vadd.s32 %v4390, 4704
          %v4979 = vadd.s32 %v4390, 4712
          %v4980 = vadd.s32 %v4390, 4720
          %v4981 = vadd.s32 %v4390, 4728
          %v4982 = vadd.s32 %v4390, 4736
          %v4983 = vadd.s32 %v4390, 4744
          %v4984 = vadd.s32 %v4390, 4752
          %v4985 = vadd.s32 %v4390, 4760
          %v4986 = vadd.s32 %v4390, 4768
          %v4987 = vadd.s32 %v4390, 4776
          %v4988 = vadd.s32 %v4390, 4784
          %v4989 = vadd.s32 %v4390, 4792
          %v4990 = vadd.s32 %v4390, 4800
          %v4991 = vadd.s32 %v4390, 4808
          %v4992 = vadd.s32 %v4390, 4816
          %v4993 = vadd.s32 %v4390, 4824
          %v4994 = vadd.s32 %v4390, 4832
          %v4995 = vadd.s32 %v4390, 4840
          %v4996 = vadd.s32 %v4390, 4848
          %v4997 = vadd.s32 %v4390, 4856
          %v4998 = vadd.s32 %v4390, 4864
          %v4999 = vadd.s32 %v4390, 4872
          %v5000 = vadd.s32 %v4390, 4880
          %v5001 = vadd.s32 %v4390, 4888
          %v5002 = vadd.s32 %v4390, 4896
          %v5003 = vadd.s32 %v4390, 4904
          %v5004 = vadd.s32 %v4390, 4912
          %v5005 = vadd.s32 %v4390, 4920
          %v5006 = vadd.s32 %v4390, 4928
          %v5007 = vadd.s32 %v4390, 4936
          %v5008 = vadd.s32 %v4390, 4944
          %v5009 = vadd.s32 %v4390, 4952
          %v5010 = vadd.s32 %v4390, 4960
          %v5011 = vadd.s32 %v4390, 4968
          %v5012 = vadd.s32 %v4390, 4976
          %v5013 = vadd.s32 %v4390, 4984
          %v5014 = vadd.s32 %v4390, 4992
          %v5015 = vadd.s32 %v4390, 5000
          %v5016 = vadd.s32 %v4390, 5008
          %v5017 = vadd.s32 %v4390, 5016
          %v5018 = vadd.s32 %v4390, 5024
          %v5019 = vadd.s32 %v4390, 5032
          %v5020 = vadd.s32 %v4390, 5040
          %v5021 = vadd.s32 %v4390, 5048
          %v5022 = vadd.s32 %v4390, 5056
          %v5023 = vadd.s32 %v4390, 5064
          %v5024 = vadd.s32 %v4390, 5072
          %v5025 = vadd.s32 %v4390, 5080
          %v5026 = vadd.s32 %v4390, 5088
          %v5027 = vadd.s32 %v4390, 5096
          %v5028 = vadd.s32 %v4390, 5104
          %v5029 = vadd.s32 %v4390, 5112
          %v5030 = vadd.s32 %v4390, 5120
          %v5031 = vadd.s32 %v4390, 5128
          %v5032 = vadd.s32 %v4390, 5136
          %v5033 = vadd.s32 %v4390, 5144
          %v5034 = vadd.s32 %v4390, 5152
          %v5035 = vadd.s32 %v4390, 5160
          %v5036 = vadd.s32 %v4390, 5168
          %v5037 = vadd.s32 %v4390, 5176
          %v5038 = vadd.s32 %v4390, 5184
          %v5039 = vadd.s32 %v4390, 5192
          %v5040 = vadd.s32 %v4390, 5200
          %v5041 = vadd.s32 %v4390, 5208
          %v5042 = vadd.s32 %v4390, 5216
          %v5043 = vadd.s32 %v4390, 5224
          %v5044 = vadd.s32 %v4390, 5232
          %v5045 = vadd.s32 %v4390, 5240
          %v5046 = vadd.s32 %v4390, 5248
          %v5047 = vadd.s32 %v4390, 5256
          %v5048 = vadd.s32 %v4390, 5264
          %v5049 = vadd.s32 %v4390, 5272
          %v5050 = vadd.s32 %v4390, 5280
          %v5051 = vadd.s32 %v4390, 5288
          %v5052 = vadd.s32 %v4390, 5296
          %v5053 = vadd.s32 %v4390, 5304
          %v5054 = vadd.s32 %v4390, 5312
          %v5055 = vadd.s32 %v4390, 5320
          %v5056 = vadd.s32 %v4390, 5328
          %v5057 = vadd.s32 %v4390, 5336
          %v5058 = vadd.s32 %v4390, 5344
          %v5059 = vadd.s32 %v4390, 5352
          %v5060 = vadd.s32 %v4390, 5360
          %v5061 = vadd.s32 %v4390, 5368
          %v5062 = vadd.s32 %v4390, 5376
          %v5063 = vadd.s32 %v4390, 5384
          %v5064 = vadd.s32 %v4390, 5392
          %v5065 = vadd.s32 %v4390, 5400
          %v5066 = vadd.s32 %v4390, 5408
          %v5067 = vadd.s32 %v4390, 5416
          %v5068 = vadd.s32 %v4390, 5424
          %v5069 = vadd.s32 %v4390, 5432
          %v5070 = vadd.s32 %v4390, 5440
          %v5071 = vadd.s32 %v4390, 5448
          %v5072 = vadd.s32 %v4390, 5456
          %v5073 = vadd.s32 %v4390, 5464
          %v5074 = vadd.s32 %v4390, 5472
          %v5075 = vadd.s32 %v4390, 5480
          %v5076 = vadd.s32 %v4390, 5488
          %v5077 = vadd.s32 %v4390, 5496
          %v5078 = vadd.s32 %v4390, 5504
          %v5079 = vadd.s32 %v4390, 5512
          %v5080 = vadd.s32 %v4390, 5520
          %v5081 = vadd.s32 %v4390, 5528
          %v5082 = vadd.s32 %v4390, 5536
          %v5083 = vadd.s32 %v4390, 5544
          %v5084 = vadd.s32 %v4390, 5552
          %v5085 = vadd.s32 %v4390, 5560
          %v5086 = vadd.s32 %v4390, 5568
          %v5087 = vadd.s32 %v4390, 5576
          %v5088 = vadd.s32 %v4390, 5584
          %v5089 = vadd.s32 %v4390, 5592
          %v5090 = vadd.s32 %v4390, 5600
          %v5091 = vadd.s32 %v4390, 5608
          %v5092 = vadd.s32 %v4390, 5616
          %v5093 = vadd.s32 %v4390, 5624
          %v5094 = vadd.s32 %v4390, 5632
          %v5095 = vadd.s32 %v4390, 5640
          %v5096 = vadd.s32 %v4390, 5648
          %v5097 = vadd.s32 %v4390, 5656
          %v5098 = vadd.s32 %v4390, 5664
          %v5099 = vadd.s32 %v4390, 5672
          %v5100 = vadd.s32 %v4390, 5680
          %v5101 = vadd.s32 %v4390, 5688
          %v5102 = vadd.s32 %v4390, 5696
          %v5103 = vadd.s32 %v4390, 5704
          %v5104 = vadd.s32 %v4390, 5712
          %v5105 = vadd.s32 %v4390, 5720
          %v5106 = vadd.s32 %v4390, 5728
          %v5107 = vadd.s32 %v4390, 5736
          %v5108 = vadd.s32 %v4390, 5744
          %v5109 = vadd.s32 %v4390, 5752
          %v5110 = vadd.s32 %v4390, 5760
          %v5111 = vadd.s32 %v4390, 5768
          %v5112 = vadd.s32 %v4390, 5776
          %v5113 = vadd.s32 %v4390, 5784
          %v5114 = vadd.s32 %v4390, 5792
          %v5115 = vadd.s32 %v4390, 5800
          %v5116 = vadd.s32 %v4390, 5808
          %v5117 = vadd.s32 %v4390, 5816
          %v5118 = vadd.s32 %v4390, 5824
          %v5119 = vadd.s32 %v4390, 5832
          %v5120 = vadd.s32 %v4390, 5840
          %v5121 = vadd.s32 %v4390, 5848
          %v5122 = vadd.s32 %v4390, 5856
          %v5123 = vadd.s32 %v4390, 5864
          %v5124 = vadd.s32 %v4390, 5872
          %v5125 = vadd.s32 %v4390, 5880
          %v5126 = vadd.s32 %v4390, 5888
          %v5127 = vadd.s32 %v4390, 5896
          %v5128 = vadd.s32 %v4390, 5904
          %v5129 = vadd.s32 %v4390, 5912
          %v5130 = vadd.s32 %v4390, 5920
          %v5131 = vadd.s32 %v4390, 5928
          %v5132 = vadd.s32 %v4390, 5936
          %v5133 = vadd.s32 %v4390, 5944
          %v5134 = vadd.s32 %v4390, 5952
          %v5135 = vadd.s32 %v4390, 5960
          %v5136 = vadd.s32 %v4390, 5968
          %v5137 = vadd.s32 %v4390, 5976
          %v5138 = vadd.s32 %v4390, 5984
          %v5139 = vadd.s32 %v4390, 5992
          %v5140 = vadd.s32 %v4390, 6000
          %v5141 = vadd.s32 %v4390, 6008
          %v5142 = vadd.s32 %v4390, 6016
          %v5143 = vadd.s32 %v4390, 6024
          %v5144 = vadd.s32 %v4390, 6032
          %v5145 = vadd.s32 %v4390, 6040
          %v5146 = vadd.s32 %v4390, 6048
          %v5147 = vadd.s32 %v4390, 6056
          %v5148 = vadd.s32 %v4390, 6064
          %v5149 = vadd.s32 %v4390, 6072
          %v5150 = vadd.s32 %v4390, 6080
          %v5151 = vadd.s32 %v4390, 6088
          %v5152 = vadd.s32 %v4390, 6096
          %v5153 = vadd.s32 %v4390, 6104
          %v5154 = vadd.s32 %v4390, 6112
          %v5155 = vadd.s32 %v4390, 6120
          %v5156 = vadd.s32 %v4390, 6128
          %v5157 = vadd.s32 %v4390, 6136
          %v5158 = vadd.s32 %v4390, 6144
          %v5159 = vadd.s32 %v4390, 6152
          %v5160 = vadd.s32 %v4390, 6160
          %v5161 = vadd.s32 %v4390, 6168
          %v5162 = vadd.s32 %v4390, 6176
          %v5163 = vadd.s32 %v4390, 6184
          %v5164 = vadd.s32 %v4390, 6192
          %v5165 = vadd.s32 %v4390, 6200
          %v5166 = vadd.s32 %v4390, 6208
          %v5167 = vadd.s32 %v4390, 6216
          %v5168 = vadd.s32 %v4390, 6224
          %v5169 = vadd.s32 %v4390, 6232
          %v5170 = vadd.s32 %v4390, 6240
          %v5171 = vadd.s32 %v4390, 6248
          %v5172 = vadd.s32 %v4390, 6256
          %v5173 = vadd.s32 %v4390, 6264
          %v5174 = vadd.s32 %v4390, 6272
          %v5175 = vadd.s32 %v4390, 6280
          %v5176 = vadd.s32 %v4390, 6288
          %v5177 = vadd.s32 %v4390, 6296
          %v5178 = vadd.s32 %v4390, 6304
          %v5179 = vadd.s32 %v4390, 6312
          %v5180 = vadd.s32 %v4390, 6320
          %v5181 = vadd.s32 %v4390, 6328
          %v5182 = vadd.s32 %v4390, 6336
          %v5183 = vadd.s32 %v4390, 6344
          %v5184 = vadd.s32 %v4390, 6352
          %v5185 = vadd.s32 %v4390, 6360
          %v5186 = vadd.s32 %v4390, 6368
          %v5187 = vadd.s32 %v4390, 6376
          %v5188 = vadd.s32 %v4390, 6384
          %v5189 = vadd.s32 %v4390, 6392
          %v5190 = vadd.s32 %v4390, 6400
          %v5191 = vadd.s32 %v4390, 6408
          %v5192 = vadd.s32 %v4390, 6416
          %v5193 = vadd.s32 %v4390, 6424
          %v5194 = vadd.s32 %v4390, 6432
          %v5195 = vadd.s32 %v4390, 6440
          %v5196 = vadd.s32 %v4390, 6448
          %v5197 = vadd.s32 %v4390, 6456
          %v5198 = vadd.s32 %v4390, 6464
          %v5199 = vadd.s32 %v4390, 6472
          %v5200 = vadd.s32 %v4390, 6480
          %v5201 = vadd.s32 %v4390, 6488
          %v5202 = vadd.s32 %v4390, 6496
          %v5203 = vadd.s32 %v4390, 6504
          %v5204 = vadd.s32 %v4390, 6512
          %v5205 = vadd.s32 %v4390, 6520
          %v5206 = vadd.s32 %v4390, 6528
          %v5207 = vadd.s32 %v4390, 6536
          %v5208 = vadd.s32 %v4390, 6544
          %v5209 = vadd.s32 %v4390, 6552
          %v5210 = vadd.s32 %v4390, 6560
          %v5211 = vadd.s32 %v4390, 6568
          %v5212 = vadd.s32 %v4390, 6576
          %v5213 = vadd.s32 %v4390, 6584
          %v5214 = vadd.s32 %v4390, 6592
          %v5215 = vadd.s32 %v4390, 6600
          %v5216 = vadd.s32 %v4390, 6608
          %v5217 = vadd.s32 %v4390, 6616
          %v5218 = vadd.s32 %v4390, 6624
          %v5219 = vadd.s32 %v4390, 6632
          %v5220 = vadd.s32 %v4390, 6640
          %v5221 = vadd.s32 %v4390, 6648
          %v5222 = vadd.s32 %v4390, 6656
          %v5223 = vadd.s32 %v4390, 6664
          %v5224 = vadd.s32 %v4390, 6672
          %v5225 = vadd.s32 %v4390, 6680
          %v5226 = vadd.s32 %v4390, 6688
          %v5227 = vadd.s32 %v4390, 6696
          %v5228 = vadd.s32 %v4390, 6704
          %v5229 = vadd.s32 %v4390, 6712
          %v5230 = vadd.s32 %v4390, 6720
          %v5231 = vadd.s32 %v4390, 6728
          %v5232 = vadd.s32 %v4390, 6736
          %v5233 = vadd.s32 %v4390, 6744
          %v5234 = vadd.s32 %v4390, 6752
          %v5235 = vadd.s32 %v4390, 6760
          %v5236 = vadd.s32 %v4390, 6768
          %v5237 = vadd.s32 %v4390, 6776
          %v5238 = vadd.s32 %v4390, 6784
          %v5239 = vadd.s32 %v4390, 6792
          %v5240 = vadd.s32 %v4390, 6800
          %v5241 = vadd.s32 %v4390, 6808
          %v5242 = vadd.s32 %v4390, 6816
          %v5243 = vadd.s32 %v4390, 6824
          %v5244 = vadd.s32 %v4390, 6832
          %v5245 = vadd.s32 %v4390, 6840
          %v5246 = vadd.s32 %v4390, 6848
          %v5247 = vadd.s32 %v4390, 6856
          %v5248 = vadd.s32 %v4390, 6864
          %v5249 = vadd.s32 %v4390, 6872
          %v5250 = vadd.s32 %v4390, 6880
          %v5251 = vadd.s32 %v4390, 6888
          %v5252 = vadd.s32 %v4390, 6896
          %v5253 = vadd.s32 %v4390, 6904
          %v5254 = vadd.s32 %v4390, 6912
          %v5255 = vadd.s32 %v4390, 6920
          %v5256 = vadd.s32 %v4390, 6928
          %v5257 = vadd.s32 %v4390, 6936
          %v5258 = vadd.s32 %v4390, 6944
          %v5259 = vadd.s32 %v4390, 6952
          %v5260 = vadd.s32 %v4390, 6960
          %v5261 = vadd.s32 %v4390, 6968
          %v5262 = vadd.s32 %v4390, 6976
          %v5263 = vadd.s32 %v4390, 6984
          %v5264 = vadd.s32 %v4390, 6992
          %v5265 = vadd.s32 %v4390, 7000
          %v5266 = vadd.s32 %v4390, 7008
          %v5267 = vadd.s32 %v4390, 7016
          %v5268 = vadd.s32 %v4390, 7024
          %v5269 = vadd.s32 %v4390, 7032
          %v5270 = vadd.s32 %v4390, 7040
          %v5271 = vadd.s32 %v4390, 7048
          %v5272 = vadd.s32 %v4390, 7056
          %v5273 = vadd.s32 %v4390, 7064
          %v5274 = vadd.s32 %v4390, 7072
          %v5275 = vadd.s32 %v4390, 7080
          %v5276 = vadd.s32 %v4390, 7088
          %v5277 = vadd.s32 %v4390, 7096
          %v5278 = vadd.s32 %v4390, 7104
          %v5279 = vadd.s32 %v4390, 7112
          %v5280 = vadd.s32 %v4390, 7120
          %v5281 = vadd.s32 %v4390, 7128
          %v5282 = vadd.s32 %v4390, 7136
          %v5283 = vadd.s32 %v4390, 7144
          %v5284 = vadd.s32 %v4390, 7152
          %v5285 = vadd.s32 %v4390, 7160
          %v5286 = vadd.s32 %v4390, 7168
          %v5287 = vadd.s32 %v4390, 7176
          %v5288 = vadd.s32 %v4390, 7184
          %v5289 = vadd.s32 %v4390, 7192
          %v5290 = vadd.s32 %v4390, 7200
          %v5291 = vadd.s32 %v4390, 7208
          %v5292 = vadd.s32 %v4390, 7216
          %v5293 = vadd.s32 %v4390, 7224
          %v5294 = vadd.s32 %v4390, 7232
          %v5295 = vadd.s32 %v4390, 7240
          %v5296 = vadd.s32 %v4390, 7248
          %v5297 = vadd.s32 %v4390, 7256
          %v5298 = vadd.s32 %v4390, 7264
          %v5299 = vadd.s32 %v4390, 7272
          %v5300 = vadd.s32 %v4390, 7280
          %v5301 = vadd.s32 %v4390, 7288
          %v5302 = vadd.s32 %v4390, 7296
          %v5303 = vadd.s32 %v4390, 7304
          %v5304 = vadd.s32 %v4390, 7312
          %v5305 = vadd.s32 %v4390, 7320
          %v5306 = vadd.s32 %v4390, 7328
          %v5307 = vadd.s32 %v4390, 7336
          %v5308 = vadd.s32 %v4390, 7344
          %v5309 = vadd.s32 %v4390, 7352
          %v5310 = vadd.s32 %v4390, 7360
          %v5311 = vadd.s32 %v4390, 7368
          %v5312 = vadd.s32 %v4390, 7376
          %v5313 = vadd.s32 %v4390, 7384
          %v5314 = vadd.s32 %v4390, 7392
          %v5315 = vadd.s32 %v4390, 7400
          %v5316 = vadd.s32 %v4390, 7408
          %v5317 = vadd.s32 %v4390, 7416
          %v5318 = vadd.s32 %v4390, 7424
          %v5319 = vadd.s32 %v4390, 7432
          %v5320 = vadd.s32 %v4390, 7440
          %v5321 = vadd.s32 %v4390, 7448
          %v5322 = vadd.s32 %v4390, 7456
          %v5323 = vadd.s32 %v4390, 7464
          %v5324 = vadd.s32 %v4390, 7472
          %v5325 = vadd.s32 %v4390, 7480
          %v5326 = vadd.s32 %v4390, 7488
          %v5327 = vadd.s32 %v4390, 7496
          %v5328 = vadd.s32 %v4390, 7504
          %v5329 = vadd.s32 %v4390, 7512
          %v5330 = vadd.s32 %v4390, 7520
          %v5331 = vadd.s32 %v4390, 7528
          %v5332 = vadd.s32 %v4390, 7536
          %v5333 = vadd.s32 %v4390, 7544
          %v5334 = vadd.s32 %v4390, 7552
          %v5335 = vadd.s32 %v4390, 7560
          %v5336 = vadd.s32 %v4390, 7568
          %v5337 = vadd.s32 %v4390, 7576
          %v5338 = vadd.s32 %v4390, 7584
          %v5339 = vadd.s32 %v4390, 7592
          %v5340 = vadd.s32 %v4390, 7600
          %v5341 = vadd.s32 %v4390, 7608
          %v5342 = vadd.s32 %v4390, 7616
          %v5343 = vadd.s32 %v4390, 7624
          %v5344 = vadd.s32 %v4390, 7632
          %v5345 = vadd.s32 %v4390, 7640
          %v5346 = vadd.s32 %v4390, 7648
          %v5347 = vadd.s32 %v4390, 7656
          %v5348 = vadd.s32 %v4390, 7664
          %v5349 = vadd.s32 %v4390, 7672
          %v5350 = vadd.s32 %v4390, 7680
          %v5351 = vadd.s32 %v4390, 7688
          %v5352 = vadd.s32 %v4390, 7696
          %v5353 = vadd.s32 %v4390, 7704
          %v5354 = vadd.s32 %v4390, 7712
          %v5355 = vadd.s32 %v4390, 7720
          %v5356 = vadd.s32 %v4390, 7728
          %v5357 = vadd.s32 %v4390, 7736
          %v5358 = vadd.s32 %v4390, 7744
          %v5359 = vadd.s32 %v4390, 7752
          %v5360 = vadd.s32 %v4390, 7760
          %v5361 = vadd.s32 %v4390, 7768
          %v5362 = vadd.s32 %v4390, 7776
          %v5363 = vadd.s32 %v4390, 7784
          %v5364 = vadd.s32 %v4390, 7792
          %v5365 = vadd.s32 %v4390, 7800
          %v5366 = vadd.s32 %v4390, 7808
          %v5367 = vadd.s32 %v4390, 7816
          %v5368 = vadd.s32 %v4390, 7824
          %v5369 = vadd.s32 %v4390, 7832
          %v5370 = vadd.s32 %v4390, 7840
          %v5371 = vadd.s32 %v4390, 7848
          %v5372 = vadd.s32 %v4390, 7856
          %v5373 = vadd.s32 %v4390, 7864
          %v5374 = vadd.s32 %v4390, 7872
          %v5375 = vadd.s32 %v4390, 7880
          %v5376 = vadd.s32 %v4390, 7888
          %v5377 = vadd.s32 %v4390, 7896
          %v5378 = vadd.s32 %v4390, 7904
          %v5379 = vadd.s32 %v4390, 7912
          %v5380 = vadd.s32 %v4390, 7920
          %v5381 = vadd.s32 %v4390, 7928
          %v5382 = vadd.s32 %v4390, 7936
          %v5383 = vadd.s32 %v4390, 7944
          %v5384 = vadd.s32 %v4390, 7952
          %v5385 = vadd.s32 %v4390, 7960
          %v5386 = vadd.s32 %v4390, 7968
          %v5387 = vadd.s32 %v4390, 7976
          %v5388 = vadd.s32 %v4390, 7984
          %v5389 = vadd.s32 %v4390, 7992
          %v5390 = vadd.s32 %v4390, 8000
          %v5391 = vadd.s32 %v4390, 8008
          %v5392 = vadd.s32 %v4390, 8016
          %v5393 = vadd.s32 %v4390, 8024
          %v5394 = vadd.s32 %v4390, 8032
          %v5395 = vadd.s32 %v4390, 8040
          %v5396 = vadd.s32 %v4390, 8048
          %v5397 = vadd.s32 %v4390, 8056
          %v5398 = vadd.s32 %v4390, 8064
          %v5399 = vadd.s32 %v4390, 8072
          %v5400 = vadd.s32 %v4390, 8080
          %v5401 = vadd.s32 %v4390, 8088
          %v5402 = vadd.s32 %v4390, 8096
          %v5403 = vadd.s32 %v4390, 8104
          %v5404 = vadd.s32 %v4390, 8112
          %v5405 = vadd.s32 %v4390, 8120
          %v5406 = vadd.s32 %v4390, 8128
          %v5407 = vadd.s32 %v4390, 8136
          %v5408 = vadd.s32 %v4390, 8144
          %v5409 = vadd.s32 %v4390, 8152
          %v5410 = vadd.s32 %v4390, 8160
          %v5411 = vadd.s32 %v4390, 8168
          %v5412 = vadd.s32 %v4390, 8176
          %v5413 = vadd.s32 %v4390, 8184
          %s5414 = smul.u32 %s3352, 8192
          %v5415 = vstv %s5414
          %v5416 = vadd.s32 %v5415, %v4390
          %v5417 = vadd.s32 %v5415, %v4391
          %v5418 = vadd.s32 %v5415, %v4392
          %v5419 = vadd.s32 %v5415, %v4393
          %v5420 = vadd.s32 %v5415, %v4394
          %v5421 = vadd.s32 %v5415, %v4395
          %v5422 = vadd.s32 %v5415, %v4396
          %v5423 = vadd.s32 %v5415, %v4397
          %v5424 = vadd.s32 %v5415, %v4398
          %v5425 = vadd.s32 %v5415, %v4399
          %v5426 = vadd.s32 %v5415, %v4400
          %v5427 = vadd.s32 %v5415, %v4401
          %v5428 = vadd.s32 %v5415, %v4402
          %v5429 = vadd.s32 %v5415, %v4403
          %v5430 = vadd.s32 %v5415, %v4404
          %v5431 = vadd.s32 %v5415, %v4405
          %v5432 = vadd.s32 %v5415, %v4406
          %v5433 = vadd.s32 %v5415, %v4407
          %v5434 = vadd.s32 %v5415, %v4408
          %v5435 = vadd.s32 %v5415, %v4409
          %v5436 = vadd.s32 %v5415, %v4410
          %v5437 = vadd.s32 %v5415, %v4411
          %v5438 = vadd.s32 %v5415, %v4412
          %v5439 = vadd.s32 %v5415, %v4413
          %v5440 = vadd.s32 %v5415, %v4414
          %v5441 = vadd.s32 %v5415, %v4415
          %v5442 = vadd.s32 %v5415, %v4416
          %v5443 = vadd.s32 %v5415, %v4417
          %v5444 = vadd.s32 %v5415, %v4418
          %v5445 = vadd.s32 %v5415, %v4419
          %v5446 = vadd.s32 %v5415, %v4420
          %v5447 = vadd.s32 %v5415, %v4421
          %v5448 = vadd.s32 %v5415, %v4422
          %v5449 = vadd.s32 %v5415, %v4423
          %v5450 = vadd.s32 %v5415, %v4424
          %v5451 = vadd.s32 %v5415, %v4425
          %v5452 = vadd.s32 %v5415, %v4426
          %v5453 = vadd.s32 %v5415, %v4427
          %v5454 = vadd.s32 %v5415, %v4428
          %v5455 = vadd.s32 %v5415, %v4429
          %v5456 = vadd.s32 %v5415, %v4430
          %v5457 = vadd.s32 %v5415, %v4431
          %v5458 = vadd.s32 %v5415, %v4432
          %v5459 = vadd.s32 %v5415, %v4433
          %v5460 = vadd.s32 %v5415, %v4434
          %v5461 = vadd.s32 %v5415, %v4435
          %v5462 = vadd.s32 %v5415, %v4436
          %v5463 = vadd.s32 %v5415, %v4437
          %v5464 = vadd.s32 %v5415, %v4438
          %v5465 = vadd.s32 %v5415, %v4439
          %v5466 = vadd.s32 %v5415, %v4440
          %v5467 = vadd.s32 %v5415, %v4441
          %v5468 = vadd.s32 %v5415, %v4442
          %v5469 = vadd.s32 %v5415, %v4443
          %v5470 = vadd.s32 %v5415, %v4444
          %v5471 = vadd.s32 %v5415, %v4445
          %v5472 = vadd.s32 %v5415, %v4446
          %v5473 = vadd.s32 %v5415, %v4447
          %v5474 = vadd.s32 %v5415, %v4448
          %v5475 = vadd.s32 %v5415, %v4449
          %v5476 = vadd.s32 %v5415, %v4450
          %v5477 = vadd.s32 %v5415, %v4451
          %v5478 = vadd.s32 %v5415, %v4452
          %v5479 = vadd.s32 %v5415, %v4453
          %v5480 = vadd.s32 %v5415, %v4454
          %v5481 = vadd.s32 %v5415, %v4455
          %v5482 = vadd.s32 %v5415, %v4456
          %v5483 = vadd.s32 %v5415, %v4457
          %v5484 = vadd.s32 %v5415, %v4458
          %v5485 = vadd.s32 %v5415, %v4459
          %v5486 = vadd.s32 %v5415, %v4460
          %v5487 = vadd.s32 %v5415, %v4461
          %v5488 = vadd.s32 %v5415, %v4462
          %v5489 = vadd.s32 %v5415, %v4463
          %v5490 = vadd.s32 %v5415, %v4464
          %v5491 = vadd.s32 %v5415, %v4465
          %v5492 = vadd.s32 %v5415, %v4466
          %v5493 = vadd.s32 %v5415, %v4467
          %v5494 = vadd.s32 %v5415, %v4468
          %v5495 = vadd.s32 %v5415, %v4469
          %v5496 = vadd.s32 %v5415, %v4470
          %v5497 = vadd.s32 %v5415, %v4471
          %v5498 = vadd.s32 %v5415, %v4472
          %v5499 = vadd.s32 %v5415, %v4473
          %v5500 = vadd.s32 %v5415, %v4474
          %v5501 = vadd.s32 %v5415, %v4475
          %v5502 = vadd.s32 %v5415, %v4476
          %v5503 = vadd.s32 %v5415, %v4477
          %v5504 = vadd.s32 %v5415, %v4478
          %v5505 = vadd.s32 %v5415, %v4479
          %v5506 = vadd.s32 %v5415, %v4480
          %v5507 = vadd.s32 %v5415, %v4481
          %v5508 = vadd.s32 %v5415, %v4482
          %v5509 = vadd.s32 %v5415, %v4483
          %v5510 = vadd.s32 %v5415, %v4484
          %v5511 = vadd.s32 %v5415, %v4485
          %v5512 = vadd.s32 %v5415, %v4486
          %v5513 = vadd.s32 %v5415, %v4487
          %v5514 = vadd.s32 %v5415, %v4488
          %v5515 = vadd.s32 %v5415, %v4489
          %v5516 = vadd.s32 %v5415, %v4490
          %v5517 = vadd.s32 %v5415, %v4491
          %v5518 = vadd.s32 %v5415, %v4492
          %v5519 = vadd.s32 %v5415, %v4493
          %v5520 = vadd.s32 %v5415, %v4494
          %v5521 = vadd.s32 %v5415, %v4495
          %v5522 = vadd.s32 %v5415, %v4496
          %v5523 = vadd.s32 %v5415, %v4497
          %v5524 = vadd.s32 %v5415, %v4498
          %v5525 = vadd.s32 %v5415, %v4499
          %v5526 = vadd.s32 %v5415, %v4500
          %v5527 = vadd.s32 %v5415, %v4501
          %v5528 = vadd.s32 %v5415, %v4502
          %v5529 = vadd.s32 %v5415, %v4503
          %v5530 = vadd.s32 %v5415, %v4504
          %v5531 = vadd.s32 %v5415, %v4505
          %v5532 = vadd.s32 %v5415, %v4506
          %v5533 = vadd.s32 %v5415, %v4507
          %v5534 = vadd.s32 %v5415, %v4508
          %v5535 = vadd.s32 %v5415, %v4509
          %v5536 = vadd.s32 %v5415, %v4510
          %v5537 = vadd.s32 %v5415, %v4511
          %v5538 = vadd.s32 %v5415, %v4512
          %v5539 = vadd.s32 %v5415, %v4513
          %v5540 = vadd.s32 %v5415, %v4514
          %v5541 = vadd.s32 %v5415, %v4515
          %v5542 = vadd.s32 %v5415, %v4516
          %v5543 = vadd.s32 %v5415, %v4517
          %v5544 = vadd.s32 %v5415, %v4518
          %v5545 = vadd.s32 %v5415, %v4519
          %v5546 = vadd.s32 %v5415, %v4520
          %v5547 = vadd.s32 %v5415, %v4521
          %v5548 = vadd.s32 %v5415, %v4522
          %v5549 = vadd.s32 %v5415, %v4523
          %v5550 = vadd.s32 %v5415, %v4524
          %v5551 = vadd.s32 %v5415, %v4525
          %v5552 = vadd.s32 %v5415, %v4526
          %v5553 = vadd.s32 %v5415, %v4527
          %v5554 = vadd.s32 %v5415, %v4528
          %v5555 = vadd.s32 %v5415, %v4529
          %v5556 = vadd.s32 %v5415, %v4530
          %v5557 = vadd.s32 %v5415, %v4531
          %v5558 = vadd.s32 %v5415, %v4532
          %v5559 = vadd.s32 %v5415, %v4533
          %v5560 = vadd.s32 %v5415, %v4534
          %v5561 = vadd.s32 %v5415, %v4535
          %v5562 = vadd.s32 %v5415, %v4536
          %v5563 = vadd.s32 %v5415, %v4537
          %v5564 = vadd.s32 %v5415, %v4538
          %v5565 = vadd.s32 %v5415, %v4539
          %v5566 = vadd.s32 %v5415, %v4540
          %v5567 = vadd.s32 %v5415, %v4541
          %v5568 = vadd.s32 %v5415, %v4542
          %v5569 = vadd.s32 %v5415, %v4543
          %v5570 = vadd.s32 %v5415, %v4544
          %v5571 = vadd.s32 %v5415, %v4545
          %v5572 = vadd.s32 %v5415, %v4546
          %v5573 = vadd.s32 %v5415, %v4547
          %v5574 = vadd.s32 %v5415, %v4548
          %v5575 = vadd.s32 %v5415, %v4549
          %v5576 = vadd.s32 %v5415, %v4550
          %v5577 = vadd.s32 %v5415, %v4551
          %v5578 = vadd.s32 %v5415, %v4552
          %v5579 = vadd.s32 %v5415, %v4553
          %v5580 = vadd.s32 %v5415, %v4554
          %v5581 = vadd.s32 %v5415, %v4555
          %v5582 = vadd.s32 %v5415, %v4556
          %v5583 = vadd.s32 %v5415, %v4557
          %v5584 = vadd.s32 %v5415, %v4558
          %v5585 = vadd.s32 %v5415, %v4559
          %v5586 = vadd.s32 %v5415, %v4560
          %v5587 = vadd.s32 %v5415, %v4561
          %v5588 = vadd.s32 %v5415, %v4562
          %v5589 = vadd.s32 %v5415, %v4563
          %v5590 = vadd.s32 %v5415, %v4564
          %v5591 = vadd.s32 %v5415, %v4565
          %v5592 = vadd.s32 %v5415, %v4566
          %v5593 = vadd.s32 %v5415, %v4567
          %v5594 = vadd.s32 %v5415, %v4568
          %v5595 = vadd.s32 %v5415, %v4569
          %v5596 = vadd.s32 %v5415, %v4570
          %v5597 = vadd.s32 %v5415, %v4571
          %v5598 = vadd.s32 %v5415, %v4572
          %v5599 = vadd.s32 %v5415, %v4573
          %v5600 = vadd.s32 %v5415, %v4574
          %v5601 = vadd.s32 %v5415, %v4575
          %v5602 = vadd.s32 %v5415, %v4576
          %v5603 = vadd.s32 %v5415, %v4577
          %v5604 = vadd.s32 %v5415, %v4578
          %v5605 = vadd.s32 %v5415, %v4579
          %v5606 = vadd.s32 %v5415, %v4580
          %v5607 = vadd.s32 %v5415, %v4581
          %v5608 = vadd.s32 %v5415, %v4582
          %v5609 = vadd.s32 %v5415, %v4583
          %v5610 = vadd.s32 %v5415, %v4584
          %v5611 = vadd.s32 %v5415, %v4585
          %v5612 = vadd.s32 %v5415, %v4586
          %v5613 = vadd.s32 %v5415, %v4587
          %v5614 = vadd.s32 %v5415, %v4588
          %v5615 = vadd.s32 %v5415, %v4589
          %v5616 = vadd.s32 %v5415, %v4590
          %v5617 = vadd.s32 %v5415, %v4591
          %v5618 = vadd.s32 %v5415, %v4592
          %v5619 = vadd.s32 %v5415, %v4593
          %v5620 = vadd.s32 %v5415, %v4594
          %v5621 = vadd.s32 %v5415, %v4595
          %v5622 = vadd.s32 %v5415, %v4596
          %v5623 = vadd.s32 %v5415, %v4597
          %v5624 = vadd.s32 %v5415, %v4598
          %v5625 = vadd.s32 %v5415, %v4599
          %v5626 = vadd.s32 %v5415, %v4600
          %v5627 = vadd.s32 %v5415, %v4601
          %v5628 = vadd.s32 %v5415, %v4602
          %v5629 = vadd.s32 %v5415, %v4603
          %v5630 = vadd.s32 %v5415, %v4604
          %v5631 = vadd.s32 %v5415, %v4605
          %v5632 = vadd.s32 %v5415, %v4606
          %v5633 = vadd.s32 %v5415, %v4607
          %v5634 = vadd.s32 %v5415, %v4608
          %v5635 = vadd.s32 %v5415, %v4609
          %v5636 = vadd.s32 %v5415, %v4610
          %v5637 = vadd.s32 %v5415, %v4611
          %v5638 = vadd.s32 %v5415, %v4612
          %v5639 = vadd.s32 %v5415, %v4613
          %v5640 = vadd.s32 %v5415, %v4614
          %v5641 = vadd.s32 %v5415, %v4615
          %v5642 = vadd.s32 %v5415, %v4616
          %v5643 = vadd.s32 %v5415, %v4617
          %v5644 = vadd.s32 %v5415, %v4618
          %v5645 = vadd.s32 %v5415, %v4619
          %v5646 = vadd.s32 %v5415, %v4620
          %v5647 = vadd.s32 %v5415, %v4621
          %v5648 = vadd.s32 %v5415, %v4622
          %v5649 = vadd.s32 %v5415, %v4623
          %v5650 = vadd.s32 %v5415, %v4624
          %v5651 = vadd.s32 %v5415, %v4625
          %v5652 = vadd.s32 %v5415, %v4626
          %v5653 = vadd.s32 %v5415, %v4627
          %v5654 = vadd.s32 %v5415, %v4628
          %v5655 = vadd.s32 %v5415, %v4629
          %v5656 = vadd.s32 %v5415, %v4630
          %v5657 = vadd.s32 %v5415, %v4631
          %v5658 = vadd.s32 %v5415, %v4632
          %v5659 = vadd.s32 %v5415, %v4633
          %v5660 = vadd.s32 %v5415, %v4634
          %v5661 = vadd.s32 %v5415, %v4635
          %v5662 = vadd.s32 %v5415, %v4636
          %v5663 = vadd.s32 %v5415, %v4637
          %v5664 = vadd.s32 %v5415, %v4638
          %v5665 = vadd.s32 %v5415, %v4639
          %v5666 = vadd.s32 %v5415, %v4640
          %v5667 = vadd.s32 %v5415, %v4641
          %v5668 = vadd.s32 %v5415, %v4642
          %v5669 = vadd.s32 %v5415, %v4643
          %v5670 = vadd.s32 %v5415, %v4644
          %v5671 = vadd.s32 %v5415, %v4645
          %v5672 = vadd.s32 %v5415, %v4646
          %v5673 = vadd.s32 %v5415, %v4647
          %v5674 = vadd.s32 %v5415, %v4648
          %v5675 = vadd.s32 %v5415, %v4649
          %v5676 = vadd.s32 %v5415, %v4650
          %v5677 = vadd.s32 %v5415, %v4651
          %v5678 = vadd.s32 %v5415, %v4652
          %v5679 = vadd.s32 %v5415, %v4653
          %v5680 = vadd.s32 %v5415, %v4654
          %v5681 = vadd.s32 %v5415, %v4655
          %v5682 = vadd.s32 %v5415, %v4656
          %v5683 = vadd.s32 %v5415, %v4657
          %v5684 = vadd.s32 %v5415, %v4658
          %v5685 = vadd.s32 %v5415, %v4659
          %v5686 = vadd.s32 %v5415, %v4660
          %v5687 = vadd.s32 %v5415, %v4661
          %v5688 = vadd.s32 %v5415, %v4662
          %v5689 = vadd.s32 %v5415, %v4663
          %v5690 = vadd.s32 %v5415, %v4664
          %v5691 = vadd.s32 %v5415, %v4665
          %v5692 = vadd.s32 %v5415, %v4666
          %v5693 = vadd.s32 %v5415, %v4667
          %v5694 = vadd.s32 %v5415, %v4668
          %v5695 = vadd.s32 %v5415, %v4669
          %v5696 = vadd.s32 %v5415, %v4670
          %v5697 = vadd.s32 %v5415, %v4671
          %v5698 = vadd.s32 %v5415, %v4672
          %v5699 = vadd.s32 %v5415, %v4673
          %v5700 = vadd.s32 %v5415, %v4674
          %v5701 = vadd.s32 %v5415, %v4675
          %v5702 = vadd.s32 %v5415, %v4676
          %v5703 = vadd.s32 %v5415, %v4677
          %v5704 = vadd.s32 %v5415, %v4678
          %v5705 = vadd.s32 %v5415, %v4679
          %v5706 = vadd.s32 %v5415, %v4680
          %v5707 = vadd.s32 %v5415, %v4681
          %v5708 = vadd.s32 %v5415, %v4682
          %v5709 = vadd.s32 %v5415, %v4683
          %v5710 = vadd.s32 %v5415, %v4684
          %v5711 = vadd.s32 %v5415, %v4685
          %v5712 = vadd.s32 %v5415, %v4686
          %v5713 = vadd.s32 %v5415, %v4687
          %v5714 = vadd.s32 %v5415, %v4688
          %v5715 = vadd.s32 %v5415, %v4689
          %v5716 = vadd.s32 %v5415, %v4690
          %v5717 = vadd.s32 %v5415, %v4691
          %v5718 = vadd.s32 %v5415, %v4692
          %v5719 = vadd.s32 %v5415, %v4693
          %v5720 = vadd.s32 %v5415, %v4694
          %v5721 = vadd.s32 %v5415, %v4695
          %v5722 = vadd.s32 %v5415, %v4696
          %v5723 = vadd.s32 %v5415, %v4697
          %v5724 = vadd.s32 %v5415, %v4698
          %v5725 = vadd.s32 %v5415, %v4699
          %v5726 = vadd.s32 %v5415, %v4700
          %v5727 = vadd.s32 %v5415, %v4701
          %v5728 = vadd.s32 %v5415, %v4702
          %v5729 = vadd.s32 %v5415, %v4703
          %v5730 = vadd.s32 %v5415, %v4704
          %v5731 = vadd.s32 %v5415, %v4705
          %v5732 = vadd.s32 %v5415, %v4706
          %v5733 = vadd.s32 %v5415, %v4707
          %v5734 = vadd.s32 %v5415, %v4708
          %v5735 = vadd.s32 %v5415, %v4709
          %v5736 = vadd.s32 %v5415, %v4710
          %v5737 = vadd.s32 %v5415, %v4711
          %v5738 = vadd.s32 %v5415, %v4712
          %v5739 = vadd.s32 %v5415, %v4713
          %v5740 = vadd.s32 %v5415, %v4714
          %v5741 = vadd.s32 %v5415, %v4715
          %v5742 = vadd.s32 %v5415, %v4716
          %v5743 = vadd.s32 %v5415, %v4717
          %v5744 = vadd.s32 %v5415, %v4718
          %v5745 = vadd.s32 %v5415, %v4719
          %v5746 = vadd.s32 %v5415, %v4720
          %v5747 = vadd.s32 %v5415, %v4721
          %v5748 = vadd.s32 %v5415, %v4722
          %v5749 = vadd.s32 %v5415, %v4723
          %v5750 = vadd.s32 %v5415, %v4724
          %v5751 = vadd.s32 %v5415, %v4725
          %v5752 = vadd.s32 %v5415, %v4726
          %v5753 = vadd.s32 %v5415, %v4727
          %v5754 = vadd.s32 %v5415, %v4728
          %v5755 = vadd.s32 %v5415, %v4729
          %v5756 = vadd.s32 %v5415, %v4730
          %v5757 = vadd.s32 %v5415, %v4731
          %v5758 = vadd.s32 %v5415, %v4732
          %v5759 = vadd.s32 %v5415, %v4733
          %v5760 = vadd.s32 %v5415, %v4734
          %v5761 = vadd.s32 %v5415, %v4735
          %v5762 = vadd.s32 %v5415, %v4736
          %v5763 = vadd.s32 %v5415, %v4737
          %v5764 = vadd.s32 %v5415, %v4738
          %v5765 = vadd.s32 %v5415, %v4739
          %v5766 = vadd.s32 %v5415, %v4740
          %v5767 = vadd.s32 %v5415, %v4741
          %v5768 = vadd.s32 %v5415, %v4742
          %v5769 = vadd.s32 %v5415, %v4743
          %v5770 = vadd.s32 %v5415, %v4744
          %v5771 = vadd.s32 %v5415, %v4745
          %v5772 = vadd.s32 %v5415, %v4746
          %v5773 = vadd.s32 %v5415, %v4747
          %v5774 = vadd.s32 %v5415, %v4748
          %v5775 = vadd.s32 %v5415, %v4749
          %v5776 = vadd.s32 %v5415, %v4750
          %v5777 = vadd.s32 %v5415, %v4751
          %v5778 = vadd.s32 %v5415, %v4752
          %v5779 = vadd.s32 %v5415, %v4753
          %v5780 = vadd.s32 %v5415, %v4754
          %v5781 = vadd.s32 %v5415, %v4755
          %v5782 = vadd.s32 %v5415, %v4756
          %v5783 = vadd.s32 %v5415, %v4757
          %v5784 = vadd.s32 %v5415, %v4758
          %v5785 = vadd.s32 %v5415, %v4759
          %v5786 = vadd.s32 %v5415, %v4760
          %v5787 = vadd.s32 %v5415, %v4761
          %v5788 = vadd.s32 %v5415, %v4762
          %v5789 = vadd.s32 %v5415, %v4763
          %v5790 = vadd.s32 %v5415, %v4764
          %v5791 = vadd.s32 %v5415, %v4765
          %v5792 = vadd.s32 %v5415, %v4766
          %v5793 = vadd.s32 %v5415, %v4767
          %v5794 = vadd.s32 %v5415, %v4768
          %v5795 = vadd.s32 %v5415, %v4769
          %v5796 = vadd.s32 %v5415, %v4770
          %v5797 = vadd.s32 %v5415, %v4771
          %v5798 = vadd.s32 %v5415, %v4772
          %v5799 = vadd.s32 %v5415, %v4773
          %v5800 = vadd.s32 %v5415, %v4774
          %v5801 = vadd.s32 %v5415, %v4775
          %v5802 = vadd.s32 %v5415, %v4776
          %v5803 = vadd.s32 %v5415, %v4777
          %v5804 = vadd.s32 %v5415, %v4778
          %v5805 = vadd.s32 %v5415, %v4779
          %v5806 = vadd.s32 %v5415, %v4780
          %v5807 = vadd.s32 %v5415, %v4781
          %v5808 = vadd.s32 %v5415, %v4782
          %v5809 = vadd.s32 %v5415, %v4783
          %v5810 = vadd.s32 %v5415, %v4784
          %v5811 = vadd.s32 %v5415, %v4785
          %v5812 = vadd.s32 %v5415, %v4786
          %v5813 = vadd.s32 %v5415, %v4787
          %v5814 = vadd.s32 %v5415, %v4788
          %v5815 = vadd.s32 %v5415, %v4789
          %v5816 = vadd.s32 %v5415, %v4790
          %v5817 = vadd.s32 %v5415, %v4791
          %v5818 = vadd.s32 %v5415, %v4792
          %v5819 = vadd.s32 %v5415, %v4793
          %v5820 = vadd.s32 %v5415, %v4794
          %v5821 = vadd.s32 %v5415, %v4795
          %v5822 = vadd.s32 %v5415, %v4796
          %v5823 = vadd.s32 %v5415, %v4797
          %v5824 = vadd.s32 %v5415, %v4798
          %v5825 = vadd.s32 %v5415, %v4799
          %v5826 = vadd.s32 %v5415, %v4800
          %v5827 = vadd.s32 %v5415, %v4801
          %v5828 = vadd.s32 %v5415, %v4802
          %v5829 = vadd.s32 %v5415, %v4803
          %v5830 = vadd.s32 %v5415, %v4804
          %v5831 = vadd.s32 %v5415, %v4805
          %v5832 = vadd.s32 %v5415, %v4806
          %v5833 = vadd.s32 %v5415, %v4807
          %v5834 = vadd.s32 %v5415, %v4808
          %v5835 = vadd.s32 %v5415, %v4809
          %v5836 = vadd.s32 %v5415, %v4810
          %v5837 = vadd.s32 %v5415, %v4811
          %v5838 = vadd.s32 %v5415, %v4812
          %v5839 = vadd.s32 %v5415, %v4813
          %v5840 = vadd.s32 %v5415, %v4814
          %v5841 = vadd.s32 %v5415, %v4815
          %v5842 = vadd.s32 %v5415, %v4816
          %v5843 = vadd.s32 %v5415, %v4817
          %v5844 = vadd.s32 %v5415, %v4818
          %v5845 = vadd.s32 %v5415, %v4819
          %v5846 = vadd.s32 %v5415, %v4820
          %v5847 = vadd.s32 %v5415, %v4821
          %v5848 = vadd.s32 %v5415, %v4822
          %v5849 = vadd.s32 %v5415, %v4823
          %v5850 = vadd.s32 %v5415, %v4824
          %v5851 = vadd.s32 %v5415, %v4825
          %v5852 = vadd.s32 %v5415, %v4826
          %v5853 = vadd.s32 %v5415, %v4827
          %v5854 = vadd.s32 %v5415, %v4828
          %v5855 = vadd.s32 %v5415, %v4829
          %v5856 = vadd.s32 %v5415, %v4830
          %v5857 = vadd.s32 %v5415, %v4831
          %v5858 = vadd.s32 %v5415, %v4832
          %v5859 = vadd.s32 %v5415, %v4833
          %v5860 = vadd.s32 %v5415, %v4834
          %v5861 = vadd.s32 %v5415, %v4835
          %v5862 = vadd.s32 %v5415, %v4836
          %v5863 = vadd.s32 %v5415, %v4837
          %v5864 = vadd.s32 %v5415, %v4838
          %v5865 = vadd.s32 %v5415, %v4839
          %v5866 = vadd.s32 %v5415, %v4840
          %v5867 = vadd.s32 %v5415, %v4841
          %v5868 = vadd.s32 %v5415, %v4842
          %v5869 = vadd.s32 %v5415, %v4843
          %v5870 = vadd.s32 %v5415, %v4844
          %v5871 = vadd.s32 %v5415, %v4845
          %v5872 = vadd.s32 %v5415, %v4846
          %v5873 = vadd.s32 %v5415, %v4847
          %v5874 = vadd.s32 %v5415, %v4848
          %v5875 = vadd.s32 %v5415, %v4849
          %v5876 = vadd.s32 %v5415, %v4850
          %v5877 = vadd.s32 %v5415, %v4851
          %v5878 = vadd.s32 %v5415, %v4852
          %v5879 = vadd.s32 %v5415, %v4853
          %v5880 = vadd.s32 %v5415, %v4854
          %v5881 = vadd.s32 %v5415, %v4855
          %v5882 = vadd.s32 %v5415, %v4856
          %v5883 = vadd.s32 %v5415, %v4857
          %v5884 = vadd.s32 %v5415, %v4858
          %v5885 = vadd.s32 %v5415, %v4859
          %v5886 = vadd.s32 %v5415, %v4860
          %v5887 = vadd.s32 %v5415, %v4861
          %v5888 = vadd.s32 %v5415, %v4862
          %v5889 = vadd.s32 %v5415, %v4863
          %v5890 = vadd.s32 %v5415, %v4864
          %v5891 = vadd.s32 %v5415, %v4865
          %v5892 = vadd.s32 %v5415, %v4866
          %v5893 = vadd.s32 %v5415, %v4867
          %v5894 = vadd.s32 %v5415, %v4868
          %v5895 = vadd.s32 %v5415, %v4869
          %v5896 = vadd.s32 %v5415, %v4870
          %v5897 = vadd.s32 %v5415, %v4871
          %v5898 = vadd.s32 %v5415, %v4872
          %v5899 = vadd.s32 %v5415, %v4873
          %v5900 = vadd.s32 %v5415, %v4874
          %v5901 = vadd.s32 %v5415, %v4875
          %v5902 = vadd.s32 %v5415, %v4876
          %v5903 = vadd.s32 %v5415, %v4877
          %v5904 = vadd.s32 %v5415, %v4878
          %v5905 = vadd.s32 %v5415, %v4879
          %v5906 = vadd.s32 %v5415, %v4880
          %v5907 = vadd.s32 %v5415, %v4881
          %v5908 = vadd.s32 %v5415, %v4882
          %v5909 = vadd.s32 %v5415, %v4883
          %v5910 = vadd.s32 %v5415, %v4884
          %v5911 = vadd.s32 %v5415, %v4885
          %v5912 = vadd.s32 %v5415, %v4886
          %v5913 = vadd.s32 %v5415, %v4887
          %v5914 = vadd.s32 %v5415, %v4888
          %v5915 = vadd.s32 %v5415, %v4889
          %v5916 = vadd.s32 %v5415, %v4890
          %v5917 = vadd.s32 %v5415, %v4891
          %v5918 = vadd.s32 %v5415, %v4892
          %v5919 = vadd.s32 %v5415, %v4893
          %v5920 = vadd.s32 %v5415, %v4894
          %v5921 = vadd.s32 %v5415, %v4895
          %v5922 = vadd.s32 %v5415, %v4896
          %v5923 = vadd.s32 %v5415, %v4897
          %v5924 = vadd.s32 %v5415, %v4898
          %v5925 = vadd.s32 %v5415, %v4899
          %v5926 = vadd.s32 %v5415, %v4900
          %v5927 = vadd.s32 %v5415, %v4901
          %v5928 = vadd.s32 %v5415, %v4902
          %v5929 = vadd.s32 %v5415, %v4903
          %v5930 = vadd.s32 %v5415, %v4904
          %v5931 = vadd.s32 %v5415, %v4905
          %v5932 = vadd.s32 %v5415, %v4906
          %v5933 = vadd.s32 %v5415, %v4907
          %v5934 = vadd.s32 %v5415, %v4908
          %v5935 = vadd.s32 %v5415, %v4909
          %v5936 = vadd.s32 %v5415, %v4910
          %v5937 = vadd.s32 %v5415, %v4911
          %v5938 = vadd.s32 %v5415, %v4912
          %v5939 = vadd.s32 %v5415, %v4913
          %v5940 = vadd.s32 %v5415, %v4914
          %v5941 = vadd.s32 %v5415, %v4915
          %v5942 = vadd.s32 %v5415, %v4916
          %v5943 = vadd.s32 %v5415, %v4917
          %v5944 = vadd.s32 %v5415, %v4918
          %v5945 = vadd.s32 %v5415, %v4919
          %v5946 = vadd.s32 %v5415, %v4920
          %v5947 = vadd.s32 %v5415, %v4921
          %v5948 = vadd.s32 %v5415, %v4922
          %v5949 = vadd.s32 %v5415, %v4923
          %v5950 = vadd.s32 %v5415, %v4924
          %v5951 = vadd.s32 %v5415, %v4925
          %v5952 = vadd.s32 %v5415, %v4926
          %v5953 = vadd.s32 %v5415, %v4927
          %v5954 = vadd.s32 %v5415, %v4928
          %v5955 = vadd.s32 %v5415, %v4929
          %v5956 = vadd.s32 %v5415, %v4930
          %v5957 = vadd.s32 %v5415, %v4931
          %v5958 = vadd.s32 %v5415, %v4932
          %v5959 = vadd.s32 %v5415, %v4933
          %v5960 = vadd.s32 %v5415, %v4934
          %v5961 = vadd.s32 %v5415, %v4935
          %v5962 = vadd.s32 %v5415, %v4936
          %v5963 = vadd.s32 %v5415, %v4937
          %v5964 = vadd.s32 %v5415, %v4938
          %v5965 = vadd.s32 %v5415, %v4939
          %v5966 = vadd.s32 %v5415, %v4940
          %v5967 = vadd.s32 %v5415, %v4941
          %v5968 = vadd.s32 %v5415, %v4942
          %v5969 = vadd.s32 %v5415, %v4943
          %v5970 = vadd.s32 %v5415, %v4944
          %v5971 = vadd.s32 %v5415, %v4945
          %v5972 = vadd.s32 %v5415, %v4946
          %v5973 = vadd.s32 %v5415, %v4947
          %v5974 = vadd.s32 %v5415, %v4948
          %v5975 = vadd.s32 %v5415, %v4949
          %v5976 = vadd.s32 %v5415, %v4950
          %v5977 = vadd.s32 %v5415, %v4951
          %v5978 = vadd.s32 %v5415, %v4952
          %v5979 = vadd.s32 %v5415, %v4953
          %v5980 = vadd.s32 %v5415, %v4954
          %v5981 = vadd.s32 %v5415, %v4955
          %v5982 = vadd.s32 %v5415, %v4956
          %v5983 = vadd.s32 %v5415, %v4957
          %v5984 = vadd.s32 %v5415, %v4958
          %v5985 = vadd.s32 %v5415, %v4959
          %v5986 = vadd.s32 %v5415, %v4960
          %v5987 = vadd.s32 %v5415, %v4961
          %v5988 = vadd.s32 %v5415, %v4962
          %v5989 = vadd.s32 %v5415, %v4963
          %v5990 = vadd.s32 %v5415, %v4964
          %v5991 = vadd.s32 %v5415, %v4965
          %v5992 = vadd.s32 %v5415, %v4966
          %v5993 = vadd.s32 %v5415, %v4967
          %v5994 = vadd.s32 %v5415, %v4968
          %v5995 = vadd.s32 %v5415, %v4969
          %v5996 = vadd.s32 %v5415, %v4970
          %v5997 = vadd.s32 %v5415, %v4971
          %v5998 = vadd.s32 %v5415, %v4972
          %v5999 = vadd.s32 %v5415, %v4973
          %v6000 = vadd.s32 %v5415, %v4974
          %v6001 = vadd.s32 %v5415, %v4975
          %v6002 = vadd.s32 %v5415, %v4976
          %v6003 = vadd.s32 %v5415, %v4977
          %v6004 = vadd.s32 %v5415, %v4978
          %v6005 = vadd.s32 %v5415, %v4979
          %v6006 = vadd.s32 %v5415, %v4980
          %v6007 = vadd.s32 %v5415, %v4981
          %v6008 = vadd.s32 %v5415, %v4982
          %v6009 = vadd.s32 %v5415, %v4983
          %v6010 = vadd.s32 %v5415, %v4984
          %v6011 = vadd.s32 %v5415, %v4985
          %v6012 = vadd.s32 %v5415, %v4986
          %v6013 = vadd.s32 %v5415, %v4987
          %v6014 = vadd.s32 %v5415, %v4988
          %v6015 = vadd.s32 %v5415, %v4989
          %v6016 = vadd.s32 %v5415, %v4990
          %v6017 = vadd.s32 %v5415, %v4991
          %v6018 = vadd.s32 %v5415, %v4992
          %v6019 = vadd.s32 %v5415, %v4993
          %v6020 = vadd.s32 %v5415, %v4994
          %v6021 = vadd.s32 %v5415, %v4995
          %v6022 = vadd.s32 %v5415, %v4996
          %v6023 = vadd.s32 %v5415, %v4997
          %v6024 = vadd.s32 %v5415, %v4998
          %v6025 = vadd.s32 %v5415, %v4999
          %v6026 = vadd.s32 %v5415, %v5000
          %v6027 = vadd.s32 %v5415, %v5001
          %v6028 = vadd.s32 %v5415, %v5002
          %v6029 = vadd.s32 %v5415, %v5003
          %v6030 = vadd.s32 %v5415, %v5004
          %v6031 = vadd.s32 %v5415, %v5005
          %v6032 = vadd.s32 %v5415, %v5006
          %v6033 = vadd.s32 %v5415, %v5007
          %v6034 = vadd.s32 %v5415, %v5008
          %v6035 = vadd.s32 %v5415, %v5009
          %v6036 = vadd.s32 %v5415, %v5010
          %v6037 = vadd.s32 %v5415, %v5011
          %v6038 = vadd.s32 %v5415, %v5012
          %v6039 = vadd.s32 %v5415, %v5013
          %v6040 = vadd.s32 %v5415, %v5014
          %v6041 = vadd.s32 %v5415, %v5015
          %v6042 = vadd.s32 %v5415, %v5016
          %v6043 = vadd.s32 %v5415, %v5017
          %v6044 = vadd.s32 %v5415, %v5018
          %v6045 = vadd.s32 %v5415, %v5019
          %v6046 = vadd.s32 %v5415, %v5020
          %v6047 = vadd.s32 %v5415, %v5021
          %v6048 = vadd.s32 %v5415, %v5022
          %v6049 = vadd.s32 %v5415, %v5023
          %v6050 = vadd.s32 %v5415, %v5024
          %v6051 = vadd.s32 %v5415, %v5025
          %v6052 = vadd.s32 %v5415, %v5026
          %v6053 = vadd.s32 %v5415, %v5027
          %v6054 = vadd.s32 %v5415, %v5028
          %v6055 = vadd.s32 %v5415, %v5029
          %v6056 = vadd.s32 %v5415, %v5030
          %v6057 = vadd.s32 %v5415, %v5031
          %v6058 = vadd.s32 %v5415, %v5032
          %v6059 = vadd.s32 %v5415, %v5033
          %v6060 = vadd.s32 %v5415, %v5034
          %v6061 = vadd.s32 %v5415, %v5035
          %v6062 = vadd.s32 %v5415, %v5036
          %v6063 = vadd.s32 %v5415, %v5037
          %v6064 = vadd.s32 %v5415, %v5038
          %v6065 = vadd.s32 %v5415, %v5039
          %v6066 = vadd.s32 %v5415, %v5040
          %v6067 = vadd.s32 %v5415, %v5041
          %v6068 = vadd.s32 %v5415, %v5042
          %v6069 = vadd.s32 %v5415, %v5043
          %v6070 = vadd.s32 %v5415, %v5044
          %v6071 = vadd.s32 %v5415, %v5045
          %v6072 = vadd.s32 %v5415, %v5046
          %v6073 = vadd.s32 %v5415, %v5047
          %v6074 = vadd.s32 %v5415, %v5048
          %v6075 = vadd.s32 %v5415, %v5049
          %v6076 = vadd.s32 %v5415, %v5050
          %v6077 = vadd.s32 %v5415, %v5051
          %v6078 = vadd.s32 %v5415, %v5052
          %v6079 = vadd.s32 %v5415, %v5053
          %v6080 = vadd.s32 %v5415, %v5054
          %v6081 = vadd.s32 %v5415, %v5055
          %v6082 = vadd.s32 %v5415, %v5056
          %v6083 = vadd.s32 %v5415, %v5057
          %v6084 = vadd.s32 %v5415, %v5058
          %v6085 = vadd.s32 %v5415, %v5059
          %v6086 = vadd.s32 %v5415, %v5060
          %v6087 = vadd.s32 %v5415, %v5061
          %v6088 = vadd.s32 %v5415, %v5062
          %v6089 = vadd.s32 %v5415, %v5063
          %v6090 = vadd.s32 %v5415, %v5064
          %v6091 = vadd.s32 %v5415, %v5065
          %v6092 = vadd.s32 %v5415, %v5066
          %v6093 = vadd.s32 %v5415, %v5067
          %v6094 = vadd.s32 %v5415, %v5068
          %v6095 = vadd.s32 %v5415, %v5069
          %v6096 = vadd.s32 %v5415, %v5070
          %v6097 = vadd.s32 %v5415, %v5071
          %v6098 = vadd.s32 %v5415, %v5072
          %v6099 = vadd.s32 %v5415, %v5073
          %v6100 = vadd.s32 %v5415, %v5074
          %v6101 = vadd.s32 %v5415, %v5075
          %v6102 = vadd.s32 %v5415, %v5076
          %v6103 = vadd.s32 %v5415, %v5077
          %v6104 = vadd.s32 %v5415, %v5078
          %v6105 = vadd.s32 %v5415, %v5079
          %v6106 = vadd.s32 %v5415, %v5080
          %v6107 = vadd.s32 %v5415, %v5081
          %v6108 = vadd.s32 %v5415, %v5082
          %v6109 = vadd.s32 %v5415, %v5083
          %v6110 = vadd.s32 %v5415, %v5084
          %v6111 = vadd.s32 %v5415, %v5085
          %v6112 = vadd.s32 %v5415, %v5086
          %v6113 = vadd.s32 %v5415, %v5087
          %v6114 = vadd.s32 %v5415, %v5088
          %v6115 = vadd.s32 %v5415, %v5089
          %v6116 = vadd.s32 %v5415, %v5090
          %v6117 = vadd.s32 %v5415, %v5091
          %v6118 = vadd.s32 %v5415, %v5092
          %v6119 = vadd.s32 %v5415, %v5093
          %v6120 = vadd.s32 %v5415, %v5094
          %v6121 = vadd.s32 %v5415, %v5095
          %v6122 = vadd.s32 %v5415, %v5096
          %v6123 = vadd.s32 %v5415, %v5097
          %v6124 = vadd.s32 %v5415, %v5098
          %v6125 = vadd.s32 %v5415, %v5099
          %v6126 = vadd.s32 %v5415, %v5100
          %v6127 = vadd.s32 %v5415, %v5101
          %v6128 = vadd.s32 %v5415, %v5102
          %v6129 = vadd.s32 %v5415, %v5103
          %v6130 = vadd.s32 %v5415, %v5104
          %v6131 = vadd.s32 %v5415, %v5105
          %v6132 = vadd.s32 %v5415, %v5106
          %v6133 = vadd.s32 %v5415, %v5107
          %v6134 = vadd.s32 %v5415, %v5108
          %v6135 = vadd.s32 %v5415, %v5109
          %v6136 = vadd.s32 %v5415, %v5110
          %v6137 = vadd.s32 %v5415, %v5111
          %v6138 = vadd.s32 %v5415, %v5112
          %v6139 = vadd.s32 %v5415, %v5113
          %v6140 = vadd.s32 %v5415, %v5114
          %v6141 = vadd.s32 %v5415, %v5115
          %v6142 = vadd.s32 %v5415, %v5116
          %v6143 = vadd.s32 %v5415, %v5117
          %v6144 = vadd.s32 %v5415, %v5118
          %v6145 = vadd.s32 %v5415, %v5119
          %v6146 = vadd.s32 %v5415, %v5120
          %v6147 = vadd.s32 %v5415, %v5121
          %v6148 = vadd.s32 %v5415, %v5122
          %v6149 = vadd.s32 %v5415, %v5123
          %v6150 = vadd.s32 %v5415, %v5124
          %v6151 = vadd.s32 %v5415, %v5125
          %v6152 = vadd.s32 %v5415, %v5126
          %v6153 = vadd.s32 %v5415, %v5127
          %v6154 = vadd.s32 %v5415, %v5128
          %v6155 = vadd.s32 %v5415, %v5129
          %v6156 = vadd.s32 %v5415, %v5130
          %v6157 = vadd.s32 %v5415, %v5131
          %v6158 = vadd.s32 %v5415, %v5132
          %v6159 = vadd.s32 %v5415, %v5133
          %v6160 = vadd.s32 %v5415, %v5134
          %v6161 = vadd.s32 %v5415, %v5135
          %v6162 = vadd.s32 %v5415, %v5136
          %v6163 = vadd.s32 %v5415, %v5137
          %v6164 = vadd.s32 %v5415, %v5138
          %v6165 = vadd.s32 %v5415, %v5139
          %v6166 = vadd.s32 %v5415, %v5140
          %v6167 = vadd.s32 %v5415, %v5141
          %v6168 = vadd.s32 %v5415, %v5142
          %v6169 = vadd.s32 %v5415, %v5143
          %v6170 = vadd.s32 %v5415, %v5144
          %v6171 = vadd.s32 %v5415, %v5145
          %v6172 = vadd.s32 %v5415, %v5146
          %v6173 = vadd.s32 %v5415, %v5147
          %v6174 = vadd.s32 %v5415, %v5148
          %v6175 = vadd.s32 %v5415, %v5149
          %v6176 = vadd.s32 %v5415, %v5150
          %v6177 = vadd.s32 %v5415, %v5151
          %v6178 = vadd.s32 %v5415, %v5152
          %v6179 = vadd.s32 %v5415, %v5153
          %v6180 = vadd.s32 %v5415, %v5154
          %v6181 = vadd.s32 %v5415, %v5155
          %v6182 = vadd.s32 %v5415, %v5156
          %v6183 = vadd.s32 %v5415, %v5157
          %v6184 = vadd.s32 %v5415, %v5158
          %v6185 = vadd.s32 %v5415, %v5159
          %v6186 = vadd.s32 %v5415, %v5160
          %v6187 = vadd.s32 %v5415, %v5161
          %v6188 = vadd.s32 %v5415, %v5162
          %v6189 = vadd.s32 %v5415, %v5163
          %v6190 = vadd.s32 %v5415, %v5164
          %v6191 = vadd.s32 %v5415, %v5165
          %v6192 = vadd.s32 %v5415, %v5166
          %v6193 = vadd.s32 %v5415, %v5167
          %v6194 = vadd.s32 %v5415, %v5168
          %v6195 = vadd.s32 %v5415, %v5169
          %v6196 = vadd.s32 %v5415, %v5170
          %v6197 = vadd.s32 %v5415, %v5171
          %v6198 = vadd.s32 %v5415, %v5172
          %v6199 = vadd.s32 %v5415, %v5173
          %v6200 = vadd.s32 %v5415, %v5174
          %v6201 = vadd.s32 %v5415, %v5175
          %v6202 = vadd.s32 %v5415, %v5176
          %v6203 = vadd.s32 %v5415, %v5177
          %v6204 = vadd.s32 %v5415, %v5178
          %v6205 = vadd.s32 %v5415, %v5179
          %v6206 = vadd.s32 %v5415, %v5180
          %v6207 = vadd.s32 %v5415, %v5181
          %v6208 = vadd.s32 %v5415, %v5182
          %v6209 = vadd.s32 %v5415, %v5183
          %v6210 = vadd.s32 %v5415, %v5184
          %v6211 = vadd.s32 %v5415, %v5185
          %v6212 = vadd.s32 %v5415, %v5186
          %v6213 = vadd.s32 %v5415, %v5187
          %v6214 = vadd.s32 %v5415, %v5188
          %v6215 = vadd.s32 %v5415, %v5189
          %v6216 = vadd.s32 %v5415, %v5190
          %v6217 = vadd.s32 %v5415, %v5191
          %v6218 = vadd.s32 %v5415, %v5192
          %v6219 = vadd.s32 %v5415, %v5193
          %v6220 = vadd.s32 %v5415, %v5194
          %v6221 = vadd.s32 %v5415, %v5195
          %v6222 = vadd.s32 %v5415, %v5196
          %v6223 = vadd.s32 %v5415, %v5197
          %v6224 = vadd.s32 %v5415, %v5198
          %v6225 = vadd.s32 %v5415, %v5199
          %v6226 = vadd.s32 %v5415, %v5200
          %v6227 = vadd.s32 %v5415, %v5201
          %v6228 = vadd.s32 %v5415, %v5202
          %v6229 = vadd.s32 %v5415, %v5203
          %v6230 = vadd.s32 %v5415, %v5204
          %v6231 = vadd.s32 %v5415, %v5205
          %v6232 = vadd.s32 %v5415, %v5206
          %v6233 = vadd.s32 %v5415, %v5207
          %v6234 = vadd.s32 %v5415, %v5208
          %v6235 = vadd.s32 %v5415, %v5209
          %v6236 = vadd.s32 %v5415, %v5210
          %v6237 = vadd.s32 %v5415, %v5211
          %v6238 = vadd.s32 %v5415, %v5212
          %v6239 = vadd.s32 %v5415, %v5213
          %v6240 = vadd.s32 %v5415, %v5214
          %v6241 = vadd.s32 %v5415, %v5215
          %v6242 = vadd.s32 %v5415, %v5216
          %v6243 = vadd.s32 %v5415, %v5217
          %v6244 = vadd.s32 %v5415, %v5218
          %v6245 = vadd.s32 %v5415, %v5219
          %v6246 = vadd.s32 %v5415, %v5220
          %v6247 = vadd.s32 %v5415, %v5221
          %v6248 = vadd.s32 %v5415, %v5222
          %v6249 = vadd.s32 %v5415, %v5223
          %v6250 = vadd.s32 %v5415, %v5224
          %v6251 = vadd.s32 %v5415, %v5225
          %v6252 = vadd.s32 %v5415, %v5226
          %v6253 = vadd.s32 %v5415, %v5227
          %v6254 = vadd.s32 %v5415, %v5228
          %v6255 = vadd.s32 %v5415, %v5229
          %v6256 = vadd.s32 %v5415, %v5230
          %v6257 = vadd.s32 %v5415, %v5231
          %v6258 = vadd.s32 %v5415, %v5232
          %v6259 = vadd.s32 %v5415, %v5233
          %v6260 = vadd.s32 %v5415, %v5234
          %v6261 = vadd.s32 %v5415, %v5235
          %v6262 = vadd.s32 %v5415, %v5236
          %v6263 = vadd.s32 %v5415, %v5237
          %v6264 = vadd.s32 %v5415, %v5238
          %v6265 = vadd.s32 %v5415, %v5239
          %v6266 = vadd.s32 %v5415, %v5240
          %v6267 = vadd.s32 %v5415, %v5241
          %v6268 = vadd.s32 %v5415, %v5242
          %v6269 = vadd.s32 %v5415, %v5243
          %v6270 = vadd.s32 %v5415, %v5244
          %v6271 = vadd.s32 %v5415, %v5245
          %v6272 = vadd.s32 %v5415, %v5246
          %v6273 = vadd.s32 %v5415, %v5247
          %v6274 = vadd.s32 %v5415, %v5248
          %v6275 = vadd.s32 %v5415, %v5249
          %v6276 = vadd.s32 %v5415, %v5250
          %v6277 = vadd.s32 %v5415, %v5251
          %v6278 = vadd.s32 %v5415, %v5252
          %v6279 = vadd.s32 %v5415, %v5253
          %v6280 = vadd.s32 %v5415, %v5254
          %v6281 = vadd.s32 %v5415, %v5255
          %v6282 = vadd.s32 %v5415, %v5256
          %v6283 = vadd.s32 %v5415, %v5257
          %v6284 = vadd.s32 %v5415, %v5258
          %v6285 = vadd.s32 %v5415, %v5259
          %v6286 = vadd.s32 %v5415, %v5260
          %v6287 = vadd.s32 %v5415, %v5261
          %v6288 = vadd.s32 %v5415, %v5262
          %v6289 = vadd.s32 %v5415, %v5263
          %v6290 = vadd.s32 %v5415, %v5264
          %v6291 = vadd.s32 %v5415, %v5265
          %v6292 = vadd.s32 %v5415, %v5266
          %v6293 = vadd.s32 %v5415, %v5267
          %v6294 = vadd.s32 %v5415, %v5268
          %v6295 = vadd.s32 %v5415, %v5269
          %v6296 = vadd.s32 %v5415, %v5270
          %v6297 = vadd.s32 %v5415, %v5271
          %v6298 = vadd.s32 %v5415, %v5272
          %v6299 = vadd.s32 %v5415, %v5273
          %v6300 = vadd.s32 %v5415, %v5274
          %v6301 = vadd.s32 %v5415, %v5275
          %v6302 = vadd.s32 %v5415, %v5276
          %v6303 = vadd.s32 %v5415, %v5277
          %v6304 = vadd.s32 %v5415, %v5278
          %v6305 = vadd.s32 %v5415, %v5279
          %v6306 = vadd.s32 %v5415, %v5280
          %v6307 = vadd.s32 %v5415, %v5281
          %v6308 = vadd.s32 %v5415, %v5282
          %v6309 = vadd.s32 %v5415, %v5283
          %v6310 = vadd.s32 %v5415, %v5284
          %v6311 = vadd.s32 %v5415, %v5285
          %v6312 = vadd.s32 %v5415, %v5286
          %v6313 = vadd.s32 %v5415, %v5287
          %v6314 = vadd.s32 %v5415, %v5288
          %v6315 = vadd.s32 %v5415, %v5289
          %v6316 = vadd.s32 %v5415, %v5290
          %v6317 = vadd.s32 %v5415, %v5291
          %v6318 = vadd.s32 %v5415, %v5292
          %v6319 = vadd.s32 %v5415, %v5293
          %v6320 = vadd.s32 %v5415, %v5294
          %v6321 = vadd.s32 %v5415, %v5295
          %v6322 = vadd.s32 %v5415, %v5296
          %v6323 = vadd.s32 %v5415, %v5297
          %v6324 = vadd.s32 %v5415, %v5298
          %v6325 = vadd.s32 %v5415, %v5299
          %v6326 = vadd.s32 %v5415, %v5300
          %v6327 = vadd.s32 %v5415, %v5301
          %v6328 = vadd.s32 %v5415, %v5302
          %v6329 = vadd.s32 %v5415, %v5303
          %v6330 = vadd.s32 %v5415, %v5304
          %v6331 = vadd.s32 %v5415, %v5305
          %v6332 = vadd.s32 %v5415, %v5306
          %v6333 = vadd.s32 %v5415, %v5307
          %v6334 = vadd.s32 %v5415, %v5308
          %v6335 = vadd.s32 %v5415, %v5309
          %v6336 = vadd.s32 %v5415, %v5310
          %v6337 = vadd.s32 %v5415, %v5311
          %v6338 = vadd.s32 %v5415, %v5312
          %v6339 = vadd.s32 %v5415, %v5313
          %v6340 = vadd.s32 %v5415, %v5314
          %v6341 = vadd.s32 %v5415, %v5315
          %v6342 = vadd.s32 %v5415, %v5316
          %v6343 = vadd.s32 %v5415, %v5317
          %v6344 = vadd.s32 %v5415, %v5318
          %v6345 = vadd.s32 %v5415, %v5319
          %v6346 = vadd.s32 %v5415, %v5320
          %v6347 = vadd.s32 %v5415, %v5321
          %v6348 = vadd.s32 %v5415, %v5322
          %v6349 = vadd.s32 %v5415, %v5323
          %v6350 = vadd.s32 %v5415, %v5324
          %v6351 = vadd.s32 %v5415, %v5325
          %v6352 = vadd.s32 %v5415, %v5326
          %v6353 = vadd.s32 %v5415, %v5327
          %v6354 = vadd.s32 %v5415, %v5328
          %v6355 = vadd.s32 %v5415, %v5329
          %v6356 = vadd.s32 %v5415, %v5330
          %v6357 = vadd.s32 %v5415, %v5331
          %v6358 = vadd.s32 %v5415, %v5332
          %v6359 = vadd.s32 %v5415, %v5333
          %v6360 = vadd.s32 %v5415, %v5334
          %v6361 = vadd.s32 %v5415, %v5335
          %v6362 = vadd.s32 %v5415, %v5336
          %v6363 = vadd.s32 %v5415, %v5337
          %v6364 = vadd.s32 %v5415, %v5338
          %v6365 = vadd.s32 %v5415, %v5339
          %v6366 = vadd.s32 %v5415, %v5340
          %v6367 = vadd.s32 %v5415, %v5341
          %v6368 = vadd.s32 %v5415, %v5342
          %v6369 = vadd.s32 %v5415, %v5343
          %v6370 = vadd.s32 %v5415, %v5344
          %v6371 = vadd.s32 %v5415, %v5345
          %v6372 = vadd.s32 %v5415, %v5346
          %v6373 = vadd.s32 %v5415, %v5347
          %v6374 = vadd.s32 %v5415, %v5348
          %v6375 = vadd.s32 %v5415, %v5349
          %v6376 = vadd.s32 %v5415, %v5350
          %v6377 = vadd.s32 %v5415, %v5351
          %v6378 = vadd.s32 %v5415, %v5352
          %v6379 = vadd.s32 %v5415, %v5353
          %v6380 = vadd.s32 %v5415, %v5354
          %v6381 = vadd.s32 %v5415, %v5355
          %v6382 = vadd.s32 %v5415, %v5356
          %v6383 = vadd.s32 %v5415, %v5357
          %v6384 = vadd.s32 %v5415, %v5358
          %v6385 = vadd.s32 %v5415, %v5359
          %v6386 = vadd.s32 %v5415, %v5360
          %v6387 = vadd.s32 %v5415, %v5361
          %v6388 = vadd.s32 %v5415, %v5362
          %v6389 = vadd.s32 %v5415, %v5363
          %v6390 = vadd.s32 %v5415, %v5364
          %v6391 = vadd.s32 %v5415, %v5365
          %v6392 = vadd.s32 %v5415, %v5366
          %v6393 = vadd.s32 %v5415, %v5367
          %v6394 = vadd.s32 %v5415, %v5368
          %v6395 = vadd.s32 %v5415, %v5369
          %v6396 = vadd.s32 %v5415, %v5370
          %v6397 = vadd.s32 %v5415, %v5371
          %v6398 = vadd.s32 %v5415, %v5372
          %v6399 = vadd.s32 %v5415, %v5373
          %v6400 = vadd.s32 %v5415, %v5374
          %v6401 = vadd.s32 %v5415, %v5375
          %v6402 = vadd.s32 %v5415, %v5376
          %v6403 = vadd.s32 %v5415, %v5377
          %v6404 = vadd.s32 %v5415, %v5378
          %v6405 = vadd.s32 %v5415, %v5379
          %v6406 = vadd.s32 %v5415, %v5380
          %v6407 = vadd.s32 %v5415, %v5381
          %v6408 = vadd.s32 %v5415, %v5382
          %v6409 = vadd.s32 %v5415, %v5383
          %v6410 = vadd.s32 %v5415, %v5384
          %v6411 = vadd.s32 %v5415, %v5385
          %v6412 = vadd.s32 %v5415, %v5386
          %v6413 = vadd.s32 %v5415, %v5387
          %v6414 = vadd.s32 %v5415, %v5388
          %v6415 = vadd.s32 %v5415, %v5389
          %v6416 = vadd.s32 %v5415, %v5390
          %v6417 = vadd.s32 %v5415, %v5391
          %v6418 = vadd.s32 %v5415, %v5392
          %v6419 = vadd.s32 %v5415, %v5393
          %v6420 = vadd.s32 %v5415, %v5394
          %v6421 = vadd.s32 %v5415, %v5395
          %v6422 = vadd.s32 %v5415, %v5396
          %v6423 = vadd.s32 %v5415, %v5397
          %v6424 = vadd.s32 %v5415, %v5398
          %v6425 = vadd.s32 %v5415, %v5399
          %v6426 = vadd.s32 %v5415, %v5400
          %v6427 = vadd.s32 %v5415, %v5401
          %v6428 = vadd.s32 %v5415, %v5402
          %v6429 = vadd.s32 %v5415, %v5403
          %v6430 = vadd.s32 %v5415, %v5404
          %v6431 = vadd.s32 %v5415, %v5405
          %v6432 = vadd.s32 %v5415, %v5406
          %v6433 = vadd.s32 %v5415, %v5407
          %v6434 = vadd.s32 %v5415, %v5408
          %v6435 = vadd.s32 %v5415, %v5409
          %v6436 = vadd.s32 %v5415, %v5410
          %v6437 = vadd.s32 %v5415, %v5411
          %v6438 = vadd.s32 %v5415, %v5412
          %v6439 = vadd.s32 %v5415, %v5413
          %vm6440 = vcmp.lt.s32.totalorder %v5416, 10000
          %vm6441 = vcmp.lt.s32.totalorder %v5417, 10000
          %vm6442 = vcmp.lt.s32.totalorder %v5418, 10000
          %vm6443 = vcmp.lt.s32.totalorder %v5419, 10000
          %vm6444 = vcmp.lt.s32.totalorder %v5420, 10000
          %vm6445 = vcmp.lt.s32.totalorder %v5421, 10000
          %vm6446 = vcmp.lt.s32.totalorder %v5422, 10000
          %vm6447 = vcmp.lt.s32.totalorder %v5423, 10000
          %vm6448 = vcmp.lt.s32.totalorder %v5424, 10000
          %vm6449 = vcmp.lt.s32.totalorder %v5425, 10000
          %vm6450 = vcmp.lt.s32.totalorder %v5426, 10000
          %vm6451 = vcmp.lt.s32.totalorder %v5427, 10000
          %vm6452 = vcmp.lt.s32.totalorder %v5428, 10000
          %vm6453 = vcmp.lt.s32.totalorder %v5429, 10000
          %vm6454 = vcmp.lt.s32.totalorder %v5430, 10000
          %vm6455 = vcmp.lt.s32.totalorder %v5431, 10000
          %vm6456 = vcmp.lt.s32.totalorder %v5432, 10000
          %vm6457 = vcmp.lt.s32.totalorder %v5433, 10000
          %vm6458 = vcmp.lt.s32.totalorder %v5434, 10000
          %vm6459 = vcmp.lt.s32.totalorder %v5435, 10000
          %vm6460 = vcmp.lt.s32.totalorder %v5436, 10000
          %vm6461 = vcmp.lt.s32.totalorder %v5437, 10000
          %vm6462 = vcmp.lt.s32.totalorder %v5438, 10000
          %vm6463 = vcmp.lt.s32.totalorder %v5439, 10000
          %vm6464 = vcmp.lt.s32.totalorder %v5440, 10000
          %vm6465 = vcmp.lt.s32.totalorder %v5441, 10000
          %vm6466 = vcmp.lt.s32.totalorder %v5442, 10000
          %vm6467 = vcmp.lt.s32.totalorder %v5443, 10000
          %vm6468 = vcmp.lt.s32.totalorder %v5444, 10000
          %vm6469 = vcmp.lt.s32.totalorder %v5445, 10000
          %vm6470 = vcmp.lt.s32.totalorder %v5446, 10000
          %vm6471 = vcmp.lt.s32.totalorder %v5447, 10000
          %vm6472 = vcmp.lt.s32.totalorder %v5448, 10000
          %vm6473 = vcmp.lt.s32.totalorder %v5449, 10000
          %vm6474 = vcmp.lt.s32.totalorder %v5450, 10000
          %vm6475 = vcmp.lt.s32.totalorder %v5451, 10000
          %vm6476 = vcmp.lt.s32.totalorder %v5452, 10000
          %vm6477 = vcmp.lt.s32.totalorder %v5453, 10000
          %vm6478 = vcmp.lt.s32.totalorder %v5454, 10000
          %vm6479 = vcmp.lt.s32.totalorder %v5455, 10000
          %vm6480 = vcmp.lt.s32.totalorder %v5456, 10000
          %vm6481 = vcmp.lt.s32.totalorder %v5457, 10000
          %vm6482 = vcmp.lt.s32.totalorder %v5458, 10000
          %vm6483 = vcmp.lt.s32.totalorder %v5459, 10000
          %vm6484 = vcmp.lt.s32.totalorder %v5460, 10000
          %vm6485 = vcmp.lt.s32.totalorder %v5461, 10000
          %vm6486 = vcmp.lt.s32.totalorder %v5462, 10000
          %vm6487 = vcmp.lt.s32.totalorder %v5463, 10000
          %vm6488 = vcmp.lt.s32.totalorder %v5464, 10000
          %vm6489 = vcmp.lt.s32.totalorder %v5465, 10000
          %vm6490 = vcmp.lt.s32.totalorder %v5466, 10000
          %vm6491 = vcmp.lt.s32.totalorder %v5467, 10000
          %vm6492 = vcmp.lt.s32.totalorder %v5468, 10000
          %vm6493 = vcmp.lt.s32.totalorder %v5469, 10000
          %vm6494 = vcmp.lt.s32.totalorder %v5470, 10000
          %vm6495 = vcmp.lt.s32.totalorder %v5471, 10000
          %vm6496 = vcmp.lt.s32.totalorder %v5472, 10000
          %vm6497 = vcmp.lt.s32.totalorder %v5473, 10000
          %vm6498 = vcmp.lt.s32.totalorder %v5474, 10000
          %vm6499 = vcmp.lt.s32.totalorder %v5475, 10000
          %vm6500 = vcmp.lt.s32.totalorder %v5476, 10000
          %vm6501 = vcmp.lt.s32.totalorder %v5477, 10000
          %vm6502 = vcmp.lt.s32.totalorder %v5478, 10000
          %vm6503 = vcmp.lt.s32.totalorder %v5479, 10000
          %vm6504 = vcmp.lt.s32.totalorder %v5480, 10000
          %vm6505 = vcmp.lt.s32.totalorder %v5481, 10000
          %vm6506 = vcmp.lt.s32.totalorder %v5482, 10000
          %vm6507 = vcmp.lt.s32.totalorder %v5483, 10000
          %vm6508 = vcmp.lt.s32.totalorder %v5484, 10000
          %vm6509 = vcmp.lt.s32.totalorder %v5485, 10000
          %vm6510 = vcmp.lt.s32.totalorder %v5486, 10000
          %vm6511 = vcmp.lt.s32.totalorder %v5487, 10000
          %vm6512 = vcmp.lt.s32.totalorder %v5488, 10000
          %vm6513 = vcmp.lt.s32.totalorder %v5489, 10000
          %vm6514 = vcmp.lt.s32.totalorder %v5490, 10000
          %vm6515 = vcmp.lt.s32.totalorder %v5491, 10000
          %vm6516 = vcmp.lt.s32.totalorder %v5492, 10000
          %vm6517 = vcmp.lt.s32.totalorder %v5493, 10000
          %vm6518 = vcmp.lt.s32.totalorder %v5494, 10000
          %vm6519 = vcmp.lt.s32.totalorder %v5495, 10000
          %vm6520 = vcmp.lt.s32.totalorder %v5496, 10000
          %vm6521 = vcmp.lt.s32.totalorder %v5497, 10000
          %vm6522 = vcmp.lt.s32.totalorder %v5498, 10000
          %vm6523 = vcmp.lt.s32.totalorder %v5499, 10000
          %vm6524 = vcmp.lt.s32.totalorder %v5500, 10000
          %vm6525 = vcmp.lt.s32.totalorder %v5501, 10000
          %vm6526 = vcmp.lt.s32.totalorder %v5502, 10000
          %vm6527 = vcmp.lt.s32.totalorder %v5503, 10000
          %vm6528 = vcmp.lt.s32.totalorder %v5504, 10000
          %vm6529 = vcmp.lt.s32.totalorder %v5505, 10000
          %vm6530 = vcmp.lt.s32.totalorder %v5506, 10000
          %vm6531 = vcmp.lt.s32.totalorder %v5507, 10000
          %vm6532 = vcmp.lt.s32.totalorder %v5508, 10000
          %vm6533 = vcmp.lt.s32.totalorder %v5509, 10000
          %vm6534 = vcmp.lt.s32.totalorder %v5510, 10000
          %vm6535 = vcmp.lt.s32.totalorder %v5511, 10000
          %vm6536 = vcmp.lt.s32.totalorder %v5512, 10000
          %vm6537 = vcmp.lt.s32.totalorder %v5513, 10000
          %vm6538 = vcmp.lt.s32.totalorder %v5514, 10000
          %vm6539 = vcmp.lt.s32.totalorder %v5515, 10000
          %vm6540 = vcmp.lt.s32.totalorder %v5516, 10000
          %vm6541 = vcmp.lt.s32.totalorder %v5517, 10000
          %vm6542 = vcmp.lt.s32.totalorder %v5518, 10000
          %vm6543 = vcmp.lt.s32.totalorder %v5519, 10000
          %vm6544 = vcmp.lt.s32.totalorder %v5520, 10000
          %vm6545 = vcmp.lt.s32.totalorder %v5521, 10000
          %vm6546 = vcmp.lt.s32.totalorder %v5522, 10000
          %vm6547 = vcmp.lt.s32.totalorder %v5523, 10000
          %vm6548 = vcmp.lt.s32.totalorder %v5524, 10000
          %vm6549 = vcmp.lt.s32.totalorder %v5525, 10000
          %vm6550 = vcmp.lt.s32.totalorder %v5526, 10000
          %vm6551 = vcmp.lt.s32.totalorder %v5527, 10000
          %vm6552 = vcmp.lt.s32.totalorder %v5528, 10000
          %vm6553 = vcmp.lt.s32.totalorder %v5529, 10000
          %vm6554 = vcmp.lt.s32.totalorder %v5530, 10000
          %vm6555 = vcmp.lt.s32.totalorder %v5531, 10000
          %vm6556 = vcmp.lt.s32.totalorder %v5532, 10000
          %vm6557 = vcmp.lt.s32.totalorder %v5533, 10000
          %vm6558 = vcmp.lt.s32.totalorder %v5534, 10000
          %vm6559 = vcmp.lt.s32.totalorder %v5535, 10000
          %vm6560 = vcmp.lt.s32.totalorder %v5536, 10000
          %vm6561 = vcmp.lt.s32.totalorder %v5537, 10000
          %vm6562 = vcmp.lt.s32.totalorder %v5538, 10000
          %vm6563 = vcmp.lt.s32.totalorder %v5539, 10000
          %vm6564 = vcmp.lt.s32.totalorder %v5540, 10000
          %vm6565 = vcmp.lt.s32.totalorder %v5541, 10000
          %vm6566 = vcmp.lt.s32.totalorder %v5542, 10000
          %vm6567 = vcmp.lt.s32.totalorder %v5543, 10000
          %vm6568 = vcmp.lt.s32.totalorder %v5544, 10000
          %vm6569 = vcmp.lt.s32.totalorder %v5545, 10000
          %vm6570 = vcmp.lt.s32.totalorder %v5546, 10000
          %vm6571 = vcmp.lt.s32.totalorder %v5547, 10000
          %vm6572 = vcmp.lt.s32.totalorder %v5548, 10000
          %vm6573 = vcmp.lt.s32.totalorder %v5549, 10000
          %vm6574 = vcmp.lt.s32.totalorder %v5550, 10000
          %vm6575 = vcmp.lt.s32.totalorder %v5551, 10000
          %vm6576 = vcmp.lt.s32.totalorder %v5552, 10000
          %vm6577 = vcmp.lt.s32.totalorder %v5553, 10000
          %vm6578 = vcmp.lt.s32.totalorder %v5554, 10000
          %vm6579 = vcmp.lt.s32.totalorder %v5555, 10000
          %vm6580 = vcmp.lt.s32.totalorder %v5556, 10000
          %vm6581 = vcmp.lt.s32.totalorder %v5557, 10000
          %vm6582 = vcmp.lt.s32.totalorder %v5558, 10000
          %vm6583 = vcmp.lt.s32.totalorder %v5559, 10000
          %vm6584 = vcmp.lt.s32.totalorder %v5560, 10000
          %vm6585 = vcmp.lt.s32.totalorder %v5561, 10000
          %vm6586 = vcmp.lt.s32.totalorder %v5562, 10000
          %vm6587 = vcmp.lt.s32.totalorder %v5563, 10000
          %vm6588 = vcmp.lt.s32.totalorder %v5564, 10000
          %vm6589 = vcmp.lt.s32.totalorder %v5565, 10000
          %vm6590 = vcmp.lt.s32.totalorder %v5566, 10000
          %vm6591 = vcmp.lt.s32.totalorder %v5567, 10000
          %vm6592 = vcmp.lt.s32.totalorder %v5568, 10000
          %vm6593 = vcmp.lt.s32.totalorder %v5569, 10000
          %vm6594 = vcmp.lt.s32.totalorder %v5570, 10000
          %vm6595 = vcmp.lt.s32.totalorder %v5571, 10000
          %vm6596 = vcmp.lt.s32.totalorder %v5572, 10000
          %vm6597 = vcmp.lt.s32.totalorder %v5573, 10000
          %vm6598 = vcmp.lt.s32.totalorder %v5574, 10000
          %vm6599 = vcmp.lt.s32.totalorder %v5575, 10000
          %vm6600 = vcmp.lt.s32.totalorder %v5576, 10000
          %vm6601 = vcmp.lt.s32.totalorder %v5577, 10000
          %vm6602 = vcmp.lt.s32.totalorder %v5578, 10000
          %vm6603 = vcmp.lt.s32.totalorder %v5579, 10000
          %vm6604 = vcmp.lt.s32.totalorder %v5580, 10000
          %vm6605 = vcmp.lt.s32.totalorder %v5581, 10000
          %vm6606 = vcmp.lt.s32.totalorder %v5582, 10000
          %vm6607 = vcmp.lt.s32.totalorder %v5583, 10000
          %vm6608 = vcmp.lt.s32.totalorder %v5584, 10000
          %vm6609 = vcmp.lt.s32.totalorder %v5585, 10000
          %vm6610 = vcmp.lt.s32.totalorder %v5586, 10000
          %vm6611 = vcmp.lt.s32.totalorder %v5587, 10000
          %vm6612 = vcmp.lt.s32.totalorder %v5588, 10000
          %vm6613 = vcmp.lt.s32.totalorder %v5589, 10000
          %vm6614 = vcmp.lt.s32.totalorder %v5590, 10000
          %vm6615 = vcmp.lt.s32.totalorder %v5591, 10000
          %vm6616 = vcmp.lt.s32.totalorder %v5592, 10000
          %vm6617 = vcmp.lt.s32.totalorder %v5593, 10000
          %vm6618 = vcmp.lt.s32.totalorder %v5594, 10000
          %vm6619 = vcmp.lt.s32.totalorder %v5595, 10000
          %vm6620 = vcmp.lt.s32.totalorder %v5596, 10000
          %vm6621 = vcmp.lt.s32.totalorder %v5597, 10000
          %vm6622 = vcmp.lt.s32.totalorder %v5598, 10000
          %vm6623 = vcmp.lt.s32.totalorder %v5599, 10000
          %vm6624 = vcmp.lt.s32.totalorder %v5600, 10000
          %vm6625 = vcmp.lt.s32.totalorder %v5601, 10000
          %vm6626 = vcmp.lt.s32.totalorder %v5602, 10000
          %vm6627 = vcmp.lt.s32.totalorder %v5603, 10000
          %vm6628 = vcmp.lt.s32.totalorder %v5604, 10000
          %vm6629 = vcmp.lt.s32.totalorder %v5605, 10000
          %vm6630 = vcmp.lt.s32.totalorder %v5606, 10000
          %vm6631 = vcmp.lt.s32.totalorder %v5607, 10000
          %vm6632 = vcmp.lt.s32.totalorder %v5608, 10000
          %vm6633 = vcmp.lt.s32.totalorder %v5609, 10000
          %vm6634 = vcmp.lt.s32.totalorder %v5610, 10000
          %vm6635 = vcmp.lt.s32.totalorder %v5611, 10000
          %vm6636 = vcmp.lt.s32.totalorder %v5612, 10000
          %vm6637 = vcmp.lt.s32.totalorder %v5613, 10000
          %vm6638 = vcmp.lt.s32.totalorder %v5614, 10000
          %vm6639 = vcmp.lt.s32.totalorder %v5615, 10000
          %vm6640 = vcmp.lt.s32.totalorder %v5616, 10000
          %vm6641 = vcmp.lt.s32.totalorder %v5617, 10000
          %vm6642 = vcmp.lt.s32.totalorder %v5618, 10000
          %vm6643 = vcmp.lt.s32.totalorder %v5619, 10000
          %vm6644 = vcmp.lt.s32.totalorder %v5620, 10000
          %vm6645 = vcmp.lt.s32.totalorder %v5621, 10000
          %vm6646 = vcmp.lt.s32.totalorder %v5622, 10000
          %vm6647 = vcmp.lt.s32.totalorder %v5623, 10000
          %vm6648 = vcmp.lt.s32.totalorder %v5624, 10000
          %vm6649 = vcmp.lt.s32.totalorder %v5625, 10000
          %vm6650 = vcmp.lt.s32.totalorder %v5626, 10000
          %vm6651 = vcmp.lt.s32.totalorder %v5627, 10000
          %vm6652 = vcmp.lt.s32.totalorder %v5628, 10000
          %vm6653 = vcmp.lt.s32.totalorder %v5629, 10000
          %vm6654 = vcmp.lt.s32.totalorder %v5630, 10000
          %vm6655 = vcmp.lt.s32.totalorder %v5631, 10000
          %vm6656 = vcmp.lt.s32.totalorder %v5632, 10000
          %vm6657 = vcmp.lt.s32.totalorder %v5633, 10000
          %vm6658 = vcmp.lt.s32.totalorder %v5634, 10000
          %vm6659 = vcmp.lt.s32.totalorder %v5635, 10000
          %vm6660 = vcmp.lt.s32.totalorder %v5636, 10000
          %vm6661 = vcmp.lt.s32.totalorder %v5637, 10000
          %vm6662 = vcmp.lt.s32.totalorder %v5638, 10000
          %vm6663 = vcmp.lt.s32.totalorder %v5639, 10000
          %vm6664 = vcmp.lt.s32.totalorder %v5640, 10000
          %vm6665 = vcmp.lt.s32.totalorder %v5641, 10000
          %vm6666 = vcmp.lt.s32.totalorder %v5642, 10000
          %vm6667 = vcmp.lt.s32.totalorder %v5643, 10000
          %vm6668 = vcmp.lt.s32.totalorder %v5644, 10000
          %vm6669 = vcmp.lt.s32.totalorder %v5645, 10000
          %vm6670 = vcmp.lt.s32.totalorder %v5646, 10000
          %vm6671 = vcmp.lt.s32.totalorder %v5647, 10000
          %vm6672 = vcmp.lt.s32.totalorder %v5648, 10000
          %vm6673 = vcmp.lt.s32.totalorder %v5649, 10000
          %vm6674 = vcmp.lt.s32.totalorder %v5650, 10000
          %vm6675 = vcmp.lt.s32.totalorder %v5651, 10000
          %vm6676 = vcmp.lt.s32.totalorder %v5652, 10000
          %vm6677 = vcmp.lt.s32.totalorder %v5653, 10000
          %vm6678 = vcmp.lt.s32.totalorder %v5654, 10000
          %vm6679 = vcmp.lt.s32.totalorder %v5655, 10000
          %vm6680 = vcmp.lt.s32.totalorder %v5656, 10000
          %vm6681 = vcmp.lt.s32.totalorder %v5657, 10000
          %vm6682 = vcmp.lt.s32.totalorder %v5658, 10000
          %vm6683 = vcmp.lt.s32.totalorder %v5659, 10000
          %vm6684 = vcmp.lt.s32.totalorder %v5660, 10000
          %vm6685 = vcmp.lt.s32.totalorder %v5661, 10000
          %vm6686 = vcmp.lt.s32.totalorder %v5662, 10000
          %vm6687 = vcmp.lt.s32.totalorder %v5663, 10000
          %vm6688 = vcmp.lt.s32.totalorder %v5664, 10000
          %vm6689 = vcmp.lt.s32.totalorder %v5665, 10000
          %vm6690 = vcmp.lt.s32.totalorder %v5666, 10000
          %vm6691 = vcmp.lt.s32.totalorder %v5667, 10000
          %vm6692 = vcmp.lt.s32.totalorder %v5668, 10000
          %vm6693 = vcmp.lt.s32.totalorder %v5669, 10000
          %vm6694 = vcmp.lt.s32.totalorder %v5670, 10000
          %vm6695 = vcmp.lt.s32.totalorder %v5671, 10000
          %vm6696 = vcmp.lt.s32.totalorder %v5672, 10000
          %vm6697 = vcmp.lt.s32.totalorder %v5673, 10000
          %vm6698 = vcmp.lt.s32.totalorder %v5674, 10000
          %vm6699 = vcmp.lt.s32.totalorder %v5675, 10000
          %vm6700 = vcmp.lt.s32.totalorder %v5676, 10000
          %vm6701 = vcmp.lt.s32.totalorder %v5677, 10000
          %vm6702 = vcmp.lt.s32.totalorder %v5678, 10000
          %vm6703 = vcmp.lt.s32.totalorder %v5679, 10000
          %vm6704 = vcmp.lt.s32.totalorder %v5680, 10000
          %vm6705 = vcmp.lt.s32.totalorder %v5681, 10000
          %vm6706 = vcmp.lt.s32.totalorder %v5682, 10000
          %vm6707 = vcmp.lt.s32.totalorder %v5683, 10000
          %vm6708 = vcmp.lt.s32.totalorder %v5684, 10000
          %vm6709 = vcmp.lt.s32.totalorder %v5685, 10000
          %vm6710 = vcmp.lt.s32.totalorder %v5686, 10000
          %vm6711 = vcmp.lt.s32.totalorder %v5687, 10000
          %vm6712 = vcmp.lt.s32.totalorder %v5688, 10000
          %vm6713 = vcmp.lt.s32.totalorder %v5689, 10000
          %vm6714 = vcmp.lt.s32.totalorder %v5690, 10000
          %vm6715 = vcmp.lt.s32.totalorder %v5691, 10000
          %vm6716 = vcmp.lt.s32.totalorder %v5692, 10000
          %vm6717 = vcmp.lt.s32.totalorder %v5693, 10000
          %vm6718 = vcmp.lt.s32.totalorder %v5694, 10000
          %vm6719 = vcmp.lt.s32.totalorder %v5695, 10000
          %vm6720 = vcmp.lt.s32.totalorder %v5696, 10000
          %vm6721 = vcmp.lt.s32.totalorder %v5697, 10000
          %vm6722 = vcmp.lt.s32.totalorder %v5698, 10000
          %vm6723 = vcmp.lt.s32.totalorder %v5699, 10000
          %vm6724 = vcmp.lt.s32.totalorder %v5700, 10000
          %vm6725 = vcmp.lt.s32.totalorder %v5701, 10000
          %vm6726 = vcmp.lt.s32.totalorder %v5702, 10000
          %vm6727 = vcmp.lt.s32.totalorder %v5703, 10000
          %vm6728 = vcmp.lt.s32.totalorder %v5704, 10000
          %vm6729 = vcmp.lt.s32.totalorder %v5705, 10000
          %vm6730 = vcmp.lt.s32.totalorder %v5706, 10000
          %vm6731 = vcmp.lt.s32.totalorder %v5707, 10000
          %vm6732 = vcmp.lt.s32.totalorder %v5708, 10000
          %vm6733 = vcmp.lt.s32.totalorder %v5709, 10000
          %vm6734 = vcmp.lt.s32.totalorder %v5710, 10000
          %vm6735 = vcmp.lt.s32.totalorder %v5711, 10000
          %vm6736 = vcmp.lt.s32.totalorder %v5712, 10000
          %vm6737 = vcmp.lt.s32.totalorder %v5713, 10000
          %vm6738 = vcmp.lt.s32.totalorder %v5714, 10000
          %vm6739 = vcmp.lt.s32.totalorder %v5715, 10000
          %vm6740 = vcmp.lt.s32.totalorder %v5716, 10000
          %vm6741 = vcmp.lt.s32.totalorder %v5717, 10000
          %vm6742 = vcmp.lt.s32.totalorder %v5718, 10000
          %vm6743 = vcmp.lt.s32.totalorder %v5719, 10000
          %vm6744 = vcmp.lt.s32.totalorder %v5720, 10000
          %vm6745 = vcmp.lt.s32.totalorder %v5721, 10000
          %vm6746 = vcmp.lt.s32.totalorder %v5722, 10000
          %vm6747 = vcmp.lt.s32.totalorder %v5723, 10000
          %vm6748 = vcmp.lt.s32.totalorder %v5724, 10000
          %vm6749 = vcmp.lt.s32.totalorder %v5725, 10000
          %vm6750 = vcmp.lt.s32.totalorder %v5726, 10000
          %vm6751 = vcmp.lt.s32.totalorder %v5727, 10000
          %vm6752 = vcmp.lt.s32.totalorder %v5728, 10000
          %vm6753 = vcmp.lt.s32.totalorder %v5729, 10000
          %vm6754 = vcmp.lt.s32.totalorder %v5730, 10000
          %vm6755 = vcmp.lt.s32.totalorder %v5731, 10000
          %vm6756 = vcmp.lt.s32.totalorder %v5732, 10000
          %vm6757 = vcmp.lt.s32.totalorder %v5733, 10000
          %vm6758 = vcmp.lt.s32.totalorder %v5734, 10000
          %vm6759 = vcmp.lt.s32.totalorder %v5735, 10000
          %vm6760 = vcmp.lt.s32.totalorder %v5736, 10000
          %vm6761 = vcmp.lt.s32.totalorder %v5737, 10000
          %vm6762 = vcmp.lt.s32.totalorder %v5738, 10000
          %vm6763 = vcmp.lt.s32.totalorder %v5739, 10000
          %vm6764 = vcmp.lt.s32.totalorder %v5740, 10000
          %vm6765 = vcmp.lt.s32.totalorder %v5741, 10000
          %vm6766 = vcmp.lt.s32.totalorder %v5742, 10000
          %vm6767 = vcmp.lt.s32.totalorder %v5743, 10000
          %vm6768 = vcmp.lt.s32.totalorder %v5744, 10000
          %vm6769 = vcmp.lt.s32.totalorder %v5745, 10000
          %vm6770 = vcmp.lt.s32.totalorder %v5746, 10000
          %vm6771 = vcmp.lt.s32.totalorder %v5747, 10000
          %vm6772 = vcmp.lt.s32.totalorder %v5748, 10000
          %vm6773 = vcmp.lt.s32.totalorder %v5749, 10000
          %vm6774 = vcmp.lt.s32.totalorder %v5750, 10000
          %vm6775 = vcmp.lt.s32.totalorder %v5751, 10000
          %vm6776 = vcmp.lt.s32.totalorder %v5752, 10000
          %vm6777 = vcmp.lt.s32.totalorder %v5753, 10000
          %vm6778 = vcmp.lt.s32.totalorder %v5754, 10000
          %vm6779 = vcmp.lt.s32.totalorder %v5755, 10000
          %vm6780 = vcmp.lt.s32.totalorder %v5756, 10000
          %vm6781 = vcmp.lt.s32.totalorder %v5757, 10000
          %vm6782 = vcmp.lt.s32.totalorder %v5758, 10000
          %vm6783 = vcmp.lt.s32.totalorder %v5759, 10000
          %vm6784 = vcmp.lt.s32.totalorder %v5760, 10000
          %vm6785 = vcmp.lt.s32.totalorder %v5761, 10000
          %vm6786 = vcmp.lt.s32.totalorder %v5762, 10000
          %vm6787 = vcmp.lt.s32.totalorder %v5763, 10000
          %vm6788 = vcmp.lt.s32.totalorder %v5764, 10000
          %vm6789 = vcmp.lt.s32.totalorder %v5765, 10000
          %vm6790 = vcmp.lt.s32.totalorder %v5766, 10000
          %vm6791 = vcmp.lt.s32.totalorder %v5767, 10000
          %vm6792 = vcmp.lt.s32.totalorder %v5768, 10000
          %vm6793 = vcmp.lt.s32.totalorder %v5769, 10000
          %vm6794 = vcmp.lt.s32.totalorder %v5770, 10000
          %vm6795 = vcmp.lt.s32.totalorder %v5771, 10000
          %vm6796 = vcmp.lt.s32.totalorder %v5772, 10000
          %vm6797 = vcmp.lt.s32.totalorder %v5773, 10000
          %vm6798 = vcmp.lt.s32.totalorder %v5774, 10000
          %vm6799 = vcmp.lt.s32.totalorder %v5775, 10000
          %vm6800 = vcmp.lt.s32.totalorder %v5776, 10000
          %vm6801 = vcmp.lt.s32.totalorder %v5777, 10000
          %vm6802 = vcmp.lt.s32.totalorder %v5778, 10000
          %vm6803 = vcmp.lt.s32.totalorder %v5779, 10000
          %vm6804 = vcmp.lt.s32.totalorder %v5780, 10000
          %vm6805 = vcmp.lt.s32.totalorder %v5781, 10000
          %vm6806 = vcmp.lt.s32.totalorder %v5782, 10000
          %vm6807 = vcmp.lt.s32.totalorder %v5783, 10000
          %vm6808 = vcmp.lt.s32.totalorder %v5784, 10000
          %vm6809 = vcmp.lt.s32.totalorder %v5785, 10000
          %vm6810 = vcmp.lt.s32.totalorder %v5786, 10000
          %vm6811 = vcmp.lt.s32.totalorder %v5787, 10000
          %vm6812 = vcmp.lt.s32.totalorder %v5788, 10000
          %vm6813 = vcmp.lt.s32.totalorder %v5789, 10000
          %vm6814 = vcmp.lt.s32.totalorder %v5790, 10000
          %vm6815 = vcmp.lt.s32.totalorder %v5791, 10000
          %vm6816 = vcmp.lt.s32.totalorder %v5792, 10000
          %vm6817 = vcmp.lt.s32.totalorder %v5793, 10000
          %vm6818 = vcmp.lt.s32.totalorder %v5794, 10000
          %vm6819 = vcmp.lt.s32.totalorder %v5795, 10000
          %vm6820 = vcmp.lt.s32.totalorder %v5796, 10000
          %vm6821 = vcmp.lt.s32.totalorder %v5797, 10000
          %vm6822 = vcmp.lt.s32.totalorder %v5798, 10000
          %vm6823 = vcmp.lt.s32.totalorder %v5799, 10000
          %vm6824 = vcmp.lt.s32.totalorder %v5800, 10000
          %vm6825 = vcmp.lt.s32.totalorder %v5801, 10000
          %vm6826 = vcmp.lt.s32.totalorder %v5802, 10000
          %vm6827 = vcmp.lt.s32.totalorder %v5803, 10000
          %vm6828 = vcmp.lt.s32.totalorder %v5804, 10000
          %vm6829 = vcmp.lt.s32.totalorder %v5805, 10000
          %vm6830 = vcmp.lt.s32.totalorder %v5806, 10000
          %vm6831 = vcmp.lt.s32.totalorder %v5807, 10000
          %vm6832 = vcmp.lt.s32.totalorder %v5808, 10000
          %vm6833 = vcmp.lt.s32.totalorder %v5809, 10000
          %vm6834 = vcmp.lt.s32.totalorder %v5810, 10000
          %vm6835 = vcmp.lt.s32.totalorder %v5811, 10000
          %vm6836 = vcmp.lt.s32.totalorder %v5812, 10000
          %vm6837 = vcmp.lt.s32.totalorder %v5813, 10000
          %vm6838 = vcmp.lt.s32.totalorder %v5814, 10000
          %vm6839 = vcmp.lt.s32.totalorder %v5815, 10000
          %vm6840 = vcmp.lt.s32.totalorder %v5816, 10000
          %vm6841 = vcmp.lt.s32.totalorder %v5817, 10000
          %vm6842 = vcmp.lt.s32.totalorder %v5818, 10000
          %vm6843 = vcmp.lt.s32.totalorder %v5819, 10000
          %vm6844 = vcmp.lt.s32.totalorder %v5820, 10000
          %vm6845 = vcmp.lt.s32.totalorder %v5821, 10000
          %vm6846 = vcmp.lt.s32.totalorder %v5822, 10000
          %vm6847 = vcmp.lt.s32.totalorder %v5823, 10000
          %vm6848 = vcmp.lt.s32.totalorder %v5824, 10000
          %vm6849 = vcmp.lt.s32.totalorder %v5825, 10000
          %vm6850 = vcmp.lt.s32.totalorder %v5826, 10000
          %vm6851 = vcmp.lt.s32.totalorder %v5827, 10000
          %vm6852 = vcmp.lt.s32.totalorder %v5828, 10000
          %vm6853 = vcmp.lt.s32.totalorder %v5829, 10000
          %vm6854 = vcmp.lt.s32.totalorder %v5830, 10000
          %vm6855 = vcmp.lt.s32.totalorder %v5831, 10000
          %vm6856 = vcmp.lt.s32.totalorder %v5832, 10000
          %vm6857 = vcmp.lt.s32.totalorder %v5833, 10000
          %vm6858 = vcmp.lt.s32.totalorder %v5834, 10000
          %vm6859 = vcmp.lt.s32.totalorder %v5835, 10000
          %vm6860 = vcmp.lt.s32.totalorder %v5836, 10000
          %vm6861 = vcmp.lt.s32.totalorder %v5837, 10000
          %vm6862 = vcmp.lt.s32.totalorder %v5838, 10000
          %vm6863 = vcmp.lt.s32.totalorder %v5839, 10000
          %vm6864 = vcmp.lt.s32.totalorder %v5840, 10000
          %vm6865 = vcmp.lt.s32.totalorder %v5841, 10000
          %vm6866 = vcmp.lt.s32.totalorder %v5842, 10000
          %vm6867 = vcmp.lt.s32.totalorder %v5843, 10000
          %vm6868 = vcmp.lt.s32.totalorder %v5844, 10000
          %vm6869 = vcmp.lt.s32.totalorder %v5845, 10000
          %vm6870 = vcmp.lt.s32.totalorder %v5846, 10000
          %vm6871 = vcmp.lt.s32.totalorder %v5847, 10000
          %vm6872 = vcmp.lt.s32.totalorder %v5848, 10000
          %vm6873 = vcmp.lt.s32.totalorder %v5849, 10000
          %vm6874 = vcmp.lt.s32.totalorder %v5850, 10000
          %vm6875 = vcmp.lt.s32.totalorder %v5851, 10000
          %vm6876 = vcmp.lt.s32.totalorder %v5852, 10000
          %vm6877 = vcmp.lt.s32.totalorder %v5853, 10000
          %vm6878 = vcmp.lt.s32.totalorder %v5854, 10000
          %vm6879 = vcmp.lt.s32.totalorder %v5855, 10000
          %vm6880 = vcmp.lt.s32.totalorder %v5856, 10000
          %vm6881 = vcmp.lt.s32.totalorder %v5857, 10000
          %vm6882 = vcmp.lt.s32.totalorder %v5858, 10000
          %vm6883 = vcmp.lt.s32.totalorder %v5859, 10000
          %vm6884 = vcmp.lt.s32.totalorder %v5860, 10000
          %vm6885 = vcmp.lt.s32.totalorder %v5861, 10000
          %vm6886 = vcmp.lt.s32.totalorder %v5862, 10000
          %vm6887 = vcmp.lt.s32.totalorder %v5863, 10000
          %vm6888 = vcmp.lt.s32.totalorder %v5864, 10000
          %vm6889 = vcmp.lt.s32.totalorder %v5865, 10000
          %vm6890 = vcmp.lt.s32.totalorder %v5866, 10000
          %vm6891 = vcmp.lt.s32.totalorder %v5867, 10000
          %vm6892 = vcmp.lt.s32.totalorder %v5868, 10000
          %vm6893 = vcmp.lt.s32.totalorder %v5869, 10000
          %vm6894 = vcmp.lt.s32.totalorder %v5870, 10000
          %vm6895 = vcmp.lt.s32.totalorder %v5871, 10000
          %vm6896 = vcmp.lt.s32.totalorder %v5872, 10000
          %vm6897 = vcmp.lt.s32.totalorder %v5873, 10000
          %vm6898 = vcmp.lt.s32.totalorder %v5874, 10000
          %vm6899 = vcmp.lt.s32.totalorder %v5875, 10000
          %vm6900 = vcmp.lt.s32.totalorder %v5876, 10000
          %vm6901 = vcmp.lt.s32.totalorder %v5877, 10000
          %vm6902 = vcmp.lt.s32.totalorder %v5878, 10000
          %vm6903 = vcmp.lt.s32.totalorder %v5879, 10000
          %vm6904 = vcmp.lt.s32.totalorder %v5880, 10000
          %vm6905 = vcmp.lt.s32.totalorder %v5881, 10000
          %vm6906 = vcmp.lt.s32.totalorder %v5882, 10000
          %vm6907 = vcmp.lt.s32.totalorder %v5883, 10000
          %vm6908 = vcmp.lt.s32.totalorder %v5884, 10000
          %vm6909 = vcmp.lt.s32.totalorder %v5885, 10000
          %vm6910 = vcmp.lt.s32.totalorder %v5886, 10000
          %vm6911 = vcmp.lt.s32.totalorder %v5887, 10000
          %vm6912 = vcmp.lt.s32.totalorder %v5888, 10000
          %vm6913 = vcmp.lt.s32.totalorder %v5889, 10000
          %vm6914 = vcmp.lt.s32.totalorder %v5890, 10000
          %vm6915 = vcmp.lt.s32.totalorder %v5891, 10000
          %vm6916 = vcmp.lt.s32.totalorder %v5892, 10000
          %vm6917 = vcmp.lt.s32.totalorder %v5893, 10000
          %vm6918 = vcmp.lt.s32.totalorder %v5894, 10000
          %vm6919 = vcmp.lt.s32.totalorder %v5895, 10000
          %vm6920 = vcmp.lt.s32.totalorder %v5896, 10000
          %vm6921 = vcmp.lt.s32.totalorder %v5897, 10000
          %vm6922 = vcmp.lt.s32.totalorder %v5898, 10000
          %vm6923 = vcmp.lt.s32.totalorder %v5899, 10000
          %vm6924 = vcmp.lt.s32.totalorder %v5900, 10000
          %vm6925 = vcmp.lt.s32.totalorder %v5901, 10000
          %vm6926 = vcmp.lt.s32.totalorder %v5902, 10000
          %vm6927 = vcmp.lt.s32.totalorder %v5903, 10000
          %vm6928 = vcmp.lt.s32.totalorder %v5904, 10000
          %vm6929 = vcmp.lt.s32.totalorder %v5905, 10000
          %vm6930 = vcmp.lt.s32.totalorder %v5906, 10000
          %vm6931 = vcmp.lt.s32.totalorder %v5907, 10000
          %vm6932 = vcmp.lt.s32.totalorder %v5908, 10000
          %vm6933 = vcmp.lt.s32.totalorder %v5909, 10000
          %vm6934 = vcmp.lt.s32.totalorder %v5910, 10000
          %vm6935 = vcmp.lt.s32.totalorder %v5911, 10000
          %vm6936 = vcmp.lt.s32.totalorder %v5912, 10000
          %vm6937 = vcmp.lt.s32.totalorder %v5913, 10000
          %vm6938 = vcmp.lt.s32.totalorder %v5914, 10000
          %vm6939 = vcmp.lt.s32.totalorder %v5915, 10000
          %vm6940 = vcmp.lt.s32.totalorder %v5916, 10000
          %vm6941 = vcmp.lt.s32.totalorder %v5917, 10000
          %vm6942 = vcmp.lt.s32.totalorder %v5918, 10000
          %vm6943 = vcmp.lt.s32.totalorder %v5919, 10000
          %vm6944 = vcmp.lt.s32.totalorder %v5920, 10000
          %vm6945 = vcmp.lt.s32.totalorder %v5921, 10000
          %vm6946 = vcmp.lt.s32.totalorder %v5922, 10000
          %vm6947 = vcmp.lt.s32.totalorder %v5923, 10000
          %vm6948 = vcmp.lt.s32.totalorder %v5924, 10000
          %vm6949 = vcmp.lt.s32.totalorder %v5925, 10000
          %vm6950 = vcmp.lt.s32.totalorder %v5926, 10000
          %vm6951 = vcmp.lt.s32.totalorder %v5927, 10000
          %vm6952 = vcmp.lt.s32.totalorder %v5928, 10000
          %vm6953 = vcmp.lt.s32.totalorder %v5929, 10000
          %vm6954 = vcmp.lt.s32.totalorder %v5930, 10000
          %vm6955 = vcmp.lt.s32.totalorder %v5931, 10000
          %vm6956 = vcmp.lt.s32.totalorder %v5932, 10000
          %vm6957 = vcmp.lt.s32.totalorder %v5933, 10000
          %vm6958 = vcmp.lt.s32.totalorder %v5934, 10000
          %vm6959 = vcmp.lt.s32.totalorder %v5935, 10000
          %vm6960 = vcmp.lt.s32.totalorder %v5936, 10000
          %vm6961 = vcmp.lt.s32.totalorder %v5937, 10000
          %vm6962 = vcmp.lt.s32.totalorder %v5938, 10000
          %vm6963 = vcmp.lt.s32.totalorder %v5939, 10000
          %vm6964 = vcmp.lt.s32.totalorder %v5940, 10000
          %vm6965 = vcmp.lt.s32.totalorder %v5941, 10000
          %vm6966 = vcmp.lt.s32.totalorder %v5942, 10000
          %vm6967 = vcmp.lt.s32.totalorder %v5943, 10000
          %vm6968 = vcmp.lt.s32.totalorder %v5944, 10000
          %vm6969 = vcmp.lt.s32.totalorder %v5945, 10000
          %vm6970 = vcmp.lt.s32.totalorder %v5946, 10000
          %vm6971 = vcmp.lt.s32.totalorder %v5947, 10000
          %vm6972 = vcmp.lt.s32.totalorder %v5948, 10000
          %vm6973 = vcmp.lt.s32.totalorder %v5949, 10000
          %vm6974 = vcmp.lt.s32.totalorder %v5950, 10000
          %vm6975 = vcmp.lt.s32.totalorder %v5951, 10000
          %vm6976 = vcmp.lt.s32.totalorder %v5952, 10000
          %vm6977 = vcmp.lt.s32.totalorder %v5953, 10000
          %vm6978 = vcmp.lt.s32.totalorder %v5954, 10000
          %vm6979 = vcmp.lt.s32.totalorder %v5955, 10000
          %vm6980 = vcmp.lt.s32.totalorder %v5956, 10000
          %vm6981 = vcmp.lt.s32.totalorder %v5957, 10000
          %vm6982 = vcmp.lt.s32.totalorder %v5958, 10000
          %vm6983 = vcmp.lt.s32.totalorder %v5959, 10000
          %vm6984 = vcmp.lt.s32.totalorder %v5960, 10000
          %vm6985 = vcmp.lt.s32.totalorder %v5961, 10000
          %vm6986 = vcmp.lt.s32.totalorder %v5962, 10000
          %vm6987 = vcmp.lt.s32.totalorder %v5963, 10000
          %vm6988 = vcmp.lt.s32.totalorder %v5964, 10000
          %vm6989 = vcmp.lt.s32.totalorder %v5965, 10000
          %vm6990 = vcmp.lt.s32.totalorder %v5966, 10000
          %vm6991 = vcmp.lt.s32.totalorder %v5967, 10000
          %vm6992 = vcmp.lt.s32.totalorder %v5968, 10000
          %vm6993 = vcmp.lt.s32.totalorder %v5969, 10000
          %vm6994 = vcmp.lt.s32.totalorder %v5970, 10000
          %vm6995 = vcmp.lt.s32.totalorder %v5971, 10000
          %vm6996 = vcmp.lt.s32.totalorder %v5972, 10000
          %vm6997 = vcmp.lt.s32.totalorder %v5973, 10000
          %vm6998 = vcmp.lt.s32.totalorder %v5974, 10000
          %vm6999 = vcmp.lt.s32.totalorder %v5975, 10000
          %vm7000 = vcmp.lt.s32.totalorder %v5976, 10000
          %vm7001 = vcmp.lt.s32.totalorder %v5977, 10000
          %vm7002 = vcmp.lt.s32.totalorder %v5978, 10000
          %vm7003 = vcmp.lt.s32.totalorder %v5979, 10000
          %vm7004 = vcmp.lt.s32.totalorder %v5980, 10000
          %vm7005 = vcmp.lt.s32.totalorder %v5981, 10000
          %vm7006 = vcmp.lt.s32.totalorder %v5982, 10000
          %vm7007 = vcmp.lt.s32.totalorder %v5983, 10000
          %vm7008 = vcmp.lt.s32.totalorder %v5984, 10000
          %vm7009 = vcmp.lt.s32.totalorder %v5985, 10000
          %vm7010 = vcmp.lt.s32.totalorder %v5986, 10000
          %vm7011 = vcmp.lt.s32.totalorder %v5987, 10000
          %vm7012 = vcmp.lt.s32.totalorder %v5988, 10000
          %vm7013 = vcmp.lt.s32.totalorder %v5989, 10000
          %vm7014 = vcmp.lt.s32.totalorder %v5990, 10000
          %vm7015 = vcmp.lt.s32.totalorder %v5991, 10000
          %vm7016 = vcmp.lt.s32.totalorder %v5992, 10000
          %vm7017 = vcmp.lt.s32.totalorder %v5993, 10000
          %vm7018 = vcmp.lt.s32.totalorder %v5994, 10000
          %vm7019 = vcmp.lt.s32.totalorder %v5995, 10000
          %vm7020 = vcmp.lt.s32.totalorder %v5996, 10000
          %vm7021 = vcmp.lt.s32.totalorder %v5997, 10000
          %vm7022 = vcmp.lt.s32.totalorder %v5998, 10000
          %vm7023 = vcmp.lt.s32.totalorder %v5999, 10000
          %vm7024 = vcmp.lt.s32.totalorder %v6000, 10000
          %vm7025 = vcmp.lt.s32.totalorder %v6001, 10000
          %vm7026 = vcmp.lt.s32.totalorder %v6002, 10000
          %vm7027 = vcmp.lt.s32.totalorder %v6003, 10000
          %vm7028 = vcmp.lt.s32.totalorder %v6004, 10000
          %vm7029 = vcmp.lt.s32.totalorder %v6005, 10000
          %vm7030 = vcmp.lt.s32.totalorder %v6006, 10000
          %vm7031 = vcmp.lt.s32.totalorder %v6007, 10000
          %vm7032 = vcmp.lt.s32.totalorder %v6008, 10000
          %vm7033 = vcmp.lt.s32.totalorder %v6009, 10000
          %vm7034 = vcmp.lt.s32.totalorder %v6010, 10000
          %vm7035 = vcmp.lt.s32.totalorder %v6011, 10000
          %vm7036 = vcmp.lt.s32.totalorder %v6012, 10000
          %vm7037 = vcmp.lt.s32.totalorder %v6013, 10000
          %vm7038 = vcmp.lt.s32.totalorder %v6014, 10000
          %vm7039 = vcmp.lt.s32.totalorder %v6015, 10000
          %vm7040 = vcmp.lt.s32.totalorder %v6016, 10000
          %vm7041 = vcmp.lt.s32.totalorder %v6017, 10000
          %vm7042 = vcmp.lt.s32.totalorder %v6018, 10000
          %vm7043 = vcmp.lt.s32.totalorder %v6019, 10000
          %vm7044 = vcmp.lt.s32.totalorder %v6020, 10000
          %vm7045 = vcmp.lt.s32.totalorder %v6021, 10000
          %vm7046 = vcmp.lt.s32.totalorder %v6022, 10000
          %vm7047 = vcmp.lt.s32.totalorder %v6023, 10000
          %vm7048 = vcmp.lt.s32.totalorder %v6024, 10000
          %vm7049 = vcmp.lt.s32.totalorder %v6025, 10000
          %vm7050 = vcmp.lt.s32.totalorder %v6026, 10000
          %vm7051 = vcmp.lt.s32.totalorder %v6027, 10000
          %vm7052 = vcmp.lt.s32.totalorder %v6028, 10000
          %vm7053 = vcmp.lt.s32.totalorder %v6029, 10000
          %vm7054 = vcmp.lt.s32.totalorder %v6030, 10000
          %vm7055 = vcmp.lt.s32.totalorder %v6031, 10000
          %vm7056 = vcmp.lt.s32.totalorder %v6032, 10000
          %vm7057 = vcmp.lt.s32.totalorder %v6033, 10000
          %vm7058 = vcmp.lt.s32.totalorder %v6034, 10000
          %vm7059 = vcmp.lt.s32.totalorder %v6035, 10000
          %vm7060 = vcmp.lt.s32.totalorder %v6036, 10000
          %vm7061 = vcmp.lt.s32.totalorder %v6037, 10000
          %vm7062 = vcmp.lt.s32.totalorder %v6038, 10000
          %vm7063 = vcmp.lt.s32.totalorder %v6039, 10000
          %vm7064 = vcmp.lt.s32.totalorder %v6040, 10000
          %vm7065 = vcmp.lt.s32.totalorder %v6041, 10000
          %vm7066 = vcmp.lt.s32.totalorder %v6042, 10000
          %vm7067 = vcmp.lt.s32.totalorder %v6043, 10000
          %vm7068 = vcmp.lt.s32.totalorder %v6044, 10000
          %vm7069 = vcmp.lt.s32.totalorder %v6045, 10000
          %vm7070 = vcmp.lt.s32.totalorder %v6046, 10000
          %vm7071 = vcmp.lt.s32.totalorder %v6047, 10000
          %vm7072 = vcmp.lt.s32.totalorder %v6048, 10000
          %vm7073 = vcmp.lt.s32.totalorder %v6049, 10000
          %vm7074 = vcmp.lt.s32.totalorder %v6050, 10000
          %vm7075 = vcmp.lt.s32.totalorder %v6051, 10000
          %vm7076 = vcmp.lt.s32.totalorder %v6052, 10000
          %vm7077 = vcmp.lt.s32.totalorder %v6053, 10000
          %vm7078 = vcmp.lt.s32.totalorder %v6054, 10000
          %vm7079 = vcmp.lt.s32.totalorder %v6055, 10000
          %vm7080 = vcmp.lt.s32.totalorder %v6056, 10000
          %vm7081 = vcmp.lt.s32.totalorder %v6057, 10000
          %vm7082 = vcmp.lt.s32.totalorder %v6058, 10000
          %vm7083 = vcmp.lt.s32.totalorder %v6059, 10000
          %vm7084 = vcmp.lt.s32.totalorder %v6060, 10000
          %vm7085 = vcmp.lt.s32.totalorder %v6061, 10000
          %vm7086 = vcmp.lt.s32.totalorder %v6062, 10000
          %vm7087 = vcmp.lt.s32.totalorder %v6063, 10000
          %vm7088 = vcmp.lt.s32.totalorder %v6064, 10000
          %vm7089 = vcmp.lt.s32.totalorder %v6065, 10000
          %vm7090 = vcmp.lt.s32.totalorder %v6066, 10000
          %vm7091 = vcmp.lt.s32.totalorder %v6067, 10000
          %vm7092 = vcmp.lt.s32.totalorder %v6068, 10000
          %vm7093 = vcmp.lt.s32.totalorder %v6069, 10000
          %vm7094 = vcmp.lt.s32.totalorder %v6070, 10000
          %vm7095 = vcmp.lt.s32.totalorder %v6071, 10000
          %vm7096 = vcmp.lt.s32.totalorder %v6072, 10000
          %vm7097 = vcmp.lt.s32.totalorder %v6073, 10000
          %vm7098 = vcmp.lt.s32.totalorder %v6074, 10000
          %vm7099 = vcmp.lt.s32.totalorder %v6075, 10000
          %vm7100 = vcmp.lt.s32.totalorder %v6076, 10000
          %vm7101 = vcmp.lt.s32.totalorder %v6077, 10000
          %vm7102 = vcmp.lt.s32.totalorder %v6078, 10000
          %vm7103 = vcmp.lt.s32.totalorder %v6079, 10000
          %vm7104 = vcmp.lt.s32.totalorder %v6080, 10000
          %vm7105 = vcmp.lt.s32.totalorder %v6081, 10000
          %vm7106 = vcmp.lt.s32.totalorder %v6082, 10000
          %vm7107 = vcmp.lt.s32.totalorder %v6083, 10000
          %vm7108 = vcmp.lt.s32.totalorder %v6084, 10000
          %vm7109 = vcmp.lt.s32.totalorder %v6085, 10000
          %vm7110 = vcmp.lt.s32.totalorder %v6086, 10000
          %vm7111 = vcmp.lt.s32.totalorder %v6087, 10000
          %vm7112 = vcmp.lt.s32.totalorder %v6088, 10000
          %vm7113 = vcmp.lt.s32.totalorder %v6089, 10000
          %vm7114 = vcmp.lt.s32.totalorder %v6090, 10000
          %vm7115 = vcmp.lt.s32.totalorder %v6091, 10000
          %vm7116 = vcmp.lt.s32.totalorder %v6092, 10000
          %vm7117 = vcmp.lt.s32.totalorder %v6093, 10000
          %vm7118 = vcmp.lt.s32.totalorder %v6094, 10000
          %vm7119 = vcmp.lt.s32.totalorder %v6095, 10000
          %vm7120 = vcmp.lt.s32.totalorder %v6096, 10000
          %vm7121 = vcmp.lt.s32.totalorder %v6097, 10000
          %vm7122 = vcmp.lt.s32.totalorder %v6098, 10000
          %vm7123 = vcmp.lt.s32.totalorder %v6099, 10000
          %vm7124 = vcmp.lt.s32.totalorder %v6100, 10000
          %vm7125 = vcmp.lt.s32.totalorder %v6101, 10000
          %vm7126 = vcmp.lt.s32.totalorder %v6102, 10000
          %vm7127 = vcmp.lt.s32.totalorder %v6103, 10000
          %vm7128 = vcmp.lt.s32.totalorder %v6104, 10000
          %vm7129 = vcmp.lt.s32.totalorder %v6105, 10000
          %vm7130 = vcmp.lt.s32.totalorder %v6106, 10000
          %vm7131 = vcmp.lt.s32.totalorder %v6107, 10000
          %vm7132 = vcmp.lt.s32.totalorder %v6108, 10000
          %vm7133 = vcmp.lt.s32.totalorder %v6109, 10000
          %vm7134 = vcmp.lt.s32.totalorder %v6110, 10000
          %vm7135 = vcmp.lt.s32.totalorder %v6111, 10000
          %vm7136 = vcmp.lt.s32.totalorder %v6112, 10000
          %vm7137 = vcmp.lt.s32.totalorder %v6113, 10000
          %vm7138 = vcmp.lt.s32.totalorder %v6114, 10000
          %vm7139 = vcmp.lt.s32.totalorder %v6115, 10000
          %vm7140 = vcmp.lt.s32.totalorder %v6116, 10000
          %vm7141 = vcmp.lt.s32.totalorder %v6117, 10000
          %vm7142 = vcmp.lt.s32.totalorder %v6118, 10000
          %vm7143 = vcmp.lt.s32.totalorder %v6119, 10000
          %vm7144 = vcmp.lt.s32.totalorder %v6120, 10000
          %vm7145 = vcmp.lt.s32.totalorder %v6121, 10000
          %vm7146 = vcmp.lt.s32.totalorder %v6122, 10000
          %vm7147 = vcmp.lt.s32.totalorder %v6123, 10000
          %vm7148 = vcmp.lt.s32.totalorder %v6124, 10000
          %vm7149 = vcmp.lt.s32.totalorder %v6125, 10000
          %vm7150 = vcmp.lt.s32.totalorder %v6126, 10000
          %vm7151 = vcmp.lt.s32.totalorder %v6127, 10000
          %vm7152 = vcmp.lt.s32.totalorder %v6128, 10000
          %vm7153 = vcmp.lt.s32.totalorder %v6129, 10000
          %vm7154 = vcmp.lt.s32.totalorder %v6130, 10000
          %vm7155 = vcmp.lt.s32.totalorder %v6131, 10000
          %vm7156 = vcmp.lt.s32.totalorder %v6132, 10000
          %vm7157 = vcmp.lt.s32.totalorder %v6133, 10000
          %vm7158 = vcmp.lt.s32.totalorder %v6134, 10000
          %vm7159 = vcmp.lt.s32.totalorder %v6135, 10000
          %vm7160 = vcmp.lt.s32.totalorder %v6136, 10000
          %vm7161 = vcmp.lt.s32.totalorder %v6137, 10000
          %vm7162 = vcmp.lt.s32.totalorder %v6138, 10000
          %vm7163 = vcmp.lt.s32.totalorder %v6139, 10000
          %vm7164 = vcmp.lt.s32.totalorder %v6140, 10000
          %vm7165 = vcmp.lt.s32.totalorder %v6141, 10000
          %vm7166 = vcmp.lt.s32.totalorder %v6142, 10000
          %vm7167 = vcmp.lt.s32.totalorder %v6143, 10000
          %vm7168 = vcmp.lt.s32.totalorder %v6144, 10000
          %vm7169 = vcmp.lt.s32.totalorder %v6145, 10000
          %vm7170 = vcmp.lt.s32.totalorder %v6146, 10000
          %vm7171 = vcmp.lt.s32.totalorder %v6147, 10000
          %vm7172 = vcmp.lt.s32.totalorder %v6148, 10000
          %vm7173 = vcmp.lt.s32.totalorder %v6149, 10000
          %vm7174 = vcmp.lt.s32.totalorder %v6150, 10000
          %vm7175 = vcmp.lt.s32.totalorder %v6151, 10000
          %vm7176 = vcmp.lt.s32.totalorder %v6152, 10000
          %vm7177 = vcmp.lt.s32.totalorder %v6153, 10000
          %vm7178 = vcmp.lt.s32.totalorder %v6154, 10000
          %vm7179 = vcmp.lt.s32.totalorder %v6155, 10000
          %vm7180 = vcmp.lt.s32.totalorder %v6156, 10000
          %vm7181 = vcmp.lt.s32.totalorder %v6157, 10000
          %vm7182 = vcmp.lt.s32.totalorder %v6158, 10000
          %vm7183 = vcmp.lt.s32.totalorder %v6159, 10000
          %vm7184 = vcmp.lt.s32.totalorder %v6160, 10000
          %vm7185 = vcmp.lt.s32.totalorder %v6161, 10000
          %vm7186 = vcmp.lt.s32.totalorder %v6162, 10000
          %vm7187 = vcmp.lt.s32.totalorder %v6163, 10000
          %vm7188 = vcmp.lt.s32.totalorder %v6164, 10000
          %vm7189 = vcmp.lt.s32.totalorder %v6165, 10000
          %vm7190 = vcmp.lt.s32.totalorder %v6166, 10000
          %vm7191 = vcmp.lt.s32.totalorder %v6167, 10000
          %vm7192 = vcmp.lt.s32.totalorder %v6168, 10000
          %vm7193 = vcmp.lt.s32.totalorder %v6169, 10000
          %vm7194 = vcmp.lt.s32.totalorder %v6170, 10000
          %vm7195 = vcmp.lt.s32.totalorder %v6171, 10000
          %vm7196 = vcmp.lt.s32.totalorder %v6172, 10000
          %vm7197 = vcmp.lt.s32.totalorder %v6173, 10000
          %vm7198 = vcmp.lt.s32.totalorder %v6174, 10000
          %vm7199 = vcmp.lt.s32.totalorder %v6175, 10000
          %vm7200 = vcmp.lt.s32.totalorder %v6176, 10000
          %vm7201 = vcmp.lt.s32.totalorder %v6177, 10000
          %vm7202 = vcmp.lt.s32.totalorder %v6178, 10000
          %vm7203 = vcmp.lt.s32.totalorder %v6179, 10000
          %vm7204 = vcmp.lt.s32.totalorder %v6180, 10000
          %vm7205 = vcmp.lt.s32.totalorder %v6181, 10000
          %vm7206 = vcmp.lt.s32.totalorder %v6182, 10000
          %vm7207 = vcmp.lt.s32.totalorder %v6183, 10000
          %vm7208 = vcmp.lt.s32.totalorder %v6184, 10000
          %vm7209 = vcmp.lt.s32.totalorder %v6185, 10000
          %vm7210 = vcmp.lt.s32.totalorder %v6186, 10000
          %vm7211 = vcmp.lt.s32.totalorder %v6187, 10000
          %vm7212 = vcmp.lt.s32.totalorder %v6188, 10000
          %vm7213 = vcmp.lt.s32.totalorder %v6189, 10000
          %vm7214 = vcmp.lt.s32.totalorder %v6190, 10000
          %vm7215 = vcmp.lt.s32.totalorder %v6191, 10000
          %vm7216 = vcmp.lt.s32.totalorder %v6192, 10000
          %vm7217 = vcmp.lt.s32.totalorder %v6193, 10000
          %vm7218 = vcmp.lt.s32.totalorder %v6194, 10000
          %vm7219 = vcmp.lt.s32.totalorder %v6195, 10000
          %vm7220 = vcmp.lt.s32.totalorder %v6196, 10000
          %vm7221 = vcmp.lt.s32.totalorder %v6197, 10000
          %vm7222 = vcmp.lt.s32.totalorder %v6198, 10000
          %vm7223 = vcmp.lt.s32.totalorder %v6199, 10000
          %vm7224 = vcmp.lt.s32.totalorder %v6200, 10000
          %vm7225 = vcmp.lt.s32.totalorder %v6201, 10000
          %vm7226 = vcmp.lt.s32.totalorder %v6202, 10000
          %vm7227 = vcmp.lt.s32.totalorder %v6203, 10000
          %vm7228 = vcmp.lt.s32.totalorder %v6204, 10000
          %vm7229 = vcmp.lt.s32.totalorder %v6205, 10000
          %vm7230 = vcmp.lt.s32.totalorder %v6206, 10000
          %vm7231 = vcmp.lt.s32.totalorder %v6207, 10000
          %vm7232 = vcmp.lt.s32.totalorder %v6208, 10000
          %vm7233 = vcmp.lt.s32.totalorder %v6209, 10000
          %vm7234 = vcmp.lt.s32.totalorder %v6210, 10000
          %vm7235 = vcmp.lt.s32.totalorder %v6211, 10000
          %vm7236 = vcmp.lt.s32.totalorder %v6212, 10000
          %vm7237 = vcmp.lt.s32.totalorder %v6213, 10000
          %vm7238 = vcmp.lt.s32.totalorder %v6214, 10000
          %vm7239 = vcmp.lt.s32.totalorder %v6215, 10000
          %vm7240 = vcmp.lt.s32.totalorder %v6216, 10000
          %vm7241 = vcmp.lt.s32.totalorder %v6217, 10000
          %vm7242 = vcmp.lt.s32.totalorder %v6218, 10000
          %vm7243 = vcmp.lt.s32.totalorder %v6219, 10000
          %vm7244 = vcmp.lt.s32.totalorder %v6220, 10000
          %vm7245 = vcmp.lt.s32.totalorder %v6221, 10000
          %vm7246 = vcmp.lt.s32.totalorder %v6222, 10000
          %vm7247 = vcmp.lt.s32.totalorder %v6223, 10000
          %vm7248 = vcmp.lt.s32.totalorder %v6224, 10000
          %vm7249 = vcmp.lt.s32.totalorder %v6225, 10000
          %vm7250 = vcmp.lt.s32.totalorder %v6226, 10000
          %vm7251 = vcmp.lt.s32.totalorder %v6227, 10000
          %vm7252 = vcmp.lt.s32.totalorder %v6228, 10000
          %vm7253 = vcmp.lt.s32.totalorder %v6229, 10000
          %vm7254 = vcmp.lt.s32.totalorder %v6230, 10000
          %vm7255 = vcmp.lt.s32.totalorder %v6231, 10000
          %vm7256 = vcmp.lt.s32.totalorder %v6232, 10000
          %vm7257 = vcmp.lt.s32.totalorder %v6233, 10000
          %vm7258 = vcmp.lt.s32.totalorder %v6234, 10000
          %vm7259 = vcmp.lt.s32.totalorder %v6235, 10000
          %vm7260 = vcmp.lt.s32.totalorder %v6236, 10000
          %vm7261 = vcmp.lt.s32.totalorder %v6237, 10000
          %vm7262 = vcmp.lt.s32.totalorder %v6238, 10000
          %vm7263 = vcmp.lt.s32.totalorder %v6239, 10000
          %vm7264 = vcmp.lt.s32.totalorder %v6240, 10000
          %vm7265 = vcmp.lt.s32.totalorder %v6241, 10000
          %vm7266 = vcmp.lt.s32.totalorder %v6242, 10000
          %vm7267 = vcmp.lt.s32.totalorder %v6243, 10000
          %vm7268 = vcmp.lt.s32.totalorder %v6244, 10000
          %vm7269 = vcmp.lt.s32.totalorder %v6245, 10000
          %vm7270 = vcmp.lt.s32.totalorder %v6246, 10000
          %vm7271 = vcmp.lt.s32.totalorder %v6247, 10000
          %vm7272 = vcmp.lt.s32.totalorder %v6248, 10000
          %vm7273 = vcmp.lt.s32.totalorder %v6249, 10000
          %vm7274 = vcmp.lt.s32.totalorder %v6250, 10000
          %vm7275 = vcmp.lt.s32.totalorder %v6251, 10000
          %vm7276 = vcmp.lt.s32.totalorder %v6252, 10000
          %vm7277 = vcmp.lt.s32.totalorder %v6253, 10000
          %vm7278 = vcmp.lt.s32.totalorder %v6254, 10000
          %vm7279 = vcmp.lt.s32.totalorder %v6255, 10000
          %vm7280 = vcmp.lt.s32.totalorder %v6256, 10000
          %vm7281 = vcmp.lt.s32.totalorder %v6257, 10000
          %vm7282 = vcmp.lt.s32.totalorder %v6258, 10000
          %vm7283 = vcmp.lt.s32.totalorder %v6259, 10000
          %vm7284 = vcmp.lt.s32.totalorder %v6260, 10000
          %vm7285 = vcmp.lt.s32.totalorder %v6261, 10000
          %vm7286 = vcmp.lt.s32.totalorder %v6262, 10000
          %vm7287 = vcmp.lt.s32.totalorder %v6263, 10000
          %vm7288 = vcmp.lt.s32.totalorder %v6264, 10000
          %vm7289 = vcmp.lt.s32.totalorder %v6265, 10000
          %vm7290 = vcmp.lt.s32.totalorder %v6266, 10000
          %vm7291 = vcmp.lt.s32.totalorder %v6267, 10000
          %vm7292 = vcmp.lt.s32.totalorder %v6268, 10000
          %vm7293 = vcmp.lt.s32.totalorder %v6269, 10000
          %vm7294 = vcmp.lt.s32.totalorder %v6270, 10000
          %vm7295 = vcmp.lt.s32.totalorder %v6271, 10000
          %vm7296 = vcmp.lt.s32.totalorder %v6272, 10000
          %vm7297 = vcmp.lt.s32.totalorder %v6273, 10000
          %vm7298 = vcmp.lt.s32.totalorder %v6274, 10000
          %vm7299 = vcmp.lt.s32.totalorder %v6275, 10000
          %vm7300 = vcmp.lt.s32.totalorder %v6276, 10000
          %vm7301 = vcmp.lt.s32.totalorder %v6277, 10000
          %vm7302 = vcmp.lt.s32.totalorder %v6278, 10000
          %vm7303 = vcmp.lt.s32.totalorder %v6279, 10000
          %vm7304 = vcmp.lt.s32.totalorder %v6280, 10000
          %vm7305 = vcmp.lt.s32.totalorder %v6281, 10000
          %vm7306 = vcmp.lt.s32.totalorder %v6282, 10000
          %vm7307 = vcmp.lt.s32.totalorder %v6283, 10000
          %vm7308 = vcmp.lt.s32.totalorder %v6284, 10000
          %vm7309 = vcmp.lt.s32.totalorder %v6285, 10000
          %vm7310 = vcmp.lt.s32.totalorder %v6286, 10000
          %vm7311 = vcmp.lt.s32.totalorder %v6287, 10000
          %vm7312 = vcmp.lt.s32.totalorder %v6288, 10000
          %vm7313 = vcmp.lt.s32.totalorder %v6289, 10000
          %vm7314 = vcmp.lt.s32.totalorder %v6290, 10000
          %vm7315 = vcmp.lt.s32.totalorder %v6291, 10000
          %vm7316 = vcmp.lt.s32.totalorder %v6292, 10000
          %vm7317 = vcmp.lt.s32.totalorder %v6293, 10000
          %vm7318 = vcmp.lt.s32.totalorder %v6294, 10000
          %vm7319 = vcmp.lt.s32.totalorder %v6295, 10000
          %vm7320 = vcmp.lt.s32.totalorder %v6296, 10000
          %vm7321 = vcmp.lt.s32.totalorder %v6297, 10000
          %vm7322 = vcmp.lt.s32.totalorder %v6298, 10000
          %vm7323 = vcmp.lt.s32.totalorder %v6299, 10000
          %vm7324 = vcmp.lt.s32.totalorder %v6300, 10000
          %vm7325 = vcmp.lt.s32.totalorder %v6301, 10000
          %vm7326 = vcmp.lt.s32.totalorder %v6302, 10000
          %vm7327 = vcmp.lt.s32.totalorder %v6303, 10000
          %vm7328 = vcmp.lt.s32.totalorder %v6304, 10000
          %vm7329 = vcmp.lt.s32.totalorder %v6305, 10000
          %vm7330 = vcmp.lt.s32.totalorder %v6306, 10000
          %vm7331 = vcmp.lt.s32.totalorder %v6307, 10000
          %vm7332 = vcmp.lt.s32.totalorder %v6308, 10000
          %vm7333 = vcmp.lt.s32.totalorder %v6309, 10000
          %vm7334 = vcmp.lt.s32.totalorder %v6310, 10000
          %vm7335 = vcmp.lt.s32.totalorder %v6311, 10000
          %vm7336 = vcmp.lt.s32.totalorder %v6312, 10000
          %vm7337 = vcmp.lt.s32.totalorder %v6313, 10000
          %vm7338 = vcmp.lt.s32.totalorder %v6314, 10000
          %vm7339 = vcmp.lt.s32.totalorder %v6315, 10000
          %vm7340 = vcmp.lt.s32.totalorder %v6316, 10000
          %vm7341 = vcmp.lt.s32.totalorder %v6317, 10000
          %vm7342 = vcmp.lt.s32.totalorder %v6318, 10000
          %vm7343 = vcmp.lt.s32.totalorder %v6319, 10000
          %vm7344 = vcmp.lt.s32.totalorder %v6320, 10000
          %vm7345 = vcmp.lt.s32.totalorder %v6321, 10000
          %vm7346 = vcmp.lt.s32.totalorder %v6322, 10000
          %vm7347 = vcmp.lt.s32.totalorder %v6323, 10000
          %vm7348 = vcmp.lt.s32.totalorder %v6324, 10000
          %vm7349 = vcmp.lt.s32.totalorder %v6325, 10000
          %vm7350 = vcmp.lt.s32.totalorder %v6326, 10000
          %vm7351 = vcmp.lt.s32.totalorder %v6327, 10000
          %vm7352 = vcmp.lt.s32.totalorder %v6328, 10000
          %vm7353 = vcmp.lt.s32.totalorder %v6329, 10000
          %vm7354 = vcmp.lt.s32.totalorder %v6330, 10000
          %vm7355 = vcmp.lt.s32.totalorder %v6331, 10000
          %vm7356 = vcmp.lt.s32.totalorder %v6332, 10000
          %vm7357 = vcmp.lt.s32.totalorder %v6333, 10000
          %vm7358 = vcmp.lt.s32.totalorder %v6334, 10000
          %vm7359 = vcmp.lt.s32.totalorder %v6335, 10000
          %vm7360 = vcmp.lt.s32.totalorder %v6336, 10000
          %vm7361 = vcmp.lt.s32.totalorder %v6337, 10000
          %vm7362 = vcmp.lt.s32.totalorder %v6338, 10000
          %vm7363 = vcmp.lt.s32.totalorder %v6339, 10000
          %vm7364 = vcmp.lt.s32.totalorder %v6340, 10000
          %vm7365 = vcmp.lt.s32.totalorder %v6341, 10000
          %vm7366 = vcmp.lt.s32.totalorder %v6342, 10000
          %vm7367 = vcmp.lt.s32.totalorder %v6343, 10000
          %vm7368 = vcmp.lt.s32.totalorder %v6344, 10000
          %vm7369 = vcmp.lt.s32.totalorder %v6345, 10000
          %vm7370 = vcmp.lt.s32.totalorder %v6346, 10000
          %vm7371 = vcmp.lt.s32.totalorder %v6347, 10000
          %vm7372 = vcmp.lt.s32.totalorder %v6348, 10000
          %vm7373 = vcmp.lt.s32.totalorder %v6349, 10000
          %vm7374 = vcmp.lt.s32.totalorder %v6350, 10000
          %vm7375 = vcmp.lt.s32.totalorder %v6351, 10000
          %vm7376 = vcmp.lt.s32.totalorder %v6352, 10000
          %vm7377 = vcmp.lt.s32.totalorder %v6353, 10000
          %vm7378 = vcmp.lt.s32.totalorder %v6354, 10000
          %vm7379 = vcmp.lt.s32.totalorder %v6355, 10000
          %vm7380 = vcmp.lt.s32.totalorder %v6356, 10000
          %vm7381 = vcmp.lt.s32.totalorder %v6357, 10000
          %vm7382 = vcmp.lt.s32.totalorder %v6358, 10000
          %vm7383 = vcmp.lt.s32.totalorder %v6359, 10000
          %vm7384 = vcmp.lt.s32.totalorder %v6360, 10000
          %vm7385 = vcmp.lt.s32.totalorder %v6361, 10000
          %vm7386 = vcmp.lt.s32.totalorder %v6362, 10000
          %vm7387 = vcmp.lt.s32.totalorder %v6363, 10000
          %vm7388 = vcmp.lt.s32.totalorder %v6364, 10000
          %vm7389 = vcmp.lt.s32.totalorder %v6365, 10000
          %vm7390 = vcmp.lt.s32.totalorder %v6366, 10000
          %vm7391 = vcmp.lt.s32.totalorder %v6367, 10000
          %vm7392 = vcmp.lt.s32.totalorder %v6368, 10000
          %vm7393 = vcmp.lt.s32.totalorder %v6369, 10000
          %vm7394 = vcmp.lt.s32.totalorder %v6370, 10000
          %vm7395 = vcmp.lt.s32.totalorder %v6371, 10000
          %vm7396 = vcmp.lt.s32.totalorder %v6372, 10000
          %vm7397 = vcmp.lt.s32.totalorder %v6373, 10000
          %vm7398 = vcmp.lt.s32.totalorder %v6374, 10000
          %vm7399 = vcmp.lt.s32.totalorder %v6375, 10000
          %vm7400 = vcmp.lt.s32.totalorder %v6376, 10000
          %vm7401 = vcmp.lt.s32.totalorder %v6377, 10000
          %vm7402 = vcmp.lt.s32.totalorder %v6378, 10000
          %vm7403 = vcmp.lt.s32.totalorder %v6379, 10000
          %vm7404 = vcmp.lt.s32.totalorder %v6380, 10000
          %vm7405 = vcmp.lt.s32.totalorder %v6381, 10000
          %vm7406 = vcmp.lt.s32.totalorder %v6382, 10000
          %vm7407 = vcmp.lt.s32.totalorder %v6383, 10000
          %vm7408 = vcmp.lt.s32.totalorder %v6384, 10000
          %vm7409 = vcmp.lt.s32.totalorder %v6385, 10000
          %vm7410 = vcmp.lt.s32.totalorder %v6386, 10000
          %vm7411 = vcmp.lt.s32.totalorder %v6387, 10000
          %vm7412 = vcmp.lt.s32.totalorder %v6388, 10000
          %vm7413 = vcmp.lt.s32.totalorder %v6389, 10000
          %vm7414 = vcmp.lt.s32.totalorder %v6390, 10000
          %vm7415 = vcmp.lt.s32.totalorder %v6391, 10000
          %vm7416 = vcmp.lt.s32.totalorder %v6392, 10000
          %vm7417 = vcmp.lt.s32.totalorder %v6393, 10000
          %vm7418 = vcmp.lt.s32.totalorder %v6394, 10000
          %vm7419 = vcmp.lt.s32.totalorder %v6395, 10000
          %vm7420 = vcmp.lt.s32.totalorder %v6396, 10000
          %vm7421 = vcmp.lt.s32.totalorder %v6397, 10000
          %vm7422 = vcmp.lt.s32.totalorder %v6398, 10000
          %vm7423 = vcmp.lt.s32.totalorder %v6399, 10000
          %vm7424 = vcmp.lt.s32.totalorder %v6400, 10000
          %vm7425 = vcmp.lt.s32.totalorder %v6401, 10000
          %vm7426 = vcmp.lt.s32.totalorder %v6402, 10000
          %vm7427 = vcmp.lt.s32.totalorder %v6403, 10000
          %vm7428 = vcmp.lt.s32.totalorder %v6404, 10000
          %vm7429 = vcmp.lt.s32.totalorder %v6405, 10000
          %vm7430 = vcmp.lt.s32.totalorder %v6406, 10000
          %vm7431 = vcmp.lt.s32.totalorder %v6407, 10000
          %vm7432 = vcmp.lt.s32.totalorder %v6408, 10000
          %vm7433 = vcmp.lt.s32.totalorder %v6409, 10000
          %vm7434 = vcmp.lt.s32.totalorder %v6410, 10000
          %vm7435 = vcmp.lt.s32.totalorder %v6411, 10000
          %vm7436 = vcmp.lt.s32.totalorder %v6412, 10000
          %vm7437 = vcmp.lt.s32.totalorder %v6413, 10000
          %vm7438 = vcmp.lt.s32.totalorder %v6414, 10000
          %vm7439 = vcmp.lt.s32.totalorder %v6415, 10000
          %vm7440 = vcmp.lt.s32.totalorder %v6416, 10000
          %vm7441 = vcmp.lt.s32.totalorder %v6417, 10000
          %vm7442 = vcmp.lt.s32.totalorder %v6418, 10000
          %vm7443 = vcmp.lt.s32.totalorder %v6419, 10000
          %vm7444 = vcmp.lt.s32.totalorder %v6420, 10000
          %vm7445 = vcmp.lt.s32.totalorder %v6421, 10000
          %vm7446 = vcmp.lt.s32.totalorder %v6422, 10000
          %vm7447 = vcmp.lt.s32.totalorder %v6423, 10000
          %vm7448 = vcmp.lt.s32.totalorder %v6424, 10000
          %vm7449 = vcmp.lt.s32.totalorder %v6425, 10000
          %vm7450 = vcmp.lt.s32.totalorder %v6426, 10000
          %vm7451 = vcmp.lt.s32.totalorder %v6427, 10000
          %vm7452 = vcmp.lt.s32.totalorder %v6428, 10000
          %vm7453 = vcmp.lt.s32.totalorder %v6429, 10000
          %vm7454 = vcmp.lt.s32.totalorder %v6430, 10000
          %vm7455 = vcmp.lt.s32.totalorder %v6431, 10000
          %vm7456 = vcmp.lt.s32.totalorder %v6432, 10000
          %vm7457 = vcmp.lt.s32.totalorder %v6433, 10000
          %vm7458 = vcmp.lt.s32.totalorder %v6434, 10000
          %vm7459 = vcmp.lt.s32.totalorder %v6435, 10000
          %vm7460 = vcmp.lt.s32.totalorder %v6436, 10000
          %vm7461 = vcmp.lt.s32.totalorder %v6437, 10000
          %vm7462 = vcmp.lt.s32.totalorder %v6438, 10000
          %vm7463 = vcmp.lt.s32.totalorder %v6439, 10000
          %v7464 = vsel %vm6440, %v2327, 0.0
          %v7465 = vsel %vm6441, %v2328, 0.0
          %v7466 = vsel %vm6442, %v2329, 0.0
          %v7467 = vsel %vm6443, %v2330, 0.0
          %v7468 = vsel %vm6444, %v2331, 0.0
          %v7469 = vsel %vm6445, %v2332, 0.0
          %v7470 = vsel %vm6446, %v2333, 0.0
          %v7471 = vsel %vm6447, %v2334, 0.0
          %v7472 = vsel %vm6448, %v2335, 0.0
          %v7473 = vsel %vm6449, %v2336, 0.0
          %v7474 = vsel %vm6450, %v2337, 0.0
          %v7475 = vsel %vm6451, %v2338, 0.0
          %v7476 = vsel %vm6452, %v2339, 0.0
          %v7477 = vsel %vm6453, %v2340, 0.0
          %v7478 = vsel %vm6454, %v2341, 0.0
          %v7479 = vsel %vm6455, %v2342, 0.0
          %v7480 = vsel %vm6456, %v2343, 0.0
          %v7481 = vsel %vm6457, %v2344, 0.0
          %v7482 = vsel %vm6458, %v2345, 0.0
          %v7483 = vsel %vm6459, %v2346, 0.0
          %v7484 = vsel %vm6460, %v2347, 0.0
          %v7485 = vsel %vm6461, %v2348, 0.0
          %v7486 = vsel %vm6462, %v2349, 0.0
          %v7487 = vsel %vm6463, %v2350, 0.0
          %v7488 = vsel %vm6464, %v2351, 0.0
          %v7489 = vsel %vm6465, %v2352, 0.0
          %v7490 = vsel %vm6466, %v2353, 0.0
          %v7491 = vsel %vm6467, %v2354, 0.0
          %v7492 = vsel %vm6468, %v2355, 0.0
          %v7493 = vsel %vm6469, %v2356, 0.0
          %v7494 = vsel %vm6470, %v2357, 0.0
          %v7495 = vsel %vm6471, %v2358, 0.0
          %v7496 = vsel %vm6472, %v2359, 0.0
          %v7497 = vsel %vm6473, %v2360, 0.0
          %v7498 = vsel %vm6474, %v2361, 0.0
          %v7499 = vsel %vm6475, %v2362, 0.0
          %v7500 = vsel %vm6476, %v2363, 0.0
          %v7501 = vsel %vm6477, %v2364, 0.0
          %v7502 = vsel %vm6478, %v2365, 0.0
          %v7503 = vsel %vm6479, %v2366, 0.0
          %v7504 = vsel %vm6480, %v2367, 0.0
          %v7505 = vsel %vm6481, %v2368, 0.0
          %v7506 = vsel %vm6482, %v2369, 0.0
          %v7507 = vsel %vm6483, %v2370, 0.0
          %v7508 = vsel %vm6484, %v2371, 0.0
          %v7509 = vsel %vm6485, %v2372, 0.0
          %v7510 = vsel %vm6486, %v2373, 0.0
          %v7511 = vsel %vm6487, %v2374, 0.0
          %v7512 = vsel %vm6488, %v2375, 0.0
          %v7513 = vsel %vm6489, %v2376, 0.0
          %v7514 = vsel %vm6490, %v2377, 0.0
          %v7515 = vsel %vm6491, %v2378, 0.0
          %v7516 = vsel %vm6492, %v2379, 0.0
          %v7517 = vsel %vm6493, %v2380, 0.0
          %v7518 = vsel %vm6494, %v2381, 0.0
          %v7519 = vsel %vm6495, %v2382, 0.0
          %v7520 = vsel %vm6496, %v2383, 0.0
          %v7521 = vsel %vm6497, %v2384, 0.0
          %v7522 = vsel %vm6498, %v2385, 0.0
          %v7523 = vsel %vm6499, %v2386, 0.0
          %v7524 = vsel %vm6500, %v2387, 0.0
          %v7525 = vsel %vm6501, %v2388, 0.0
          %v7526 = vsel %vm6502, %v2389, 0.0
          %v7527 = vsel %vm6503, %v2390, 0.0
          %v7528 = vsel %vm6504, %v2391, 0.0
          %v7529 = vsel %vm6505, %v2392, 0.0
          %v7530 = vsel %vm6506, %v2393, 0.0
          %v7531 = vsel %vm6507, %v2394, 0.0
          %v7532 = vsel %vm6508, %v2395, 0.0
          %v7533 = vsel %vm6509, %v2396, 0.0
          %v7534 = vsel %vm6510, %v2397, 0.0
          %v7535 = vsel %vm6511, %v2398, 0.0
          %v7536 = vsel %vm6512, %v2399, 0.0
          %v7537 = vsel %vm6513, %v2400, 0.0
          %v7538 = vsel %vm6514, %v2401, 0.0
          %v7539 = vsel %vm6515, %v2402, 0.0
          %v7540 = vsel %vm6516, %v2403, 0.0
          %v7541 = vsel %vm6517, %v2404, 0.0
          %v7542 = vsel %vm6518, %v2405, 0.0
          %v7543 = vsel %vm6519, %v2406, 0.0
          %v7544 = vsel %vm6520, %v2407, 0.0
          %v7545 = vsel %vm6521, %v2408, 0.0
          %v7546 = vsel %vm6522, %v2409, 0.0
          %v7547 = vsel %vm6523, %v2410, 0.0
          %v7548 = vsel %vm6524, %v2411, 0.0
          %v7549 = vsel %vm6525, %v2412, 0.0
          %v7550 = vsel %vm6526, %v2413, 0.0
          %v7551 = vsel %vm6527, %v2414, 0.0
          %v7552 = vsel %vm6528, %v2415, 0.0
          %v7553 = vsel %vm6529, %v2416, 0.0
          %v7554 = vsel %vm6530, %v2417, 0.0
          %v7555 = vsel %vm6531, %v2418, 0.0
          %v7556 = vsel %vm6532, %v2419, 0.0
          %v7557 = vsel %vm6533, %v2420, 0.0
          %v7558 = vsel %vm6534, %v2421, 0.0
          %v7559 = vsel %vm6535, %v2422, 0.0
          %v7560 = vsel %vm6536, %v2423, 0.0
          %v7561 = vsel %vm6537, %v2424, 0.0
          %v7562 = vsel %vm6538, %v2425, 0.0
          %v7563 = vsel %vm6539, %v2426, 0.0
          %v7564 = vsel %vm6540, %v2427, 0.0
          %v7565 = vsel %vm6541, %v2428, 0.0
          %v7566 = vsel %vm6542, %v2429, 0.0
          %v7567 = vsel %vm6543, %v2430, 0.0
          %v7568 = vsel %vm6544, %v2431, 0.0
          %v7569 = vsel %vm6545, %v2432, 0.0
          %v7570 = vsel %vm6546, %v2433, 0.0
          %v7571 = vsel %vm6547, %v2434, 0.0
          %v7572 = vsel %vm6548, %v2435, 0.0
          %v7573 = vsel %vm6549, %v2436, 0.0
          %v7574 = vsel %vm6550, %v2437, 0.0
          %v7575 = vsel %vm6551, %v2438, 0.0
          %v7576 = vsel %vm6552, %v2439, 0.0
          %v7577 = vsel %vm6553, %v2440, 0.0
          %v7578 = vsel %vm6554, %v2441, 0.0
          %v7579 = vsel %vm6555, %v2442, 0.0
          %v7580 = vsel %vm6556, %v2443, 0.0
          %v7581 = vsel %vm6557, %v2444, 0.0
          %v7582 = vsel %vm6558, %v2445, 0.0
          %v7583 = vsel %vm6559, %v2446, 0.0
          %v7584 = vsel %vm6560, %v2447, 0.0
          %v7585 = vsel %vm6561, %v2448, 0.0
          %v7586 = vsel %vm6562, %v2449, 0.0
          %v7587 = vsel %vm6563, %v2450, 0.0
          %v7588 = vsel %vm6564, %v2451, 0.0
          %v7589 = vsel %vm6565, %v2452, 0.0
          %v7590 = vsel %vm6566, %v2453, 0.0
          %v7591 = vsel %vm6567, %v2454, 0.0
          %v7592 = vsel %vm6568, %v2455, 0.0
          %v7593 = vsel %vm6569, %v2456, 0.0
          %v7594 = vsel %vm6570, %v2457, 0.0
          %v7595 = vsel %vm6571, %v2458, 0.0
          %v7596 = vsel %vm6572, %v2459, 0.0
          %v7597 = vsel %vm6573, %v2460, 0.0
          %v7598 = vsel %vm6574, %v2461, 0.0
          %v7599 = vsel %vm6575, %v2462, 0.0
          %v7600 = vsel %vm6576, %v2463, 0.0
          %v7601 = vsel %vm6577, %v2464, 0.0
          %v7602 = vsel %vm6578, %v2465, 0.0
          %v7603 = vsel %vm6579, %v2466, 0.0
          %v7604 = vsel %vm6580, %v2467, 0.0
          %v7605 = vsel %vm6581, %v2468, 0.0
          %v7606 = vsel %vm6582, %v2469, 0.0
          %v7607 = vsel %vm6583, %v2470, 0.0
          %v7608 = vsel %vm6584, %v2471, 0.0
          %v7609 = vsel %vm6585, %v2472, 0.0
          %v7610 = vsel %vm6586, %v2473, 0.0
          %v7611 = vsel %vm6587, %v2474, 0.0
          %v7612 = vsel %vm6588, %v2475, 0.0
          %v7613 = vsel %vm6589, %v2476, 0.0
          %v7614 = vsel %vm6590, %v2477, 0.0
          %v7615 = vsel %vm6591, %v2478, 0.0
          %v7616 = vsel %vm6592, %v2479, 0.0
          %v7617 = vsel %vm6593, %v2480, 0.0
          %v7618 = vsel %vm6594, %v2481, 0.0
          %v7619 = vsel %vm6595, %v2482, 0.0
          %v7620 = vsel %vm6596, %v2483, 0.0
          %v7621 = vsel %vm6597, %v2484, 0.0
          %v7622 = vsel %vm6598, %v2485, 0.0
          %v7623 = vsel %vm6599, %v2486, 0.0
          %v7624 = vsel %vm6600, %v2487, 0.0
          %v7625 = vsel %vm6601, %v2488, 0.0
          %v7626 = vsel %vm6602, %v2489, 0.0
          %v7627 = vsel %vm6603, %v2490, 0.0
          %v7628 = vsel %vm6604, %v2491, 0.0
          %v7629 = vsel %vm6605, %v2492, 0.0
          %v7630 = vsel %vm6606, %v2493, 0.0
          %v7631 = vsel %vm6607, %v2494, 0.0
          %v7632 = vsel %vm6608, %v2495, 0.0
          %v7633 = vsel %vm6609, %v2496, 0.0
          %v7634 = vsel %vm6610, %v2497, 0.0
          %v7635 = vsel %vm6611, %v2498, 0.0
          %v7636 = vsel %vm6612, %v2499, 0.0
          %v7637 = vsel %vm6613, %v2500, 0.0
          %v7638 = vsel %vm6614, %v2501, 0.0
          %v7639 = vsel %vm6615, %v2502, 0.0
          %v7640 = vsel %vm6616, %v2503, 0.0
          %v7641 = vsel %vm6617, %v2504, 0.0
          %v7642 = vsel %vm6618, %v2505, 0.0
          %v7643 = vsel %vm6619, %v2506, 0.0
          %v7644 = vsel %vm6620, %v2507, 0.0
          %v7645 = vsel %vm6621, %v2508, 0.0
          %v7646 = vsel %vm6622, %v2509, 0.0
          %v7647 = vsel %vm6623, %v2510, 0.0
          %v7648 = vsel %vm6624, %v2511, 0.0
          %v7649 = vsel %vm6625, %v2512, 0.0
          %v7650 = vsel %vm6626, %v2513, 0.0
          %v7651 = vsel %vm6627, %v2514, 0.0
          %v7652 = vsel %vm6628, %v2515, 0.0
          %v7653 = vsel %vm6629, %v2516, 0.0
          %v7654 = vsel %vm6630, %v2517, 0.0
          %v7655 = vsel %vm6631, %v2518, 0.0
          %v7656 = vsel %vm6632, %v2519, 0.0
          %v7657 = vsel %vm6633, %v2520, 0.0
          %v7658 = vsel %vm6634, %v2521, 0.0
          %v7659 = vsel %vm6635, %v2522, 0.0
          %v7660 = vsel %vm6636, %v2523, 0.0
          %v7661 = vsel %vm6637, %v2524, 0.0
          %v7662 = vsel %vm6638, %v2525, 0.0
          %v7663 = vsel %vm6639, %v2526, 0.0
          %v7664 = vsel %vm6640, %v2527, 0.0
          %v7665 = vsel %vm6641, %v2528, 0.0
          %v7666 = vsel %vm6642, %v2529, 0.0
          %v7667 = vsel %vm6643, %v2530, 0.0
          %v7668 = vsel %vm6644, %v2531, 0.0
          %v7669 = vsel %vm6645, %v2532, 0.0
          %v7670 = vsel %vm6646, %v2533, 0.0
          %v7671 = vsel %vm6647, %v2534, 0.0
          %v7672 = vsel %vm6648, %v2535, 0.0
          %v7673 = vsel %vm6649, %v2536, 0.0
          %v7674 = vsel %vm6650, %v2537, 0.0
          %v7675 = vsel %vm6651, %v2538, 0.0
          %v7676 = vsel %vm6652, %v2539, 0.0
          %v7677 = vsel %vm6653, %v2540, 0.0
          %v7678 = vsel %vm6654, %v2541, 0.0
          %v7679 = vsel %vm6655, %v2542, 0.0
          %v7680 = vsel %vm6656, %v2543, 0.0
          %v7681 = vsel %vm6657, %v2544, 0.0
          %v7682 = vsel %vm6658, %v2545, 0.0
          %v7683 = vsel %vm6659, %v2546, 0.0
          %v7684 = vsel %vm6660, %v2547, 0.0
          %v7685 = vsel %vm6661, %v2548, 0.0
          %v7686 = vsel %vm6662, %v2549, 0.0
          %v7687 = vsel %vm6663, %v2550, 0.0
          %v7688 = vsel %vm6664, %v2551, 0.0
          %v7689 = vsel %vm6665, %v2552, 0.0
          %v7690 = vsel %vm6666, %v2553, 0.0
          %v7691 = vsel %vm6667, %v2554, 0.0
          %v7692 = vsel %vm6668, %v2555, 0.0
          %v7693 = vsel %vm6669, %v2556, 0.0
          %v7694 = vsel %vm6670, %v2557, 0.0
          %v7695 = vsel %vm6671, %v2558, 0.0
          %v7696 = vsel %vm6672, %v2559, 0.0
          %v7697 = vsel %vm6673, %v2560, 0.0
          %v7698 = vsel %vm6674, %v2561, 0.0
          %v7699 = vsel %vm6675, %v2562, 0.0
          %v7700 = vsel %vm6676, %v2563, 0.0
          %v7701 = vsel %vm6677, %v2564, 0.0
          %v7702 = vsel %vm6678, %v2565, 0.0
          %v7703 = vsel %vm6679, %v2566, 0.0
          %v7704 = vsel %vm6680, %v2567, 0.0
          %v7705 = vsel %vm6681, %v2568, 0.0
          %v7706 = vsel %vm6682, %v2569, 0.0
          %v7707 = vsel %vm6683, %v2570, 0.0
          %v7708 = vsel %vm6684, %v2571, 0.0
          %v7709 = vsel %vm6685, %v2572, 0.0
          %v7710 = vsel %vm6686, %v2573, 0.0
          %v7711 = vsel %vm6687, %v2574, 0.0
          %v7712 = vsel %vm6688, %v2575, 0.0
          %v7713 = vsel %vm6689, %v2576, 0.0
          %v7714 = vsel %vm6690, %v2577, 0.0
          %v7715 = vsel %vm6691, %v2578, 0.0
          %v7716 = vsel %vm6692, %v2579, 0.0
          %v7717 = vsel %vm6693, %v2580, 0.0
          %v7718 = vsel %vm6694, %v2581, 0.0
          %v7719 = vsel %vm6695, %v2582, 0.0
          %v7720 = vsel %vm6696, %v2583, 0.0
          %v7721 = vsel %vm6697, %v2584, 0.0
          %v7722 = vsel %vm6698, %v2585, 0.0
          %v7723 = vsel %vm6699, %v2586, 0.0
          %v7724 = vsel %vm6700, %v2587, 0.0
          %v7725 = vsel %vm6701, %v2588, 0.0
          %v7726 = vsel %vm6702, %v2589, 0.0
          %v7727 = vsel %vm6703, %v2590, 0.0
          %v7728 = vsel %vm6704, %v2591, 0.0
          %v7729 = vsel %vm6705, %v2592, 0.0
          %v7730 = vsel %vm6706, %v2593, 0.0
          %v7731 = vsel %vm6707, %v2594, 0.0
          %v7732 = vsel %vm6708, %v2595, 0.0
          %v7733 = vsel %vm6709, %v2596, 0.0
          %v7734 = vsel %vm6710, %v2597, 0.0
          %v7735 = vsel %vm6711, %v2598, 0.0
          %v7736 = vsel %vm6712, %v2599, 0.0
          %v7737 = vsel %vm6713, %v2600, 0.0
          %v7738 = vsel %vm6714, %v2601, 0.0
          %v7739 = vsel %vm6715, %v2602, 0.0
          %v7740 = vsel %vm6716, %v2603, 0.0
          %v7741 = vsel %vm6717, %v2604, 0.0
          %v7742 = vsel %vm6718, %v2605, 0.0
          %v7743 = vsel %vm6719, %v2606, 0.0
          %v7744 = vsel %vm6720, %v2607, 0.0
          %v7745 = vsel %vm6721, %v2608, 0.0
          %v7746 = vsel %vm6722, %v2609, 0.0
          %v7747 = vsel %vm6723, %v2610, 0.0
          %v7748 = vsel %vm6724, %v2611, 0.0
          %v7749 = vsel %vm6725, %v2612, 0.0
          %v7750 = vsel %vm6726, %v2613, 0.0
          %v7751 = vsel %vm6727, %v2614, 0.0
          %v7752 = vsel %vm6728, %v2615, 0.0
          %v7753 = vsel %vm6729, %v2616, 0.0
          %v7754 = vsel %vm6730, %v2617, 0.0
          %v7755 = vsel %vm6731, %v2618, 0.0
          %v7756 = vsel %vm6732, %v2619, 0.0
          %v7757 = vsel %vm6733, %v2620, 0.0
          %v7758 = vsel %vm6734, %v2621, 0.0
          %v7759 = vsel %vm6735, %v2622, 0.0
          %v7760 = vsel %vm6736, %v2623, 0.0
          %v7761 = vsel %vm6737, %v2624, 0.0
          %v7762 = vsel %vm6738, %v2625, 0.0
          %v7763 = vsel %vm6739, %v2626, 0.0
          %v7764 = vsel %vm6740, %v2627, 0.0
          %v7765 = vsel %vm6741, %v2628, 0.0
          %v7766 = vsel %vm6742, %v2629, 0.0
          %v7767 = vsel %vm6743, %v2630, 0.0
          %v7768 = vsel %vm6744, %v2631, 0.0
          %v7769 = vsel %vm6745, %v2632, 0.0
          %v7770 = vsel %vm6746, %v2633, 0.0
          %v7771 = vsel %vm6747, %v2634, 0.0
          %v7772 = vsel %vm6748, %v2635, 0.0
          %v7773 = vsel %vm6749, %v2636, 0.0
          %v7774 = vsel %vm6750, %v2637, 0.0
          %v7775 = vsel %vm6751, %v2638, 0.0
          %v7776 = vsel %vm6752, %v2639, 0.0
          %v7777 = vsel %vm6753, %v2640, 0.0
          %v7778 = vsel %vm6754, %v2641, 0.0
          %v7779 = vsel %vm6755, %v2642, 0.0
          %v7780 = vsel %vm6756, %v2643, 0.0
          %v7781 = vsel %vm6757, %v2644, 0.0
          %v7782 = vsel %vm6758, %v2645, 0.0
          %v7783 = vsel %vm6759, %v2646, 0.0
          %v7784 = vsel %vm6760, %v2647, 0.0
          %v7785 = vsel %vm6761, %v2648, 0.0
          %v7786 = vsel %vm6762, %v2649, 0.0
          %v7787 = vsel %vm6763, %v2650, 0.0
          %v7788 = vsel %vm6764, %v2651, 0.0
          %v7789 = vsel %vm6765, %v2652, 0.0
          %v7790 = vsel %vm6766, %v2653, 0.0
          %v7791 = vsel %vm6767, %v2654, 0.0
          %v7792 = vsel %vm6768, %v2655, 0.0
          %v7793 = vsel %vm6769, %v2656, 0.0
          %v7794 = vsel %vm6770, %v2657, 0.0
          %v7795 = vsel %vm6771, %v2658, 0.0
          %v7796 = vsel %vm6772, %v2659, 0.0
          %v7797 = vsel %vm6773, %v2660, 0.0
          %v7798 = vsel %vm6774, %v2661, 0.0
          %v7799 = vsel %vm6775, %v2662, 0.0
          %v7800 = vsel %vm6776, %v2663, 0.0
          %v7801 = vsel %vm6777, %v2664, 0.0
          %v7802 = vsel %vm6778, %v2665, 0.0
          %v7803 = vsel %vm6779, %v2666, 0.0
          %v7804 = vsel %vm6780, %v2667, 0.0
          %v7805 = vsel %vm6781, %v2668, 0.0
          %v7806 = vsel %vm6782, %v2669, 0.0
          %v7807 = vsel %vm6783, %v2670, 0.0
          %v7808 = vsel %vm6784, %v2671, 0.0
          %v7809 = vsel %vm6785, %v2672, 0.0
          %v7810 = vsel %vm6786, %v2673, 0.0
          %v7811 = vsel %vm6787, %v2674, 0.0
          %v7812 = vsel %vm6788, %v2675, 0.0
          %v7813 = vsel %vm6789, %v2676, 0.0
          %v7814 = vsel %vm6790, %v2677, 0.0
          %v7815 = vsel %vm6791, %v2678, 0.0
          %v7816 = vsel %vm6792, %v2679, 0.0
          %v7817 = vsel %vm6793, %v2680, 0.0
          %v7818 = vsel %vm6794, %v2681, 0.0
          %v7819 = vsel %vm6795, %v2682, 0.0
          %v7820 = vsel %vm6796, %v2683, 0.0
          %v7821 = vsel %vm6797, %v2684, 0.0
          %v7822 = vsel %vm6798, %v2685, 0.0
          %v7823 = vsel %vm6799, %v2686, 0.0
          %v7824 = vsel %vm6800, %v2687, 0.0
          %v7825 = vsel %vm6801, %v2688, 0.0
          %v7826 = vsel %vm6802, %v2689, 0.0
          %v7827 = vsel %vm6803, %v2690, 0.0
          %v7828 = vsel %vm6804, %v2691, 0.0
          %v7829 = vsel %vm6805, %v2692, 0.0
          %v7830 = vsel %vm6806, %v2693, 0.0
          %v7831 = vsel %vm6807, %v2694, 0.0
          %v7832 = vsel %vm6808, %v2695, 0.0
          %v7833 = vsel %vm6809, %v2696, 0.0
          %v7834 = vsel %vm6810, %v2697, 0.0
          %v7835 = vsel %vm6811, %v2698, 0.0
          %v7836 = vsel %vm6812, %v2699, 0.0
          %v7837 = vsel %vm6813, %v2700, 0.0
          %v7838 = vsel %vm6814, %v2701, 0.0
          %v7839 = vsel %vm6815, %v2702, 0.0
          %v7840 = vsel %vm6816, %v2703, 0.0
          %v7841 = vsel %vm6817, %v2704, 0.0
          %v7842 = vsel %vm6818, %v2705, 0.0
          %v7843 = vsel %vm6819, %v2706, 0.0
          %v7844 = vsel %vm6820, %v2707, 0.0
          %v7845 = vsel %vm6821, %v2708, 0.0
          %v7846 = vsel %vm6822, %v2709, 0.0
          %v7847 = vsel %vm6823, %v2710, 0.0
          %v7848 = vsel %vm6824, %v2711, 0.0
          %v7849 = vsel %vm6825, %v2712, 0.0
          %v7850 = vsel %vm6826, %v2713, 0.0
          %v7851 = vsel %vm6827, %v2714, 0.0
          %v7852 = vsel %vm6828, %v2715, 0.0
          %v7853 = vsel %vm6829, %v2716, 0.0
          %v7854 = vsel %vm6830, %v2717, 0.0
          %v7855 = vsel %vm6831, %v2718, 0.0
          %v7856 = vsel %vm6832, %v2719, 0.0
          %v7857 = vsel %vm6833, %v2720, 0.0
          %v7858 = vsel %vm6834, %v2721, 0.0
          %v7859 = vsel %vm6835, %v2722, 0.0
          %v7860 = vsel %vm6836, %v2723, 0.0
          %v7861 = vsel %vm6837, %v2724, 0.0
          %v7862 = vsel %vm6838, %v2725, 0.0
          %v7863 = vsel %vm6839, %v2726, 0.0
          %v7864 = vsel %vm6840, %v2727, 0.0
          %v7865 = vsel %vm6841, %v2728, 0.0
          %v7866 = vsel %vm6842, %v2729, 0.0
          %v7867 = vsel %vm6843, %v2730, 0.0
          %v7868 = vsel %vm6844, %v2731, 0.0
          %v7869 = vsel %vm6845, %v2732, 0.0
          %v7870 = vsel %vm6846, %v2733, 0.0
          %v7871 = vsel %vm6847, %v2734, 0.0
          %v7872 = vsel %vm6848, %v2735, 0.0
          %v7873 = vsel %vm6849, %v2736, 0.0
          %v7874 = vsel %vm6850, %v2737, 0.0
          %v7875 = vsel %vm6851, %v2738, 0.0
          %v7876 = vsel %vm6852, %v2739, 0.0
          %v7877 = vsel %vm6853, %v2740, 0.0
          %v7878 = vsel %vm6854, %v2741, 0.0
          %v7879 = vsel %vm6855, %v2742, 0.0
          %v7880 = vsel %vm6856, %v2743, 0.0
          %v7881 = vsel %vm6857, %v2744, 0.0
          %v7882 = vsel %vm6858, %v2745, 0.0
          %v7883 = vsel %vm6859, %v2746, 0.0
          %v7884 = vsel %vm6860, %v2747, 0.0
          %v7885 = vsel %vm6861, %v2748, 0.0
          %v7886 = vsel %vm6862, %v2749, 0.0
          %v7887 = vsel %vm6863, %v2750, 0.0
          %v7888 = vsel %vm6864, %v2751, 0.0
          %v7889 = vsel %vm6865, %v2752, 0.0
          %v7890 = vsel %vm6866, %v2753, 0.0
          %v7891 = vsel %vm6867, %v2754, 0.0
          %v7892 = vsel %vm6868, %v2755, 0.0
          %v7893 = vsel %vm6869, %v2756, 0.0
          %v7894 = vsel %vm6870, %v2757, 0.0
          %v7895 = vsel %vm6871, %v2758, 0.0
          %v7896 = vsel %vm6872, %v2759, 0.0
          %v7897 = vsel %vm6873, %v2760, 0.0
          %v7898 = vsel %vm6874, %v2761, 0.0
          %v7899 = vsel %vm6875, %v2762, 0.0
          %v7900 = vsel %vm6876, %v2763, 0.0
          %v7901 = vsel %vm6877, %v2764, 0.0
          %v7902 = vsel %vm6878, %v2765, 0.0
          %v7903 = vsel %vm6879, %v2766, 0.0
          %v7904 = vsel %vm6880, %v2767, 0.0
          %v7905 = vsel %vm6881, %v2768, 0.0
          %v7906 = vsel %vm6882, %v2769, 0.0
          %v7907 = vsel %vm6883, %v2770, 0.0
          %v7908 = vsel %vm6884, %v2771, 0.0
          %v7909 = vsel %vm6885, %v2772, 0.0
          %v7910 = vsel %vm6886, %v2773, 0.0
          %v7911 = vsel %vm6887, %v2774, 0.0
          %v7912 = vsel %vm6888, %v2775, 0.0
          %v7913 = vsel %vm6889, %v2776, 0.0
          %v7914 = vsel %vm6890, %v2777, 0.0
          %v7915 = vsel %vm6891, %v2778, 0.0
          %v7916 = vsel %vm6892, %v2779, 0.0
          %v7917 = vsel %vm6893, %v2780, 0.0
          %v7918 = vsel %vm6894, %v2781, 0.0
          %v7919 = vsel %vm6895, %v2782, 0.0
          %v7920 = vsel %vm6896, %v2783, 0.0
          %v7921 = vsel %vm6897, %v2784, 0.0
          %v7922 = vsel %vm6898, %v2785, 0.0
          %v7923 = vsel %vm6899, %v2786, 0.0
          %v7924 = vsel %vm6900, %v2787, 0.0
          %v7925 = vsel %vm6901, %v2788, 0.0
          %v7926 = vsel %vm6902, %v2789, 0.0
          %v7927 = vsel %vm6903, %v2790, 0.0
          %v7928 = vsel %vm6904, %v2791, 0.0
          %v7929 = vsel %vm6905, %v2792, 0.0
          %v7930 = vsel %vm6906, %v2793, 0.0
          %v7931 = vsel %vm6907, %v2794, 0.0
          %v7932 = vsel %vm6908, %v2795, 0.0
          %v7933 = vsel %vm6909, %v2796, 0.0
          %v7934 = vsel %vm6910, %v2797, 0.0
          %v7935 = vsel %vm6911, %v2798, 0.0
          %v7936 = vsel %vm6912, %v2799, 0.0
          %v7937 = vsel %vm6913, %v2800, 0.0
          %v7938 = vsel %vm6914, %v2801, 0.0
          %v7939 = vsel %vm6915, %v2802, 0.0
          %v7940 = vsel %vm6916, %v2803, 0.0
          %v7941 = vsel %vm6917, %v2804, 0.0
          %v7942 = vsel %vm6918, %v2805, 0.0
          %v7943 = vsel %vm6919, %v2806, 0.0
          %v7944 = vsel %vm6920, %v2807, 0.0
          %v7945 = vsel %vm6921, %v2808, 0.0
          %v7946 = vsel %vm6922, %v2809, 0.0
          %v7947 = vsel %vm6923, %v2810, 0.0
          %v7948 = vsel %vm6924, %v2811, 0.0
          %v7949 = vsel %vm6925, %v2812, 0.0
          %v7950 = vsel %vm6926, %v2813, 0.0
          %v7951 = vsel %vm6927, %v2814, 0.0
          %v7952 = vsel %vm6928, %v2815, 0.0
          %v7953 = vsel %vm6929, %v2816, 0.0
          %v7954 = vsel %vm6930, %v2817, 0.0
          %v7955 = vsel %vm6931, %v2818, 0.0
          %v7956 = vsel %vm6932, %v2819, 0.0
          %v7957 = vsel %vm6933, %v2820, 0.0
          %v7958 = vsel %vm6934, %v2821, 0.0
          %v7959 = vsel %vm6935, %v2822, 0.0
          %v7960 = vsel %vm6936, %v2823, 0.0
          %v7961 = vsel %vm6937, %v2824, 0.0
          %v7962 = vsel %vm6938, %v2825, 0.0
          %v7963 = vsel %vm6939, %v2826, 0.0
          %v7964 = vsel %vm6940, %v2827, 0.0
          %v7965 = vsel %vm6941, %v2828, 0.0
          %v7966 = vsel %vm6942, %v2829, 0.0
          %v7967 = vsel %vm6943, %v2830, 0.0
          %v7968 = vsel %vm6944, %v2831, 0.0
          %v7969 = vsel %vm6945, %v2832, 0.0
          %v7970 = vsel %vm6946, %v2833, 0.0
          %v7971 = vsel %vm6947, %v2834, 0.0
          %v7972 = vsel %vm6948, %v2835, 0.0
          %v7973 = vsel %vm6949, %v2836, 0.0
          %v7974 = vsel %vm6950, %v2837, 0.0
          %v7975 = vsel %vm6951, %v2838, 0.0
          %v7976 = vsel %vm6952, %v2839, 0.0
          %v7977 = vsel %vm6953, %v2840, 0.0
          %v7978 = vsel %vm6954, %v2841, 0.0
          %v7979 = vsel %vm6955, %v2842, 0.0
          %v7980 = vsel %vm6956, %v2843, 0.0
          %v7981 = vsel %vm6957, %v2844, 0.0
          %v7982 = vsel %vm6958, %v2845, 0.0
          %v7983 = vsel %vm6959, %v2846, 0.0
          %v7984 = vsel %vm6960, %v2847, 0.0
          %v7985 = vsel %vm6961, %v2848, 0.0
          %v7986 = vsel %vm6962, %v2849, 0.0
          %v7987 = vsel %vm6963, %v2850, 0.0
          %v7988 = vsel %vm6964, %v2851, 0.0
          %v7989 = vsel %vm6965, %v2852, 0.0
          %v7990 = vsel %vm6966, %v2853, 0.0
          %v7991 = vsel %vm6967, %v2854, 0.0
          %v7992 = vsel %vm6968, %v2855, 0.0
          %v7993 = vsel %vm6969, %v2856, 0.0
          %v7994 = vsel %vm6970, %v2857, 0.0
          %v7995 = vsel %vm6971, %v2858, 0.0
          %v7996 = vsel %vm6972, %v2859, 0.0
          %v7997 = vsel %vm6973, %v2860, 0.0
          %v7998 = vsel %vm6974, %v2861, 0.0
          %v7999 = vsel %vm6975, %v2862, 0.0
          %v8000 = vsel %vm6976, %v2863, 0.0
          %v8001 = vsel %vm6977, %v2864, 0.0
          %v8002 = vsel %vm6978, %v2865, 0.0
          %v8003 = vsel %vm6979, %v2866, 0.0
          %v8004 = vsel %vm6980, %v2867, 0.0
          %v8005 = vsel %vm6981, %v2868, 0.0
          %v8006 = vsel %vm6982, %v2869, 0.0
          %v8007 = vsel %vm6983, %v2870, 0.0
          %v8008 = vsel %vm6984, %v2871, 0.0
          %v8009 = vsel %vm6985, %v2872, 0.0
          %v8010 = vsel %vm6986, %v2873, 0.0
          %v8011 = vsel %vm6987, %v2874, 0.0
          %v8012 = vsel %vm6988, %v2875, 0.0
          %v8013 = vsel %vm6989, %v2876, 0.0
          %v8014 = vsel %vm6990, %v2877, 0.0
          %v8015 = vsel %vm6991, %v2878, 0.0
          %v8016 = vsel %vm6992, %v2879, 0.0
          %v8017 = vsel %vm6993, %v2880, 0.0
          %v8018 = vsel %vm6994, %v2881, 0.0
          %v8019 = vsel %vm6995, %v2882, 0.0
          %v8020 = vsel %vm6996, %v2883, 0.0
          %v8021 = vsel %vm6997, %v2884, 0.0
          %v8022 = vsel %vm6998, %v2885, 0.0
          %v8023 = vsel %vm6999, %v2886, 0.0
          %v8024 = vsel %vm7000, %v2887, 0.0
          %v8025 = vsel %vm7001, %v2888, 0.0
          %v8026 = vsel %vm7002, %v2889, 0.0
          %v8027 = vsel %vm7003, %v2890, 0.0
          %v8028 = vsel %vm7004, %v2891, 0.0
          %v8029 = vsel %vm7005, %v2892, 0.0
          %v8030 = vsel %vm7006, %v2893, 0.0
          %v8031 = vsel %vm7007, %v2894, 0.0
          %v8032 = vsel %vm7008, %v2895, 0.0
          %v8033 = vsel %vm7009, %v2896, 0.0
          %v8034 = vsel %vm7010, %v2897, 0.0
          %v8035 = vsel %vm7011, %v2898, 0.0
          %v8036 = vsel %vm7012, %v2899, 0.0
          %v8037 = vsel %vm7013, %v2900, 0.0
          %v8038 = vsel %vm7014, %v2901, 0.0
          %v8039 = vsel %vm7015, %v2902, 0.0
          %v8040 = vsel %vm7016, %v2903, 0.0
          %v8041 = vsel %vm7017, %v2904, 0.0
          %v8042 = vsel %vm7018, %v2905, 0.0
          %v8043 = vsel %vm7019, %v2906, 0.0
          %v8044 = vsel %vm7020, %v2907, 0.0
          %v8045 = vsel %vm7021, %v2908, 0.0
          %v8046 = vsel %vm7022, %v2909, 0.0
          %v8047 = vsel %vm7023, %v2910, 0.0
          %v8048 = vsel %vm7024, %v2911, 0.0
          %v8049 = vsel %vm7025, %v2912, 0.0
          %v8050 = vsel %vm7026, %v2913, 0.0
          %v8051 = vsel %vm7027, %v2914, 0.0
          %v8052 = vsel %vm7028, %v2915, 0.0
          %v8053 = vsel %vm7029, %v2916, 0.0
          %v8054 = vsel %vm7030, %v2917, 0.0
          %v8055 = vsel %vm7031, %v2918, 0.0
          %v8056 = vsel %vm7032, %v2919, 0.0
          %v8057 = vsel %vm7033, %v2920, 0.0
          %v8058 = vsel %vm7034, %v2921, 0.0
          %v8059 = vsel %vm7035, %v2922, 0.0
          %v8060 = vsel %vm7036, %v2923, 0.0
          %v8061 = vsel %vm7037, %v2924, 0.0
          %v8062 = vsel %vm7038, %v2925, 0.0
          %v8063 = vsel %vm7039, %v2926, 0.0
          %v8064 = vsel %vm7040, %v2927, 0.0
          %v8065 = vsel %vm7041, %v2928, 0.0
          %v8066 = vsel %vm7042, %v2929, 0.0
          %v8067 = vsel %vm7043, %v2930, 0.0
          %v8068 = vsel %vm7044, %v2931, 0.0
          %v8069 = vsel %vm7045, %v2932, 0.0
          %v8070 = vsel %vm7046, %v2933, 0.0
          %v8071 = vsel %vm7047, %v2934, 0.0
          %v8072 = vsel %vm7048, %v2935, 0.0
          %v8073 = vsel %vm7049, %v2936, 0.0
          %v8074 = vsel %vm7050, %v2937, 0.0
          %v8075 = vsel %vm7051, %v2938, 0.0
          %v8076 = vsel %vm7052, %v2939, 0.0
          %v8077 = vsel %vm7053, %v2940, 0.0
          %v8078 = vsel %vm7054, %v2941, 0.0
          %v8079 = vsel %vm7055, %v2942, 0.0
          %v8080 = vsel %vm7056, %v2943, 0.0
          %v8081 = vsel %vm7057, %v2944, 0.0
          %v8082 = vsel %vm7058, %v2945, 0.0
          %v8083 = vsel %vm7059, %v2946, 0.0
          %v8084 = vsel %vm7060, %v2947, 0.0
          %v8085 = vsel %vm7061, %v2948, 0.0
          %v8086 = vsel %vm7062, %v2949, 0.0
          %v8087 = vsel %vm7063, %v2950, 0.0
          %v8088 = vsel %vm7064, %v2951, 0.0
          %v8089 = vsel %vm7065, %v2952, 0.0
          %v8090 = vsel %vm7066, %v2953, 0.0
          %v8091 = vsel %vm7067, %v2954, 0.0
          %v8092 = vsel %vm7068, %v2955, 0.0
          %v8093 = vsel %vm7069, %v2956, 0.0
          %v8094 = vsel %vm7070, %v2957, 0.0
          %v8095 = vsel %vm7071, %v2958, 0.0
          %v8096 = vsel %vm7072, %v2959, 0.0
          %v8097 = vsel %vm7073, %v2960, 0.0
          %v8098 = vsel %vm7074, %v2961, 0.0
          %v8099 = vsel %vm7075, %v2962, 0.0
          %v8100 = vsel %vm7076, %v2963, 0.0
          %v8101 = vsel %vm7077, %v2964, 0.0
          %v8102 = vsel %vm7078, %v2965, 0.0
          %v8103 = vsel %vm7079, %v2966, 0.0
          %v8104 = vsel %vm7080, %v2967, 0.0
          %v8105 = vsel %vm7081, %v2968, 0.0
          %v8106 = vsel %vm7082, %v2969, 0.0
          %v8107 = vsel %vm7083, %v2970, 0.0
          %v8108 = vsel %vm7084, %v2971, 0.0
          %v8109 = vsel %vm7085, %v2972, 0.0
          %v8110 = vsel %vm7086, %v2973, 0.0
          %v8111 = vsel %vm7087, %v2974, 0.0
          %v8112 = vsel %vm7088, %v2975, 0.0
          %v8113 = vsel %vm7089, %v2976, 0.0
          %v8114 = vsel %vm7090, %v2977, 0.0
          %v8115 = vsel %vm7091, %v2978, 0.0
          %v8116 = vsel %vm7092, %v2979, 0.0
          %v8117 = vsel %vm7093, %v2980, 0.0
          %v8118 = vsel %vm7094, %v2981, 0.0
          %v8119 = vsel %vm7095, %v2982, 0.0
          %v8120 = vsel %vm7096, %v2983, 0.0
          %v8121 = vsel %vm7097, %v2984, 0.0
          %v8122 = vsel %vm7098, %v2985, 0.0
          %v8123 = vsel %vm7099, %v2986, 0.0
          %v8124 = vsel %vm7100, %v2987, 0.0
          %v8125 = vsel %vm7101, %v2988, 0.0
          %v8126 = vsel %vm7102, %v2989, 0.0
          %v8127 = vsel %vm7103, %v2990, 0.0
          %v8128 = vsel %vm7104, %v2991, 0.0
          %v8129 = vsel %vm7105, %v2992, 0.0
          %v8130 = vsel %vm7106, %v2993, 0.0
          %v8131 = vsel %vm7107, %v2994, 0.0
          %v8132 = vsel %vm7108, %v2995, 0.0
          %v8133 = vsel %vm7109, %v2996, 0.0
          %v8134 = vsel %vm7110, %v2997, 0.0
          %v8135 = vsel %vm7111, %v2998, 0.0
          %v8136 = vsel %vm7112, %v2999, 0.0
          %v8137 = vsel %vm7113, %v3000, 0.0
          %v8138 = vsel %vm7114, %v3001, 0.0
          %v8139 = vsel %vm7115, %v3002, 0.0
          %v8140 = vsel %vm7116, %v3003, 0.0
          %v8141 = vsel %vm7117, %v3004, 0.0
          %v8142 = vsel %vm7118, %v3005, 0.0
          %v8143 = vsel %vm7119, %v3006, 0.0
          %v8144 = vsel %vm7120, %v3007, 0.0
          %v8145 = vsel %vm7121, %v3008, 0.0
          %v8146 = vsel %vm7122, %v3009, 0.0
          %v8147 = vsel %vm7123, %v3010, 0.0
          %v8148 = vsel %vm7124, %v3011, 0.0
          %v8149 = vsel %vm7125, %v3012, 0.0
          %v8150 = vsel %vm7126, %v3013, 0.0
          %v8151 = vsel %vm7127, %v3014, 0.0
          %v8152 = vsel %vm7128, %v3015, 0.0
          %v8153 = vsel %vm7129, %v3016, 0.0
          %v8154 = vsel %vm7130, %v3017, 0.0
          %v8155 = vsel %vm7131, %v3018, 0.0
          %v8156 = vsel %vm7132, %v3019, 0.0
          %v8157 = vsel %vm7133, %v3020, 0.0
          %v8158 = vsel %vm7134, %v3021, 0.0
          %v8159 = vsel %vm7135, %v3022, 0.0
          %v8160 = vsel %vm7136, %v3023, 0.0
          %v8161 = vsel %vm7137, %v3024, 0.0
          %v8162 = vsel %vm7138, %v3025, 0.0
          %v8163 = vsel %vm7139, %v3026, 0.0
          %v8164 = vsel %vm7140, %v3027, 0.0
          %v8165 = vsel %vm7141, %v3028, 0.0
          %v8166 = vsel %vm7142, %v3029, 0.0
          %v8167 = vsel %vm7143, %v3030, 0.0
          %v8168 = vsel %vm7144, %v3031, 0.0
          %v8169 = vsel %vm7145, %v3032, 0.0
          %v8170 = vsel %vm7146, %v3033, 0.0
          %v8171 = vsel %vm7147, %v3034, 0.0
          %v8172 = vsel %vm7148, %v3035, 0.0
          %v8173 = vsel %vm7149, %v3036, 0.0
          %v8174 = vsel %vm7150, %v3037, 0.0
          %v8175 = vsel %vm7151, %v3038, 0.0
          %v8176 = vsel %vm7152, %v3039, 0.0
          %v8177 = vsel %vm7153, %v3040, 0.0
          %v8178 = vsel %vm7154, %v3041, 0.0
          %v8179 = vsel %vm7155, %v3042, 0.0
          %v8180 = vsel %vm7156, %v3043, 0.0
          %v8181 = vsel %vm7157, %v3044, 0.0
          %v8182 = vsel %vm7158, %v3045, 0.0
          %v8183 = vsel %vm7159, %v3046, 0.0
          %v8184 = vsel %vm7160, %v3047, 0.0
          %v8185 = vsel %vm7161, %v3048, 0.0
          %v8186 = vsel %vm7162, %v3049, 0.0
          %v8187 = vsel %vm7163, %v3050, 0.0
          %v8188 = vsel %vm7164, %v3051, 0.0
          %v8189 = vsel %vm7165, %v3052, 0.0
          %v8190 = vsel %vm7166, %v3053, 0.0
          %v8191 = vsel %vm7167, %v3054, 0.0
          %v8192 = vsel %vm7168, %v3055, 0.0
          %v8193 = vsel %vm7169, %v3056, 0.0
          %v8194 = vsel %vm7170, %v3057, 0.0
          %v8195 = vsel %vm7171, %v3058, 0.0
          %v8196 = vsel %vm7172, %v3059, 0.0
          %v8197 = vsel %vm7173, %v3060, 0.0
          %v8198 = vsel %vm7174, %v3061, 0.0
          %v8199 = vsel %vm7175, %v3062, 0.0
          %v8200 = vsel %vm7176, %v3063, 0.0
          %v8201 = vsel %vm7177, %v3064, 0.0
          %v8202 = vsel %vm7178, %v3065, 0.0
          %v8203 = vsel %vm7179, %v3066, 0.0
          %v8204 = vsel %vm7180, %v3067, 0.0
          %v8205 = vsel %vm7181, %v3068, 0.0
          %v8206 = vsel %vm7182, %v3069, 0.0
          %v8207 = vsel %vm7183, %v3070, 0.0
          %v8208 = vsel %vm7184, %v3071, 0.0
          %v8209 = vsel %vm7185, %v3072, 0.0
          %v8210 = vsel %vm7186, %v3073, 0.0
          %v8211 = vsel %vm7187, %v3074, 0.0
          %v8212 = vsel %vm7188, %v3075, 0.0
          %v8213 = vsel %vm7189, %v3076, 0.0
          %v8214 = vsel %vm7190, %v3077, 0.0
          %v8215 = vsel %vm7191, %v3078, 0.0
          %v8216 = vsel %vm7192, %v3079, 0.0
          %v8217 = vsel %vm7193, %v3080, 0.0
          %v8218 = vsel %vm7194, %v3081, 0.0
          %v8219 = vsel %vm7195, %v3082, 0.0
          %v8220 = vsel %vm7196, %v3083, 0.0
          %v8221 = vsel %vm7197, %v3084, 0.0
          %v8222 = vsel %vm7198, %v3085, 0.0
          %v8223 = vsel %vm7199, %v3086, 0.0
          %v8224 = vsel %vm7200, %v3087, 0.0
          %v8225 = vsel %vm7201, %v3088, 0.0
          %v8226 = vsel %vm7202, %v3089, 0.0
          %v8227 = vsel %vm7203, %v3090, 0.0
          %v8228 = vsel %vm7204, %v3091, 0.0
          %v8229 = vsel %vm7205, %v3092, 0.0
          %v8230 = vsel %vm7206, %v3093, 0.0
          %v8231 = vsel %vm7207, %v3094, 0.0
          %v8232 = vsel %vm7208, %v3095, 0.0
          %v8233 = vsel %vm7209, %v3096, 0.0
          %v8234 = vsel %vm7210, %v3097, 0.0
          %v8235 = vsel %vm7211, %v3098, 0.0
          %v8236 = vsel %vm7212, %v3099, 0.0
          %v8237 = vsel %vm7213, %v3100, 0.0
          %v8238 = vsel %vm7214, %v3101, 0.0
          %v8239 = vsel %vm7215, %v3102, 0.0
          %v8240 = vsel %vm7216, %v3103, 0.0
          %v8241 = vsel %vm7217, %v3104, 0.0
          %v8242 = vsel %vm7218, %v3105, 0.0
          %v8243 = vsel %vm7219, %v3106, 0.0
          %v8244 = vsel %vm7220, %v3107, 0.0
          %v8245 = vsel %vm7221, %v3108, 0.0
          %v8246 = vsel %vm7222, %v3109, 0.0
          %v8247 = vsel %vm7223, %v3110, 0.0
          %v8248 = vsel %vm7224, %v3111, 0.0
          %v8249 = vsel %vm7225, %v3112, 0.0
          %v8250 = vsel %vm7226, %v3113, 0.0
          %v8251 = vsel %vm7227, %v3114, 0.0
          %v8252 = vsel %vm7228, %v3115, 0.0
          %v8253 = vsel %vm7229, %v3116, 0.0
          %v8254 = vsel %vm7230, %v3117, 0.0
          %v8255 = vsel %vm7231, %v3118, 0.0
          %v8256 = vsel %vm7232, %v3119, 0.0
          %v8257 = vsel %vm7233, %v3120, 0.0
          %v8258 = vsel %vm7234, %v3121, 0.0
          %v8259 = vsel %vm7235, %v3122, 0.0
          %v8260 = vsel %vm7236, %v3123, 0.0
          %v8261 = vsel %vm7237, %v3124, 0.0
          %v8262 = vsel %vm7238, %v3125, 0.0
          %v8263 = vsel %vm7239, %v3126, 0.0
          %v8264 = vsel %vm7240, %v3127, 0.0
          %v8265 = vsel %vm7241, %v3128, 0.0
          %v8266 = vsel %vm7242, %v3129, 0.0
          %v8267 = vsel %vm7243, %v3130, 0.0
          %v8268 = vsel %vm7244, %v3131, 0.0
          %v8269 = vsel %vm7245, %v3132, 0.0
          %v8270 = vsel %vm7246, %v3133, 0.0
          %v8271 = vsel %vm7247, %v3134, 0.0
          %v8272 = vsel %vm7248, %v3135, 0.0
          %v8273 = vsel %vm7249, %v3136, 0.0
          %v8274 = vsel %vm7250, %v3137, 0.0
          %v8275 = vsel %vm7251, %v3138, 0.0
          %v8276 = vsel %vm7252, %v3139, 0.0
          %v8277 = vsel %vm7253, %v3140, 0.0
          %v8278 = vsel %vm7254, %v3141, 0.0
          %v8279 = vsel %vm7255, %v3142, 0.0
          %v8280 = vsel %vm7256, %v3143, 0.0
          %v8281 = vsel %vm7257, %v3144, 0.0
          %v8282 = vsel %vm7258, %v3145, 0.0
          %v8283 = vsel %vm7259, %v3146, 0.0
          %v8284 = vsel %vm7260, %v3147, 0.0
          %v8285 = vsel %vm7261, %v3148, 0.0
          %v8286 = vsel %vm7262, %v3149, 0.0
          %v8287 = vsel %vm7263, %v3150, 0.0
          %v8288 = vsel %vm7264, %v3151, 0.0
          %v8289 = vsel %vm7265, %v3152, 0.0
          %v8290 = vsel %vm7266, %v3153, 0.0
          %v8291 = vsel %vm7267, %v3154, 0.0
          %v8292 = vsel %vm7268, %v3155, 0.0
          %v8293 = vsel %vm7269, %v3156, 0.0
          %v8294 = vsel %vm7270, %v3157, 0.0
          %v8295 = vsel %vm7271, %v3158, 0.0
          %v8296 = vsel %vm7272, %v3159, 0.0
          %v8297 = vsel %vm7273, %v3160, 0.0
          %v8298 = vsel %vm7274, %v3161, 0.0
          %v8299 = vsel %vm7275, %v3162, 0.0
          %v8300 = vsel %vm7276, %v3163, 0.0
          %v8301 = vsel %vm7277, %v3164, 0.0
          %v8302 = vsel %vm7278, %v3165, 0.0
          %v8303 = vsel %vm7279, %v3166, 0.0
          %v8304 = vsel %vm7280, %v3167, 0.0
          %v8305 = vsel %vm7281, %v3168, 0.0
          %v8306 = vsel %vm7282, %v3169, 0.0
          %v8307 = vsel %vm7283, %v3170, 0.0
          %v8308 = vsel %vm7284, %v3171, 0.0
          %v8309 = vsel %vm7285, %v3172, 0.0
          %v8310 = vsel %vm7286, %v3173, 0.0
          %v8311 = vsel %vm7287, %v3174, 0.0
          %v8312 = vsel %vm7288, %v3175, 0.0
          %v8313 = vsel %vm7289, %v3176, 0.0
          %v8314 = vsel %vm7290, %v3177, 0.0
          %v8315 = vsel %vm7291, %v3178, 0.0
          %v8316 = vsel %vm7292, %v3179, 0.0
          %v8317 = vsel %vm7293, %v3180, 0.0
          %v8318 = vsel %vm7294, %v3181, 0.0
          %v8319 = vsel %vm7295, %v3182, 0.0
          %v8320 = vsel %vm7296, %v3183, 0.0
          %v8321 = vsel %vm7297, %v3184, 0.0
          %v8322 = vsel %vm7298, %v3185, 0.0
          %v8323 = vsel %vm7299, %v3186, 0.0
          %v8324 = vsel %vm7300, %v3187, 0.0
          %v8325 = vsel %vm7301, %v3188, 0.0
          %v8326 = vsel %vm7302, %v3189, 0.0
          %v8327 = vsel %vm7303, %v3190, 0.0
          %v8328 = vsel %vm7304, %v3191, 0.0
          %v8329 = vsel %vm7305, %v3192, 0.0
          %v8330 = vsel %vm7306, %v3193, 0.0
          %v8331 = vsel %vm7307, %v3194, 0.0
          %v8332 = vsel %vm7308, %v3195, 0.0
          %v8333 = vsel %vm7309, %v3196, 0.0
          %v8334 = vsel %vm7310, %v3197, 0.0
          %v8335 = vsel %vm7311, %v3198, 0.0
          %v8336 = vsel %vm7312, %v3199, 0.0
          %v8337 = vsel %vm7313, %v3200, 0.0
          %v8338 = vsel %vm7314, %v3201, 0.0
          %v8339 = vsel %vm7315, %v3202, 0.0
          %v8340 = vsel %vm7316, %v3203, 0.0
          %v8341 = vsel %vm7317, %v3204, 0.0
          %v8342 = vsel %vm7318, %v3205, 0.0
          %v8343 = vsel %vm7319, %v3206, 0.0
          %v8344 = vsel %vm7320, %v3207, 0.0
          %v8345 = vsel %vm7321, %v3208, 0.0
          %v8346 = vsel %vm7322, %v3209, 0.0
          %v8347 = vsel %vm7323, %v3210, 0.0
          %v8348 = vsel %vm7324, %v3211, 0.0
          %v8349 = vsel %vm7325, %v3212, 0.0
          %v8350 = vsel %vm7326, %v3213, 0.0
          %v8351 = vsel %vm7327, %v3214, 0.0
          %v8352 = vsel %vm7328, %v3215, 0.0
          %v8353 = vsel %vm7329, %v3216, 0.0
          %v8354 = vsel %vm7330, %v3217, 0.0
          %v8355 = vsel %vm7331, %v3218, 0.0
          %v8356 = vsel %vm7332, %v3219, 0.0
          %v8357 = vsel %vm7333, %v3220, 0.0
          %v8358 = vsel %vm7334, %v3221, 0.0
          %v8359 = vsel %vm7335, %v3222, 0.0
          %v8360 = vsel %vm7336, %v3223, 0.0
          %v8361 = vsel %vm7337, %v3224, 0.0
          %v8362 = vsel %vm7338, %v3225, 0.0
          %v8363 = vsel %vm7339, %v3226, 0.0
          %v8364 = vsel %vm7340, %v3227, 0.0
          %v8365 = vsel %vm7341, %v3228, 0.0
          %v8366 = vsel %vm7342, %v3229, 0.0
          %v8367 = vsel %vm7343, %v3230, 0.0
          %v8368 = vsel %vm7344, %v3231, 0.0
          %v8369 = vsel %vm7345, %v3232, 0.0
          %v8370 = vsel %vm7346, %v3233, 0.0
          %v8371 = vsel %vm7347, %v3234, 0.0
          %v8372 = vsel %vm7348, %v3235, 0.0
          %v8373 = vsel %vm7349, %v3236, 0.0
          %v8374 = vsel %vm7350, %v3237, 0.0
          %v8375 = vsel %vm7351, %v3238, 0.0
          %v8376 = vsel %vm7352, %v3239, 0.0
          %v8377 = vsel %vm7353, %v3240, 0.0
          %v8378 = vsel %vm7354, %v3241, 0.0
          %v8379 = vsel %vm7355, %v3242, 0.0
          %v8380 = vsel %vm7356, %v3243, 0.0
          %v8381 = vsel %vm7357, %v3244, 0.0
          %v8382 = vsel %vm7358, %v3245, 0.0
          %v8383 = vsel %vm7359, %v3246, 0.0
          %v8384 = vsel %vm7360, %v3247, 0.0
          %v8385 = vsel %vm7361, %v3248, 0.0
          %v8386 = vsel %vm7362, %v3249, 0.0
          %v8387 = vsel %vm7363, %v3250, 0.0
          %v8388 = vsel %vm7364, %v3251, 0.0
          %v8389 = vsel %vm7365, %v3252, 0.0
          %v8390 = vsel %vm7366, %v3253, 0.0
          %v8391 = vsel %vm7367, %v3254, 0.0
          %v8392 = vsel %vm7368, %v3255, 0.0
          %v8393 = vsel %vm7369, %v3256, 0.0
          %v8394 = vsel %vm7370, %v3257, 0.0
          %v8395 = vsel %vm7371, %v3258, 0.0
          %v8396 = vsel %vm7372, %v3259, 0.0
          %v8397 = vsel %vm7373, %v3260, 0.0
          %v8398 = vsel %vm7374, %v3261, 0.0
          %v8399 = vsel %vm7375, %v3262, 0.0
          %v8400 = vsel %vm7376, %v3263, 0.0
          %v8401 = vsel %vm7377, %v3264, 0.0
          %v8402 = vsel %vm7378, %v3265, 0.0
          %v8403 = vsel %vm7379, %v3266, 0.0
          %v8404 = vsel %vm7380, %v3267, 0.0
          %v8405 = vsel %vm7381, %v3268, 0.0
          %v8406 = vsel %vm7382, %v3269, 0.0
          %v8407 = vsel %vm7383, %v3270, 0.0
          %v8408 = vsel %vm7384, %v3271, 0.0
          %v8409 = vsel %vm7385, %v3272, 0.0
          %v8410 = vsel %vm7386, %v3273, 0.0
          %v8411 = vsel %vm7387, %v3274, 0.0
          %v8412 = vsel %vm7388, %v3275, 0.0
          %v8413 = vsel %vm7389, %v3276, 0.0
          %v8414 = vsel %vm7390, %v3277, 0.0
          %v8415 = vsel %vm7391, %v3278, 0.0
          %v8416 = vsel %vm7392, %v3279, 0.0
          %v8417 = vsel %vm7393, %v3280, 0.0
          %v8418 = vsel %vm7394, %v3281, 0.0
          %v8419 = vsel %vm7395, %v3282, 0.0
          %v8420 = vsel %vm7396, %v3283, 0.0
          %v8421 = vsel %vm7397, %v3284, 0.0
          %v8422 = vsel %vm7398, %v3285, 0.0
          %v8423 = vsel %vm7399, %v3286, 0.0
          %v8424 = vsel %vm7400, %v3287, 0.0
          %v8425 = vsel %vm7401, %v3288, 0.0
          %v8426 = vsel %vm7402, %v3289, 0.0
          %v8427 = vsel %vm7403, %v3290, 0.0
          %v8428 = vsel %vm7404, %v3291, 0.0
          %v8429 = vsel %vm7405, %v3292, 0.0
          %v8430 = vsel %vm7406, %v3293, 0.0
          %v8431 = vsel %vm7407, %v3294, 0.0
          %v8432 = vsel %vm7408, %v3295, 0.0
          %v8433 = vsel %vm7409, %v3296, 0.0
          %v8434 = vsel %vm7410, %v3297, 0.0
          %v8435 = vsel %vm7411, %v3298, 0.0
          %v8436 = vsel %vm7412, %v3299, 0.0
          %v8437 = vsel %vm7413, %v3300, 0.0
          %v8438 = vsel %vm7414, %v3301, 0.0
          %v8439 = vsel %vm7415, %v3302, 0.0
          %v8440 = vsel %vm7416, %v3303, 0.0
          %v8441 = vsel %vm7417, %v3304, 0.0
          %v8442 = vsel %vm7418, %v3305, 0.0
          %v8443 = vsel %vm7419, %v3306, 0.0
          %v8444 = vsel %vm7420, %v3307, 0.0
          %v8445 = vsel %vm7421, %v3308, 0.0
          %v8446 = vsel %vm7422, %v3309, 0.0
          %v8447 = vsel %vm7423, %v3310, 0.0
          %v8448 = vsel %vm7424, %v3311, 0.0
          %v8449 = vsel %vm7425, %v3312, 0.0
          %v8450 = vsel %vm7426, %v3313, 0.0
          %v8451 = vsel %vm7427, %v3314, 0.0
          %v8452 = vsel %vm7428, %v3315, 0.0
          %v8453 = vsel %vm7429, %v3316, 0.0
          %v8454 = vsel %vm7430, %v3317, 0.0
          %v8455 = vsel %vm7431, %v3318, 0.0
          %v8456 = vsel %vm7432, %v3319, 0.0
          %v8457 = vsel %vm7433, %v3320, 0.0
          %v8458 = vsel %vm7434, %v3321, 0.0
          %v8459 = vsel %vm7435, %v3322, 0.0
          %v8460 = vsel %vm7436, %v3323, 0.0
          %v8461 = vsel %vm7437, %v3324, 0.0
          %v8462 = vsel %vm7438, %v3325, 0.0
          %v8463 = vsel %vm7439, %v3326, 0.0
          %v8464 = vsel %vm7440, %v3327, 0.0
          %v8465 = vsel %vm7441, %v3328, 0.0
          %v8466 = vsel %vm7442, %v3329, 0.0
          %v8467 = vsel %vm7443, %v3330, 0.0
          %v8468 = vsel %vm7444, %v3331, 0.0
          %v8469 = vsel %vm7445, %v3332, 0.0
          %v8470 = vsel %vm7446, %v3333, 0.0
          %v8471 = vsel %vm7447, %v3334, 0.0
          %v8472 = vsel %vm7448, %v3335, 0.0
          %v8473 = vsel %vm7449, %v3336, 0.0
          %v8474 = vsel %vm7450, %v3337, 0.0
          %v8475 = vsel %vm7451, %v3338, 0.0
          %v8476 = vsel %vm7452, %v3339, 0.0
          %v8477 = vsel %vm7453, %v3340, 0.0
          %v8478 = vsel %vm7454, %v3341, 0.0
          %v8479 = vsel %vm7455, %v3342, 0.0
          %v8480 = vsel %vm7456, %v3343, 0.0
          %v8481 = vsel %vm7457, %v3344, 0.0
          %v8482 = vsel %vm7458, %v3345, 0.0
          %v8483 = vsel %vm7459, %v3346, 0.0
          %v8484 = vsel %vm7460, %v3347, 0.0
          %v8485 = vsel %vm7461, %v3348, 0.0
          %v8486 = vsel %vm7462, %v3349, 0.0
          %v8487 = vsel %vm7463, %v3350, 0.0
          %v8488 = vld [vmem:[#allocation2] sm:$0xff]
          %v8489 = vadd.f32 %v7464, %v7465
          %v8490 = vadd.f32 %v8489, %v7466
          %v8491 = vadd.f32 %v8490, %v7467
          %v8492 = vadd.f32 %v8491, %v7468
          %v8493 = vadd.f32 %v8492, %v7469
          %v8494 = vadd.f32 %v8493, %v7470
          %v8495 = vadd.f32 %v8494, %v7471
          %v8496 = vadd.f32 %v8495, %v7472
          %v8497 = vadd.f32 %v8496, %v7473
          %v8498 = vadd.f32 %v8497, %v7474
          %v8499 = vadd.f32 %v8498, %v7475
          %v8500 = vadd.f32 %v8499, %v7476
          %v8501 = vadd.f32 %v8500, %v7477
          %v8502 = vadd.f32 %v8501, %v7478
          %v8503 = vadd.f32 %v8502, %v7479
          %v8504 = vadd.f32 %v8503, %v7480
          %v8505 = vadd.f32 %v8504, %v7481
          %v8506 = vadd.f32 %v8505, %v7482
          %v8507 = vadd.f32 %v8506, %v7483
          %v8508 = vadd.f32 %v8507, %v7484
          %v8509 = vadd.f32 %v8508, %v7485
          %v8510 = vadd.f32 %v8509, %v7486
          %v8511 = vadd.f32 %v8510, %v7487
          %v8512 = vadd.f32 %v8511, %v7488
          %v8513 = vadd.f32 %v8512, %v7489
          %v8514 = vadd.f32 %v8513, %v7490
          %v8515 = vadd.f32 %v8514, %v7491
          %v8516 = vadd.f32 %v8515, %v7492
          %v8517 = vadd.f32 %v8516, %v7493
          %v8518 = vadd.f32 %v8517, %v7494
          %v8519 = vadd.f32 %v8518, %v7495
          %v8520 = vadd.f32 %v8519, %v7496
          %v8521 = vadd.f32 %v8520, %v7497
          %v8522 = vadd.f32 %v8521, %v7498
          %v8523 = vadd.f32 %v8522, %v7499
          %v8524 = vadd.f32 %v8523, %v7500
          %v8525 = vadd.f32 %v8524, %v7501
          %v8526 = vadd.f32 %v8525, %v7502
          %v8527 = vadd.f32 %v8526, %v7503
          %v8528 = vadd.f32 %v8527, %v7504
          %v8529 = vadd.f32 %v8528, %v7505
          %v8530 = vadd.f32 %v8529, %v7506
          %v8531 = vadd.f32 %v8530, %v7507
          %v8532 = vadd.f32 %v8531, %v7508
          %v8533 = vadd.f32 %v8532, %v7509
          %v8534 = vadd.f32 %v8533, %v7510
          %v8535 = vadd.f32 %v8534, %v7511
          %v8536 = vadd.f32 %v8535, %v7512
          %v8537 = vadd.f32 %v8536, %v7513
          %v8538 = vadd.f32 %v8537, %v7514
          %v8539 = vadd.f32 %v8538, %v7515
          %v8540 = vadd.f32 %v8539, %v7516
          %v8541 = vadd.f32 %v8540, %v7517
          %v8542 = vadd.f32 %v8541, %v7518
          %v8543 = vadd.f32 %v8542, %v7519
          %v8544 = vadd.f32 %v8543, %v7520
          %v8545 = vadd.f32 %v8544, %v7521
          %v8546 = vadd.f32 %v8545, %v7522
          %v8547 = vadd.f32 %v8546, %v7523
          %v8548 = vadd.f32 %v8547, %v7524
          %v8549 = vadd.f32 %v8548, %v7525
          %v8550 = vadd.f32 %v8549, %v7526
          %v8551 = vadd.f32 %v8550, %v7527
          %v8552 = vadd.f32 %v8551, %v7528
          %v8553 = vadd.f32 %v8552, %v7529
          %v8554 = vadd.f32 %v8553, %v7530
          %v8555 = vadd.f32 %v8554, %v7531
          %v8556 = vadd.f32 %v8555, %v7532
          %v8557 = vadd.f32 %v8556, %v7533
          %v8558 = vadd.f32 %v8557, %v7534
          %v8559 = vadd.f32 %v8558, %v7535
          %v8560 = vadd.f32 %v8559, %v7536
          %v8561 = vadd.f32 %v8560, %v7537
          %v8562 = vadd.f32 %v8561, %v7538
          %v8563 = vadd.f32 %v8562, %v7539
          %v8564 = vadd.f32 %v8563, %v7540
          %v8565 = vadd.f32 %v8564, %v7541
          %v8566 = vadd.f32 %v8565, %v7542
          %v8567 = vadd.f32 %v8566, %v7543
          %v8568 = vadd.f32 %v8567, %v7544
          %v8569 = vadd.f32 %v8568, %v7545
          %v8570 = vadd.f32 %v8569, %v7546
          %v8571 = vadd.f32 %v8570, %v7547
          %v8572 = vadd.f32 %v8571, %v7548
          %v8573 = vadd.f32 %v8572, %v7549
          %v8574 = vadd.f32 %v8573, %v7550
          %v8575 = vadd.f32 %v8574, %v7551
          %v8576 = vadd.f32 %v8575, %v7552
          %v8577 = vadd.f32 %v8576, %v7553
          %v8578 = vadd.f32 %v8577, %v7554
          %v8579 = vadd.f32 %v8578, %v7555
          %v8580 = vadd.f32 %v8579, %v7556
          %v8581 = vadd.f32 %v8580, %v7557
          %v8582 = vadd.f32 %v8581, %v7558
          %v8583 = vadd.f32 %v8582, %v7559
          %v8584 = vadd.f32 %v8583, %v7560
          %v8585 = vadd.f32 %v8584, %v7561
          %v8586 = vadd.f32 %v8585, %v7562
          %v8587 = vadd.f32 %v8586, %v7563
          %v8588 = vadd.f32 %v8587, %v7564
          %v8589 = vadd.f32 %v8588, %v7565
          %v8590 = vadd.f32 %v8589, %v7566
          %v8591 = vadd.f32 %v8590, %v7567
          %v8592 = vadd.f32 %v8591, %v7568
          %v8593 = vadd.f32 %v8592, %v7569
          %v8594 = vadd.f32 %v8593, %v7570
          %v8595 = vadd.f32 %v8594, %v7571
          %v8596 = vadd.f32 %v8595, %v7572
          %v8597 = vadd.f32 %v8596, %v7573
          %v8598 = vadd.f32 %v8597, %v7574
          %v8599 = vadd.f32 %v8598, %v7575
          %v8600 = vadd.f32 %v8599, %v7576
          %v8601 = vadd.f32 %v8600, %v7577
          %v8602 = vadd.f32 %v8601, %v7578
          %v8603 = vadd.f32 %v8602, %v7579
          %v8604 = vadd.f32 %v8603, %v7580
          %v8605 = vadd.f32 %v8604, %v7581
          %v8606 = vadd.f32 %v8605, %v7582
          %v8607 = vadd.f32 %v8606, %v7583
          %v8608 = vadd.f32 %v8607, %v7584
          %v8609 = vadd.f32 %v8608, %v7585
          %v8610 = vadd.f32 %v8609, %v7586
          %v8611 = vadd.f32 %v8610, %v7587
          %v8612 = vadd.f32 %v8611, %v7588
          %v8613 = vadd.f32 %v8612, %v7589
          %v8614 = vadd.f32 %v8613, %v7590
          %v8615 = vadd.f32 %v8614, %v7591
          %v8616 = vadd.f32 %v8615, %v7592
          %v8617 = vadd.f32 %v8616, %v7593
          %v8618 = vadd.f32 %v8617, %v7594
          %v8619 = vadd.f32 %v8618, %v7595
          %v8620 = vadd.f32 %v8619, %v7596
          %v8621 = vadd.f32 %v8620, %v7597
          %v8622 = vadd.f32 %v8621, %v7598
          %v8623 = vadd.f32 %v8622, %v7599
          %v8624 = vadd.f32 %v8623, %v7600
          %v8625 = vadd.f32 %v8624, %v7601
          %v8626 = vadd.f32 %v8625, %v7602
          %v8627 = vadd.f32 %v8626, %v7603
          %v8628 = vadd.f32 %v8627, %v7604
          %v8629 = vadd.f32 %v8628, %v7605
          %v8630 = vadd.f32 %v8629, %v7606
          %v8631 = vadd.f32 %v8630, %v7607
          %v8632 = vadd.f32 %v8631, %v7608
          %v8633 = vadd.f32 %v8632, %v7609
          %v8634 = vadd.f32 %v8633, %v7610
          %v8635 = vadd.f32 %v8634, %v7611
          %v8636 = vadd.f32 %v8635, %v7612
          %v8637 = vadd.f32 %v8636, %v7613
          %v8638 = vadd.f32 %v8637, %v7614
          %v8639 = vadd.f32 %v8638, %v7615
          %v8640 = vadd.f32 %v8639, %v7616
          %v8641 = vadd.f32 %v8640, %v7617
          %v8642 = vadd.f32 %v8641, %v7618
          %v8643 = vadd.f32 %v8642, %v7619
          %v8644 = vadd.f32 %v8643, %v7620
          %v8645 = vadd.f32 %v8644, %v7621
          %v8646 = vadd.f32 %v8645, %v7622
          %v8647 = vadd.f32 %v8646, %v7623
          %v8648 = vadd.f32 %v8647, %v7624
          %v8649 = vadd.f32 %v8648, %v7625
          %v8650 = vadd.f32 %v8649, %v7626
          %v8651 = vadd.f32 %v8650, %v7627
          %v8652 = vadd.f32 %v8651, %v7628
          %v8653 = vadd.f32 %v8652, %v7629
          %v8654 = vadd.f32 %v8653, %v7630
          %v8655 = vadd.f32 %v8654, %v7631
          %v8656 = vadd.f32 %v8655, %v7632
          %v8657 = vadd.f32 %v8656, %v7633
          %v8658 = vadd.f32 %v8657, %v7634
          %v8659 = vadd.f32 %v8658, %v7635
          %v8660 = vadd.f32 %v8659, %v7636
          %v8661 = vadd.f32 %v8660, %v7637
          %v8662 = vadd.f32 %v8661, %v7638
          %v8663 = vadd.f32 %v8662, %v7639
          %v8664 = vadd.f32 %v8663, %v7640
          %v8665 = vadd.f32 %v8664, %v7641
          %v8666 = vadd.f32 %v8665, %v7642
          %v8667 = vadd.f32 %v8666, %v7643
          %v8668 = vadd.f32 %v8667, %v7644
          %v8669 = vadd.f32 %v8668, %v7645
          %v8670 = vadd.f32 %v8669, %v7646
          %v8671 = vadd.f32 %v8670, %v7647
          %v8672 = vadd.f32 %v8671, %v7648
          %v8673 = vadd.f32 %v8672, %v7649
          %v8674 = vadd.f32 %v8673, %v7650
          %v8675 = vadd.f32 %v8674, %v7651
          %v8676 = vadd.f32 %v8675, %v7652
          %v8677 = vadd.f32 %v8676, %v7653
          %v8678 = vadd.f32 %v8677, %v7654
          %v8679 = vadd.f32 %v8678, %v7655
          %v8680 = vadd.f32 %v8679, %v7656
          %v8681 = vadd.f32 %v8680, %v7657
          %v8682 = vadd.f32 %v8681, %v7658
          %v8683 = vadd.f32 %v8682, %v7659
          %v8684 = vadd.f32 %v8683, %v7660
          %v8685 = vadd.f32 %v8684, %v7661
          %v8686 = vadd.f32 %v8685, %v7662
          %v8687 = vadd.f32 %v8686, %v7663
          %v8688 = vadd.f32 %v8687, %v7664
          %v8689 = vadd.f32 %v8688, %v7665
          %v8690 = vadd.f32 %v8689, %v7666
          %v8691 = vadd.f32 %v8690, %v7667
          %v8692 = vadd.f32 %v8691, %v7668
          %v8693 = vadd.f32 %v8692, %v7669
          %v8694 = vadd.f32 %v8693, %v7670
          %v8695 = vadd.f32 %v8694, %v7671
          %v8696 = vadd.f32 %v8695, %v7672
          %v8697 = vadd.f32 %v8696, %v7673
          %v8698 = vadd.f32 %v8697, %v7674
          %v8699 = vadd.f32 %v8698, %v7675
          %v8700 = vadd.f32 %v8699, %v7676
          %v8701 = vadd.f32 %v8700, %v7677
          %v8702 = vadd.f32 %v8701, %v7678
          %v8703 = vadd.f32 %v8702, %v7679
          %v8704 = vadd.f32 %v8703, %v7680
          %v8705 = vadd.f32 %v8704, %v7681
          %v8706 = vadd.f32 %v8705, %v7682
          %v8707 = vadd.f32 %v8706, %v7683
          %v8708 = vadd.f32 %v8707, %v7684
          %v8709 = vadd.f32 %v8708, %v7685
          %v8710 = vadd.f32 %v8709, %v7686
          %v8711 = vadd.f32 %v8710, %v7687
          %v8712 = vadd.f32 %v8711, %v7688
          %v8713 = vadd.f32 %v8712, %v7689
          %v8714 = vadd.f32 %v8713, %v7690
          %v8715 = vadd.f32 %v8714, %v7691
          %v8716 = vadd.f32 %v8715, %v7692
          %v8717 = vadd.f32 %v8716, %v7693
          %v8718 = vadd.f32 %v8717, %v7694
          %v8719 = vadd.f32 %v8718, %v7695
          %v8720 = vadd.f32 %v8719, %v7696
          %v8721 = vadd.f32 %v8720, %v7697
          %v8722 = vadd.f32 %v8721, %v7698
          %v8723 = vadd.f32 %v8722, %v7699
          %v8724 = vadd.f32 %v8723, %v7700
          %v8725 = vadd.f32 %v8724, %v7701
          %v8726 = vadd.f32 %v8725, %v7702
          %v8727 = vadd.f32 %v8726, %v7703
          %v8728 = vadd.f32 %v8727, %v7704
          %v8729 = vadd.f32 %v8728, %v7705
          %v8730 = vadd.f32 %v8729, %v7706
          %v8731 = vadd.f32 %v8730, %v7707
          %v8732 = vadd.f32 %v8731, %v7708
          %v8733 = vadd.f32 %v8732, %v7709
          %v8734 = vadd.f32 %v8733, %v7710
          %v8735 = vadd.f32 %v8734, %v7711
          %v8736 = vadd.f32 %v8735, %v7712
          %v8737 = vadd.f32 %v8736, %v7713
          %v8738 = vadd.f32 %v8737, %v7714
          %v8739 = vadd.f32 %v8738, %v7715
          %v8740 = vadd.f32 %v8739, %v7716
          %v8741 = vadd.f32 %v8740, %v7717
          %v8742 = vadd.f32 %v8741, %v7718
          %v8743 = vadd.f32 %v8742, %v7719
          %v8744 = vadd.f32 %v8743, %v7720
          %v8745 = vadd.f32 %v8744, %v7721
          %v8746 = vadd.f32 %v8745, %v7722
          %v8747 = vadd.f32 %v8746, %v7723
          %v8748 = vadd.f32 %v8747, %v7724
          %v8749 = vadd.f32 %v8748, %v7725
          %v8750 = vadd.f32 %v8749, %v7726
          %v8751 = vadd.f32 %v8750, %v7727
          %v8752 = vadd.f32 %v8751, %v7728
          %v8753 = vadd.f32 %v8752, %v7729
          %v8754 = vadd.f32 %v8753, %v7730
          %v8755 = vadd.f32 %v8754, %v7731
          %v8756 = vadd.f32 %v8755, %v7732
          %v8757 = vadd.f32 %v8756, %v7733
          %v8758 = vadd.f32 %v8757, %v7734
          %v8759 = vadd.f32 %v8758, %v7735
          %v8760 = vadd.f32 %v8759, %v7736
          %v8761 = vadd.f32 %v8760, %v7737
          %v8762 = vadd.f32 %v8761, %v7738
          %v8763 = vadd.f32 %v8762, %v7739
          %v8764 = vadd.f32 %v8763, %v7740
          %v8765 = vadd.f32 %v8764, %v7741
          %v8766 = vadd.f32 %v8765, %v7742
          %v8767 = vadd.f32 %v8766, %v7743
          %v8768 = vadd.f32 %v8767, %v7744
          %v8769 = vadd.f32 %v8768, %v7745
          %v8770 = vadd.f32 %v8769, %v7746
          %v8771 = vadd.f32 %v8770, %v7747
          %v8772 = vadd.f32 %v8771, %v7748
          %v8773 = vadd.f32 %v8772, %v7749
          %v8774 = vadd.f32 %v8773, %v7750
          %v8775 = vadd.f32 %v8774, %v7751
          %v8776 = vadd.f32 %v8775, %v7752
          %v8777 = vadd.f32 %v8776, %v7753
          %v8778 = vadd.f32 %v8777, %v7754
          %v8779 = vadd.f32 %v8778, %v7755
          %v8780 = vadd.f32 %v8779, %v7756
          %v8781 = vadd.f32 %v8780, %v7757
          %v8782 = vadd.f32 %v8781, %v7758
          %v8783 = vadd.f32 %v8782, %v7759
          %v8784 = vadd.f32 %v8783, %v7760
          %v8785 = vadd.f32 %v8784, %v7761
          %v8786 = vadd.f32 %v8785, %v7762
          %v8787 = vadd.f32 %v8786, %v7763
          %v8788 = vadd.f32 %v8787, %v7764
          %v8789 = vadd.f32 %v8788, %v7765
          %v8790 = vadd.f32 %v8789, %v7766
          %v8791 = vadd.f32 %v8790, %v7767
          %v8792 = vadd.f32 %v8791, %v7768
          %v8793 = vadd.f32 %v8792, %v7769
          %v8794 = vadd.f32 %v8793, %v7770
          %v8795 = vadd.f32 %v8794, %v7771
          %v8796 = vadd.f32 %v8795, %v7772
          %v8797 = vadd.f32 %v8796, %v7773
          %v8798 = vadd.f32 %v8797, %v7774
          %v8799 = vadd.f32 %v8798, %v7775
          %v8800 = vadd.f32 %v8799, %v7776
          %v8801 = vadd.f32 %v8800, %v7777
          %v8802 = vadd.f32 %v8801, %v7778
          %v8803 = vadd.f32 %v8802, %v7779
          %v8804 = vadd.f32 %v8803, %v7780
          %v8805 = vadd.f32 %v8804, %v7781
          %v8806 = vadd.f32 %v8805, %v7782
          %v8807 = vadd.f32 %v8806, %v7783
          %v8808 = vadd.f32 %v8807, %v7784
          %v8809 = vadd.f32 %v8808, %v7785
          %v8810 = vadd.f32 %v8809, %v7786
          %v8811 = vadd.f32 %v8810, %v7787
          %v8812 = vadd.f32 %v8811, %v7788
          %v8813 = vadd.f32 %v8812, %v7789
          %v8814 = vadd.f32 %v8813, %v7790
          %v8815 = vadd.f32 %v8814, %v7791
          %v8816 = vadd.f32 %v8815, %v7792
          %v8817 = vadd.f32 %v8816, %v7793
          %v8818 = vadd.f32 %v8817, %v7794
          %v8819 = vadd.f32 %v8818, %v7795
          %v8820 = vadd.f32 %v8819, %v7796
          %v8821 = vadd.f32 %v8820, %v7797
          %v8822 = vadd.f32 %v8821, %v7798
          %v8823 = vadd.f32 %v8822, %v7799
          %v8824 = vadd.f32 %v8823, %v7800
          %v8825 = vadd.f32 %v8824, %v7801
          %v8826 = vadd.f32 %v8825, %v7802
          %v8827 = vadd.f32 %v8826, %v7803
          %v8828 = vadd.f32 %v8827, %v7804
          %v8829 = vadd.f32 %v8828, %v7805
          %v8830 = vadd.f32 %v8829, %v7806
          %v8831 = vadd.f32 %v8830, %v7807
          %v8832 = vadd.f32 %v8831, %v7808
          %v8833 = vadd.f32 %v8832, %v7809
          %v8834 = vadd.f32 %v8833, %v7810
          %v8835 = vadd.f32 %v8834, %v7811
          %v8836 = vadd.f32 %v8835, %v7812
          %v8837 = vadd.f32 %v8836, %v7813
          %v8838 = vadd.f32 %v8837, %v7814
          %v8839 = vadd.f32 %v8838, %v7815
          %v8840 = vadd.f32 %v8839, %v7816
          %v8841 = vadd.f32 %v8840, %v7817
          %v8842 = vadd.f32 %v8841, %v7818
          %v8843 = vadd.f32 %v8842, %v7819
          %v8844 = vadd.f32 %v8843, %v7820
          %v8845 = vadd.f32 %v8844, %v7821
          %v8846 = vadd.f32 %v8845, %v7822
          %v8847 = vadd.f32 %v8846, %v7823
          %v8848 = vadd.f32 %v8847, %v7824
          %v8849 = vadd.f32 %v8848, %v7825
          %v8850 = vadd.f32 %v8849, %v7826
          %v8851 = vadd.f32 %v8850, %v7827
          %v8852 = vadd.f32 %v8851, %v7828
          %v8853 = vadd.f32 %v8852, %v7829
          %v8854 = vadd.f32 %v8853, %v7830
          %v8855 = vadd.f32 %v8854, %v7831
          %v8856 = vadd.f32 %v8855, %v7832
          %v8857 = vadd.f32 %v8856, %v7833
          %v8858 = vadd.f32 %v8857, %v7834
          %v8859 = vadd.f32 %v8858, %v7835
          %v8860 = vadd.f32 %v8859, %v7836
          %v8861 = vadd.f32 %v8860, %v7837
          %v8862 = vadd.f32 %v8861, %v7838
          %v8863 = vadd.f32 %v8862, %v7839
          %v8864 = vadd.f32 %v8863, %v7840
          %v8865 = vadd.f32 %v8864, %v7841
          %v8866 = vadd.f32 %v8865, %v7842
          %v8867 = vadd.f32 %v8866, %v7843
          %v8868 = vadd.f32 %v8867, %v7844
          %v8869 = vadd.f32 %v8868, %v7845
          %v8870 = vadd.f32 %v8869, %v7846
          %v8871 = vadd.f32 %v8870, %v7847
          %v8872 = vadd.f32 %v8871, %v7848
          %v8873 = vadd.f32 %v8872, %v7849
          %v8874 = vadd.f32 %v8873, %v7850
          %v8875 = vadd.f32 %v8874, %v7851
          %v8876 = vadd.f32 %v8875, %v7852
          %v8877 = vadd.f32 %v8876, %v7853
          %v8878 = vadd.f32 %v8877, %v7854
          %v8879 = vadd.f32 %v8878, %v7855
          %v8880 = vadd.f32 %v8879, %v7856
          %v8881 = vadd.f32 %v8880, %v7857
          %v8882 = vadd.f32 %v8881, %v7858
          %v8883 = vadd.f32 %v8882, %v7859
          %v8884 = vadd.f32 %v8883, %v7860
          %v8885 = vadd.f32 %v8884, %v7861
          %v8886 = vadd.f32 %v8885, %v7862
          %v8887 = vadd.f32 %v8886, %v7863
          %v8888 = vadd.f32 %v8887, %v7864
          %v8889 = vadd.f32 %v8888, %v7865
          %v8890 = vadd.f32 %v8889, %v7866
          %v8891 = vadd.f32 %v8890, %v7867
          %v8892 = vadd.f32 %v8891, %v7868
          %v8893 = vadd.f32 %v8892, %v7869
          %v8894 = vadd.f32 %v8893, %v7870
          %v8895 = vadd.f32 %v8894, %v7871
          %v8896 = vadd.f32 %v8895, %v7872
          %v8897 = vadd.f32 %v8896, %v7873
          %v8898 = vadd.f32 %v8897, %v7874
          %v8899 = vadd.f32 %v8898, %v7875
          %v8900 = vadd.f32 %v8899, %v7876
          %v8901 = vadd.f32 %v8900, %v7877
          %v8902 = vadd.f32 %v8901, %v7878
          %v8903 = vadd.f32 %v8902, %v7879
          %v8904 = vadd.f32 %v8903, %v7880
          %v8905 = vadd.f32 %v8904, %v7881
          %v8906 = vadd.f32 %v8905, %v7882
          %v8907 = vadd.f32 %v8906, %v7883
          %v8908 = vadd.f32 %v8907, %v7884
          %v8909 = vadd.f32 %v8908, %v7885
          %v8910 = vadd.f32 %v8909, %v7886
          %v8911 = vadd.f32 %v8910, %v7887
          %v8912 = vadd.f32 %v8911, %v7888
          %v8913 = vadd.f32 %v8912, %v7889
          %v8914 = vadd.f32 %v8913, %v7890
          %v8915 = vadd.f32 %v8914, %v7891
          %v8916 = vadd.f32 %v8915, %v7892
          %v8917 = vadd.f32 %v8916, %v7893
          %v8918 = vadd.f32 %v8917, %v7894
          %v8919 = vadd.f32 %v8918, %v7895
          %v8920 = vadd.f32 %v8919, %v7896
          %v8921 = vadd.f32 %v8920, %v7897
          %v8922 = vadd.f32 %v8921, %v7898
          %v8923 = vadd.f32 %v8922, %v7899
          %v8924 = vadd.f32 %v8923, %v7900
          %v8925 = vadd.f32 %v8924, %v7901
          %v8926 = vadd.f32 %v8925, %v7902
          %v8927 = vadd.f32 %v8926, %v7903
          %v8928 = vadd.f32 %v8927, %v7904
          %v8929 = vadd.f32 %v8928, %v7905
          %v8930 = vadd.f32 %v8929, %v7906
          %v8931 = vadd.f32 %v8930, %v7907
          %v8932 = vadd.f32 %v8931, %v7908
          %v8933 = vadd.f32 %v8932, %v7909
          %v8934 = vadd.f32 %v8933, %v7910
          %v8935 = vadd.f32 %v8934, %v7911
          %v8936 = vadd.f32 %v8935, %v7912
          %v8937 = vadd.f32 %v8936, %v7913
          %v8938 = vadd.f32 %v8937, %v7914
          %v8939 = vadd.f32 %v8938, %v7915
          %v8940 = vadd.f32 %v8939, %v7916
          %v8941 = vadd.f32 %v8940, %v7917
          %v8942 = vadd.f32 %v8941, %v7918
          %v8943 = vadd.f32 %v8942, %v7919
          %v8944 = vadd.f32 %v8943, %v7920
          %v8945 = vadd.f32 %v8944, %v7921
          %v8946 = vadd.f32 %v8945, %v7922
          %v8947 = vadd.f32 %v8946, %v7923
          %v8948 = vadd.f32 %v8947, %v7924
          %v8949 = vadd.f32 %v8948, %v7925
          %v8950 = vadd.f32 %v8949, %v7926
          %v8951 = vadd.f32 %v8950, %v7927
          %v8952 = vadd.f32 %v8951, %v7928
          %v8953 = vadd.f32 %v8952, %v7929
          %v8954 = vadd.f32 %v8953, %v7930
          %v8955 = vadd.f32 %v8954, %v7931
          %v8956 = vadd.f32 %v8955, %v7932
          %v8957 = vadd.f32 %v8956, %v7933
          %v8958 = vadd.f32 %v8957, %v7934
          %v8959 = vadd.f32 %v8958, %v7935
          %v8960 = vadd.f32 %v8959, %v7936
          %v8961 = vadd.f32 %v8960, %v7937
          %v8962 = vadd.f32 %v8961, %v7938
          %v8963 = vadd.f32 %v8962, %v7939
          %v8964 = vadd.f32 %v8963, %v7940
          %v8965 = vadd.f32 %v8964, %v7941
          %v8966 = vadd.f32 %v8965, %v7942
          %v8967 = vadd.f32 %v8966, %v7943
          %v8968 = vadd.f32 %v8967, %v7944
          %v8969 = vadd.f32 %v8968, %v7945
          %v8970 = vadd.f32 %v8969, %v7946
          %v8971 = vadd.f32 %v8970, %v7947
          %v8972 = vadd.f32 %v8971, %v7948
          %v8973 = vadd.f32 %v8972, %v7949
          %v8974 = vadd.f32 %v8973, %v7950
          %v8975 = vadd.f32 %v8974, %v7951
          %v8976 = vadd.f32 %v8975, %v7952
          %v8977 = vadd.f32 %v8976, %v7953
          %v8978 = vadd.f32 %v8977, %v7954
          %v8979 = vadd.f32 %v8978, %v7955
          %v8980 = vadd.f32 %v8979, %v7956
          %v8981 = vadd.f32 %v8980, %v7957
          %v8982 = vadd.f32 %v8981, %v7958
          %v8983 = vadd.f32 %v8982, %v7959
          %v8984 = vadd.f32 %v8983, %v7960
          %v8985 = vadd.f32 %v8984, %v7961
          %v8986 = vadd.f32 %v8985, %v7962
          %v8987 = vadd.f32 %v8986, %v7963
          %v8988 = vadd.f32 %v8987, %v7964
          %v8989 = vadd.f32 %v8988, %v7965
          %v8990 = vadd.f32 %v8989, %v7966
          %v8991 = vadd.f32 %v8990, %v7967
          %v8992 = vadd.f32 %v8991, %v7968
          %v8993 = vadd.f32 %v8992, %v7969
          %v8994 = vadd.f32 %v8993, %v7970
          %v8995 = vadd.f32 %v8994, %v7971
          %v8996 = vadd.f32 %v8995, %v7972
          %v8997 = vadd.f32 %v8996, %v7973
          %v8998 = vadd.f32 %v8997, %v7974
          %v8999 = vadd.f32 %v8998, %v7975
          %v9000 = vadd.f32 %v8999, %v7976
          %v9001 = vadd.f32 %v9000, %v7977
          %v9002 = vadd.f32 %v9001, %v7978
          %v9003 = vadd.f32 %v9002, %v7979
          %v9004 = vadd.f32 %v9003, %v7980
          %v9005 = vadd.f32 %v9004, %v7981
          %v9006 = vadd.f32 %v9005, %v7982
          %v9007 = vadd.f32 %v9006, %v7983
          %v9008 = vadd.f32 %v9007, %v7984
          %v9009 = vadd.f32 %v9008, %v7985
          %v9010 = vadd.f32 %v9009, %v7986
          %v9011 = vadd.f32 %v9010, %v7987
          %v9012 = vadd.f32 %v9011, %v7988
          %v9013 = vadd.f32 %v9012, %v7989
          %v9014 = vadd.f32 %v9013, %v7990
          %v9015 = vadd.f32 %v9014, %v7991
          %v9016 = vadd.f32 %v9015, %v7992
          %v9017 = vadd.f32 %v9016, %v7993
          %v9018 = vadd.f32 %v9017, %v7994
          %v9019 = vadd.f32 %v9018, %v7995
          %v9020 = vadd.f32 %v9019, %v7996
          %v9021 = vadd.f32 %v9020, %v7997
          %v9022 = vadd.f32 %v9021, %v7998
          %v9023 = vadd.f32 %v9022, %v7999
          %v9024 = vadd.f32 %v9023, %v8000
          %v9025 = vadd.f32 %v9024, %v8001
          %v9026 = vadd.f32 %v9025, %v8002
          %v9027 = vadd.f32 %v9026, %v8003
          %v9028 = vadd.f32 %v9027, %v8004
          %v9029 = vadd.f32 %v9028, %v8005
          %v9030 = vadd.f32 %v9029, %v8006
          %v9031 = vadd.f32 %v9030, %v8007
          %v9032 = vadd.f32 %v9031, %v8008
          %v9033 = vadd.f32 %v9032, %v8009
          %v9034 = vadd.f32 %v9033, %v8010
          %v9035 = vadd.f32 %v9034, %v8011
          %v9036 = vadd.f32 %v9035, %v8012
          %v9037 = vadd.f32 %v9036, %v8013
          %v9038 = vadd.f32 %v9037, %v8014
          %v9039 = vadd.f32 %v9038, %v8015
          %v9040 = vadd.f32 %v9039, %v8016
          %v9041 = vadd.f32 %v9040, %v8017
          %v9042 = vadd.f32 %v9041, %v8018
          %v9043 = vadd.f32 %v9042, %v8019
          %v9044 = vadd.f32 %v9043, %v8020
          %v9045 = vadd.f32 %v9044, %v8021
          %v9046 = vadd.f32 %v9045, %v8022
          %v9047 = vadd.f32 %v9046, %v8023
          %v9048 = vadd.f32 %v9047, %v8024
          %v9049 = vadd.f32 %v9048, %v8025
          %v9050 = vadd.f32 %v9049, %v8026
          %v9051 = vadd.f32 %v9050, %v8027
          %v9052 = vadd.f32 %v9051, %v8028
          %v9053 = vadd.f32 %v9052, %v8029
          %v9054 = vadd.f32 %v9053, %v8030
          %v9055 = vadd.f32 %v9054, %v8031
          %v9056 = vadd.f32 %v9055, %v8032
          %v9057 = vadd.f32 %v9056, %v8033
          %v9058 = vadd.f32 %v9057, %v8034
          %v9059 = vadd.f32 %v9058, %v8035
          %v9060 = vadd.f32 %v9059, %v8036
          %v9061 = vadd.f32 %v9060, %v8037
          %v9062 = vadd.f32 %v9061, %v8038
          %v9063 = vadd.f32 %v9062, %v8039
          %v9064 = vadd.f32 %v9063, %v8040
          %v9065 = vadd.f32 %v9064, %v8041
          %v9066 = vadd.f32 %v9065, %v8042
          %v9067 = vadd.f32 %v9066, %v8043
          %v9068 = vadd.f32 %v9067, %v8044
          %v9069 = vadd.f32 %v9068, %v8045
          %v9070 = vadd.f32 %v9069, %v8046
          %v9071 = vadd.f32 %v9070, %v8047
          %v9072 = vadd.f32 %v9071, %v8048
          %v9073 = vadd.f32 %v9072, %v8049
          %v9074 = vadd.f32 %v9073, %v8050
          %v9075 = vadd.f32 %v9074, %v8051
          %v9076 = vadd.f32 %v9075, %v8052
          %v9077 = vadd.f32 %v9076, %v8053
          %v9078 = vadd.f32 %v9077, %v8054
          %v9079 = vadd.f32 %v9078, %v8055
          %v9080 = vadd.f32 %v9079, %v8056
          %v9081 = vadd.f32 %v9080, %v8057
          %v9082 = vadd.f32 %v9081, %v8058
          %v9083 = vadd.f32 %v9082, %v8059
          %v9084 = vadd.f32 %v9083, %v8060
          %v9085 = vadd.f32 %v9084, %v8061
          %v9086 = vadd.f32 %v9085, %v8062
          %v9087 = vadd.f32 %v9086, %v8063
          %v9088 = vadd.f32 %v9087, %v8064
          %v9089 = vadd.f32 %v9088, %v8065
          %v9090 = vadd.f32 %v9089, %v8066
          %v9091 = vadd.f32 %v9090, %v8067
          %v9092 = vadd.f32 %v9091, %v8068
          %v9093 = vadd.f32 %v9092, %v8069
          %v9094 = vadd.f32 %v9093, %v8070
          %v9095 = vadd.f32 %v9094, %v8071
          %v9096 = vadd.f32 %v9095, %v8072
          %v9097 = vadd.f32 %v9096, %v8073
          %v9098 = vadd.f32 %v9097, %v8074
          %v9099 = vadd.f32 %v9098, %v8075
          %v9100 = vadd.f32 %v9099, %v8076
          %v9101 = vadd.f32 %v9100, %v8077
          %v9102 = vadd.f32 %v9101, %v8078
          %v9103 = vadd.f32 %v9102, %v8079
          %v9104 = vadd.f32 %v9103, %v8080
          %v9105 = vadd.f32 %v9104, %v8081
          %v9106 = vadd.f32 %v9105, %v8082
          %v9107 = vadd.f32 %v9106, %v8083
          %v9108 = vadd.f32 %v9107, %v8084
          %v9109 = vadd.f32 %v9108, %v8085
          %v9110 = vadd.f32 %v9109, %v8086
          %v9111 = vadd.f32 %v9110, %v8087
          %v9112 = vadd.f32 %v9111, %v8088
          %v9113 = vadd.f32 %v9112, %v8089
          %v9114 = vadd.f32 %v9113, %v8090
          %v9115 = vadd.f32 %v9114, %v8091
          %v9116 = vadd.f32 %v9115, %v8092
          %v9117 = vadd.f32 %v9116, %v8093
          %v9118 = vadd.f32 %v9117, %v8094
          %v9119 = vadd.f32 %v9118, %v8095
          %v9120 = vadd.f32 %v9119, %v8096
          %v9121 = vadd.f32 %v9120, %v8097
          %v9122 = vadd.f32 %v9121, %v8098
          %v9123 = vadd.f32 %v9122, %v8099
          %v9124 = vadd.f32 %v9123, %v8100
          %v9125 = vadd.f32 %v9124, %v8101
          %v9126 = vadd.f32 %v9125, %v8102
          %v9127 = vadd.f32 %v9126, %v8103
          %v9128 = vadd.f32 %v9127, %v8104
          %v9129 = vadd.f32 %v9128, %v8105
          %v9130 = vadd.f32 %v9129, %v8106
          %v9131 = vadd.f32 %v9130, %v8107
          %v9132 = vadd.f32 %v9131, %v8108
          %v9133 = vadd.f32 %v9132, %v8109
          %v9134 = vadd.f32 %v9133, %v8110
          %v9135 = vadd.f32 %v9134, %v8111
          %v9136 = vadd.f32 %v9135, %v8112
          %v9137 = vadd.f32 %v9136, %v8113
          %v9138 = vadd.f32 %v9137, %v8114
          %v9139 = vadd.f32 %v9138, %v8115
          %v9140 = vadd.f32 %v9139, %v8116
          %v9141 = vadd.f32 %v9140, %v8117
          %v9142 = vadd.f32 %v9141, %v8118
          %v9143 = vadd.f32 %v9142, %v8119
          %v9144 = vadd.f32 %v9143, %v8120
          %v9145 = vadd.f32 %v9144, %v8121
          %v9146 = vadd.f32 %v9145, %v8122
          %v9147 = vadd.f32 %v9146, %v8123
          %v9148 = vadd.f32 %v9147, %v8124
          %v9149 = vadd.f32 %v9148, %v8125
          %v9150 = vadd.f32 %v9149, %v8126
          %v9151 = vadd.f32 %v9150, %v8127
          %v9152 = vadd.f32 %v9151, %v8128
          %v9153 = vadd.f32 %v9152, %v8129
          %v9154 = vadd.f32 %v9153, %v8130
          %v9155 = vadd.f32 %v9154, %v8131
          %v9156 = vadd.f32 %v9155, %v8132
          %v9157 = vadd.f32 %v9156, %v8133
          %v9158 = vadd.f32 %v9157, %v8134
          %v9159 = vadd.f32 %v9158, %v8135
          %v9160 = vadd.f32 %v9159, %v8136
          %v9161 = vadd.f32 %v9160, %v8137
          %v9162 = vadd.f32 %v9161, %v8138
          %v9163 = vadd.f32 %v9162, %v8139
          %v9164 = vadd.f32 %v9163, %v8140
          %v9165 = vadd.f32 %v9164, %v8141
          %v9166 = vadd.f32 %v9165, %v8142
          %v9167 = vadd.f32 %v9166, %v8143
          %v9168 = vadd.f32 %v9167, %v8144
          %v9169 = vadd.f32 %v9168, %v8145
          %v9170 = vadd.f32 %v9169, %v8146
          %v9171 = vadd.f32 %v9170, %v8147
          %v9172 = vadd.f32 %v9171, %v8148
          %v9173 = vadd.f32 %v9172, %v8149
          %v9174 = vadd.f32 %v9173, %v8150
          %v9175 = vadd.f32 %v9174, %v8151
          %v9176 = vadd.f32 %v9175, %v8152
          %v9177 = vadd.f32 %v9176, %v8153
          %v9178 = vadd.f32 %v9177, %v8154
          %v9179 = vadd.f32 %v9178, %v8155
          %v9180 = vadd.f32 %v9179, %v8156
          %v9181 = vadd.f32 %v9180, %v8157
          %v9182 = vadd.f32 %v9181, %v8158
          %v9183 = vadd.f32 %v9182, %v8159
          %v9184 = vadd.f32 %v9183, %v8160
          %v9185 = vadd.f32 %v9184, %v8161
          %v9186 = vadd.f32 %v9185, %v8162
          %v9187 = vadd.f32 %v9186, %v8163
          %v9188 = vadd.f32 %v9187, %v8164
          %v9189 = vadd.f32 %v9188, %v8165
          %v9190 = vadd.f32 %v9189, %v8166
          %v9191 = vadd.f32 %v9190, %v8167
          %v9192 = vadd.f32 %v9191, %v8168
          %v9193 = vadd.f32 %v9192, %v8169
          %v9194 = vadd.f32 %v9193, %v8170
          %v9195 = vadd.f32 %v9194, %v8171
          %v9196 = vadd.f32 %v9195, %v8172
          %v9197 = vadd.f32 %v9196, %v8173
          %v9198 = vadd.f32 %v9197, %v8174
          %v9199 = vadd.f32 %v9198, %v8175
          %v9200 = vadd.f32 %v9199, %v8176
          %v9201 = vadd.f32 %v9200, %v8177
          %v9202 = vadd.f32 %v9201, %v8178
          %v9203 = vadd.f32 %v9202, %v8179
          %v9204 = vadd.f32 %v9203, %v8180
          %v9205 = vadd.f32 %v9204, %v8181
          %v9206 = vadd.f32 %v9205, %v8182
          %v9207 = vadd.f32 %v9206, %v8183
          %v9208 = vadd.f32 %v9207, %v8184
          %v9209 = vadd.f32 %v9208, %v8185
          %v9210 = vadd.f32 %v9209, %v8186
          %v9211 = vadd.f32 %v9210, %v8187
          %v9212 = vadd.f32 %v9211, %v8188
          %v9213 = vadd.f32 %v9212, %v8189
          %v9214 = vadd.f32 %v9213, %v8190
          %v9215 = vadd.f32 %v9214, %v8191
          %v9216 = vadd.f32 %v9215, %v8192
          %v9217 = vadd.f32 %v9216, %v8193
          %v9218 = vadd.f32 %v9217, %v8194
          %v9219 = vadd.f32 %v9218, %v8195
          %v9220 = vadd.f32 %v9219, %v8196
          %v9221 = vadd.f32 %v9220, %v8197
          %v9222 = vadd.f32 %v9221, %v8198
          %v9223 = vadd.f32 %v9222, %v8199
          %v9224 = vadd.f32 %v9223, %v8200
          %v9225 = vadd.f32 %v9224, %v8201
          %v9226 = vadd.f32 %v9225, %v8202
          %v9227 = vadd.f32 %v9226, %v8203
          %v9228 = vadd.f32 %v9227, %v8204
          %v9229 = vadd.f32 %v9228, %v8205
          %v9230 = vadd.f32 %v9229, %v8206
          %v9231 = vadd.f32 %v9230, %v8207
          %v9232 = vadd.f32 %v9231, %v8208
          %v9233 = vadd.f32 %v9232, %v8209
          %v9234 = vadd.f32 %v9233, %v8210
          %v9235 = vadd.f32 %v9234, %v8211
          %v9236 = vadd.f32 %v9235, %v8212
          %v9237 = vadd.f32 %v9236, %v8213
          %v9238 = vadd.f32 %v9237, %v8214
          %v9239 = vadd.f32 %v9238, %v8215
          %v9240 = vadd.f32 %v9239, %v8216
          %v9241 = vadd.f32 %v9240, %v8217
          %v9242 = vadd.f32 %v9241, %v8218
          %v9243 = vadd.f32 %v9242, %v8219
          %v9244 = vadd.f32 %v9243, %v8220
          %v9245 = vadd.f32 %v9244, %v8221
          %v9246 = vadd.f32 %v9245, %v8222
          %v9247 = vadd.f32 %v9246, %v8223
          %v9248 = vadd.f32 %v9247, %v8224
          %v9249 = vadd.f32 %v9248, %v8225
          %v9250 = vadd.f32 %v9249, %v8226
          %v9251 = vadd.f32 %v9250, %v8227
          %v9252 = vadd.f32 %v9251, %v8228
          %v9253 = vadd.f32 %v9252, %v8229
          %v9254 = vadd.f32 %v9253, %v8230
          %v9255 = vadd.f32 %v9254, %v8231
          %v9256 = vadd.f32 %v9255, %v8232
          %v9257 = vadd.f32 %v9256, %v8233
          %v9258 = vadd.f32 %v9257, %v8234
          %v9259 = vadd.f32 %v9258, %v8235
          %v9260 = vadd.f32 %v9259, %v8236
          %v9261 = vadd.f32 %v9260, %v8237
          %v9262 = vadd.f32 %v9261, %v8238
          %v9263 = vadd.f32 %v9262, %v8239
          %v9264 = vadd.f32 %v9263, %v8240
          %v9265 = vadd.f32 %v9264, %v8241
          %v9266 = vadd.f32 %v9265, %v8242
          %v9267 = vadd.f32 %v9266, %v8243
          %v9268 = vadd.f32 %v9267, %v8244
          %v9269 = vadd.f32 %v9268, %v8245
          %v9270 = vadd.f32 %v9269, %v8246
          %v9271 = vadd.f32 %v9270, %v8247
          %v9272 = vadd.f32 %v9271, %v8248
          %v9273 = vadd.f32 %v9272, %v8249
          %v9274 = vadd.f32 %v9273, %v8250
          %v9275 = vadd.f32 %v9274, %v8251
          %v9276 = vadd.f32 %v9275, %v8252
          %v9277 = vadd.f32 %v9276, %v8253
          %v9278 = vadd.f32 %v9277, %v8254
          %v9279 = vadd.f32 %v9278, %v8255
          %v9280 = vadd.f32 %v9279, %v8256
          %v9281 = vadd.f32 %v9280, %v8257
          %v9282 = vadd.f32 %v9281, %v8258
          %v9283 = vadd.f32 %v9282, %v8259
          %v9284 = vadd.f32 %v9283, %v8260
          %v9285 = vadd.f32 %v9284, %v8261
          %v9286 = vadd.f32 %v9285, %v8262
          %v9287 = vadd.f32 %v9286, %v8263
          %v9288 = vadd.f32 %v9287, %v8264
          %v9289 = vadd.f32 %v9288, %v8265
          %v9290 = vadd.f32 %v9289, %v8266
          %v9291 = vadd.f32 %v9290, %v8267
          %v9292 = vadd.f32 %v9291, %v8268
          %v9293 = vadd.f32 %v9292, %v8269
          %v9294 = vadd.f32 %v9293, %v8270
          %v9295 = vadd.f32 %v9294, %v8271
          %v9296 = vadd.f32 %v9295, %v8272
          %v9297 = vadd.f32 %v9296, %v8273
          %v9298 = vadd.f32 %v9297, %v8274
          %v9299 = vadd.f32 %v9298, %v8275
          %v9300 = vadd.f32 %v9299, %v8276
          %v9301 = vadd.f32 %v9300, %v8277
          %v9302 = vadd.f32 %v9301, %v8278
          %v9303 = vadd.f32 %v9302, %v8279
          %v9304 = vadd.f32 %v9303, %v8280
          %v9305 = vadd.f32 %v9304, %v8281
          %v9306 = vadd.f32 %v9305, %v8282
          %v9307 = vadd.f32 %v9306, %v8283
          %v9308 = vadd.f32 %v9307, %v8284
          %v9309 = vadd.f32 %v9308, %v8285
          %v9310 = vadd.f32 %v9309, %v8286
          %v9311 = vadd.f32 %v9310, %v8287
          %v9312 = vadd.f32 %v9311, %v8288
          %v9313 = vadd.f32 %v9312, %v8289
          %v9314 = vadd.f32 %v9313, %v8290
          %v9315 = vadd.f32 %v9314, %v8291
          %v9316 = vadd.f32 %v9315, %v8292
          %v9317 = vadd.f32 %v9316, %v8293
          %v9318 = vadd.f32 %v9317, %v8294
          %v9319 = vadd.f32 %v9318, %v8295
          %v9320 = vadd.f32 %v9319, %v8296
          %v9321 = vadd.f32 %v9320, %v8297
          %v9322 = vadd.f32 %v9321, %v8298
          %v9323 = vadd.f32 %v9322, %v8299
          %v9324 = vadd.f32 %v9323, %v8300
          %v9325 = vadd.f32 %v9324, %v8301
          %v9326 = vadd.f32 %v9325, %v8302
          %v9327 = vadd.f32 %v9326, %v8303
          %v9328 = vadd.f32 %v9327, %v8304
          %v9329 = vadd.f32 %v9328, %v8305
          %v9330 = vadd.f32 %v9329, %v8306
          %v9331 = vadd.f32 %v9330, %v8307
          %v9332 = vadd.f32 %v9331, %v8308
          %v9333 = vadd.f32 %v9332, %v8309
          %v9334 = vadd.f32 %v9333, %v8310
          %v9335 = vadd.f32 %v9334, %v8311
          %v9336 = vadd.f32 %v9335, %v8312
          %v9337 = vadd.f32 %v9336, %v8313
          %v9338 = vadd.f32 %v9337, %v8314
          %v9339 = vadd.f32 %v9338, %v8315
          %v9340 = vadd.f32 %v9339, %v8316
          %v9341 = vadd.f32 %v9340, %v8317
          %v9342 = vadd.f32 %v9341, %v8318
          %v9343 = vadd.f32 %v9342, %v8319
          %v9344 = vadd.f32 %v9343, %v8320
          %v9345 = vadd.f32 %v9344, %v8321
          %v9346 = vadd.f32 %v9345, %v8322
          %v9347 = vadd.f32 %v9346, %v8323
          %v9348 = vadd.f32 %v9347, %v8324
          %v9349 = vadd.f32 %v9348, %v8325
          %v9350 = vadd.f32 %v9349, %v8326
          %v9351 = vadd.f32 %v9350, %v8327
          %v9352 = vadd.f32 %v9351, %v8328
          %v9353 = vadd.f32 %v9352, %v8329
          %v9354 = vadd.f32 %v9353, %v8330
          %v9355 = vadd.f32 %v9354, %v8331
          %v9356 = vadd.f32 %v9355, %v8332
          %v9357 = vadd.f32 %v9356, %v8333
          %v9358 = vadd.f32 %v9357, %v8334
          %v9359 = vadd.f32 %v9358, %v8335
          %v9360 = vadd.f32 %v9359, %v8336
          %v9361 = vadd.f32 %v9360, %v8337
          %v9362 = vadd.f32 %v9361, %v8338
          %v9363 = vadd.f32 %v9362, %v8339
          %v9364 = vadd.f32 %v9363, %v8340
          %v9365 = vadd.f32 %v9364, %v8341
          %v9366 = vadd.f32 %v9365, %v8342
          %v9367 = vadd.f32 %v9366, %v8343
          %v9368 = vadd.f32 %v9367, %v8344
          %v9369 = vadd.f32 %v9368, %v8345
          %v9370 = vadd.f32 %v9369, %v8346
          %v9371 = vadd.f32 %v9370, %v8347
          %v9372 = vadd.f32 %v9371, %v8348
          %v9373 = vadd.f32 %v9372, %v8349
          %v9374 = vadd.f32 %v9373, %v8350
          %v9375 = vadd.f32 %v9374, %v8351
          %v9376 = vadd.f32 %v9375, %v8352
          %v9377 = vadd.f32 %v9376, %v8353
          %v9378 = vadd.f32 %v9377, %v8354
          %v9379 = vadd.f32 %v9378, %v8355
          %v9380 = vadd.f32 %v9379, %v8356
          %v9381 = vadd.f32 %v9380, %v8357
          %v9382 = vadd.f32 %v9381, %v8358
          %v9383 = vadd.f32 %v9382, %v8359
          %v9384 = vadd.f32 %v9383, %v8360
          %v9385 = vadd.f32 %v9384, %v8361
          %v9386 = vadd.f32 %v9385, %v8362
          %v9387 = vadd.f32 %v9386, %v8363
          %v9388 = vadd.f32 %v9387, %v8364
          %v9389 = vadd.f32 %v9388, %v8365
          %v9390 = vadd.f32 %v9389, %v8366
          %v9391 = vadd.f32 %v9390, %v8367
          %v9392 = vadd.f32 %v9391, %v8368
          %v9393 = vadd.f32 %v9392, %v8369
          %v9394 = vadd.f32 %v9393, %v8370
          %v9395 = vadd.f32 %v9394, %v8371
          %v9396 = vadd.f32 %v9395, %v8372
          %v9397 = vadd.f32 %v9396, %v8373
          %v9398 = vadd.f32 %v9397, %v8374
          %v9399 = vadd.f32 %v9398, %v8375
          %v9400 = vadd.f32 %v9399, %v8376
          %v9401 = vadd.f32 %v9400, %v8377
          %v9402 = vadd.f32 %v9401, %v8378
          %v9403 = vadd.f32 %v9402, %v8379
          %v9404 = vadd.f32 %v9403, %v8380
          %v9405 = vadd.f32 %v9404, %v8381
          %v9406 = vadd.f32 %v9405, %v8382
          %v9407 = vadd.f32 %v9406, %v8383
          %v9408 = vadd.f32 %v9407, %v8384
          %v9409 = vadd.f32 %v9408, %v8385
          %v9410 = vadd.f32 %v9409, %v8386
          %v9411 = vadd.f32 %v9410, %v8387
          %v9412 = vadd.f32 %v9411, %v8388
          %v9413 = vadd.f32 %v9412, %v8389
          %v9414 = vadd.f32 %v9413, %v8390
          %v9415 = vadd.f32 %v9414, %v8391
          %v9416 = vadd.f32 %v9415, %v8392
          %v9417 = vadd.f32 %v9416, %v8393
          %v9418 = vadd.f32 %v9417, %v8394
          %v9419 = vadd.f32 %v9418, %v8395
          %v9420 = vadd.f32 %v9419, %v8396
          %v9421 = vadd.f32 %v9420, %v8397
          %v9422 = vadd.f32 %v9421, %v8398
          %v9423 = vadd.f32 %v9422, %v8399
          %v9424 = vadd.f32 %v9423, %v8400
          %v9425 = vadd.f32 %v9424, %v8401
          %v9426 = vadd.f32 %v9425, %v8402
          %v9427 = vadd.f32 %v9426, %v8403
          %v9428 = vadd.f32 %v9427, %v8404
          %v9429 = vadd.f32 %v9428, %v8405
          %v9430 = vadd.f32 %v9429, %v8406
          %v9431 = vadd.f32 %v9430, %v8407
          %v9432 = vadd.f32 %v9431, %v8408
          %v9433 = vadd.f32 %v9432, %v8409
          %v9434 = vadd.f32 %v9433, %v8410
          %v9435 = vadd.f32 %v9434, %v8411
          %v9436 = vadd.f32 %v9435, %v8412
          %v9437 = vadd.f32 %v9436, %v8413
          %v9438 = vadd.f32 %v9437, %v8414
          %v9439 = vadd.f32 %v9438, %v8415
          %v9440 = vadd.f32 %v9439, %v8416
          %v9441 = vadd.f32 %v9440, %v8417
          %v9442 = vadd.f32 %v9441, %v8418
          %v9443 = vadd.f32 %v9442, %v8419
          %v9444 = vadd.f32 %v9443, %v8420
          %v9445 = vadd.f32 %v9444, %v8421
          %v9446 = vadd.f32 %v9445, %v8422
          %v9447 = vadd.f32 %v9446, %v8423
          %v9448 = vadd.f32 %v9447, %v8424
          %v9449 = vadd.f32 %v9448, %v8425
          %v9450 = vadd.f32 %v9449, %v8426
          %v9451 = vadd.f32 %v9450, %v8427
          %v9452 = vadd.f32 %v9451, %v8428
          %v9453 = vadd.f32 %v9452, %v8429
          %v9454 = vadd.f32 %v9453, %v8430
          %v9455 = vadd.f32 %v9454, %v8431
          %v9456 = vadd.f32 %v9455, %v8432
          %v9457 = vadd.f32 %v9456, %v8433
          %v9458 = vadd.f32 %v9457, %v8434
          %v9459 = vadd.f32 %v9458, %v8435
          %v9460 = vadd.f32 %v9459, %v8436
          %v9461 = vadd.f32 %v9460, %v8437
          %v9462 = vadd.f32 %v9461, %v8438
          %v9463 = vadd.f32 %v9462, %v8439
          %v9464 = vadd.f32 %v9463, %v8440
          %v9465 = vadd.f32 %v9464, %v8441
          %v9466 = vadd.f32 %v9465, %v8442
          %v9467 = vadd.f32 %v9466, %v8443
          %v9468 = vadd.f32 %v9467, %v8444
          %v9469 = vadd.f32 %v9468, %v8445
          %v9470 = vadd.f32 %v9469, %v8446
          %v9471 = vadd.f32 %v9470, %v8447
          %v9472 = vadd.f32 %v9471, %v8448
          %v9473 = vadd.f32 %v9472, %v8449
          %v9474 = vadd.f32 %v9473, %v8450
          %v9475 = vadd.f32 %v9474, %v8451
          %v9476 = vadd.f32 %v9475, %v8452
          %v9477 = vadd.f32 %v9476, %v8453
          %v9478 = vadd.f32 %v9477, %v8454
          %v9479 = vadd.f32 %v9478, %v8455
          %v9480 = vadd.f32 %v9479, %v8456
          %v9481 = vadd.f32 %v9480, %v8457
          %v9482 = vadd.f32 %v9481, %v8458
          %v9483 = vadd.f32 %v9482, %v8459
          %v9484 = vadd.f32 %v9483, %v8460
          %v9485 = vadd.f32 %v9484, %v8461
          %v9486 = vadd.f32 %v9485, %v8462
          %v9487 = vadd.f32 %v9486, %v8463
          %v9488 = vadd.f32 %v9487, %v8464
          %v9489 = vadd.f32 %v9488, %v8465
          %v9490 = vadd.f32 %v9489, %v8466
          %v9491 = vadd.f32 %v9490, %v8467
          %v9492 = vadd.f32 %v9491, %v8468
          %v9493 = vadd.f32 %v9492, %v8469
          %v9494 = vadd.f32 %v9493, %v8470
          %v9495 = vadd.f32 %v9494, %v8471
          %v9496 = vadd.f32 %v9495, %v8472
          %v9497 = vadd.f32 %v9496, %v8473
          %v9498 = vadd.f32 %v9497, %v8474
          %v9499 = vadd.f32 %v9498, %v8475
          %v9500 = vadd.f32 %v9499, %v8476
          %v9501 = vadd.f32 %v9500, %v8477
          %v9502 = vadd.f32 %v9501, %v8478
          %v9503 = vadd.f32 %v9502, %v8479
          %v9504 = vadd.f32 %v9503, %v8480
          %v9505 = vadd.f32 %v9504, %v8481
          %v9506 = vadd.f32 %v9505, %v8482
          %v9507 = vadd.f32 %v9506, %v8483
          %v9508 = vadd.f32 %v9507, %v8484
          %v9509 = vadd.f32 %v9508, %v8485
          %v9510 = vadd.f32 %v9509, %v8486
          %v9511 = vadd.f32 %v9510, %v8487
          %v9512 = vadd.f32 %v8488, %v9511
          %9513 = vst [vmem:[#allocation2] sm:$0xff] %v9512
        $region48: #{euclidean_metric_forward.1} parent=27 // pred_fallthru
          _
        %p9514 = scmp.eq.s32.totalorder %s24, 1
        // Predicated region
        $region49: #{euclidean_metric_forward.1} parent=27 // pred_check
          %p9515 = pneg %p9514
        $region50: #{euclidean_metric_forward.1} parent=27 // pred_check_branch
          %9517 = sbr.rel (%p9515) target = $region52
        $region51: #{euclidean_metric_forward.1} parent=27 // pred_region
          %v9518 = vld [vmem:[#allocation2] sm:$0xff]
          %9519 = vadd.xlane.f32.xlu0 %v9518
          %v9520 = vpop.xlane.xlu0 %9519
          %v9521 = vrot.slane %v9520, 4
          %v9522 = vadd.f32 %v9520, %v9521
          %v9523 = vrot.slane %v9522, 2
          %v9524 = vadd.f32 %v9522, %v9523
          %v9525 = vrot.slane %v9524, 1
          %v9526 = vadd.f32 %v9524, %v9525
          %s9527 = vtos %v9526
          %v9528 = vstv %s9527
          %9529 = vst [vmem:[%s273] sm:$0xff] %v9528
        $region52: #{euclidean_metric_forward.1} parent=27 // pred_fallthru
          _
        %p9530 = scmp.lt.s32.totalorder %s23, 0
        %s9531 = scalar_select %p9530, %s23, 0
        %s9532 = smul.addr %s9531, 8
        %s9533 = scalar_lea.vmem %s2, %s9532
        // Predicated region
        $region53: #{euclidean_metric_forward.1} parent=27 // pred_check
          %p9534 = pneg %p117
        $region54: #{euclidean_metric_forward.1} parent=27 // pred_check_branch
          %9536 = sbr.rel (%p9534) target = $region56
        $region55: #{euclidean_metric_forward.1} parent=27 // pred_region
          _
        $region56: #{euclidean_metric_forward.1} parent=27 // pred_fallthru
          _
        // Predicated region
        $region57: #{euclidean_metric_forward.1} parent=27 // pred_check
          %p9537 = pneg %p117
        $region58: #{euclidean_metric_forward.1} parent=27 // pred_check_branch
          %9539 = sbr.rel (%p9537) target = $region60
        $region59: #{euclidean_metric_forward.1} parent=27 // pred_region
          %p9540 = scmp.lt.s32.totalorder %s23, 0
          %s9541 = scalar_select %p9540, %s23, 0
          %s9542 = smul.addr %s9541, 8
          %s9543 = scalar_lea.vmem %s2, %s9542
        $region60: #{euclidean_metric_forward.1} parent=27 // pred_fallthru
          _
      $region28: #{euclidean_metric_forward.1} parent=5 // pred_fallthru
        _
      %p9544 = scmp.le.s32.totalorder 2, %s14
      // Predicated region
      $region61: #{euclidean_metric_forward.1} parent=5 // pred_check
        %p9545 = pneg %p9544
      $region62: #{euclidean_metric_forward.1} parent=5 // pred_check_branch
        %9547 = sbr.rel (%p9545) target = $region64
      $region63: #{euclidean_metric_forward.1} parent=5 // pred_region
        %s9548 = ssub.s32 %s14, 2
      $region64: #{euclidean_metric_forward.1} parent=5 // pred_fallthru
        _
    $region6: #{euclidean_metric_forward.1} parent=1 // loop_footer
      %s18 = sadd.s32 1, %s14
    $region7: #{euclidean_metric_forward.1} parent=1 // loop_footer_branch
      %13 = sbr.rel target = $region3
    $region8: #{euclidean_metric_forward.1} parent=1 // loop_exit
      _
    %9549 = vsyncpa [#allocation4], 1
    %s9550 = scalar_lea.sflag [#allocation4], 1
    %9551 = vsyncpa %s9550, 1
    %9552 = vsyncpa [#allocation6], 1
    %s9553 = scalar_lea.sflag [#allocation6], 1
    %9554 = vsyncpa %s9553, 1

</llo_original>
